<compile_context>
chip_gen: v7x
topology: tpu7x:2x2x1
jax: 0.10.0
libtpu: 0.0.40
codegen_flags: <defaults>
</compile_context>

<pallas_src>
import math
from functools import partial

import jax
import jax.numpy as jnp
from jax.experimental import pallas as pl
from jax.experimental.pallas import tpu as pltpu


# ---------------------------------------------------------------------------
# Kernel: ONE decoder layer for ONE batch block.  grid = (B // TB, L),
# layer axis innermost ("arbitrary"); activations are carried in o_ref.
# ---------------------------------------------------------------------------
def _decoder_kernel(TB, H, S, Se, D,
                    x_ref, enc_ref, tb_ref, sb_ref,
                    w_qkv_ref, b_qkv_ref, w_o1_ref, b_o1_ref,
                    w_q2_ref, b_q2_ref, w_kv2_ref, b_kv2_ref,
                    w_o2_ref, b_o2_ref,
                    w_f1_ref, b_f1_ref, w_f2_ref, b_f2_ref,
                    g1_ref, be1_ref, g2_ref, be2_ref, g3_ref, be3_ref,
                    o_ref):
    hd = D // H
    l = pl.program_id(1)

    # Seed the layer-carried activations from the embedded input at layer 0.
    @pl.when(l == 0)
    def _():
        o_ref[...] = x_ref[...]

    # (TB, S, D) -> (TB*S, D): fold batch into the matmul M dimension.
    x = o_ref[...].reshape(TB * S, D)                       # f32 residual stream
    enc = enc_ref[...].reshape(TB * Se, D)                  # bf16 encoder output

    tbias = tb_ref[...]                                     # (S, S)   f32 additive
    sbias = sb_ref[...]                                     # (S, Se)  f32 additive

    def linear(v, w_ref, b_ref):
        # bf16 MXU matmul with f32 accumulation; bias add in f32.
        return jnp.dot(v.astype(jnp.bfloat16), w_ref[0],
                       preferred_element_type=jnp.float32) + b_ref[0]

    def layernorm(v, g_ref, b_ref):
        mu = jnp.mean(v, axis=-1, keepdims=True)
        var = jnp.mean(jnp.square(v - mu), axis=-1, keepdims=True)
        return (v - mu) * jax.lax.rsqrt(var + 1e-5) * g_ref[0] + b_ref[0]

    def split_heads(t, Sx):
        # (TB*Sx, D) -> (TB*H, Sx, hd): one reshape + one transpose (no per-head loop).
        t = t.reshape(TB, Sx, H, hd)
        t = jnp.transpose(t, (0, 2, 1, 3))                  # (TB, H, Sx, hd)
        return t.reshape(TB * H, Sx, hd).astype(jnp.bfloat16)

    def merge_heads(t, Sx):
        # (TB*H, Sx, hd) -> (TB*Sx, D)
        t = t.reshape(TB, H, Sx, hd)
        t = jnp.transpose(t, (0, 2, 1, 3))                  # (TB, Sx, H, hd)
        return t.reshape(TB * Sx, D)

    def attention(q, k, v, bias, Skv):
        # All heads & batch elements at once via leading-batch einsums.
        qh, kh, vh = split_heads(q, S), split_heads(k, Skv), split_heads(v, Skv)
        sc = jnp.einsum('hqd,hkd->hqk', qh, kh,
                        preferred_element_type=jnp.float32)  # (TB*H, S, Skv) f32
        sc = sc + bias[None, :, :]                           # additive mask (0 / -1e30)
        m = jnp.max(sc, axis=-1, keepdims=True)
        e = jnp.exp(sc - m)
        p = e * pl.reciprocal(jnp.sum(e, axis=-1, keepdims=True), approx=True)
        ctx = jnp.einsum('hqk,hkd->hqd', p.astype(jnp.bfloat16), vh,
                         preferred_element_type=jnp.float32)
        return merge_heads(ctx, S)                           # (TB*S, D) f32

    # --- masked self attention + residual + LN (scale folded into Q weights) ---
    qkv = linear(x, w_qkv_ref, b_qkv_ref)                    # (TB*S, 3D) fused QKV
    sa = attention(qkv[:, :D], qkv[:, D:2 * D], qkv[:, 2 * D:], tbias, S)
    sa = linear(sa, w_o1_ref, b_o1_ref)
    x = layernorm(x + sa, g1_ref, be1_ref)

    # --- encoder/decoder cross attention + residual + LN ---
    q2 = linear(x, w_q2_ref, b_q2_ref)                       # (TB*S, D)
    kv = linear(enc, w_kv2_ref, b_kv2_ref)                   # (TB*Se, 2D) fused K/V
    ca = attention(q2, kv[:, :D], kv[:, D:], sbias, Se)
    ca = linear(ca, w_o2_ref, b_o2_ref)
    x = layernorm(x + ca, g2_ref, be2_ref)

    # --- position-wise feed forward + residual + LN ---
    hdn = jnp.maximum(linear(x, w_f1_ref, b_f1_ref), 0.0)
    ff = linear(hdn, w_f2_ref, b_f2_ref)
    x = layernorm(x + ff, g3_ref, be3_ref)

    # dropout1/2/3 are identity (eval mode)

    # Carry to the next layer step (and this is the final value at l == L-1).
    o_ref[...] = x.reshape(TB, S, D)


# ---------------------------------------------------------------------------
# Host-side parameter packing: PyTorch (out, in) layout -> pre-transposed,
# QKV/KV-fused, attention-scale-folded, layer-stacked, bf16 weights.
# ---------------------------------------------------------------------------
PARAM_ORDER = ("w_qkv", "b_qkv", "w_o1", "b_o1",
               "w_q2", "b_q2", "w_kv2", "b_kv2", "w_o2", "b_o2",
               "w_ff1", "b_ff1", "w_ff2", "b_ff2",
               "g1", "be1", "g2", "be2", "g3", "be3")


def pack_decoder_params(layer_params_list, num_heads):
    d_model = layer_params_list[0][0].shape[0]
    assert d_model % num_heads == 0
    scale = 1.0 / math.sqrt(d_model // num_heads)   # folded into Q weights/biases

    per_layer = []
    for p in layer_params_list:
        (wq1, bq1, wk1, bk1, wv1, bv1, wo1, bo1,
         wq2, bq2, wk2, bk2, wv2, bv2, wo2, bo2,
         w1, b1, w2, b2,
         g1, be1, g2, be2, g3, be3) = p
        per_layer.append(dict(
            w_qkv=jnp.concatenate([wq1.T * scale, wk1.T, wv1.T], axis=1),  # (D, 3D)
            b_qkv=jnp.concatenate([bq1 * scale, bk1, bv1]),                # (3D,)
            w_o1=wo1.T, b_o1=bo1,
            w_q2=wq2.T * scale, b_q2=bq2 * scale,
            w_kv2=jnp.concatenate([wk2.T, wv2.T], axis=1),                 # (D, 2D)
            b_kv2=jnp.concatenate([bk2, bv2]),                             # (2D,)
            w_o2=wo2.T, b_o2=bo2,
            w_ff1=w1.T, b_ff1=b1,                                          # (D, F)
            w_ff2=w2.T, b_ff2=b2,                                          # (F, D)
            g1=g1, be1=be1, g2=g2, be2=be2, g3=g3, be3=be3))

    stacked = {}
    for k in PARAM_ORDER:
        a = jnp.stack([d[k] for d in per_layer])            # leading layer axis
        if a.ndim == 2:                                      # vectors -> (L, 1, X)
            a = a[:, None, :]
        if k.startswith("w_"):
            a = a.astype(jnp.bfloat16)                       # MXU weights in bf16
        else:
            a = a.astype(jnp.float32)                        # biases / LN params f32
        stacked[k] = a
    return stacked


# ---------------------------------------------------------------------------
# pallas_call wrapper: one fused call, grid = (batch blocks, layers).
# ---------------------------------------------------------------------------
def decoder_stack_pallas(x, enc, tgt_mask, src_mask, stacked, num_heads,
                         batch_block=None):
    B, S, D = x.shape
    Se = enc.shape[1]
    L = stacked["w_qkv"].shape[0]
    F = stacked["w_ff1"].shape[-1]

    TB = B if batch_block is None else batch_block           # v7x: use B // 2
    assert B % TB == 0, "batch_block must divide the batch size"
    assert D % num_heads == 0

    # Additive attention biases (0 attended / -1e30 masked), computed once on
    # the host: no per-head compare/select in the kernel, no -inf NaN hazard.
    big_neg = jnp.float32(-1e30)
    if tgt_mask is not None:
        assert tgt_mask.shape == (S, S), "tgt_mask must be (S_tgt, S_tgt)"
        tbias = jnp.where(tgt_mask == 0, big_neg, 0.0).astype(jnp.float32)
    else:
        tbias = jnp.zeros((S, S), jnp.float32)
    if src_mask is not None:
        assert src_mask.shape == (S, Se), "src_mask (cross-attn) must be (S_tgt, S_enc)"
        sbias = jnp.where(src_mask == 0, big_neg, 0.0).astype(jnp.float32)
    else:
        sbias = jnp.zeros((S, Se), jnp.float32)

    params = [stacked[k] for k in PARAM_ORDER]

    in_specs = (
        [pl.BlockSpec((TB, S, D), lambda b, l: (b, 0, 0)),     # x (layer-0 seed)
         pl.BlockSpec((TB, Se, D), lambda b, l: (b, 0, 0)),    # encoder output
         pl.BlockSpec((S, S), lambda b, l: (0, 0)),            # self-attn bias
         pl.BlockSpec((S, Se), lambda b, l: (0, 0))]           # cross-attn bias
        # Per-layer weights: stream layer `l` only (streamed, double-buffered).
        + [pl.BlockSpec((1,) + p.shape[1:], lambda b, l: (l, 0, 0)) for p in params]
    )
    out_spec = pl.BlockSpec((TB, S, D), lambda b, l: (b, 0, 0))  # layer carry + output

    # --- scoped VMEM limit: per-step residency estimate with headroom ---
    def nbytes(shape, dtype):
        n = 1
        for s in shape:
            n *= int(s)
        return n * jnp.dtype(dtype).itemsize

    wbytes = sum(nbytes(p.shape[1:], p.dtype) for p in params) * 2   # double-buffered
    abytes = (nbytes((TB, S, D), jnp.float32) * 4                     # x in + out carry
              + nbytes((TB, Se, D), jnp.bfloat16) * 2
              + nbytes((S, S), jnp.float32) * 2
              + nbytes((S, Se), jnp.float32) * 2)
    scratch = (TB * num_heads * S * (S + Se) * 4 * 4                  # scores / probs
               + TB * S * max(F, 3 * D) * 4 * 4)                      # qkv / ffn temps
    vmem_bytes = int(min(64 * 1024 * 1024,
                         max(32 * 1024 * 1024, 2 * (wbytes + abytes + scratch))))

    kernel = partial(_decoder_kernel, TB, num_heads, S, Se, D)

    return pl.pallas_call(
        kernel,
        out_shape=jax.ShapeDtypeStruct((B, S, D), jnp.float32),
        grid=(B // TB, L),
        in_specs=in_specs,
        out_specs=out_spec,
        compiler_params=pltpu.CompilerParams(
            dimension_semantics=("parallel", "arbitrary"),
            vmem_limit_bytes=vmem_bytes),
    )(x.astype(jnp.float32), enc.astype(jnp.bfloat16), tbias, sbias, *params)


# ---------------------------------------------------------------------------
# Plain-JAX glue (embedding gather + positional-encoding table).
# ---------------------------------------------------------------------------
def make_positional_encoding(max_len, d_model):
    pos = jnp.arange(max_len, dtype=jnp.float32)[:, None]
    div = jnp.exp(jnp.arange(0, d_model, 2, dtype=jnp.float32)
                  * (-math.log(10000.0) / d_model))
    pe = jnp.zeros((max_len, d_model), jnp.float32)
    pe = pe.at[:, 0::2].set(jnp.sin(pos * div))
    pe = pe.at[:, 1::2].set(jnp.cos(pos * div))
    return pe


def decoder_forward(tgt_tokens, enc_output, emb_table, pe, stacked_params,
                    num_heads, tgt_mask, src_mask, batch_block=None):
    # Embedding lookup + positional encoding (gather is not a Pallas hot path
    # at these sizes); top-level dropout is identity (eval mode).
    x = emb_table[tgt_tokens]                       # (B, S, D)
    x = x + pe[None, : x.shape[1], :]
    return decoder_stack_pallas(x, enc_output, tgt_mask, src_mask,
                                stacked_params, num_heads, batch_block)


# ---------------------------------------------------------------------------
# Example parameters / driver.
# ---------------------------------------------------------------------------
def make_layer_params(key, d_model, ff_hidden_dim):
    ks = jax.random.split(key, 20)
    n = lambda k, shape: (0.02 * jax.random.normal(k, shape)).astype(jnp.float32)
    wq1, wk1, wv1, wo1 = (n(ks[i], (d_model, d_model)) for i in range(4))
    wq2, wk2, wv2, wo2 = (n(ks[4 + i], (d_model, d_model)) for i in range(4))
    w1 = n(ks[8], (ff_hidden_dim, d_model))
    w2 = n(ks[9], (d_model, ff_hidden_dim))
    bq1, bk1, bv1, bo1 = (n(ks[10 + i], (d_model,)) for i in range(4))
    bq2, bk2, bv2, bo2 = (n(ks[14 + i], (d_model,)) for i in range(4))
    b1 = n(ks[18], (ff_hidden_dim,))
    b2 = n(ks[19], (d_model,))
    ones = jnp.ones((d_model,), jnp.float32)
    zeros = jnp.zeros((d_model,), jnp.float32)
    return (wq1, bq1, wk1, bk1, wv1, bv1, wo1, bo1,
            wq2, bq2, wk2, bk2, wv2, bv2, wo2, bo2,
            w1, b1, w2, b2,
            ones, zeros, ones, zeros, ones, zeros)


if __name__ == "__main__":
    # Small config consistent with the module; D = 128 keeps lanes dense.
    vocab_size, d_model, num_layers = 50, 128, 2
    num_heads, ff_hidden_dim, max_len = 4, 256, 64
    B, S, Se = 2, 16, 24          # decoder length S, encoder length Se (S != Se)

    root = jax.random.PRNGKey(0)
    k_emb, k_tok, k_enc, k_layers = jax.random.split(root, 4)

    emb_table = (0.02 * jax.random.normal(k_emb, (vocab_size, d_model))
                 ).astype(jnp.float32)
    pe = make_positional_encoding(max_len, d_model)

    layer_keys = jax.random.split(k_layers, num_layers)
    layer_params_list = [make_layer_params(k, d_model, ff_hidden_dim)
                         for k in layer_keys]
    stacked_params = pack_decoder_params(layer_params_list, num_heads)

    tgt_tokens = jax.random.randint(k_tok, (B, S), 0, vocab_size)
    enc_output = jax.random.normal(k_enc, (B, Se, d_model)).astype(jnp.float32)

    # Causal mask for self-attention, full-visibility mask for cross-attention
    # (cross mask shape is (S_tgt, S_enc) — fixed vs. the previous driver).
    tgt_mask = jnp.tril(jnp.ones((S, S), jnp.float32))
    src_mask = jnp.ones((S, Se), jnp.float32)

    out = decoder_forward(tgt_tokens, enc_output, emb_table, pe,
                          stacked_params, num_heads, tgt_mask, src_mask,
                          batch_block=B)   # single-TC chips: full batch per step
    out = jax.block_until_ready(out)
    assert out.shape == (B, S, d_model)
    assert bool(jnp.all(jnp.isfinite(out)))
    print("KERNEL_OK")
</pallas_src>

<mosaic_0001>
module attributes {stable_mosaic.version = 11 : i64} {
  func.func @_decoder_kernel(%arg0: i32, %arg1: i32, %arg2: memref<2x16x128xf32, #tpu.memory_space<vmem>>, %arg3: memref<2x24x128xbf16, #tpu.memory_space<vmem>>, %arg4: memref<16x16xf32, #tpu.memory_space<vmem>>, %arg5: memref<16x24xf32, #tpu.memory_space<vmem>>, %arg6: memref<1x128x384xbf16, #tpu.memory_space<vmem>>, %arg7: memref<1x1x384xf32, #tpu.memory_space<vmem>>, %arg8: memref<1x128x128xbf16, #tpu.memory_space<vmem>>, %arg9: memref<1x1x128xf32, #tpu.memory_space<vmem>>, %arg10: memref<1x128x128xbf16, #tpu.memory_space<vmem>>, %arg11: memref<1x1x128xf32, #tpu.memory_space<vmem>>, %arg12: memref<1x128x256xbf16, #tpu.memory_space<vmem>>, %arg13: memref<1x1x256xf32, #tpu.memory_space<vmem>>, %arg14: memref<1x128x128xbf16, #tpu.memory_space<vmem>>, %arg15: memref<1x1x128xf32, #tpu.memory_space<vmem>>, %arg16: memref<1x128x256xbf16, #tpu.memory_space<vmem>>, %arg17: memref<1x1x256xf32, #tpu.memory_space<vmem>>, %arg18: memref<1x256x128xbf16, #tpu.memory_space<vmem>>, %arg19: memref<1x1x128xf32, #tpu.memory_space<vmem>>, %arg20: memref<1x1x128xf32, #tpu.memory_space<vmem>>, %arg21: memref<1x1x128xf32, #tpu.memory_space<vmem>>, %arg22: memref<1x1x128xf32, #tpu.memory_space<vmem>>, %arg23: memref<1x1x128xf32, #tpu.memory_space<vmem>>, %arg24: memref<1x1x128xf32, #tpu.memory_space<vmem>>, %arg25: memref<1x1x128xf32, #tpu.memory_space<vmem>>, %arg26: memref<2x16x128xf32, #tpu.memory_space<vmem>>) attributes {dimension_semantics = [#tpu.dimension_semantics<parallel>, #tpu.dimension_semantics<arbitrary>], iteration_bounds = array<i64: 1, 2>, scalar_prefetch = 0 : i64, scratch_operands = 0 : i64, tpu.core_type = #tpu.core_type<tc>, window_params = [{transform_indices = @transform_0, window_bounds = array<i64: 2, 16, 128>}, {transform_indices = @transform_1, window_bounds = array<i64: 2, 24, 128>}, {pipeline_mode = #tpu.pipeline_mode<synchronous>, transform_indices = @transform_2, window_bounds = array<i64: 16, 16>}, {pipeline_mode = #tpu.pipeline_mode<synchronous>, transform_indices = @transform_3, window_bounds = array<i64: 16, 24>}, {transform_indices = @transform_4, window_bounds = array<i64: 1, 128, 384>}, {transform_indices = @transform_5, window_bounds = array<i64: 1, 1, 384>}, {transform_indices = @transform_6, window_bounds = array<i64: 1, 128, 128>}, {transform_indices = @transform_7, window_bounds = array<i64: 1, 1, 128>}, {transform_indices = @transform_8, window_bounds = array<i64: 1, 128, 128>}, {transform_indices = @transform_9, window_bounds = array<i64: 1, 1, 128>}, {transform_indices = @transform_10, window_bounds = array<i64: 1, 128, 256>}, {transform_indices = @transform_11, window_bounds = array<i64: 1, 1, 256>}, {transform_indices = @transform_12, window_bounds = array<i64: 1, 128, 128>}, {transform_indices = @transform_13, window_bounds = array<i64: 1, 1, 128>}, {transform_indices = @transform_14, window_bounds = array<i64: 1, 128, 256>}, {transform_indices = @transform_15, window_bounds = array<i64: 1, 1, 256>}, {transform_indices = @transform_16, window_bounds = array<i64: 1, 256, 128>}, {transform_indices = @transform_17, window_bounds = array<i64: 1, 1, 128>}, {transform_indices = @transform_18, window_bounds = array<i64: 1, 1, 128>}, {transform_indices = @transform_19, window_bounds = array<i64: 1, 1, 128>}, {transform_indices = @transform_20, window_bounds = array<i64: 1, 1, 128>}, {transform_indices = @transform_21, window_bounds = array<i64: 1, 1, 128>}, {transform_indices = @transform_22, window_bounds = array<i64: 1, 1, 128>}, {transform_indices = @transform_23, window_bounds = array<i64: 1, 1, 128>}, {transform_indices = @transform_24, window_bounds = array<i64: 2, 16, 128>}]} {
    %c0_i32 = arith.constant 0 : i32
    %0 = arith.cmpi eq, %arg1, %c0_i32 : i32
    %1 = arith.extui %0 : i1 to i32
    %c0_i32_0 = arith.constant 0 : i32
    %2 = arith.cmpi ne, %1, %c0_i32_0 : i32
    scf.if %2 {
      %c0_103 = arith.constant 0 : index
      %c0_104 = arith.constant 0 : index
      %c0_105 = arith.constant 0 : index
      %216 = vector.load %arg2[%c0_103, %c0_104, %c0_105] : memref<2x16x128xf32, #tpu.memory_space<vmem>>, vector<2x16x128xf32>
      %c0_106 = arith.constant 0 : index
      %c0_107 = arith.constant 0 : index
      %c0_108 = arith.constant 0 : index
      %217 = vector.load %arg26[%c0_106, %c0_107, %c0_108] : memref<2x16x128xf32, #tpu.memory_space<vmem>>, vector<2x16x128xf32>
      tpu.vector_store %arg26[%c0_106, %c0_107, %c0_108], %216 {strides = array<i32>} : memref<2x16x128xf32, #tpu.memory_space<vmem>>, vector<2x16x128xf32>,
    } else {
    }
    %c0 = arith.constant 0 : index
    %c0_1 = arith.constant 0 : index
    %c0_2 = arith.constant 0 : index
    %3 = vector.load %arg26[%c0, %c0_1, %c0_2] : memref<2x16x128xf32, #tpu.memory_space<vmem>>, vector<2x16x128xf32>
    %4 = vector.shape_cast %3 : vector<2x16x128xf32> to vector<32x128xf32>
    %c0_3 = arith.constant 0 : index
    %c0_4 = arith.constant 0 : index
    %c0_5 = arith.constant 0 : index
    %5 = vector.load %arg3[%c0_3, %c0_4, %c0_5] : memref<2x24x128xbf16, #tpu.memory_space<vmem>>, vector<2x24x128xbf16>
    %6 = vector.shape_cast %5 : vector<2x24x128xbf16> to vector<48x128xbf16>
    %c0_6 = arith.constant 0 : index
    %c0_7 = arith.constant 0 : index
    %7 = vector.load %arg4[%c0_6, %c0_7] : memref<16x16xf32, #tpu.memory_space<vmem>>, vector<16x16xf32>
    %c0_8 = arith.constant 0 : index
    %c0_9 = arith.constant 0 : index
    %8 = vector.load %arg5[%c0_8, %c0_9] : memref<16x24xf32, #tpu.memory_space<vmem>>, vector<16x24xf32>
    %9 = arith.truncf %4 : vector<32x128xf32> to vector<32x128xbf16>
    %c0_10 = arith.constant 0 : index
    %c0_11 = arith.constant 0 : index
    %c0_12 = arith.constant 0 : index
    %10 = vector.load %arg6[%c0_10, %c0_11, %c0_12] : memref<1x128x384xbf16, #tpu.memory_space<vmem>>, vector<1x128x384xbf16>
    %11 = vector.shape_cast %10 : vector<1x128x384xbf16> to vector<128x384xbf16>
    %cst = arith.constant dense<0.000000e+00> : vector<32x384xf32>
    %12 = tpu.matmul %9, %11, %cst {dimension_numbers = #tpu.dot_dimension_numbers<[1], [0], [0], [1], [0, 0, 1, 1], [], []>} : vector<32x128xbf16>, vector<128x384xbf16>, vector<32x384xf32> -> vector<32x384xf32>
    %c0_13 = arith.constant 0 : index
    %c0_14 = arith.constant 0 : index
    %c0_15 = arith.constant 0 : index
    %13 = vector.load %arg7[%c0_13, %c0_14, %c0_15] : memref<1x1x384xf32, #tpu.memory_space<vmem>>, vector<1x1x384xf32>
    %14 = vector.shape_cast %13 : vector<1x1x384xf32> to vector<1x384xf32>
    %15 = vector.broadcast %14 : vector<1x384xf32> to vector<32x384xf32>
    %16 = arith.addf %12, %15 : vector<32x384xf32>
    %17 = vector.extract_strided_slice %16 {offsets = [0, 0], sizes = [32, 128], strides = [1, 1]} : vector<32x384xf32> to vector<32x128xf32>
    %18 = vector.extract_strided_slice %16 {offsets = [0, 128], sizes = [32, 128], strides = [1, 1]} : vector<32x384xf32> to vector<32x128xf32>
    %19 = vector.extract_strided_slice %16 {offsets = [0, 256], sizes = [32, 128], strides = [1, 1]} : vector<32x384xf32> to vector<32x128xf32>
    %20 = vector.shape_cast %17 : vector<32x128xf32> to vector<2x16x4x32xf32>
    %21 = tpu.transpose %20, [0, 2, 1, 3] : vector<2x16x4x32xf32> -> vector<2x4x16x32xf32>
    %22 = vector.shape_cast %21 : vector<2x4x16x32xf32> to vector<8x16x32xf32>
    %23 = arith.truncf %22 : vector<8x16x32xf32> to vector<8x16x32xbf16>
    %24 = vector.shape_cast %18 : vector<32x128xf32> to vector<2x16x4x32xf32>
    %25 = tpu.transpose %24, [0, 2, 1, 3] : vector<2x16x4x32xf32> -> vector<2x4x16x32xf32>
    %26 = vector.shape_cast %25 : vector<2x4x16x32xf32> to vector<8x16x32xf32>
    %27 = arith.truncf %26 : vector<8x16x32xf32> to vector<8x16x32xbf16>
    %28 = vector.shape_cast %19 : vector<32x128xf32> to vector<2x16x4x32xf32>
    %29 = tpu.transpose %28, [0, 2, 1, 3] : vector<2x16x4x32xf32> -> vector<2x4x16x32xf32>
    %30 = vector.shape_cast %29 : vector<2x4x16x32xf32> to vector<8x16x32xf32>
    %31 = arith.truncf %30 : vector<8x16x32xf32> to vector<8x16x32xbf16>
    "tpu.trace_start"() <{level = 10 : i32, message = "hqd,hkd->hqk"}> : () -> ()
    %cst_16 = arith.constant dense<0.000000e+00> : vector<8x16x16xf32>
    %32 = tpu.matmul %23, %27, %cst_16 {dimension_numbers = #tpu.dot_dimension_numbers<[2], [2], [1], [1], [0, 0, 0, 1, 1, 1], [0], [0]>} : vector<8x16x32xbf16>, vector<8x16x32xbf16>, vector<8x16x16xf32> -> vector<8x16x16xf32>
    "tpu.trace_stop"() : () -> ()
    %33 = vector.shape_cast %7 : vector<16x16xf32> to vector<1x16x16xf32>
    %34 = vector.broadcast %33 : vector<1x16x16xf32> to vector<8x16x16xf32>
    %35 = arith.addf %32, %34 : vector<8x16x16xf32>
    %cst_17 = arith.constant dense<0xFF800000> : vector<8x16xf32>
    %36 = vector.multi_reduction <maximumf>, %35, %cst_17 [2] : vector<8x16x16xf32> to vector<8x16xf32>
    %37 = vector.shape_cast %36 : vector<8x16xf32> to vector<8x16x1xf32>
    %38 = vector.broadcast %37 : vector<8x16x1xf32> to vector<8x16x16xf32>
    %39 = arith.subf %35, %38 : vector<8x16x16xf32>
    %40 = math.exp %39 : vector<8x16x16xf32>
    %cst_18 = arith.constant dense<0.000000e+00> : vector<8x16xf32>
    %41 = vector.multi_reduction <add>, %40, %cst_18 [2] : vector<8x16x16xf32> to vector<8x16xf32>
    %42 = vector.shape_cast %41 : vector<8x16xf32> to vector<8x16x1xf32>
    %43 = tpu.reciprocal %42 {approx = true} : vector<8x16x1xf32> -> vector<8x16x1xf32>
    %44 = vector.broadcast %43 : vector<8x16x1xf32> to vector<8x16x16xf32>
    %45 = arith.mulf %40, %44 : vector<8x16x16xf32>
    %46 = arith.truncf %45 : vector<8x16x16xf32> to vector<8x16x16xbf16>
    "tpu.trace_start"() <{level = 10 : i32, message = "hqk,hkd->hqd"}> : () -> ()
    %cst_19 = arith.constant dense<0.000000e+00> : vector<8x16x32xf32>
    %47 = tpu.matmul %46, %31, %cst_19 {dimension_numbers = #tpu.dot_dimension_numbers<[2], [1], [1], [2], [0, 0, 0, 1, 1, 2], [0], [0]>} : vector<8x16x16xbf16>, vector<8x16x32xbf16>, vector<8x16x32xf32> -> vector<8x16x32xf32>
    "tpu.trace_stop"() : () -> ()
    %48 = vector.shape_cast %47 : vector<8x16x32xf32> to vector<2x4x16x32xf32>
    %49 = tpu.transpose %48, [0, 2, 1, 3] : vector<2x4x16x32xf32> -> vector<2x16x4x32xf32>
    %50 = vector.shape_cast %49 : vector<2x16x4x32xf32> to vector<32x128xf32>
    %51 = arith.truncf %50 : vector<32x128xf32> to vector<32x128xbf16>
    %c0_20 = arith.constant 0 : index
    %c0_21 = arith.constant 0 : index
    %c0_22 = arith.constant 0 : index
    %52 = vector.load %arg8[%c0_20, %c0_21, %c0_22] : memref<1x128x128xbf16, #tpu.memory_space<vmem>>, vector<1x128x128xbf16>
    %53 = vector.shape_cast %52 : vector<1x128x128xbf16> to vector<128x128xbf16>
    %cst_23 = arith.constant dense<0.000000e+00> : vector<32x128xf32>
    %54 = tpu.matmul %51, %53, %cst_23 {dimension_numbers = #tpu.dot_dimension_numbers<[1], [0], [0], [1], [0, 0, 1, 1], [], []>} : vector<32x128xbf16>, vector<128x128xbf16>, vector<32x128xf32> -> vector<32x128xf32>
    %c0_24 = arith.constant 0 : index
    %c0_25 = arith.constant 0 : index
    %c0_26 = arith.constant 0 : index
    %55 = vector.load %arg9[%c0_24, %c0_25, %c0_26] : memref<1x1x128xf32, #tpu.memory_space<vmem>>, vector<1x1x128xf32>
    %56 = vector.shape_cast %55 : vector<1x1x128xf32> to vector<1x128xf32>
    %57 = vector.broadcast %56 : vector<1x128xf32> to vector<32x128xf32>
    %58 = arith.addf %54, %57 : vector<32x128xf32>
    %59 = arith.addf %4, %58 : vector<32x128xf32>
    %cst_27 = arith.constant dense<0.000000e+00> : vector<32xf32>
    %60 = vector.multi_reduction <add>, %59, %cst_27 [1] : vector<32x128xf32> to vector<32xf32>
    %61 = vector.shape_cast %60 : vector<32xf32> to vector<32x1xf32>
    %cst_28 = arith.constant 1.280000e+02 : f32
    %62 = vector.broadcast %cst_28 : f32 to vector<32x1xf32>
    %63 = arith.divf %61, %62 : vector<32x1xf32>
    %64 = vector.broadcast %63 : vector<32x1xf32> to vector<32x128xf32>
    %65 = arith.subf %59, %64 : vector<32x128xf32>
    %66 = arith.mulf %65, %65 : vector<32x128xf32>
    %cst_29 = arith.constant dense<0.000000e+00> : vector<32xf32>
    %67 = vector.multi_reduction <add>, %66, %cst_29 [1] : vector<32x128xf32> to vector<32xf32>
    %68 = vector.shape_cast %67 : vector<32xf32> to vector<32x1xf32>
    %cst_30 = arith.constant 1.280000e+02 : f32
    %69 = vector.broadcast %cst_30 : f32 to vector<32x1xf32>
    %70 = arith.divf %68, %69 : vector<32x1xf32>
    %71 = vector.broadcast %63 : vector<32x1xf32> to vector<32x128xf32>
    %72 = arith.subf %59, %71 : vector<32x128xf32>
    %cst_31 = arith.constant 9.99999974E-6 : f32
    %73 = vector.broadcast %cst_31 : f32 to vector<32x1xf32>
    %74 = arith.addf %70, %73 : vector<32x1xf32>
    %75 = math.rsqrt %74 : vector<32x1xf32>
    %76 = vector.broadcast %75 : vector<32x1xf32> to vector<32x128xf32>
    %77 = arith.mulf %72, %76 : vector<32x128xf32>
    %c0_32 = arith.constant 0 : index
    %c0_33 = arith.constant 0 : index
    %c0_34 = arith.constant 0 : index
    %78 = vector.load %arg20[%c0_32, %c0_33, %c0_34] : memref<1x1x128xf32, #tpu.memory_space<vmem>>, vector<1x1x128xf32>
    %79 = vector.shape_cast %78 : vector<1x1x128xf32> to vector<1x128xf32>
    %80 = vector.broadcast %79 : vector<1x128xf32> to vector<32x128xf32>
    %81 = arith.mulf %77, %80 : vector<32x128xf32>
    %c0_35 = arith.constant 0 : index
    %c0_36 = arith.constant 0 : index
    %c0_37 = arith.constant 0 : index
    %82 = vector.load %arg21[%c0_35, %c0_36, %c0_37] : memref<1x1x128xf32, #tpu.memory_space<vmem>>, vector<1x1x128xf32>
    %83 = vector.shape_cast %82 : vector<1x1x128xf32> to vector<1x128xf32>
    %84 = vector.broadcast %83 : vector<1x128xf32> to vector<32x128xf32>
    %85 = arith.addf %81, %84 : vector<32x128xf32>
    %86 = arith.truncf %85 : vector<32x128xf32> to vector<32x128xbf16>
    %c0_38 = arith.constant 0 : index
    %c0_39 = arith.constant 0 : index
    %c0_40 = arith.constant 0 : index
    %87 = vector.load %arg10[%c0_38, %c0_39, %c0_40] : memref<1x128x128xbf16, #tpu.memory_space<vmem>>, vector<1x128x128xbf16>
    %88 = vector.shape_cast %87 : vector<1x128x128xbf16> to vector<128x128xbf16>
    %cst_41 = arith.constant dense<0.000000e+00> : vector<32x128xf32>
    %89 = tpu.matmul %86, %88, %cst_41 {dimension_numbers = #tpu.dot_dimension_numbers<[1], [0], [0], [1], [0, 0, 1, 1], [], []>} : vector<32x128xbf16>, vector<128x128xbf16>, vector<32x128xf32> -> vector<32x128xf32>
    %c0_42 = arith.constant 0 : index
    %c0_43 = arith.constant 0 : index
    %c0_44 = arith.constant 0 : index
    %90 = vector.load %arg11[%c0_42, %c0_43, %c0_44] : memref<1x1x128xf32, #tpu.memory_space<vmem>>, vector<1x1x128xf32>
    %91 = vector.shape_cast %90 : vector<1x1x128xf32> to vector<1x128xf32>
    %92 = vector.broadcast %91 : vector<1x128xf32> to vector<32x128xf32>
    %93 = arith.addf %89, %92 : vector<32x128xf32>
    %c0_45 = arith.constant 0 : index
    %c0_46 = arith.constant 0 : index
    %c0_47 = arith.constant 0 : index
    %94 = vector.load %arg12[%c0_45, %c0_46, %c0_47] : memref<1x128x256xbf16, #tpu.memory_space<vmem>>, vector<1x128x256xbf16>
    %95 = vector.shape_cast %94 : vector<1x128x256xbf16> to vector<128x256xbf16>
    %cst_48 = arith.constant dense<0.000000e+00> : vector<48x256xf32>
    %96 = tpu.matmul %6, %95, %cst_48 {dimension_numbers = #tpu.dot_dimension_numbers<[1], [0], [0], [1], [0, 0, 1, 1], [], []>} : vector<48x128xbf16>, vector<128x256xbf16>, vector<48x256xf32> -> vector<48x256xf32>
    %c0_49 = arith.constant 0 : index
    %c0_50 = arith.constant 0 : index
    %c0_51 = arith.constant 0 : index
    %97 = vector.load %arg13[%c0_49, %c0_50, %c0_51] : memref<1x1x256xf32, #tpu.memory_space<vmem>>, vector<1x1x256xf32>
    %98 = vector.shape_cast %97 : vector<1x1x256xf32> to vector<1x256xf32>
    %99 = vector.broadcast %98 : vector<1x256xf32> to vector<48x256xf32>
    %100 = arith.addf %96, %99 : vector<48x256xf32>
    %101 = vector.extract_strided_slice %100 {offsets = [0, 0], sizes = [48, 128], strides = [1, 1]} : vector<48x256xf32> to vector<48x128xf32>
    %102 = vector.extract_strided_slice %100 {offsets = [0, 128], sizes = [48, 128], strides = [1, 1]} : vector<48x256xf32> to vector<48x128xf32>
    %103 = vector.shape_cast %93 : vector<32x128xf32> to vector<2x16x4x32xf32>
    %104 = tpu.transpose %103, [0, 2, 1, 3] : vector<2x16x4x32xf32> -> vector<2x4x16x32xf32>
    %105 = vector.shape_cast %104 : vector<2x4x16x32xf32> to vector<8x16x32xf32>
    %106 = arith.truncf %105 : vector<8x16x32xf32> to vector<8x16x32xbf16>
    %107 = vector.shape_cast %101 : vector<48x128xf32> to vector<2x24x4x32xf32>
    %108 = tpu.transpose %107, [0, 2, 1, 3] : vector<2x24x4x32xf32> -> vector<2x4x24x32xf32>
    %109 = vector.shape_cast %108 : vector<2x4x24x32xf32> to vector<8x24x32xf32>
    %110 = arith.truncf %109 : vector<8x24x32xf32> to vector<8x24x32xbf16>
    %111 = vector.shape_cast %102 : vector<48x128xf32> to vector<2x24x4x32xf32>
    %112 = tpu.transpose %111, [0, 2, 1, 3] : vector<2x24x4x32xf32> -> vector<2x4x24x32xf32>
    %113 = vector.shape_cast %112 : vector<2x4x24x32xf32> to vector<8x24x32xf32>
    %114 = arith.truncf %113 : vector<8x24x32xf32> to vector<8x24x32xbf16>
    "tpu.trace_start"() <{level = 10 : i32, message = "hqd,hkd->hqk"}> : () -> ()
    %cst_52 = arith.constant dense<0.000000e+00> : vector<8x16x24xf32>
    %115 = tpu.matmul %106, %110, %cst_52 {dimension_numbers = #tpu.dot_dimension_numbers<[2], [2], [1], [1], [0, 0, 0, 1, 1, 1], [0], [0]>} : vector<8x16x32xbf16>, vector<8x24x32xbf16>, vector<8x16x24xf32> -> vector<8x16x24xf32>
    "tpu.trace_stop"() : () -> ()
    %116 = vector.shape_cast %8 : vector<16x24xf32> to vector<1x16x24xf32>
    %117 = vector.broadcast %116 : vector<1x16x24xf32> to vector<8x16x24xf32>
    %118 = arith.addf %115, %117 : vector<8x16x24xf32>
    %cst_53 = arith.constant dense<0xFF800000> : vector<8x16xf32>
    %119 = vector.multi_reduction <maximumf>, %118, %cst_53 [2] : vector<8x16x24xf32> to vector<8x16xf32>
    %120 = vector.shape_cast %119 : vector<8x16xf32> to vector<8x16x1xf32>
    %121 = vector.broadcast %120 : vector<8x16x1xf32> to vector<8x16x24xf32>
    %122 = arith.subf %118, %121 : vector<8x16x24xf32>
    %123 = math.exp %122 : vector<8x16x24xf32>
    %cst_54 = arith.constant dense<0.000000e+00> : vector<8x16xf32>
    %124 = vector.multi_reduction <add>, %123, %cst_54 [2] : vector<8x16x24xf32> to vector<8x16xf32>
    %125 = vector.shape_cast %124 : vector<8x16xf32> to vector<8x16x1xf32>
    %126 = tpu.reciprocal %125 {approx = true} : vector<8x16x1xf32> -> vector<8x16x1xf32>
    %127 = vector.broadcast %126 : vector<8x16x1xf32> to vector<8x16x24xf32>
    %128 = arith.mulf %123, %127 : vector<8x16x24xf32>
    %129 = arith.truncf %128 : vector<8x16x24xf32> to vector<8x16x24xbf16>
    "tpu.trace_start"() <{level = 10 : i32, message = "hqk,hkd->hqd"}> : () -> ()
    %cst_55 = arith.constant dense<0.000000e+00> : vector<8x16x32xf32>
    %130 = tpu.matmul %129, %114, %cst_55 {dimension_numbers = #tpu.dot_dimension_numbers<[2], [1], [1], [2], [0, 0, 0, 1, 1, 2], [0], [0]>} : vector<8x16x24xbf16>, vector<8x24x32xbf16>, vector<8x16x32xf32> -> vector<8x16x32xf32>
    "tpu.trace_stop"() : () -> ()
    %131 = vector.shape_cast %130 : vector<8x16x32xf32> to vector<2x4x16x32xf32>
    %132 = tpu.transpose %131, [0, 2, 1, 3] : vector<2x4x16x32xf32> -> vector<2x16x4x32xf32>
    %133 = vector.shape_cast %132 : vector<2x16x4x32xf32> to vector<32x128xf32>
    %134 = arith.truncf %133 : vector<32x128xf32> to vector<32x128xbf16>
    %c0_56 = arith.constant 0 : index
    %c0_57 = arith.constant 0 : index
    %c0_58 = arith.constant 0 : index
    %135 = vector.load %arg14[%c0_56, %c0_57, %c0_58] : memref<1x128x128xbf16, #tpu.memory_space<vmem>>, vector<1x128x128xbf16>
    %136 = vector.shape_cast %135 : vector<1x128x128xbf16> to vector<128x128xbf16>
    %cst_59 = arith.constant dense<0.000000e+00> : vector<32x128xf32>
    %137 = tpu.matmul %134, %136, %cst_59 {dimension_numbers = #tpu.dot_dimension_numbers<[1], [0], [0], [1], [0, 0, 1, 1], [], []>} : vector<32x128xbf16>, vector<128x128xbf16>, vector<32x128xf32> -> vector<32x128xf32>
    %c0_60 = arith.constant 0 : index
    %c0_61 = arith.constant 0 : index
    %c0_62 = arith.constant 0 : index
    %138 = vector.load %arg15[%c0_60, %c0_61, %c0_62] : memref<1x1x128xf32, #tpu.memory_space<vmem>>, vector<1x1x128xf32>
    %139 = vector.shape_cast %138 : vector<1x1x128xf32> to vector<1x128xf32>
    %140 = vector.broadcast %139 : vector<1x128xf32> to vector<32x128xf32>
    %141 = arith.addf %137, %140 : vector<32x128xf32>
    %142 = arith.addf %85, %141 : vector<32x128xf32>
    %cst_63 = arith.constant dense<0.000000e+00> : vector<32xf32>
    %143 = vector.multi_reduction <add>, %142, %cst_63 [1] : vector<32x128xf32> to vector<32xf32>
    %144 = vector.shape_cast %143 : vector<32xf32> to vector<32x1xf32>
    %cst_64 = arith.constant 1.280000e+02 : f32
    %145 = vector.broadcast %cst_64 : f32 to vector<32x1xf32>
    %146 = arith.divf %144, %145 : vector<32x1xf32>
    %147 = vector.broadcast %146 : vector<32x1xf32> to vector<32x128xf32>
    %148 = arith.subf %142, %147 : vector<32x128xf32>
    %149 = arith.mulf %148, %148 : vector<32x128xf32>
    %cst_65 = arith.constant dense<0.000000e+00> : vector<32xf32>
    %150 = vector.multi_reduction <add>, %149, %cst_65 [1] : vector<32x128xf32> to vector<32xf32>
    %151 = vector.shape_cast %150 : vector<32xf32> to vector<32x1xf32>
    %cst_66 = arith.constant 1.280000e+02 : f32
    %152 = vector.broadcast %cst_66 : f32 to vector<32x1xf32>
    %153 = arith.divf %151, %152 : vector<32x1xf32>
    %154 = vector.broadcast %146 : vector<32x1xf32> to vector<32x128xf32>
    %155 = arith.subf %142, %154 : vector<32x128xf32>
    %cst_67 = arith.constant 9.99999974E-6 : f32
    %156 = vector.broadcast %cst_67 : f32 to vector<32x1xf32>
    %157 = arith.addf %153, %156 : vector<32x1xf32>
    %158 = math.rsqrt %157 : vector<32x1xf32>
    %159 = vector.broadcast %158 : vector<32x1xf32> to vector<32x128xf32>
    %160 = arith.mulf %155, %159 : vector<32x128xf32>
    %c0_68 = arith.constant 0 : index
    %c0_69 = arith.constant 0 : index
    %c0_70 = arith.constant 0 : index
    %161 = vector.load %arg22[%c0_68, %c0_69, %c0_70] : memref<1x1x128xf32, #tpu.memory_space<vmem>>, vector<1x1x128xf32>
    %162 = vector.shape_cast %161 : vector<1x1x128xf32> to vector<1x128xf32>
    %163 = vector.broadcast %162 : vector<1x128xf32> to vector<32x128xf32>
    %164 = arith.mulf %160, %163 : vector<32x128xf32>
    %c0_71 = arith.constant 0 : index
    %c0_72 = arith.constant 0 : index
    %c0_73 = arith.constant 0 : index
    %165 = vector.load %arg23[%c0_71, %c0_72, %c0_73] : memref<1x1x128xf32, #tpu.memory_space<vmem>>, vector<1x1x128xf32>
    %166 = vector.shape_cast %165 : vector<1x1x128xf32> to vector<1x128xf32>
    %167 = vector.broadcast %166 : vector<1x128xf32> to vector<32x128xf32>
    %168 = arith.addf %164, %167 : vector<32x128xf32>
    %169 = arith.truncf %168 : vector<32x128xf32> to vector<32x128xbf16>
    %c0_74 = arith.constant 0 : index
    %c0_75 = arith.constant 0 : index
    %c0_76 = arith.constant 0 : index
    %170 = vector.load %arg16[%c0_74, %c0_75, %c0_76] : memref<1x128x256xbf16, #tpu.memory_space<vmem>>, vector<1x128x256xbf16>
    %171 = vector.shape_cast %170 : vector<1x128x256xbf16> to vector<128x256xbf16>
    %cst_77 = arith.constant dense<0.000000e+00> : vector<32x256xf32>
    %172 = tpu.matmul %169, %171, %cst_77 {dimension_numbers = #tpu.dot_dimension_numbers<[1], [0], [0], [1], [0, 0, 1, 1], [], []>} : vector<32x128xbf16>, vector<128x256xbf16>, vector<32x256xf32> -> vector<32x256xf32>
    %c0_78 = arith.constant 0 : index
    %c0_79 = arith.constant 0 : index
    %c0_80 = arith.constant 0 : index
    %173 = vector.load %arg17[%c0_78, %c0_79, %c0_80] : memref<1x1x256xf32, #tpu.memory_space<vmem>>, vector<1x1x256xf32>
    %174 = vector.shape_cast %173 : vector<1x1x256xf32> to vector<1x256xf32>
    %175 = vector.broadcast %174 : vector<1x256xf32> to vector<32x256xf32>
    %176 = arith.addf %172, %175 : vector<32x256xf32>
    %cst_81 = arith.constant 0.000000e+00 : f32
    %177 = vector.broadcast %cst_81 : f32 to vector<32x256xf32>
    %178 = arith.maximumf %176, %177 : vector<32x256xf32>
    %179 = arith.truncf %178 : vector<32x256xf32> to vector<32x256xbf16>
    %c0_82 = arith.constant 0 : index
    %c0_83 = arith.constant 0 : index
    %c0_84 = arith.constant 0 : index
    %180 = vector.load %arg18[%c0_82, %c0_83, %c0_84] : memref<1x256x128xbf16, #tpu.memory_space<vmem>>, vector<1x256x128xbf16>
    %181 = vector.shape_cast %180 : vector<1x256x128xbf16> to vector<256x128xbf16>
    %cst_85 = arith.constant dense<0.000000e+00> : vector<32x128xf32>
    %182 = tpu.matmul %179, %181, %cst_85 {dimension_numbers = #tpu.dot_dimension_numbers<[1], [0], [0], [1], [0, 0, 1, 1], [], []>} : vector<32x256xbf16>, vector<256x128xbf16>, vector<32x128xf32> -> vector<32x128xf32>
    %c0_86 = arith.constant 0 : index
    %c0_87 = arith.constant 0 : index
    %c0_88 = arith.constant 0 : index
    %183 = vector.load %arg19[%c0_86, %c0_87, %c0_88] : memref<1x1x128xf32, #tpu.memory_space<vmem>>, vector<1x1x128xf32>
    %184 = vector.shape_cast %183 : vector<1x1x128xf32> to vector<1x128xf32>
    %185 = vector.broadcast %184 : vector<1x128xf32> to vector<32x128xf32>
    %186 = arith.addf %182, %185 : vector<32x128xf32>
    %187 = arith.addf %168, %186 : vector<32x128xf32>
    %cst_89 = arith.constant dense<0.000000e+00> : vector<32xf32>
    %188 = vector.multi_reduction <add>, %187, %cst_89 [1] : vector<32x128xf32> to vector<32xf32>
    %189 = vector.shape_cast %188 : vector<32xf32> to vector<32x1xf32>
    %cst_90 = arith.constant 1.280000e+02 : f32
    %190 = vector.broadcast %cst_90 : f32 to vector<32x1xf32>
    %191 = arith.divf %189, %190 : vector<32x1xf32>
    %192 = vector.broadcast %191 : vector<32x1xf32> to vector<32x128xf32>
    %193 = arith.subf %187, %192 : vector<32x128xf32>
    %194 = arith.mulf %193, %193 : vector<32x128xf32>
    %cst_91 = arith.constant dense<0.000000e+00> : vector<32xf32>
    %195 = vector.multi_reduction <add>, %194, %cst_91 [1] : vector<32x128xf32> to vector<32xf32>
    %196 = vector.shape_cast %195 : vector<32xf32> to vector<32x1xf32>
    %cst_92 = arith.constant 1.280000e+02 : f32
    %197 = vector.broadcast %cst_92 : f32 to vector<32x1xf32>
    %198 = arith.divf %196, %197 : vector<32x1xf32>
    %199 = vector.broadcast %191 : vector<32x1xf32> to vector<32x128xf32>
    %200 = arith.subf %187, %199 : vector<32x128xf32>
    %cst_93 = arith.constant 9.99999974E-6 : f32
    %201 = vector.broadcast %cst_93 : f32 to vector<32x1xf32>
    %202 = arith.addf %198, %201 : vector<32x1xf32>
    %203 = math.rsqrt %202 : vector<32x1xf32>
    %204 = vector.broadcast %203 : vector<32x1xf32> to vector<32x128xf32>
    %205 = arith.mulf %200, %204 : vector<32x128xf32>
    %c0_94 = arith.constant 0 : index
    %c0_95 = arith.constant 0 : index
    %c0_96 = arith.constant 0 : index
    %206 = vector.load %arg24[%c0_94, %c0_95, %c0_96] : memref<1x1x128xf32, #tpu.memory_space<vmem>>, vector<1x1x128xf32>
    %207 = vector.shape_cast %206 : vector<1x1x128xf32> to vector<1x128xf32>
    %208 = vector.broadcast %207 : vector<1x128xf32> to vector<32x128xf32>
    %209 = arith.mulf %205, %208 : vector<32x128xf32>
    %c0_97 = arith.constant 0 : index
    %c0_98 = arith.constant 0 : index
    %c0_99 = arith.constant 0 : index
    %210 = vector.load %arg25[%c0_97, %c0_98, %c0_99] : memref<1x1x128xf32, #tpu.memory_space<vmem>>, vector<1x1x128xf32>
    %211 = vector.shape_cast %210 : vector<1x1x128xf32> to vector<1x128xf32>
    %212 = vector.broadcast %211 : vector<1x128xf32> to vector<32x128xf32>
    %213 = arith.addf %209, %212 : vector<32x128xf32>
    %214 = vector.shape_cast %213 : vector<32x128xf32> to vector<2x16x128xf32>
    %c0_100 = arith.constant 0 : index
    %c0_101 = arith.constant 0 : index
    %c0_102 = arith.constant 0 : index
    %215 = vector.load %arg26[%c0_100, %c0_101, %c0_102] : memref<2x16x128xf32, #tpu.memory_space<vmem>>, vector<2x16x128xf32>
    tpu.vector_store %arg26[%c0_100, %c0_101, %c0_102], %214 {strides = array<i32>} : memref<2x16x128xf32, #tpu.memory_space<vmem>>, vector<2x16x128xf32>,
    return
  }
  func.func @transform_0(%arg0: i32, %arg1: i32) -> (i32, i32, i32) {
    %c0_i32 = arith.constant 0 : i32
    %c0_i32_0 = arith.constant 0 : i32
    %c0_i32_1 = arith.constant 0 : i32
    return %arg0, %c0_i32, %c0_i32_0 : i32, i32, i32
  }
  func.func @transform_1(%arg0: i32, %arg1: i32) -> (i32, i32, i32) {
    %c0_i32 = arith.constant 0 : i32
    %c0_i32_0 = arith.constant 0 : i32
    %c0_i32_1 = arith.constant 0 : i32
    return %arg0, %c0_i32, %c0_i32_0 : i32, i32, i32
  }
  func.func @transform_2(%arg0: i32, %arg1: i32) -> (i32, i32) {
    %c0_i32 = arith.constant 0 : i32
    %c0_i32_0 = arith.constant 0 : i32
    %c0_i32_1 = arith.constant 0 : i32
    return %c0_i32, %c0_i32_0 : i32, i32
  }
  func.func @transform_3(%arg0: i32, %arg1: i32) -> (i32, i32) {
    %c0_i32 = arith.constant 0 : i32
    %c0_i32_0 = arith.constant 0 : i32
    %c0_i32_1 = arith.constant 0 : i32
    return %c0_i32, %c0_i32_0 : i32, i32
  }
  func.func @transform_4(%arg0: i32, %arg1: i32) -> (i32, i32, i32) {
    %c0_i32 = arith.constant 0 : i32
    %c0_i32_0 = arith.constant 0 : i32
    %c0_i32_1 = arith.constant 0 : i32
    return %arg1, %c0_i32, %c0_i32_0 : i32, i32, i32
  }
  func.func @transform_5(%arg0: i32, %arg1: i32) -> (i32, i32, i32) {
    %c0_i32 = arith.constant 0 : i32
    %c0_i32_0 = arith.constant 0 : i32
    %c0_i32_1 = arith.constant 0 : i32
    return %arg1, %c0_i32, %c0_i32_0 : i32, i32, i32
  }
  func.func @transform_6(%arg0: i32, %arg1: i32) -> (i32, i32, i32) {
    %c0_i32 = arith.constant 0 : i32
    %c0_i32_0 = arith.constant 0 : i32
    %c0_i32_1 = arith.constant 0 : i32
    return %arg1, %c0_i32, %c0_i32_0 : i32, i32, i32
  }
  func.func @transform_7(%arg0: i32, %arg1: i32) -> (i32, i32, i32) {
    %c0_i32 = arith.constant 0 : i32
    %c0_i32_0 = arith.constant 0 : i32
    %c0_i32_1 = arith.constant 0 : i32
    return %arg1, %c0_i32, %c0_i32_0 : i32, i32, i32
  }
  func.func @transform_8(%arg0: i32, %arg1: i32) -> (i32, i32, i32) {
    %c0_i32 = arith.constant 0 : i32
    %c0_i32_0 = arith.constant 0 : i32
    %c0_i32_1 = arith.constant 0 : i32
    return %arg1, %c0_i32, %c0_i32_0 : i32, i32, i32
  }
  func.func @transform_9(%arg0: i32, %arg1: i32) -> (i32, i32, i32) {
    %c0_i32 = arith.constant 0 : i32
    %c0_i32_0 = arith.constant 0 : i32
    %c0_i32_1 = arith.constant 0 : i32
    return %arg1, %c0_i32, %c0_i32_0 : i32, i32, i32
  }
  func.func @transform_10(%arg0: i32, %arg1: i32) -> (i32, i32, i32) {
    %c0_i32 = arith.constant 0 : i32
    %c0_i32_0 = arith.constant 0 : i32
    %c0_i32_1 = arith.constant 0 : i32
    return %arg1, %c0_i32, %c0_i32_0 : i32, i32, i32
  }
  func.func @transform_11(%arg0: i32, %arg1: i32) -> (i32, i32, i32) {
    %c0_i32 = arith.constant 0 : i32
    %c0_i32_0 = arith.constant 0 : i32
    %c0_i32_1 = arith.constant 0 : i32
    return %arg1, %c0_i32, %c0_i32_0 : i32, i32, i32
  }
  func.func @transform_12(%arg0: i32, %arg1: i32) -> (i32, i32, i32) {
    %c0_i32 = arith.constant 0 : i32
    %c0_i32_0 = arith.constant 0 : i32
    %c0_i32_1 = arith.constant 0 : i32
    return %arg1, %c0_i32, %c0_i32_0 : i32, i32, i32
  }
  func.func @transform_13(%arg0: i32, %arg1: i32) -> (i32, i32, i32) {
    %c0_i32 = arith.constant 0 : i32
    %c0_i32_0 = arith.constant 0 : i32
    %c0_i32_1 = arith.constant 0 : i32
    return %arg1, %c0_i32, %c0_i32_0 : i32, i32, i32
  }
  func.func @transform_14(%arg0: i32, %arg1: i32) -> (i32, i32, i32) {
    %c0_i32 = arith.constant 0 : i32
    %c0_i32_0 = arith.constant 0 : i32
    %c0_i32_1 = arith.constant 0 : i32
    return %arg1, %c0_i32, %c0_i32_0 : i32, i32, i32
  }
  func.func @transform_15(%arg0: i32, %arg1: i32) -> (i32, i32, i32) {
    %c0_i32 = arith.constant 0 : i32
    %c0_i32_0 = arith.constant 0 : i32
    %c0_i32_1 = arith.constant 0 : i32
    return %arg1, %c0_i32, %c0_i32_0 : i32, i32, i32
  }
  func.func @transform_16(%arg0: i32, %arg1: i32) -> (i32, i32, i32) {
    %c0_i32 = arith.constant 0 : i32
    %c0_i32_0 = arith.constant 0 : i32
    %c0_i32_1 = arith.constant 0 : i32
    return %arg1, %c0_i32, %c0_i32_0 : i32, i32, i32
  }
  func.func @transform_17(%arg0: i32, %arg1: i32) -> (i32, i32, i32) {
    %c0_i32 = arith.constant 0 : i32
    %c0_i32_0 = arith.constant 0 : i32
    %c0_i32_1 = arith.constant 0 : i32
    return %arg1, %c0_i32, %c0_i32_0 : i32, i32, i32
  }
  func.func @transform_18(%arg0: i32, %arg1: i32) -> (i32, i32, i32) {
    %c0_i32 = arith.constant 0 : i32
    %c0_i32_0 = arith.constant 0 : i32
    %c0_i32_1 = arith.constant 0 : i32
    return %arg1, %c0_i32, %c0_i32_0 : i32, i32, i32
  }
  func.func @transform_19(%arg0: i32, %arg1: i32) -> (i32, i32, i32) {
    %c0_i32 = arith.constant 0 : i32
    %c0_i32_0 = arith.constant 0 : i32
    %c0_i32_1 = arith.constant 0 : i32
    return %arg1, %c0_i32, %c0_i32_0 : i32, i32, i32
  }
  func.func @transform_20(%arg0: i32, %arg1: i32) -> (i32, i32, i32) {
    %c0_i32 = arith.constant 0 : i32
    %c0_i32_0 = arith.constant 0 : i32
    %c0_i32_1 = arith.constant 0 : i32
    return %arg1, %c0_i32, %c0_i32_0 : i32, i32, i32
  }
  func.func @transform_21(%arg0: i32, %arg1: i32) -> (i32, i32, i32) {
    %c0_i32 = arith.constant 0 : i32
    %c0_i32_0 = arith.constant 0 : i32
    %c0_i32_1 = arith.constant 0 : i32
    return %arg1, %c0_i32, %c0_i32_0 : i32, i32, i32
  }
  func.func @transform_22(%arg0: i32, %arg1: i32) -> (i32, i32, i32) {
    %c0_i32 = arith.constant 0 : i32
    %c0_i32_0 = arith.constant 0 : i32
    %c0_i32_1 = arith.constant 0 : i32
    return %arg1, %c0_i32, %c0_i32_0 : i32, i32, i32
  }
  func.func @transform_23(%arg0: i32, %arg1: i32) -> (i32, i32, i32) {
    %c0_i32 = arith.constant 0 : i32
    %c0_i32_0 = arith.constant 0 : i32
    %c0_i32_1 = arith.constant 0 : i32
    return %arg1, %c0_i32, %c0_i32_0 : i32, i32, i32
  }
  func.func @transform_24(%arg0: i32, %arg1: i32) -> (i32, i32, i32) {
    %c0_i32 = arith.constant 0 : i32
    %c0_i32_0 = arith.constant 0 : i32
    %c0_i32_1 = arith.constant 0 : i32
    return %arg0, %c0_i32, %c0_i32_0 : i32, i32, i32
  }
}

</mosaic_0001>

<llo_original>
// kernel: tpu_custom_call.1
$region0: #{tpu_custom_call.1}
  #allocation0 [shape = 'u32[]', space=smem, size = 0x4, offset = 0x4, fixed_abs, tag = 'smem constant byte address 0x4 - core index']
  #allocation1 [shape = 'u32[144,128]{1,0:T(1,128)}', space=vmem, size = 0x12000, scoped, tag = 'internal scratch']
  %s0 = inlined_call_operand.hbm [shape: f32[2,16,128], index: 0, kind: input, shape index: {}]
  %s1 = inlined_call_operand.hbm [shape: bf16[2,24,128], index: 1, kind: input, shape index: {}]
  %s2 = inlined_call_operand.hbm [shape: f32[16,16], index: 2, kind: input, shape index: {}]
  %s3 = inlined_call_operand.hbm [shape: f32[16,24], index: 3, kind: input, shape index: {}]
  %s4 = inlined_call_operand.hbm [shape: bf16[2,128,384], index: 4, kind: input, shape index: {}]
  %s5 = inlined_call_operand.vmem [shape: f32[2,1,384], index: 5, kind: input, shape index: {}]
  %s6 = inlined_call_operand.hbm [shape: bf16[2,128,128], index: 6, kind: input, shape index: {}]
  %s7 = inlined_call_operand.vmem [shape: f32[2,1,128], index: 7, kind: input, shape index: {}]
  %s8 = inlined_call_operand.hbm [shape: bf16[2,128,128], index: 8, kind: input, shape index: {}]
  %s9 = inlined_call_operand.vmem [shape: f32[2,1,128], index: 9, kind: input, shape index: {}]
  %s10 = inlined_call_operand.hbm [shape: bf16[2,128,256], index: 10, kind: input, shape index: {}]
  %s11 = inlined_call_operand.vmem [shape: f32[2,1,256], index: 11, kind: input, shape index: {}]
  %s12 = inlined_call_operand.hbm [shape: bf16[2,128,128], index: 12, kind: input, shape index: {}]
  %s13 = inlined_call_operand.vmem [shape: f32[2,1,128], index: 13, kind: input, shape index: {}]
  %s14 = inlined_call_operand.hbm [shape: bf16[2,128,256], index: 14, kind: input, shape index: {}]
  %s15 = inlined_call_operand.vmem [shape: f32[2,1,256], index: 15, kind: input, shape index: {}]
  %s16 = inlined_call_operand.hbm [shape: bf16[2,256,128], index: 16, kind: input, shape index: {}]
  %s17 = inlined_call_operand.vmem [shape: f32[2,1,128], index: 17, kind: input, shape index: {}]
  %s18 = inlined_call_operand.vmem [shape: f32[2,1,128], index: 18, kind: input, shape index: {}]
  %s19 = inlined_call_operand.vmem [shape: f32[2,1,128], index: 19, kind: input, shape index: {}]
  %s20 = inlined_call_operand.vmem [shape: f32[2,1,128], index: 20, kind: input, shape index: {}]
  %s21 = inlined_call_operand.vmem [shape: f32[2,1,128], index: 21, kind: input, shape index: {}]
  %s22 = inlined_call_operand.vmem [shape: f32[2,1,128], index: 22, kind: input, shape index: {}]
  %s23 = inlined_call_operand.vmem [shape: f32[2,1,128], index: 23, kind: input, shape index: {}]
  %s24 = inlined_call_operand.hbm [shape: f32[2,16,128], index: 24, kind: output, shape index: {}]
  %s25 = sld [smem:[#allocation0]]
  $region177: #{tpu_custom_call.1} parent=0
    _
  %s27 = ssub.s32 1, %s25
  %s28 = scalar_select 0, %s27, %s25
  $region1: #{tpu_custom_call.1} parent=0
    #allocation2 [shape = 'u8[16384]{0}', space=vmem, size = 0x4000, scoped, tag = 'input window, operand 0, single buffered']
    #allocation3 [shape = 's32[2]{0}', space=sflag, size = 0x8, scoped, tag = 'scoped memory for tpu_custom_call.1']
    #allocation4 [shape = 's32[2]{0}', space=sflag, size = 0x8, scoped, tag = 'scoped memory for tpu_custom_call.1']
    #allocation5 [shape = 'u8[12288]{0}', space=vmem, size = 0x3000, scoped, tag = 'input window, operand 1, single buffered']
    #allocation6 [shape = 's32[1]{0}', space=sflag, size = 0x4, scoped, tag = 'scoped memory for tpu_custom_call.1']
    #allocation7 [shape = 'u8[8192]{0}', space=vmem, size = 0x2000, scoped, tag = 'input window, operand 2, single buffered']
    #allocation8 [shape = 'u8[8192]{0}', space=vmem, size = 0x2000, scoped, tag = 'input window, operand 3, single buffered']
    #allocation9 [shape = 's32[1]{0}', space=sflag, size = 0x4, scoped, tag = 'scoped memory for tpu_custom_call.1']
    #allocation10 [shape = 'u8[196608]{0}', space=vmem, size = 0x30000, scoped, tag = 'input window, operand 4']
    #allocation11 [shape = 'u8[65536]{0}', space=vmem, size = 0x10000, scoped, tag = 'input window, operand 6']
    #allocation12 [shape = 'u8[65536]{0}', space=vmem, size = 0x10000, scoped, tag = 'input window, operand 8']
    #allocation13 [shape = 'u8[131072]{0}', space=vmem, size = 0x20000, scoped, tag = 'input window, operand 10']
    #allocation14 [shape = 'u8[65536]{0}', space=vmem, size = 0x10000, scoped, tag = 'input window, operand 12']
    #allocation15 [shape = 'u8[131072]{0}', space=vmem, size = 0x20000, scoped, tag = 'input window, operand 14']
    #allocation16 [shape = 'u8[131072]{0}', space=vmem, size = 0x20000, scoped, tag = 'input window, operand 16']
    #allocation17 [shape = 'u8[16384]{0}', space=vmem, size = 0x4000, scoped, tag = 'output window, operand 0, single buffered']
    %29 = vsyncpa [#allocation3], 0
    %30 = vsyncpa [#allocation6], 0
    %31 = vsyncpa [#allocation9], 0
    %32 = vsyncpa [#allocation4], 0
    loop: start=0, step=1, limit=4
    $region2: #{tpu_custom_call.1} parent=1 // loop_pre_header
      _
    $region3: #{tpu_custom_call.1} parent=1 // loop_header
      %s34 = sphi 0, %s38
      %p35 = scmp.ge.s32.totalorder %s34, 4
      %s41 = sphi 0, %s53
      %s42 = sphi 0, %s49
      %s43 = sphi 0, %s41
      %s44 = sphi 0, %s42
      %s45 = sphi 0, %s43
      %s46 = sphi 0, %s44
      %s56 = sphi 0, %s58
      %s59 = sphi 0, %s56
      %s60 = sphi 0, %s59
      %s76 = sphi 0, %s60
      %s82 = sphi 0, %s84
      %s85 = sphi 0, %s82
      %s86 = sphi 0, %s85
      %s102 = sphi 0, %s86
      %s106 = sphi 0, %s106
      %s108 = sphi 0, %s106
      %s109 = sphi 0, %s108
      %s123 = sphi 0, %s109
      %s127 = sphi 0, %s127
      %s129 = sphi 0, %s127
      %s130 = sphi 0, %s129
      %s144 = sphi 0, %s130
      %s150 = sphi 0, %s152
      %s153 = sphi 0, %s150
      %s154 = sphi 0, %s153
      %s170 = sphi 0, %s154
      %s176 = sphi 0, %s178
      %s179 = sphi 0, %s176
      %s180 = sphi 0, %s179
      %s196 = sphi 0, %s180
      %s202 = sphi 0, %s204
      %s205 = sphi 0, %s202
      %s206 = sphi 0, %s205
      %s222 = sphi 0, %s206
      %s228 = sphi 0, %s230
      %s231 = sphi 0, %s228
      %s232 = sphi 0, %s231
      %s248 = sphi 0, %s232
      %s254 = sphi 0, %s256
      %s257 = sphi 0, %s254
      %s258 = sphi 0, %s257
      %s274 = sphi 0, %s258
      %s280 = sphi 0, %s282
      %s283 = sphi 0, %s280
      %s284 = sphi 0, %s283
      %s300 = sphi 0, %s284
      %s306 = sphi 0, %s308
      %s309 = sphi 0, %s306
      %s310 = sphi 0, %s309
      %s326 = sphi 0, %s310
      %s332 = sphi 0, %s334
      %s335 = sphi 0, %s332
      %s336 = sphi 0, %s335
      %s352 = sphi 0, %s336
      %s358 = sphi 0, %s360
      %s361 = sphi 0, %s358
      %s362 = sphi 0, %s361
      %s378 = sphi 0, %s362
      %s384 = sphi 0, %s386
      %s387 = sphi 0, %s384
      %s388 = sphi 0, %s387
      %s404 = sphi 0, %s388
      %s410 = sphi 0, %s412
      %s413 = sphi 0, %s410
      %s414 = sphi 0, %s413
      %s430 = sphi 0, %s414
      %s436 = sphi 0, %s438
      %s439 = sphi 0, %s436
      %s440 = sphi 0, %s439
      %s456 = sphi 0, %s440
      %s462 = sphi 0, %s464
      %s465 = sphi 0, %s462
      %s466 = sphi 0, %s465
      %s482 = sphi 0, %s466
      %s488 = sphi 0, %s490
      %s491 = sphi 0, %s488
      %s492 = sphi 0, %s491
      %s508 = sphi 0, %s492
      %s514 = sphi 0, %s516
      %s517 = sphi 0, %s514
      %s518 = sphi 0, %s517
      %s534 = sphi 0, %s518
      %s540 = sphi 0, %s542
      %s543 = sphi 0, %s540
      %s544 = sphi 0, %s543
      %s560 = sphi 0, %s544
      %s566 = sphi 0, %s568
      %s569 = sphi 0, %s566
      %s570 = sphi 0, %s569
      %s586 = sphi 0, %s570
      %s592 = sphi 0, %s594
      %s595 = sphi 0, %s592
      %s596 = sphi 0, %s595
      %s612 = sphi 0, %s596
      %s618 = sphi 0, %s620
      %s621 = sphi 0, %s618
      %s622 = sphi 0, %s621
      %s638 = sphi 0, %s622
      %s644 = sphi 0, %s646
      %s647 = sphi 0, %s644
      %s648 = sphi 0, %s647
      %s664 = sphi 0, %s648
      %s670 = sphi 0, %s672
      %s673 = sphi 0, %s670
      %s674 = sphi 0, %s673
      %s690 = sphi 0, %s674
    $region4: #{tpu_custom_call.1} parent=1 // loop_header_branch
      %37 = sbr.rel (%p35) target = $region8
    $region5: #{tpu_custom_call.1} parent=1 // loop_body
      %s39 = ssub.s32 %s34, 1
      %s40 = ssub.s32 %s34, 2
      %s47 = sadd.s32 1, %s42
      %p48 = scmp.ge.s32.totalorder %s47, 2
      %s49 = scalar_select %p48, 0, %s47
      %s50 = sadd.s32 1, %s41
      %s51 = scalar_select %p48, %s50, %s41
      %p52 = scmp.ge.s32.totalorder %s51, 1
      %s53 = scalar_select %p52, 0, %s51
      %s54 = ssub.s32 %s41, %s53
      %p55 = scmp.eq.s32.totalorder %s54, 0
      %s57 = sadd.s32 %s56, 1
      %s58 = scalar_select %p55, %s56, %s57
      %p61 = pneg %p55
      %p62 = scmp.eq.s32.totalorder %s34, 1
      %p63 = por %p61, %p62
      %p64 = scmp.ne.s32.totalorder %s56, %s59
      %p65 = scmp.eq.s32.totalorder %s34, 0
      %p66 = por %p64, %p65
      %p67 = scmp.ne.s32.totalorder %s56, %s59
      %p68 = scmp.eq.s32.totalorder %s39, 1
      %p69 = por %p67, %p68
      %p70 = scmp.ne.s32.totalorder %s59, %s60
      %p71 = scmp.eq.s32.totalorder %s39, 0
      %p72 = por %p70, %p71
      %p73 = scmp.ne.s32.totalorder %s59, %s60
      %p74 = scmp.eq.s32.totalorder %s40, 1
      %p75 = por %p73, %p74
      %p77 = scmp.ne.s32.totalorder %s60, %s76
      %p78 = scmp.eq.s32.totalorder %s40, 0
      %p79 = por %p77, %p78
      %s80 = ssub.s32 %s41, %s53
      %p81 = scmp.eq.s32.totalorder %s80, 0
      %s83 = sadd.s32 %s82, 1
      %s84 = scalar_select %p81, %s82, %s83
      %p87 = pneg %p81
      %p88 = scmp.eq.s32.totalorder %s34, 1
      %p89 = por %p87, %p88
      %p90 = scmp.ne.s32.totalorder %s82, %s85
      %p91 = scmp.eq.s32.totalorder %s34, 0
      %p92 = por %p90, %p91
      %p93 = scmp.ne.s32.totalorder %s82, %s85
      %p94 = scmp.eq.s32.totalorder %s39, 1
      %p95 = por %p93, %p94
      %p96 = scmp.ne.s32.totalorder %s85, %s86
      %p97 = scmp.eq.s32.totalorder %s39, 0
      %p98 = por %p96, %p97
      %p99 = scmp.ne.s32.totalorder %s85, %s86
      %p100 = scmp.eq.s32.totalorder %s40, 1
      %p101 = por %p99, %p100
      %p103 = scmp.ne.s32.totalorder %s86, %s102
      %p104 = scmp.eq.s32.totalorder %s40, 0
      %p105 = por %p103, %p104
      %s107 = sadd.s32 %s106, 1
      %p110 = scmp.eq.s32.totalorder %s34, 1
      %p111 = scmp.ne.s32.totalorder %s106, %s108
      %p112 = scmp.eq.s32.totalorder %s34, 0
      %p113 = por %p111, %p112
      %p114 = scmp.ne.s32.totalorder %s106, %s108
      %p115 = scmp.eq.s32.totalorder %s39, 1
      %p116 = por %p114, %p115
      %p117 = scmp.ne.s32.totalorder %s108, %s109
      %p118 = scmp.eq.s32.totalorder %s39, 0
      %p119 = por %p117, %p118
      %p120 = scmp.ne.s32.totalorder %s108, %s109
      %p121 = scmp.eq.s32.totalorder %s40, 1
      %p122 = por %p120, %p121
      %p124 = scmp.ne.s32.totalorder %s109, %s123
      %p125 = scmp.eq.s32.totalorder %s40, 0
      %p126 = por %p124, %p125
      %s128 = sadd.s32 %s127, 1
      %p131 = scmp.eq.s32.totalorder %s34, 1
      %p132 = scmp.ne.s32.totalorder %s127, %s129
      %p133 = scmp.eq.s32.totalorder %s34, 0
      %p134 = por %p132, %p133
      %p135 = scmp.ne.s32.totalorder %s127, %s129
      %p136 = scmp.eq.s32.totalorder %s39, 1
      %p137 = por %p135, %p136
      %p138 = scmp.ne.s32.totalorder %s129, %s130
      %p139 = scmp.eq.s32.totalorder %s39, 0
      %p140 = por %p138, %p139
      %p141 = scmp.ne.s32.totalorder %s129, %s130
      %p142 = scmp.eq.s32.totalorder %s40, 1
      %p143 = por %p141, %p142
      %p145 = scmp.ne.s32.totalorder %s130, %s144
      %p146 = scmp.eq.s32.totalorder %s40, 0
      %p147 = por %p145, %p146
      %s148 = ssub.s32 %s42, %s49
      %p149 = scmp.eq.s32.totalorder %s148, 0
      %s151 = sadd.s32 %s150, 1
      %s152 = scalar_select %p149, %s150, %s151
      %p155 = pneg %p149
      %p156 = scmp.eq.s32.totalorder %s34, 1
      %p157 = por %p155, %p156
      %p158 = scmp.ne.s32.totalorder %s150, %s153
      %p159 = scmp.eq.s32.totalorder %s34, 0
      %p160 = por %p158, %p159
      %p161 = scmp.ne.s32.totalorder %s150, %s153
      %p162 = scmp.eq.s32.totalorder %s39, 1
      %p163 = por %p161, %p162
      %p164 = scmp.ne.s32.totalorder %s153, %s154
      %p165 = scmp.eq.s32.totalorder %s39, 0
      %p166 = por %p164, %p165
      %p167 = scmp.ne.s32.totalorder %s153, %s154
      %p168 = scmp.eq.s32.totalorder %s40, 1
      %p169 = por %p167, %p168
      %p171 = scmp.ne.s32.totalorder %s154, %s170
      %p172 = scmp.eq.s32.totalorder %s40, 0
      %p173 = por %p171, %p172
      %s174 = ssub.s32 %s42, %s49
      %p175 = scmp.eq.s32.totalorder %s174, 0
      %s177 = sadd.s32 %s176, 1
      %s178 = scalar_select %p175, %s176, %s177
      %p181 = pneg %p175
      %p182 = scmp.eq.s32.totalorder %s34, 1
      %p183 = por %p181, %p182
      %p184 = scmp.ne.s32.totalorder %s176, %s179
      %p185 = scmp.eq.s32.totalorder %s34, 0
      %p186 = por %p184, %p185
      %p187 = scmp.ne.s32.totalorder %s176, %s179
      %p188 = scmp.eq.s32.totalorder %s39, 1
      %p189 = por %p187, %p188
      %p190 = scmp.ne.s32.totalorder %s179, %s180
      %p191 = scmp.eq.s32.totalorder %s39, 0
      %p192 = por %p190, %p191
      %p193 = scmp.ne.s32.totalorder %s179, %s180
      %p194 = scmp.eq.s32.totalorder %s40, 1
      %p195 = por %p193, %p194
      %p197 = scmp.ne.s32.totalorder %s180, %s196
      %p198 = scmp.eq.s32.totalorder %s40, 0
      %p199 = por %p197, %p198
      %s200 = ssub.s32 %s42, %s49
      %p201 = scmp.eq.s32.totalorder %s200, 0
      %s203 = sadd.s32 %s202, 1
      %s204 = scalar_select %p201, %s202, %s203
      %p207 = pneg %p201
      %p208 = scmp.eq.s32.totalorder %s34, 1
      %p209 = por %p207, %p208
      %p210 = scmp.ne.s32.totalorder %s202, %s205
      %p211 = scmp.eq.s32.totalorder %s34, 0
      %p212 = por %p210, %p211
      %p213 = scmp.ne.s32.totalorder %s202, %s205
      %p214 = scmp.eq.s32.totalorder %s39, 1
      %p215 = por %p213, %p214
      %p216 = scmp.ne.s32.totalorder %s205, %s206
      %p217 = scmp.eq.s32.totalorder %s39, 0
      %p218 = por %p216, %p217
      %p219 = scmp.ne.s32.totalorder %s205, %s206
      %p220 = scmp.eq.s32.totalorder %s40, 1
      %p221 = por %p219, %p220
      %p223 = scmp.ne.s32.totalorder %s206, %s222
      %p224 = scmp.eq.s32.totalorder %s40, 0
      %p225 = por %p223, %p224
      %s226 = ssub.s32 %s42, %s49
      %p227 = scmp.eq.s32.totalorder %s226, 0
      %s229 = sadd.s32 %s228, 1
      %s230 = scalar_select %p227, %s228, %s229
      %p233 = pneg %p227
      %p234 = scmp.eq.s32.totalorder %s34, 1
      %p235 = por %p233, %p234
      %p236 = scmp.ne.s32.totalorder %s228, %s231
      %p237 = scmp.eq.s32.totalorder %s34, 0
      %p238 = por %p236, %p237
      %p239 = scmp.ne.s32.totalorder %s228, %s231
      %p240 = scmp.eq.s32.totalorder %s39, 1
      %p241 = por %p239, %p240
      %p242 = scmp.ne.s32.totalorder %s231, %s232
      %p243 = scmp.eq.s32.totalorder %s39, 0
      %p244 = por %p242, %p243
      %p245 = scmp.ne.s32.totalorder %s231, %s232
      %p246 = scmp.eq.s32.totalorder %s40, 1
      %p247 = por %p245, %p246
      %p249 = scmp.ne.s32.totalorder %s232, %s248
      %p250 = scmp.eq.s32.totalorder %s40, 0
      %p251 = por %p249, %p250
      %s252 = ssub.s32 %s42, %s49
      %p253 = scmp.eq.s32.totalorder %s252, 0
      %s255 = sadd.s32 %s254, 1
      %s256 = scalar_select %p253, %s254, %s255
      %p259 = pneg %p253
      %p260 = scmp.eq.s32.totalorder %s34, 1
      %p261 = por %p259, %p260
      %p262 = scmp.ne.s32.totalorder %s254, %s257
      %p263 = scmp.eq.s32.totalorder %s34, 0
      %p264 = por %p262, %p263
      %p265 = scmp.ne.s32.totalorder %s254, %s257
      %p266 = scmp.eq.s32.totalorder %s39, 1
      %p267 = por %p265, %p266
      %p268 = scmp.ne.s32.totalorder %s257, %s258
      %p269 = scmp.eq.s32.totalorder %s39, 0
      %p270 = por %p268, %p269
      %p271 = scmp.ne.s32.totalorder %s257, %s258
      %p272 = scmp.eq.s32.totalorder %s40, 1
      %p273 = por %p271, %p272
      %p275 = scmp.ne.s32.totalorder %s258, %s274
      %p276 = scmp.eq.s32.totalorder %s40, 0
      %p277 = por %p275, %p276
      %s278 = ssub.s32 %s42, %s49
      %p279 = scmp.eq.s32.totalorder %s278, 0
      %s281 = sadd.s32 %s280, 1
      %s282 = scalar_select %p279, %s280, %s281
      %p285 = pneg %p279
      %p286 = scmp.eq.s32.totalorder %s34, 1
      %p287 = por %p285, %p286
      %p288 = scmp.ne.s32.totalorder %s280, %s283
      %p289 = scmp.eq.s32.totalorder %s34, 0
      %p290 = por %p288, %p289
      %p291 = scmp.ne.s32.totalorder %s280, %s283
      %p292 = scmp.eq.s32.totalorder %s39, 1
      %p293 = por %p291, %p292
      %p294 = scmp.ne.s32.totalorder %s283, %s284
      %p295 = scmp.eq.s32.totalorder %s39, 0
      %p296 = por %p294, %p295
      %p297 = scmp.ne.s32.totalorder %s283, %s284
      %p298 = scmp.eq.s32.totalorder %s40, 1
      %p299 = por %p297, %p298
      %p301 = scmp.ne.s32.totalorder %s284, %s300
      %p302 = scmp.eq.s32.totalorder %s40, 0
      %p303 = por %p301, %p302
      %s304 = ssub.s32 %s42, %s49
      %p305 = scmp.eq.s32.totalorder %s304, 0
      %s307 = sadd.s32 %s306, 1
      %s308 = scalar_select %p305, %s306, %s307
      %p311 = pneg %p305
      %p312 = scmp.eq.s32.totalorder %s34, 1
      %p313 = por %p311, %p312
      %p314 = scmp.ne.s32.totalorder %s306, %s309
      %p315 = scmp.eq.s32.totalorder %s34, 0
      %p316 = por %p314, %p315
      %p317 = scmp.ne.s32.totalorder %s306, %s309
      %p318 = scmp.eq.s32.totalorder %s39, 1
      %p319 = por %p317, %p318
      %p320 = scmp.ne.s32.totalorder %s309, %s310
      %p321 = scmp.eq.s32.totalorder %s39, 0
      %p322 = por %p320, %p321
      %p323 = scmp.ne.s32.totalorder %s309, %s310
      %p324 = scmp.eq.s32.totalorder %s40, 1
      %p325 = por %p323, %p324
      %p327 = scmp.ne.s32.totalorder %s310, %s326
      %p328 = scmp.eq.s32.totalorder %s40, 0
      %p329 = por %p327, %p328
      %s330 = ssub.s32 %s42, %s49
      %p331 = scmp.eq.s32.totalorder %s330, 0
      %s333 = sadd.s32 %s332, 1
      %s334 = scalar_select %p331, %s332, %s333
      %p337 = pneg %p331
      %p338 = scmp.eq.s32.totalorder %s34, 1
      %p339 = por %p337, %p338
      %p340 = scmp.ne.s32.totalorder %s332, %s335
      %p341 = scmp.eq.s32.totalorder %s34, 0
      %p342 = por %p340, %p341
      %p343 = scmp.ne.s32.totalorder %s332, %s335
      %p344 = scmp.eq.s32.totalorder %s39, 1
      %p345 = por %p343, %p344
      %p346 = scmp.ne.s32.totalorder %s335, %s336
      %p347 = scmp.eq.s32.totalorder %s39, 0
      %p348 = por %p346, %p347
      %p349 = scmp.ne.s32.totalorder %s335, %s336
      %p350 = scmp.eq.s32.totalorder %s40, 1
      %p351 = por %p349, %p350
      %p353 = scmp.ne.s32.totalorder %s336, %s352
      %p354 = scmp.eq.s32.totalorder %s40, 0
      %p355 = por %p353, %p354
      %s356 = ssub.s32 %s42, %s49
      %p357 = scmp.eq.s32.totalorder %s356, 0
      %s359 = sadd.s32 %s358, 1
      %s360 = scalar_select %p357, %s358, %s359
      %p363 = pneg %p357
      %p364 = scmp.eq.s32.totalorder %s34, 1
      %p365 = por %p363, %p364
      %p366 = scmp.ne.s32.totalorder %s358, %s361
      %p367 = scmp.eq.s32.totalorder %s34, 0
      %p368 = por %p366, %p367
      %p369 = scmp.ne.s32.totalorder %s358, %s361
      %p370 = scmp.eq.s32.totalorder %s39, 1
      %p371 = por %p369, %p370
      %p372 = scmp.ne.s32.totalorder %s361, %s362
      %p373 = scmp.eq.s32.totalorder %s39, 0
      %p374 = por %p372, %p373
      %p375 = scmp.ne.s32.totalorder %s361, %s362
      %p376 = scmp.eq.s32.totalorder %s40, 1
      %p377 = por %p375, %p376
      %p379 = scmp.ne.s32.totalorder %s362, %s378
      %p380 = scmp.eq.s32.totalorder %s40, 0
      %p381 = por %p379, %p380
      %s382 = ssub.s32 %s42, %s49
      %p383 = scmp.eq.s32.totalorder %s382, 0
      %s385 = sadd.s32 %s384, 1
      %s386 = scalar_select %p383, %s384, %s385
      %p389 = pneg %p383
      %p390 = scmp.eq.s32.totalorder %s34, 1
      %p391 = por %p389, %p390
      %p392 = scmp.ne.s32.totalorder %s384, %s387
      %p393 = scmp.eq.s32.totalorder %s34, 0
      %p394 = por %p392, %p393
      %p395 = scmp.ne.s32.totalorder %s384, %s387
      %p396 = scmp.eq.s32.totalorder %s39, 1
      %p397 = por %p395, %p396
      %p398 = scmp.ne.s32.totalorder %s387, %s388
      %p399 = scmp.eq.s32.totalorder %s39, 0
      %p400 = por %p398, %p399
      %p401 = scmp.ne.s32.totalorder %s387, %s388
      %p402 = scmp.eq.s32.totalorder %s40, 1
      %p403 = por %p401, %p402
      %p405 = scmp.ne.s32.totalorder %s388, %s404
      %p406 = scmp.eq.s32.totalorder %s40, 0
      %p407 = por %p405, %p406
      %s408 = ssub.s32 %s42, %s49
      %p409 = scmp.eq.s32.totalorder %s408, 0
      %s411 = sadd.s32 %s410, 1
      %s412 = scalar_select %p409, %s410, %s411
      %p415 = pneg %p409
      %p416 = scmp.eq.s32.totalorder %s34, 1
      %p417 = por %p415, %p416
      %p418 = scmp.ne.s32.totalorder %s410, %s413
      %p419 = scmp.eq.s32.totalorder %s34, 0
      %p420 = por %p418, %p419
      %p421 = scmp.ne.s32.totalorder %s410, %s413
      %p422 = scmp.eq.s32.totalorder %s39, 1
      %p423 = por %p421, %p422
      %p424 = scmp.ne.s32.totalorder %s413, %s414
      %p425 = scmp.eq.s32.totalorder %s39, 0
      %p426 = por %p424, %p425
      %p427 = scmp.ne.s32.totalorder %s413, %s414
      %p428 = scmp.eq.s32.totalorder %s40, 1
      %p429 = por %p427, %p428
      %p431 = scmp.ne.s32.totalorder %s414, %s430
      %p432 = scmp.eq.s32.totalorder %s40, 0
      %p433 = por %p431, %p432
      %s434 = ssub.s32 %s42, %s49
      %p435 = scmp.eq.s32.totalorder %s434, 0
      %s437 = sadd.s32 %s436, 1
      %s438 = scalar_select %p435, %s436, %s437
      %p441 = pneg %p435
      %p442 = scmp.eq.s32.totalorder %s34, 1
      %p443 = por %p441, %p442
      %p444 = scmp.ne.s32.totalorder %s436, %s439
      %p445 = scmp.eq.s32.totalorder %s34, 0
      %p446 = por %p444, %p445
      %p447 = scmp.ne.s32.totalorder %s436, %s439
      %p448 = scmp.eq.s32.totalorder %s39, 1
      %p449 = por %p447, %p448
      %p450 = scmp.ne.s32.totalorder %s439, %s440
      %p451 = scmp.eq.s32.totalorder %s39, 0
      %p452 = por %p450, %p451
      %p453 = scmp.ne.s32.totalorder %s439, %s440
      %p454 = scmp.eq.s32.totalorder %s40, 1
      %p455 = por %p453, %p454
      %p457 = scmp.ne.s32.totalorder %s440, %s456
      %p458 = scmp.eq.s32.totalorder %s40, 0
      %p459 = por %p457, %p458
      %s460 = ssub.s32 %s42, %s49
      %p461 = scmp.eq.s32.totalorder %s460, 0
      %s463 = sadd.s32 %s462, 1
      %s464 = scalar_select %p461, %s462, %s463
      %p467 = pneg %p461
      %p468 = scmp.eq.s32.totalorder %s34, 1
      %p469 = por %p467, %p468
      %p470 = scmp.ne.s32.totalorder %s462, %s465
      %p471 = scmp.eq.s32.totalorder %s34, 0
      %p472 = por %p470, %p471
      %p473 = scmp.ne.s32.totalorder %s462, %s465
      %p474 = scmp.eq.s32.totalorder %s39, 1
      %p475 = por %p473, %p474
      %p476 = scmp.ne.s32.totalorder %s465, %s466
      %p477 = scmp.eq.s32.totalorder %s39, 0
      %p478 = por %p476, %p477
      %p479 = scmp.ne.s32.totalorder %s465, %s466
      %p480 = scmp.eq.s32.totalorder %s40, 1
      %p481 = por %p479, %p480
      %p483 = scmp.ne.s32.totalorder %s466, %s482
      %p484 = scmp.eq.s32.totalorder %s40, 0
      %p485 = por %p483, %p484
      %s486 = ssub.s32 %s42, %s49
      %p487 = scmp.eq.s32.totalorder %s486, 0
      %s489 = sadd.s32 %s488, 1
      %s490 = scalar_select %p487, %s488, %s489
      %p493 = pneg %p487
      %p494 = scmp.eq.s32.totalorder %s34, 1
      %p495 = por %p493, %p494
      %p496 = scmp.ne.s32.totalorder %s488, %s491
      %p497 = scmp.eq.s32.totalorder %s34, 0
      %p498 = por %p496, %p497
      %p499 = scmp.ne.s32.totalorder %s488, %s491
      %p500 = scmp.eq.s32.totalorder %s39, 1
      %p501 = por %p499, %p500
      %p502 = scmp.ne.s32.totalorder %s491, %s492
      %p503 = scmp.eq.s32.totalorder %s39, 0
      %p504 = por %p502, %p503
      %p505 = scmp.ne.s32.totalorder %s491, %s492
      %p506 = scmp.eq.s32.totalorder %s40, 1
      %p507 = por %p505, %p506
      %p509 = scmp.ne.s32.totalorder %s492, %s508
      %p510 = scmp.eq.s32.totalorder %s40, 0
      %p511 = por %p509, %p510
      %s512 = ssub.s32 %s42, %s49
      %p513 = scmp.eq.s32.totalorder %s512, 0
      %s515 = sadd.s32 %s514, 1
      %s516 = scalar_select %p513, %s514, %s515
      %p519 = pneg %p513
      %p520 = scmp.eq.s32.totalorder %s34, 1
      %p521 = por %p519, %p520
      %p522 = scmp.ne.s32.totalorder %s514, %s517
      %p523 = scmp.eq.s32.totalorder %s34, 0
      %p524 = por %p522, %p523
      %p525 = scmp.ne.s32.totalorder %s514, %s517
      %p526 = scmp.eq.s32.totalorder %s39, 1
      %p527 = por %p525, %p526
      %p528 = scmp.ne.s32.totalorder %s517, %s518
      %p529 = scmp.eq.s32.totalorder %s39, 0
      %p530 = por %p528, %p529
      %p531 = scmp.ne.s32.totalorder %s517, %s518
      %p532 = scmp.eq.s32.totalorder %s40, 1
      %p533 = por %p531, %p532
      %p535 = scmp.ne.s32.totalorder %s518, %s534
      %p536 = scmp.eq.s32.totalorder %s40, 0
      %p537 = por %p535, %p536
      %s538 = ssub.s32 %s42, %s49
      %p539 = scmp.eq.s32.totalorder %s538, 0
      %s541 = sadd.s32 %s540, 1
      %s542 = scalar_select %p539, %s540, %s541
      %p545 = pneg %p539
      %p546 = scmp.eq.s32.totalorder %s34, 1
      %p547 = por %p545, %p546
      %p548 = scmp.ne.s32.totalorder %s540, %s543
      %p549 = scmp.eq.s32.totalorder %s34, 0
      %p550 = por %p548, %p549
      %p551 = scmp.ne.s32.totalorder %s540, %s543
      %p552 = scmp.eq.s32.totalorder %s39, 1
      %p553 = por %p551, %p552
      %p554 = scmp.ne.s32.totalorder %s543, %s544
      %p555 = scmp.eq.s32.totalorder %s39, 0
      %p556 = por %p554, %p555
      %p557 = scmp.ne.s32.totalorder %s543, %s544
      %p558 = scmp.eq.s32.totalorder %s40, 1
      %p559 = por %p557, %p558
      %p561 = scmp.ne.s32.totalorder %s544, %s560
      %p562 = scmp.eq.s32.totalorder %s40, 0
      %p563 = por %p561, %p562
      %s564 = ssub.s32 %s42, %s49
      %p565 = scmp.eq.s32.totalorder %s564, 0
      %s567 = sadd.s32 %s566, 1
      %s568 = scalar_select %p565, %s566, %s567
      %p571 = pneg %p565
      %p572 = scmp.eq.s32.totalorder %s34, 1
      %p573 = por %p571, %p572
      %p574 = scmp.ne.s32.totalorder %s566, %s569
      %p575 = scmp.eq.s32.totalorder %s34, 0
      %p576 = por %p574, %p575
      %p577 = scmp.ne.s32.totalorder %s566, %s569
      %p578 = scmp.eq.s32.totalorder %s39, 1
      %p579 = por %p577, %p578
      %p580 = scmp.ne.s32.totalorder %s569, %s570
      %p581 = scmp.eq.s32.totalorder %s39, 0
      %p582 = por %p580, %p581
      %p583 = scmp.ne.s32.totalorder %s569, %s570
      %p584 = scmp.eq.s32.totalorder %s40, 1
      %p585 = por %p583, %p584
      %p587 = scmp.ne.s32.totalorder %s570, %s586
      %p588 = scmp.eq.s32.totalorder %s40, 0
      %p589 = por %p587, %p588
      %s590 = ssub.s32 %s42, %s49
      %p591 = scmp.eq.s32.totalorder %s590, 0
      %s593 = sadd.s32 %s592, 1
      %s594 = scalar_select %p591, %s592, %s593
      %p597 = pneg %p591
      %p598 = scmp.eq.s32.totalorder %s34, 1
      %p599 = por %p597, %p598
      %p600 = scmp.ne.s32.totalorder %s592, %s595
      %p601 = scmp.eq.s32.totalorder %s34, 0
      %p602 = por %p600, %p601
      %p603 = scmp.ne.s32.totalorder %s592, %s595
      %p604 = scmp.eq.s32.totalorder %s39, 1
      %p605 = por %p603, %p604
      %p606 = scmp.ne.s32.totalorder %s595, %s596
      %p607 = scmp.eq.s32.totalorder %s39, 0
      %p608 = por %p606, %p607
      %p609 = scmp.ne.s32.totalorder %s595, %s596
      %p610 = scmp.eq.s32.totalorder %s40, 1
      %p611 = por %p609, %p610
      %p613 = scmp.ne.s32.totalorder %s596, %s612
      %p614 = scmp.eq.s32.totalorder %s40, 0
      %p615 = por %p613, %p614
      %s616 = ssub.s32 %s42, %s49
      %p617 = scmp.eq.s32.totalorder %s616, 0
      %s619 = sadd.s32 %s618, 1
      %s620 = scalar_select %p617, %s618, %s619
      %p623 = pneg %p617
      %p624 = scmp.eq.s32.totalorder %s34, 1
      %p625 = por %p623, %p624
      %p626 = scmp.ne.s32.totalorder %s618, %s621
      %p627 = scmp.eq.s32.totalorder %s34, 0
      %p628 = por %p626, %p627
      %p629 = scmp.ne.s32.totalorder %s618, %s621
      %p630 = scmp.eq.s32.totalorder %s39, 1
      %p631 = por %p629, %p630
      %p632 = scmp.ne.s32.totalorder %s621, %s622
      %p633 = scmp.eq.s32.totalorder %s39, 0
      %p634 = por %p632, %p633
      %p635 = scmp.ne.s32.totalorder %s621, %s622
      %p636 = scmp.eq.s32.totalorder %s40, 1
      %p637 = por %p635, %p636
      %p639 = scmp.ne.s32.totalorder %s622, %s638
      %p640 = scmp.eq.s32.totalorder %s40, 0
      %p641 = por %p639, %p640
      %s642 = ssub.s32 %s42, %s49
      %p643 = scmp.eq.s32.totalorder %s642, 0
      %s645 = sadd.s32 %s644, 1
      %s646 = scalar_select %p643, %s644, %s645
      %p649 = pneg %p643
      %p650 = scmp.eq.s32.totalorder %s34, 1
      %p651 = por %p649, %p650
      %p652 = scmp.ne.s32.totalorder %s644, %s647
      %p653 = scmp.eq.s32.totalorder %s34, 0
      %p654 = por %p652, %p653
      %p655 = scmp.ne.s32.totalorder %s644, %s647
      %p656 = scmp.eq.s32.totalorder %s39, 1
      %p657 = por %p655, %p656
      %p658 = scmp.ne.s32.totalorder %s647, %s648
      %p659 = scmp.eq.s32.totalorder %s39, 0
      %p660 = por %p658, %p659
      %p661 = scmp.ne.s32.totalorder %s647, %s648
      %p662 = scmp.eq.s32.totalorder %s40, 1
      %p663 = por %p661, %p662
      %p665 = scmp.ne.s32.totalorder %s648, %s664
      %p666 = scmp.eq.s32.totalorder %s40, 0
      %p667 = por %p665, %p666
      %s668 = ssub.s32 %s41, %s53
      %p669 = scmp.eq.s32.totalorder %s668, 0
      %s671 = sadd.s32 %s670, 1
      %s672 = scalar_select %p669, %s670, %s671
      %p675 = pneg %p669
      %p676 = scmp.eq.s32.totalorder %s34, 1
      %p677 = por %p675, %p676
      %p678 = scmp.ne.s32.totalorder %s670, %s673
      %p679 = scmp.eq.s32.totalorder %s34, 0
      %p680 = por %p678, %p679
      %p681 = scmp.ne.s32.totalorder %s670, %s673
      %p682 = scmp.eq.s32.totalorder %s39, 1
      %p683 = por %p681, %p682
      %p684 = scmp.ne.s32.totalorder %s673, %s674
      %p685 = scmp.eq.s32.totalorder %s39, 0
      %p686 = por %p684, %p685
      %p687 = scmp.ne.s32.totalorder %s673, %s674
      %p688 = scmp.eq.s32.totalorder %s40, 1
      %p689 = por %p687, %p688
      %p691 = scmp.ne.s32.totalorder %s674, %s690
      %p692 = scmp.eq.s32.totalorder %s40, 0
      %p693 = por %p691, %p692
      %p694 = scmp.le.s32.totalorder 1, %s34
      %p695 = scmp.lt.s32.totalorder %s34, 3
      %p696 = pnand %p694, %p695
      %p697 = pneg %p696
      // Predicated region
      $region9: #{tpu_custom_call.1} parent=5 // pred_check
        _
      $region10: #{tpu_custom_call.1} parent=5 // pred_check_branch
        %699 = sbr.rel (%p696) target = $region12
      $region11: #{tpu_custom_call.1} parent=5 // pred_region
        %s700 = ssub.s32 %s34, 1
        // Predicated region
        $region13: #{tpu_custom_call.1} parent=11 // pred_check
          %p701 = pneg %p72
        $region14: #{tpu_custom_call.1} parent=11 // pred_check_branch
          %703 = sbr.rel (%p701) target = $region16
        $region15: #{tpu_custom_call.1} parent=11 // pred_region
          %s704 = smul.u32 2, %s43
          %s706 = ssub.s32 512, 512
          %707 = vsyncadd [#allocation3], %s706
          %s708 = smul.addr %s704, 2
          %s709 = smul.addr %s708, 128
          %s710 = scalar_lea.hbm %s0, %s709
          %s711 = sshll.u32 [#allocation2], 4
          %s712 = int_to_ptr.vmem [resolvable:$true] %s711
          %717 = dma.hbm_to_vmem [thread:$0]  %s710, 512, %s712, [#allocation3], 128, 128, 8
        $region16: #{tpu_custom_call.1} parent=11 // pred_fallthru
          _
        // Predicated region
        $region17: #{tpu_custom_call.1} parent=11 // pred_check
          %p718 = pneg %p98
        $region18: #{tpu_custom_call.1} parent=11 // pred_check_branch
          %720 = sbr.rel (%p718) target = $region20
        $region19: #{tpu_custom_call.1} parent=11 // pred_region
          %s721 = smul.u32 2, %s43
          %s723 = ssub.s32 384, 384
          %724 = vsyncadd [#allocation6], %s723
          %s725 = smul.addr %s721, 3
          %s726 = smul.addr %s725, 64
          %s727 = scalar_lea.hbm %s1, %s726
          %s728 = sshll.u32 [#allocation5], 4
          %s729 = int_to_ptr.vmem [resolvable:$true] %s728
          %734 = dma.hbm_to_vmem [thread:$0]  %s727, 384, %s729, [#allocation6], 64, 64, 4
        $region20: #{tpu_custom_call.1} parent=11 // pred_fallthru
          _
        // Predicated region
        $region21: #{tpu_custom_call.1} parent=11 // pred_check
          %p735 = pneg %p119
        $region22: #{tpu_custom_call.1} parent=11 // pred_check_branch
          %737 = sbr.rel (%p735) target = $region24
        $region23: #{tpu_custom_call.1} parent=11 // pred_region
          %s739 = ssub.s32 256, 256
          %740 = vsyncadd [#allocation6], %s739
          %s741 = sshll.u32 [#allocation7], 4
          %s742 = int_to_ptr.vmem [resolvable:$true] %s741
          %747 = dma.hbm_to_vmem [thread:$0]  %s2, 256, %s742, [#allocation6], 128, 128, 8
        $region24: #{tpu_custom_call.1} parent=11 // pred_fallthru
          _
        // Predicated region
        $region25: #{tpu_custom_call.1} parent=11 // pred_check
          %p748 = pneg %p140
        $region26: #{tpu_custom_call.1} parent=11 // pred_check_branch
          %750 = sbr.rel (%p748) target = $region28
        $region27: #{tpu_custom_call.1} parent=11 // pred_region
          %s752 = ssub.s32 256, 256
          %753 = vsyncadd [#allocation9], %s752
          %s754 = sshll.u32 [#allocation8], 4
          %s755 = int_to_ptr.vmem [resolvable:$true] %s754
          %760 = dma.hbm_to_vmem [thread:$0]  %s3, 256, %s755, [#allocation9], 128, 128, 8
        $region28: #{tpu_custom_call.1} parent=11 // pred_fallthru
          _
      $region12: #{tpu_custom_call.1} parent=5 // pred_fallthru
        _
      %p761 = scmp.lt.s32.totalorder %s34, 2
      // Predicated region
      $region29: #{tpu_custom_call.1} parent=5 // pred_check
        %p762 = pneg %p761
      $region30: #{tpu_custom_call.1} parent=5 // pred_check_branch
        %764 = sbr.rel (%p762) target = $region32
      $region31: #{tpu_custom_call.1} parent=5 // pred_region
        // Predicated region
        $region33: #{tpu_custom_call.1} parent=31 // pred_check
          %p765 = pneg %p160
        $region34: #{tpu_custom_call.1} parent=31 // pred_check_branch
          %767 = sbr.rel (%p765) target = $region36
        $region35: #{tpu_custom_call.1} parent=31 // pred_region
          %s768 = sand.u32 %s34, 1
          %s769 = scalar_lea.sflag [#allocation3], %s768
          %s770 = sand.u32 %s150, 1
          %s771 = smul.addr %s770, 192
          %s772 = scalar_lea.vmem [#allocation10], %s771
          %s774 = ssub.s32 3072, 3072
          %775 = vsyncadd %s769, %s774
          %s776 = smul.addr %s42, 48
          %s777 = smul.addr %s776, 64
          %s778 = scalar_lea.hbm %s4, %s777
          %s779 = sshll.u32 %s772, 4
          %s780 = int_to_ptr.vmem [resolvable:$true] %s779
          %785 = dma.hbm_to_vmem [thread:$0]  %s778, 3072, %s780, %s769, 192, 192, 12
        $region36: #{tpu_custom_call.1} parent=31 // pred_fallthru
          _
        // Predicated region
        $region37: #{tpu_custom_call.1} parent=31 // pred_check
          %p786 = pneg %p186
        $region38: #{tpu_custom_call.1} parent=31 // pred_check_branch
          %788 = sbr.rel (%p786) target = $region40
        $region39: #{tpu_custom_call.1} parent=31 // pred_region
          %p789 = scmp.lt.s32.totalorder %s42, 1
          %s790 = scalar_select %p789, %s42, 1
          %s791 = smul.addr %s790, 3
          %s792 = scalar_lea.vmem %s5, %s791
        $region40: #{tpu_custom_call.1} parent=31 // pred_fallthru
          _
        // Predicated region
        $region41: #{tpu_custom_call.1} parent=31 // pred_check
          %p793 = pneg %p212
        $region42: #{tpu_custom_call.1} parent=31 // pred_check_branch
          %795 = sbr.rel (%p793) target = $region44
        $region43: #{tpu_custom_call.1} parent=31 // pred_region
          %s796 = sand.u32 %s34, 1
          %s797 = scalar_lea.sflag [#allocation3], %s796
          %s798 = sand.u32 %s202, 1
          %s799 = smul.addr %s798, 64
          %s800 = scalar_lea.vmem [#allocation11], %s799
          %s802 = ssub.s32 1024, 1024
          %803 = vsyncadd %s797, %s802
          %s804 = smul.addr %s42, 16
          %s805 = smul.addr %s804, 64
          %s806 = scalar_lea.hbm %s6, %s805
          %s807 = sshll.u32 %s800, 4
          %s808 = int_to_ptr.vmem [resolvable:$true] %s807
          %813 = dma.hbm_to_vmem [thread:$0]  %s806, 1024, %s808, %s797, 64, 64, 4
        $region44: #{tpu_custom_call.1} parent=31 // pred_fallthru
          _
        // Predicated region
        $region45: #{tpu_custom_call.1} parent=31 // pred_check
          %p814 = pneg %p238
        $region46: #{tpu_custom_call.1} parent=31 // pred_check_branch
          %816 = sbr.rel (%p814) target = $region48
        $region47: #{tpu_custom_call.1} parent=31 // pred_region
          %p817 = scmp.lt.s32.totalorder %s42, 1
          %s818 = scalar_select %p817, %s42, 1
          %s819 = scalar_lea.vmem %s7, %s818
        $region48: #{tpu_custom_call.1} parent=31 // pred_fallthru
          _
        // Predicated region
        $region49: #{tpu_custom_call.1} parent=31 // pred_check
          %p820 = pneg %p264
        $region50: #{tpu_custom_call.1} parent=31 // pred_check_branch
          %822 = sbr.rel (%p820) target = $region52
        $region51: #{tpu_custom_call.1} parent=31 // pred_region
          %s823 = sand.u32 %s34, 1
          %s824 = scalar_lea.sflag [#allocation3], %s823
          %s825 = sand.u32 %s254, 1
          %s826 = smul.addr %s825, 64
          %s827 = scalar_lea.vmem [#allocation12], %s826
          %s829 = ssub.s32 1024, 1024
          %830 = vsyncadd %s824, %s829
          %s831 = smul.addr %s42, 16
          %s832 = smul.addr %s831, 64
          %s833 = scalar_lea.hbm %s8, %s832
          %s834 = sshll.u32 %s827, 4
          %s835 = int_to_ptr.vmem [resolvable:$true] %s834
          %840 = dma.hbm_to_vmem [thread:$0]  %s833, 1024, %s835, %s824, 64, 64, 4
        $region52: #{tpu_custom_call.1} parent=31 // pred_fallthru
          _
        // Predicated region
        $region53: #{tpu_custom_call.1} parent=31 // pred_check
          %p841 = pneg %p290
        $region54: #{tpu_custom_call.1} parent=31 // pred_check_branch
          %843 = sbr.rel (%p841) target = $region56
        $region55: #{tpu_custom_call.1} parent=31 // pred_region
          %p844 = scmp.lt.s32.totalorder %s42, 1
          %s845 = scalar_select %p844, %s42, 1
          %s846 = scalar_lea.vmem %s9, %s845
        $region56: #{tpu_custom_call.1} parent=31 // pred_fallthru
          _
        // Predicated region
        $region57: #{tpu_custom_call.1} parent=31 // pred_check
          %p847 = pneg %p316
        $region58: #{tpu_custom_call.1} parent=31 // pred_check_branch
          %849 = sbr.rel (%p847) target = $region60
        $region59: #{tpu_custom_call.1} parent=31 // pred_region
          %s850 = sand.u32 %s34, 1
          %s851 = scalar_lea.sflag [#allocation3], %s850
          %s852 = sand.u32 %s306, 1
          %s853 = smul.addr %s852, 128
          %s854 = scalar_lea.vmem [#allocation13], %s853
          %s856 = ssub.s32 2048, 2048
          %857 = vsyncadd %s851, %s856
          %s858 = smul.addr %s42, 32
          %s859 = smul.addr %s858, 64
          %s860 = scalar_lea.hbm %s10, %s859
          %s861 = sshll.u32 %s854, 4
          %s862 = int_to_ptr.vmem [resolvable:$true] %s861
          %867 = dma.hbm_to_vmem [thread:$0]  %s860, 2048, %s862, %s851, 128, 128, 8
        $region60: #{tpu_custom_call.1} parent=31 // pred_fallthru
          _
        // Predicated region
        $region61: #{tpu_custom_call.1} parent=31 // pred_check
          %p868 = pneg %p342
        $region62: #{tpu_custom_call.1} parent=31 // pred_check_branch
          %870 = sbr.rel (%p868) target = $region64
        $region63: #{tpu_custom_call.1} parent=31 // pred_region
          %p871 = scmp.lt.s32.totalorder %s42, 1
          %s872 = scalar_select %p871, %s42, 1
          %s873 = smul.addr %s872, 2
          %s874 = scalar_lea.vmem %s11, %s873
        $region64: #{tpu_custom_call.1} parent=31 // pred_fallthru
          _
        // Predicated region
        $region65: #{tpu_custom_call.1} parent=31 // pred_check
          %p875 = pneg %p368
        $region66: #{tpu_custom_call.1} parent=31 // pred_check_branch
          %877 = sbr.rel (%p875) target = $region68
        $region67: #{tpu_custom_call.1} parent=31 // pred_region
          %s878 = sand.u32 %s34, 1
          %s879 = scalar_lea.sflag [#allocation3], %s878
          %s880 = sand.u32 %s358, 1
          %s881 = smul.addr %s880, 64
          %s882 = scalar_lea.vmem [#allocation14], %s881
          %s884 = ssub.s32 1024, 1024
          %885 = vsyncadd %s879, %s884
          %s886 = smul.addr %s42, 16
          %s887 = smul.addr %s886, 64
          %s888 = scalar_lea.hbm %s12, %s887
          %s889 = sshll.u32 %s882, 4
          %s890 = int_to_ptr.vmem [resolvable:$true] %s889
          %895 = dma.hbm_to_vmem [thread:$0]  %s888, 1024, %s890, %s879, 64, 64, 4
        $region68: #{tpu_custom_call.1} parent=31 // pred_fallthru
          _
        // Predicated region
        $region69: #{tpu_custom_call.1} parent=31 // pred_check
          %p896 = pneg %p394
        $region70: #{tpu_custom_call.1} parent=31 // pred_check_branch
          %898 = sbr.rel (%p896) target = $region72
        $region71: #{tpu_custom_call.1} parent=31 // pred_region
          %p899 = scmp.lt.s32.totalorder %s42, 1
          %s900 = scalar_select %p899, %s42, 1
          %s901 = scalar_lea.vmem %s13, %s900
        $region72: #{tpu_custom_call.1} parent=31 // pred_fallthru
          _
        // Predicated region
        $region73: #{tpu_custom_call.1} parent=31 // pred_check
          %p902 = pneg %p420
        $region74: #{tpu_custom_call.1} parent=31 // pred_check_branch
          %904 = sbr.rel (%p902) target = $region76
        $region75: #{tpu_custom_call.1} parent=31 // pred_region
          %s905 = sand.u32 %s34, 1
          %s906 = scalar_lea.sflag [#allocation3], %s905
          %s907 = sand.u32 %s410, 1
          %s908 = smul.addr %s907, 128
          %s909 = scalar_lea.vmem [#allocation15], %s908
          %s911 = ssub.s32 2048, 2048
          %912 = vsyncadd %s906, %s911
          %s913 = smul.addr %s42, 32
          %s914 = smul.addr %s913, 64
          %s915 = scalar_lea.hbm %s14, %s914
          %s916 = sshll.u32 %s909, 4
          %s917 = int_to_ptr.vmem [resolvable:$true] %s916
          %922 = dma.hbm_to_vmem [thread:$0]  %s915, 2048, %s917, %s906, 128, 128, 8
        $region76: #{tpu_custom_call.1} parent=31 // pred_fallthru
          _
        // Predicated region
        $region77: #{tpu_custom_call.1} parent=31 // pred_check
          %p923 = pneg %p446
        $region78: #{tpu_custom_call.1} parent=31 // pred_check_branch
          %925 = sbr.rel (%p923) target = $region80
        $region79: #{tpu_custom_call.1} parent=31 // pred_region
          %p926 = scmp.lt.s32.totalorder %s42, 1
          %s927 = scalar_select %p926, %s42, 1
          %s928 = smul.addr %s927, 2
          %s929 = scalar_lea.vmem %s15, %s928
        $region80: #{tpu_custom_call.1} parent=31 // pred_fallthru
          _
        // Predicated region
        $region81: #{tpu_custom_call.1} parent=31 // pred_check
          %p930 = pneg %p472
        $region82: #{tpu_custom_call.1} parent=31 // pred_check_branch
          %932 = sbr.rel (%p930) target = $region84
        $region83: #{tpu_custom_call.1} parent=31 // pred_region
          %s933 = sand.u32 %s34, 1
          %s934 = scalar_lea.sflag [#allocation3], %s933
          %s935 = sand.u32 %s462, 1
          %s936 = smul.addr %s935, 128
          %s937 = scalar_lea.vmem [#allocation16], %s936
          %s939 = ssub.s32 2048, 2048
          %940 = vsyncadd %s934, %s939
          %s941 = smul.addr %s42, 32
          %s942 = smul.addr %s941, 64
          %s943 = scalar_lea.hbm %s16, %s942
          %s944 = sshll.u32 %s937, 4
          %s945 = int_to_ptr.vmem [resolvable:$true] %s944
          %950 = dma.hbm_to_vmem [thread:$0]  %s943, 2048, %s945, %s934, 64, 64, 4
        $region84: #{tpu_custom_call.1} parent=31 // pred_fallthru
          _
        // Predicated region
        $region85: #{tpu_custom_call.1} parent=31 // pred_check
          %p951 = pneg %p498
        $region86: #{tpu_custom_call.1} parent=31 // pred_check_branch
          %953 = sbr.rel (%p951) target = $region88
        $region87: #{tpu_custom_call.1} parent=31 // pred_region
          %p954 = scmp.lt.s32.totalorder %s42, 1
          %s955 = scalar_select %p954, %s42, 1
          %s956 = scalar_lea.vmem %s17, %s955
        $region88: #{tpu_custom_call.1} parent=31 // pred_fallthru
          _
        // Predicated region
        $region89: #{tpu_custom_call.1} parent=31 // pred_check
          %p957 = pneg %p524
        $region90: #{tpu_custom_call.1} parent=31 // pred_check_branch
          %959 = sbr.rel (%p957) target = $region92
        $region91: #{tpu_custom_call.1} parent=31 // pred_region
          %p960 = scmp.lt.s32.totalorder %s42, 1
          %s961 = scalar_select %p960, %s42, 1
          %s962 = scalar_lea.vmem %s18, %s961
        $region92: #{tpu_custom_call.1} parent=31 // pred_fallthru
          _
        // Predicated region
        $region93: #{tpu_custom_call.1} parent=31 // pred_check
          %p963 = pneg %p550
        $region94: #{tpu_custom_call.1} parent=31 // pred_check_branch
          %965 = sbr.rel (%p963) target = $region96
        $region95: #{tpu_custom_call.1} parent=31 // pred_region
          %p966 = scmp.lt.s32.totalorder %s42, 1
          %s967 = scalar_select %p966, %s42, 1
          %s968 = scalar_lea.vmem %s19, %s967
        $region96: #{tpu_custom_call.1} parent=31 // pred_fallthru
          _
        // Predicated region
        $region97: #{tpu_custom_call.1} parent=31 // pred_check
          %p969 = pneg %p576
        $region98: #{tpu_custom_call.1} parent=31 // pred_check_branch
          %971 = sbr.rel (%p969) target = $region100
        $region99: #{tpu_custom_call.1} parent=31 // pred_region
          %p972 = scmp.lt.s32.totalorder %s42, 1
          %s973 = scalar_select %p972, %s42, 1
          %s974 = scalar_lea.vmem %s20, %s973
        $region100: #{tpu_custom_call.1} parent=31 // pred_fallthru
          _
        // Predicated region
        $region101: #{tpu_custom_call.1} parent=31 // pred_check
          %p975 = pneg %p602
        $region102: #{tpu_custom_call.1} parent=31 // pred_check_branch
          %977 = sbr.rel (%p975) target = $region104
        $region103: #{tpu_custom_call.1} parent=31 // pred_region
          %p978 = scmp.lt.s32.totalorder %s42, 1
          %s979 = scalar_select %p978, %s42, 1
          %s980 = scalar_lea.vmem %s21, %s979
        $region104: #{tpu_custom_call.1} parent=31 // pred_fallthru
          _
        // Predicated region
        $region105: #{tpu_custom_call.1} parent=31 // pred_check
          %p981 = pneg %p628
        $region106: #{tpu_custom_call.1} parent=31 // pred_check_branch
          %983 = sbr.rel (%p981) target = $region108
        $region107: #{tpu_custom_call.1} parent=31 // pred_region
          %p984 = scmp.lt.s32.totalorder %s42, 1
          %s985 = scalar_select %p984, %s42, 1
          %s986 = scalar_lea.vmem %s22, %s985
        $region108: #{tpu_custom_call.1} parent=31 // pred_fallthru
          _
        // Predicated region
        $region109: #{tpu_custom_call.1} parent=31 // pred_check
          %p987 = pneg %p654
        $region110: #{tpu_custom_call.1} parent=31 // pred_check_branch
          %989 = sbr.rel (%p987) target = $region112
        $region111: #{tpu_custom_call.1} parent=31 // pred_region
          %p990 = scmp.lt.s32.totalorder %s42, 1
          %s991 = scalar_select %p990, %s42, 1
          %s992 = scalar_lea.vmem %s23, %s991
        $region112: #{tpu_custom_call.1} parent=31 // pred_fallthru
          _
      $region32: #{tpu_custom_call.1} parent=5 // pred_fallthru
        _
      %p993 = scmp.le.s32.totalorder 1, %s34
      %p994 = scmp.lt.s32.totalorder %s34, 3
      %p995 = pnand %p993, %p994
      %p996 = pneg %p995
      // Predicated region
      $region113: #{tpu_custom_call.1} parent=5 // pred_check
        _
      $region114: #{tpu_custom_call.1} parent=5 // pred_check_branch
        %998 = sbr.rel (%p995) target = $region116
      $region115: #{tpu_custom_call.1} parent=5 // pred_region
        %s999 = ssub.s32 %s34, 1
        // Predicated region
        $region117: #{tpu_custom_call.1} parent=115 // pred_check
          %p1000 = pneg %p72
        $region118: #{tpu_custom_call.1} parent=115 // pred_check_branch
          %1002 = sbr.rel (%p1000) target = $region120
        $region119: #{tpu_custom_call.1} parent=115 // pred_region
          %1003 = dma.done [#allocation3], 512
        $region120: #{tpu_custom_call.1} parent=115 // pred_fallthru
          _
        // Predicated region
        $region121: #{tpu_custom_call.1} parent=115 // pred_check
          %p1004 = pneg %p98
        $region122: #{tpu_custom_call.1} parent=115 // pred_check_branch
          %1006 = sbr.rel (%p1004) target = $region124
        $region123: #{tpu_custom_call.1} parent=115 // pred_region
          %1007 = dma.done [#allocation6], 384
        $region124: #{tpu_custom_call.1} parent=115 // pred_fallthru
          _
        // Predicated region
        $region125: #{tpu_custom_call.1} parent=115 // pred_check
          %p1008 = pneg %p119
        $region126: #{tpu_custom_call.1} parent=115 // pred_check_branch
          %1010 = sbr.rel (%p1008) target = $region128
        $region127: #{tpu_custom_call.1} parent=115 // pred_region
          %1011 = dma.done [#allocation6], 256
        $region128: #{tpu_custom_call.1} parent=115 // pred_fallthru
          _
        // Predicated region
        $region129: #{tpu_custom_call.1} parent=115 // pred_check
          %p1012 = pneg %p140
        $region130: #{tpu_custom_call.1} parent=115 // pred_check_branch
          %1014 = sbr.rel (%p1012) target = $region132
        $region131: #{tpu_custom_call.1} parent=115 // pred_region
          %1015 = dma.done [#allocation9], 256
        $region132: #{tpu_custom_call.1} parent=115 // pred_fallthru
          _
        %s1016 = sand.u32 %s39, 1
        %s1017 = scalar_lea.sflag [#allocation3], %s1016
        %s1018 = sand.u32 %s153, 1
        %s1019 = smul.addr %s1018, 192
        %s1020 = scalar_lea.vmem [#allocation10], %s1019
        // Predicated region
        $region133: #{tpu_custom_call.1} parent=115 // pred_check
          %p1021 = pneg %p166
        $region134: #{tpu_custom_call.1} parent=115 // pred_check_branch
          %1023 = sbr.rel (%p1021) target = $region136
        $region135: #{tpu_custom_call.1} parent=115 // pred_region
          %1024 = dma.done %s1017, 3072
        $region136: #{tpu_custom_call.1} parent=115 // pred_fallthru
          _
        %s1025 = sand.u32 %s39, 1
        %s1026 = scalar_lea.sflag [#allocation3], %s1025
        %s1027 = sand.u32 %s205, 1
        %s1028 = smul.addr %s1027, 64
        %s1029 = scalar_lea.vmem [#allocation11], %s1028
        // Predicated region
        $region137: #{tpu_custom_call.1} parent=115 // pred_check
          %p1030 = pneg %p218
        $region138: #{tpu_custom_call.1} parent=115 // pred_check_branch
          %1032 = sbr.rel (%p1030) target = $region140
        $region139: #{tpu_custom_call.1} parent=115 // pred_region
          %1033 = dma.done %s1026, 1024
        $region140: #{tpu_custom_call.1} parent=115 // pred_fallthru
          _
        %s1034 = sand.u32 %s39, 1
        %s1035 = scalar_lea.sflag [#allocation3], %s1034
        %s1036 = sand.u32 %s257, 1
        %s1037 = smul.addr %s1036, 64
        %s1038 = scalar_lea.vmem [#allocation12], %s1037
        // Predicated region
        $region141: #{tpu_custom_call.1} parent=115 // pred_check
          %p1039 = pneg %p270
        $region142: #{tpu_custom_call.1} parent=115 // pred_check_branch
          %1041 = sbr.rel (%p1039) target = $region144
        $region143: #{tpu_custom_call.1} parent=115 // pred_region
          %1042 = dma.done %s1035, 1024
        $region144: #{tpu_custom_call.1} parent=115 // pred_fallthru
          _
        %s1043 = sand.u32 %s39, 1
        %s1044 = scalar_lea.sflag [#allocation3], %s1043
        %s1045 = sand.u32 %s309, 1
        %s1046 = smul.addr %s1045, 128
        %s1047 = scalar_lea.vmem [#allocation13], %s1046
        // Predicated region
        $region145: #{tpu_custom_call.1} parent=115 // pred_check
          %p1048 = pneg %p322
        $region146: #{tpu_custom_call.1} parent=115 // pred_check_branch
          %1050 = sbr.rel (%p1048) target = $region148
        $region147: #{tpu_custom_call.1} parent=115 // pred_region
          %1051 = dma.done %s1044, 2048
        $region148: #{tpu_custom_call.1} parent=115 // pred_fallthru
          _
        %s1052 = sand.u32 %s39, 1
        %s1053 = scalar_lea.sflag [#allocation3], %s1052
        %s1054 = sand.u32 %s361, 1
        %s1055 = smul.addr %s1054, 64
        %s1056 = scalar_lea.vmem [#allocation14], %s1055
        // Predicated region
        $region149: #{tpu_custom_call.1} parent=115 // pred_check
          %p1057 = pneg %p374
        $region150: #{tpu_custom_call.1} parent=115 // pred_check_branch
          %1059 = sbr.rel (%p1057) target = $region152
        $region151: #{tpu_custom_call.1} parent=115 // pred_region
          %1060 = dma.done %s1053, 1024
        $region152: #{tpu_custom_call.1} parent=115 // pred_fallthru
          _
        %s1061 = sand.u32 %s39, 1
        %s1062 = scalar_lea.sflag [#allocation3], %s1061
        %s1063 = sand.u32 %s413, 1
        %s1064 = smul.addr %s1063, 128
        %s1065 = scalar_lea.vmem [#allocation15], %s1064
        // Predicated region
        $region153: #{tpu_custom_call.1} parent=115 // pred_check
          %p1066 = pneg %p426
        $region154: #{tpu_custom_call.1} parent=115 // pred_check_branch
          %1068 = sbr.rel (%p1066) target = $region156
        $region155: #{tpu_custom_call.1} parent=115 // pred_region
          %1069 = dma.done %s1062, 2048
        $region156: #{tpu_custom_call.1} parent=115 // pred_fallthru
          _
        %s1070 = sand.u32 %s39, 1
        %s1071 = scalar_lea.sflag [#allocation3], %s1070
        %s1072 = sand.u32 %s465, 1
        %s1073 = smul.addr %s1072, 128
        %s1074 = scalar_lea.vmem [#allocation16], %s1073
        // Predicated region
        $region157: #{tpu_custom_call.1} parent=115 // pred_check
          %p1075 = pneg %p478
        $region158: #{tpu_custom_call.1} parent=115 // pred_check_branch
          %1077 = sbr.rel (%p1075) target = $region160
        $region159: #{tpu_custom_call.1} parent=115 // pred_region
          %1078 = dma.done %s1071, 2048
        $region160: #{tpu_custom_call.1} parent=115 // pred_fallthru
          _
        %p1079 = pneg %p72
        %p1080 = pneg %p69
        %p1081 = pneg %p98
        %p1082 = pneg %p95
        %p1083 = pneg %p119
        %p1084 = pneg %p116
        %p1085 = pneg %p140
        %p1086 = pneg %p137
        %s1087 = sand.u32 %s39, 1
        %s1088 = scalar_lea.sflag [#allocation3], %s1087
        %s1089 = sand.u32 %s153, 1
        %s1090 = smul.addr %s1089, 192
        %s1091 = scalar_lea.vmem [#allocation10], %s1090
        %p1092 = pneg %p166
        %p1093 = pneg %p163
        %p1094 = scmp.lt.s32.totalorder %s44, 1
        %s1095 = scalar_select %p1094, %s44, 1
        %s1096 = smul.addr %s1095, 3
        %s1097 = scalar_lea.vmem %s5, %s1096
        %p1098 = pneg %p192
        %p1099 = pneg %p189
        %s1100 = sand.u32 %s39, 1
        %s1101 = scalar_lea.sflag [#allocation3], %s1100
        %s1102 = sand.u32 %s205, 1
        %s1103 = smul.addr %s1102, 64
        %s1104 = scalar_lea.vmem [#allocation11], %s1103
        %p1105 = pneg %p218
        %p1106 = pneg %p215
        %p1107 = scmp.lt.s32.totalorder %s44, 1
        %s1108 = scalar_select %p1107, %s44, 1
        %s1109 = scalar_lea.vmem %s7, %s1108
        %p1110 = pneg %p244
        %p1111 = pneg %p241
        %s1112 = sand.u32 %s39, 1
        %s1113 = scalar_lea.sflag [#allocation3], %s1112
        %s1114 = sand.u32 %s257, 1
        %s1115 = smul.addr %s1114, 64
        %s1116 = scalar_lea.vmem [#allocation12], %s1115
        %p1117 = pneg %p270
        %p1118 = pneg %p267
        %p1119 = scmp.lt.s32.totalorder %s44, 1
        %s1120 = scalar_select %p1119, %s44, 1
        %s1121 = scalar_lea.vmem %s9, %s1120
        %p1122 = pneg %p296
        %p1123 = pneg %p293
        %s1124 = sand.u32 %s39, 1
        %s1125 = scalar_lea.sflag [#allocation3], %s1124
        %s1126 = sand.u32 %s309, 1
        %s1127 = smul.addr %s1126, 128
        %s1128 = scalar_lea.vmem [#allocation13], %s1127
        %p1129 = pneg %p322
        %p1130 = pneg %p319
        %p1131 = scmp.lt.s32.totalorder %s44, 1
        %s1132 = scalar_select %p1131, %s44, 1
        %s1133 = smul.addr %s1132, 2
        %s1134 = scalar_lea.vmem %s11, %s1133
        %p1135 = pneg %p348
        %p1136 = pneg %p345
        %s1137 = sand.u32 %s39, 1
        %s1138 = scalar_lea.sflag [#allocation3], %s1137
        %s1139 = sand.u32 %s361, 1
        %s1140 = smul.addr %s1139, 64
        %s1141 = scalar_lea.vmem [#allocation14], %s1140
        %p1142 = pneg %p374
        %p1143 = pneg %p371
        %p1144 = scmp.lt.s32.totalorder %s44, 1
        %s1145 = scalar_select %p1144, %s44, 1
        %s1146 = scalar_lea.vmem %s13, %s1145
        %p1147 = pneg %p400
        %p1148 = pneg %p397
        %s1149 = sand.u32 %s39, 1
        %s1150 = scalar_lea.sflag [#allocation3], %s1149
        %s1151 = sand.u32 %s413, 1
        %s1152 = smul.addr %s1151, 128
        %s1153 = scalar_lea.vmem [#allocation15], %s1152
        %p1154 = pneg %p426
        %p1155 = pneg %p423
        %p1156 = scmp.lt.s32.totalorder %s44, 1
        %s1157 = scalar_select %p1156, %s44, 1
        %s1158 = smul.addr %s1157, 2
        %s1159 = scalar_lea.vmem %s15, %s1158
        %p1160 = pneg %p452
        %p1161 = pneg %p449
        %s1162 = sand.u32 %s39, 1
        %s1163 = scalar_lea.sflag [#allocation3], %s1162
        %s1164 = sand.u32 %s465, 1
        %s1165 = smul.addr %s1164, 128
        %s1166 = scalar_lea.vmem [#allocation16], %s1165
        %p1167 = pneg %p478
        %p1168 = pneg %p475
        %p1169 = scmp.lt.s32.totalorder %s44, 1
        %s1170 = scalar_select %p1169, %s44, 1
        %s1171 = scalar_lea.vmem %s17, %s1170
        %p1172 = pneg %p504
        %p1173 = pneg %p501
        %p1174 = scmp.lt.s32.totalorder %s44, 1
        %s1175 = scalar_select %p1174, %s44, 1
        %s1176 = scalar_lea.vmem %s18, %s1175
        %p1177 = pneg %p530
        %p1178 = pneg %p527
        %p1179 = scmp.lt.s32.totalorder %s44, 1
        %s1180 = scalar_select %p1179, %s44, 1
        %s1181 = scalar_lea.vmem %s19, %s1180
        %p1182 = pneg %p556
        %p1183 = pneg %p553
        %p1184 = scmp.lt.s32.totalorder %s44, 1
        %s1185 = scalar_select %p1184, %s44, 1
        %s1186 = scalar_lea.vmem %s20, %s1185
        %p1187 = pneg %p582
        %p1188 = pneg %p579
        %p1189 = scmp.lt.s32.totalorder %s44, 1
        %s1190 = scalar_select %p1189, %s44, 1
        %s1191 = scalar_lea.vmem %s21, %s1190
        %p1192 = pneg %p608
        %p1193 = pneg %p605
        %p1194 = scmp.lt.s32.totalorder %s44, 1
        %s1195 = scalar_select %p1194, %s44, 1
        %s1196 = scalar_lea.vmem %s22, %s1195
        %p1197 = pneg %p634
        %p1198 = pneg %p631
        %p1199 = scmp.lt.s32.totalorder %s44, 1
        %s1200 = scalar_select %p1199, %s44, 1
        %s1201 = scalar_lea.vmem %s23, %s1200
        %p1202 = pneg %p660
        %p1203 = pneg %p657
        %p1204 = pneg %p686
        %p1205 = pneg %p683
        %s1206 = smul.u32 2, %s43
        %s1207 = smul.u32 2, %s43
        %p1208 = scmp.lt.s32.totalorder %s44, 1
        %s1209 = scalar_select %p1208, %s44, 1
        %s1210 = smul.addr %s1209, 3
        %s1211 = scalar_lea.vmem %s5, %s1210
        %p1212 = scmp.lt.s32.totalorder %s44, 1
        %s1213 = scalar_select %p1212, %s44, 1
        %s1214 = scalar_lea.vmem %s7, %s1213
        %p1215 = scmp.lt.s32.totalorder %s44, 1
        %s1216 = scalar_select %p1215, %s44, 1
        %s1217 = scalar_lea.vmem %s9, %s1216
        %p1218 = scmp.lt.s32.totalorder %s44, 1
        %s1219 = scalar_select %p1218, %s44, 1
        %s1220 = smul.addr %s1219, 2
        %s1221 = scalar_lea.vmem %s11, %s1220
        %p1222 = scmp.lt.s32.totalorder %s44, 1
        %s1223 = scalar_select %p1222, %s44, 1
        %s1224 = scalar_lea.vmem %s13, %s1223
        %p1225 = scmp.lt.s32.totalorder %s44, 1
        %s1226 = scalar_select %p1225, %s44, 1
        %s1227 = smul.addr %s1226, 2
        %s1228 = scalar_lea.vmem %s15, %s1227
        %p1229 = scmp.lt.s32.totalorder %s44, 1
        %s1230 = scalar_select %p1229, %s44, 1
        %s1231 = scalar_lea.vmem %s17, %s1230
        %p1232 = scmp.lt.s32.totalorder %s44, 1
        %s1233 = scalar_select %p1232, %s44, 1
        %s1234 = scalar_lea.vmem %s18, %s1233
        %p1235 = scmp.lt.s32.totalorder %s44, 1
        %s1236 = scalar_select %p1235, %s44, 1
        %s1237 = scalar_lea.vmem %s19, %s1236
        %p1238 = scmp.lt.s32.totalorder %s44, 1
        %s1239 = scalar_select %p1238, %s44, 1
        %s1240 = scalar_lea.vmem %s20, %s1239
        %p1241 = scmp.lt.s32.totalorder %s44, 1
        %s1242 = scalar_select %p1241, %s44, 1
        %s1243 = scalar_lea.vmem %s21, %s1242
        %p1244 = scmp.lt.s32.totalorder %s44, 1
        %s1245 = scalar_select %p1244, %s44, 1
        %s1246 = scalar_lea.vmem %s22, %s1245
        %p1247 = scmp.lt.s32.totalorder %s44, 1
        %s1248 = scalar_select %p1247, %s44, 1
        %s1249 = scalar_lea.vmem %s23, %s1248
        %s1250 = smul.u32 2, %s43
        %p1252 = scmp.eq.s32.totalorder %s44, 0
        // Predicated region
        $region161: #{tpu_custom_call.1} parent=115 // pred_check
          %p1253 = pneg %p1252
        $region162: #{tpu_custom_call.1} parent=115 // pred_check_branch
          %1255 = sbr.rel (%p1253) target = $region164
        $region163: #{tpu_custom_call.1} parent=115 // pred_region
          %v1256 = vld [vmem:[#allocation2] sm:$0xff]
          %v1257 = vld [vmem:[#allocation2 + $0x8] sm:$0xff]
          %v1258 = vld [vmem:[#allocation2 + $0x10] sm:$0xff]
          %v1259 = vld [vmem:[#allocation2 + $0x18] sm:$0xff]
          %1260 = vst [vmem:[#allocation17] sm:$0xff] %v1256
          %1261 = vst [vmem:[#allocation17 + $0x8] sm:$0xff] %v1257
          %1262 = vst [vmem:[#allocation17 + $0x10] sm:$0xff] %v1258
          %1263 = vst [vmem:[#allocation17 + $0x18] sm:$0xff] %v1259
        $region164: #{tpu_custom_call.1} parent=115 // pred_fallthru
          _
        %v1264 = vld [vmem:[#allocation17] sm:$0xff]
        %v1265 = vld [vmem:[#allocation17 + $0x8] sm:$0xff]
        %v1266 = vld [vmem:[#allocation17 + $0x10] sm:$0xff]
        %v1267 = vld [vmem:[#allocation17 + $0x18] sm:$0xff]
        %v1268 = vld [vmem:[#allocation5] sm:$0xf]
        %v1269 = vld [vmem:[#allocation5 + $0x4] sm:$0xf]
        %v1270 = vld [vmem:[#allocation5 + $0x8] sm:$0xf]
        %v1271 = vld [vmem:[#allocation5 + $0xc] sm:$0xf]
        %v1272 = vld [vmem:[#allocation5 + $0x10] sm:$0xf]
        %v1273 = vld [vmem:[#allocation5 + $0x14] sm:$0xf]
        %v1274 = vld [vmem:[#allocation7] sm:$0xff]
        %v1275 = vld [vmem:[#allocation7 + $0x8] sm:$0xff]
        %v1276 = vld [vmem:[#allocation8] sm:$0xff]
        %v1277 = vld [vmem:[#allocation8 + $0x8] sm:$0xff]
        %v1278 = vpack.c.bf16 %v1265, %v1264
        %v1279 = vpack.c.bf16 %v1267, %v1266
        %v1280 = vld [vmem:[%s1020] sm:$0xff]
        %v1281 = vld [vmem:[%s1020 + $0x8] sm:$0xf]
        %v1282 = vld [vmem:[%s1020 + $0xc] sm:$0xff]
        %v1283 = vld [vmem:[%s1020 + $0x14] sm:$0xf]
        %v1284 = vld [vmem:[%s1020 + $0x18] sm:$0xff]
        %v1285 = vld [vmem:[%s1020 + $0x20] sm:$0xf]
        %v1286 = vld [vmem:[%s1020 + $0x24] sm:$0xff]
        %v1287 = vld [vmem:[%s1020 + $0x2c] sm:$0xf]
        %v1288 = vld [vmem:[%s1020 + $0x30] sm:$0xff]
        %v1289 = vld [vmem:[%s1020 + $0x38] sm:$0xf]
        %v1290 = vld [vmem:[%s1020 + $0x3c] sm:$0xff]
        %v1291 = vld [vmem:[%s1020 + $0x44] sm:$0xf]
        %v1292 = vld [vmem:[%s1020 + $0x48] sm:$0xff]
        %v1293 = vld [vmem:[%s1020 + $0x50] sm:$0xf]
        %v1294 = vld [vmem:[%s1020 + $0x54] sm:$0xff]
        %v1295 = vld [vmem:[%s1020 + $0x5c] sm:$0xf]
        %v1296 = vld [vmem:[%s1020 + $0x60] sm:$0xff]
        %v1297 = vld [vmem:[%s1020 + $0x68] sm:$0xf]
        %v1298 = vld [vmem:[%s1020 + $0x6c] sm:$0xff]
        %v1299 = vld [vmem:[%s1020 + $0x74] sm:$0xf]
        %v1300 = vld [vmem:[%s1020 + $0x78] sm:$0xff]
        %v1301 = vld [vmem:[%s1020 + $0x80] sm:$0xf]
        %v1302 = vld [vmem:[%s1020 + $0x84] sm:$0xff]
        %v1303 = vld [vmem:[%s1020 + $0x8c] sm:$0xf]
        %v1304 = vld [vmem:[%s1020 + $0x90] sm:$0xff]
        %v1305 = vld [vmem:[%s1020 + $0x98] sm:$0xf]
        %v1306 = vld [vmem:[%s1020 + $0x9c] sm:$0xff]
        %v1307 = vld [vmem:[%s1020 + $0xa4] sm:$0xf]
        %v1308 = vld [vmem:[%s1020 + $0xa8] sm:$0xff]
        %v1309 = vld [vmem:[%s1020 + $0xb0] sm:$0xf]
        %v1310 = vld [vmem:[%s1020 + $0xb4] sm:$0xff]
        %v1311 = vld [vmem:[%s1020 + $0xbc] sm:$0xf]
        %v1312 = vld [vmem:[%s1211] sm:$0x7]
        %v1314 = vlaneseq
        %v1315 = vshrl.u32 %v1314, 7
        %v1316 = vsub.s32 0, %v1315
        %v1317 = vrot.slane %v1312, %v1316
        %v1318 = vlaneseq
        %v1319 = vshrl.u32 %v1318, 7
        %v1320 = vsub.s32 1, %v1319
        %v1321 = vrot.slane %v1312, %v1320
        %v1322 = vlaneseq
        %v1323 = vshrl.u32 %v1322, 7
        %v1324 = vsub.s32 2, %v1323
        %v1325 = vrot.slane %v1312, %v1324
        %v1361 = vunpack.c.l.b16 %v1280
        %v1362 = vunpack.c.h.b16 %v1280
        %v1363 = vunpack.c.l.b16 %v1281
        %v1364 = vunpack.c.l.b16 %v1282
        %v1365 = vunpack.c.h.b16 %v1282
        %v1366 = vunpack.c.l.b16 %v1283
        %v1367 = vunpack.c.l.b16 %v1284
        %v1368 = vunpack.c.h.b16 %v1284
        %v1369 = vunpack.c.l.b16 %v1285
        %v1370 = vunpack.c.l.b16 %v1286
        %v1371 = vunpack.c.h.b16 %v1286
        %v1372 = vunpack.c.l.b16 %v1287
        %v1373 = vunpack.c.l.b16 %v1288
        %v1374 = vunpack.c.h.b16 %v1288
        %v1375 = vunpack.c.l.b16 %v1289
        %v1376 = vunpack.c.l.b16 %v1290
        %v1377 = vunpack.c.h.b16 %v1290
        %v1378 = vunpack.c.l.b16 %v1291
        %v1379 = vunpack.c.l.b16 %v1292
        %v1380 = vunpack.c.h.b16 %v1292
        %v1381 = vunpack.c.l.b16 %v1293
        %v1382 = vunpack.c.l.b16 %v1294
        %v1383 = vunpack.c.h.b16 %v1294
        %v1384 = vunpack.c.l.b16 %v1295
        %v1385 = vunpack.c.l.b16 %v1296
        %v1386 = vunpack.c.h.b16 %v1296
        %v1387 = vunpack.c.l.b16 %v1297
        %v1388 = vunpack.c.l.b16 %v1298
        %v1389 = vunpack.c.h.b16 %v1298
        %v1390 = vunpack.c.l.b16 %v1299
        %v1391 = vunpack.c.l.b16 %v1300
        %v1392 = vunpack.c.h.b16 %v1300
        %v1393 = vunpack.c.l.b16 %v1301
        %v1394 = vunpack.c.l.b16 %v1302
        %v1395 = vunpack.c.h.b16 %v1302
        %v1396 = vunpack.c.l.b16 %v1303
        %v1397 = vunpack.c.l.b16 %v1304
        %v1398 = vunpack.c.h.b16 %v1304
        %v1399 = vunpack.c.l.b16 %v1305
        %v1400 = vunpack.c.l.b16 %v1306
        %v1401 = vunpack.c.h.b16 %v1306
        %v1402 = vunpack.c.l.b16 %v1307
        %v1403 = vunpack.c.l.b16 %v1308
        %v1404 = vunpack.c.h.b16 %v1308
        %v1405 = vunpack.c.l.b16 %v1309
        %v1406 = vunpack.c.l.b16 %v1310
        %v1407 = vunpack.c.h.b16 %v1310
        %v1408 = vunpack.c.l.b16 %v1311
        %v1409 = vpack.c.b16 %v1364, %v1361
        %v1410 = vpack.c.b16 %v1365, %v1362
        %v1411 = vpack.c.b16 %v1366, %v1363
        %v1412 = vpack.c.b16 %v1370, %v1367
        %v1413 = vpack.c.b16 %v1371, %v1368
        %v1414 = vpack.c.b16 %v1372, %v1369
        %v1415 = vpack.c.b16 %v1376, %v1373
        %v1416 = vpack.c.b16 %v1377, %v1374
        %v1417 = vpack.c.b16 %v1378, %v1375
        %v1418 = vpack.c.b16 %v1382, %v1379
        %v1419 = vpack.c.b16 %v1383, %v1380
        %v1420 = vpack.c.b16 %v1384, %v1381
        %v1421 = vpack.c.b16 %v1388, %v1385
        %v1422 = vpack.c.b16 %v1389, %v1386
        %v1423 = vpack.c.b16 %v1390, %v1387
        %v1424 = vpack.c.b16 %v1394, %v1391
        %v1425 = vpack.c.b16 %v1395, %v1392
        %v1426 = vpack.c.b16 %v1396, %v1393
        %v1427 = vpack.c.b16 %v1400, %v1397
        %v1428 = vpack.c.b16 %v1401, %v1398
        %v1429 = vpack.c.b16 %v1402, %v1399
        %v1430 = vpack.c.b16 %v1406, %v1403
        %v1431 = vpack.c.b16 %v1407, %v1404
        %v1432 = vpack.c.b16 %v1408, %v1405
        %1457 = vmatprep.subr.bf16.mxu0 %v1410
        %1458 = vmatpush1.bf16.msra.mxu0 %v1409
        %1459 = vmatprep.subr.bf16.mxu0 %v1413
        %1460 = vmatpush1.bf16.msra.mxu0 %v1412
        %1461 = vmatprep.subr.bf16.mxu0 %v1416
        %1462 = vmatpush1.bf16.msra.mxu0 %v1415
        %1463 = vmatprep.subr.bf16.mxu0 %v1419
        %1464 = vmatpush1.bf16.msra.mxu0 %v1418
        %1465 = vmatprep.subr.bf16.mxu0 %v1422
        %1466 = vmatpush1.bf16.msra.mxu0 %v1421
        %1467 = vmatprep.subr.bf16.mxu0 %v1425
        %1468 = vmatpush1.bf16.msra.mxu0 %v1424
        %1469 = vmatprep.subr.bf16.mxu0 %v1428
        %1470 = vmatpush1.bf16.msra.mxu0 %v1427
        %1471 = vmatprep.subr.bf16.mxu0 %v1431
        %1472 = vmatpush1.bf16.msra.mxu0 %v1430
        %1473 = vmatprep.subr.bf16.mxu0 0
        %1474 = vmatpush1.bf16.msra.mxu0 0
        %1475 = vmatprep.subr.bf16.mxu0 0
        %1476 = vmatpush1.bf16.msra.mxu0 0
        %1477 = vmatprep.subr.bf16.mxu0 0
        %1478 = vmatpush1.bf16.msra.mxu0 0
        %1479 = vmatprep.subr.bf16.mxu0 0
        %1480 = vmatpush1.bf16.msra.mxu0 0
        %1481 = vmatprep.subr.bf16.mxu0 0
        %1482 = vmatpush1.bf16.msra.mxu0 0
        %1483 = vmatprep.subr.bf16.mxu0 0
        %1484 = vmatpush1.bf16.msra.mxu0 0
        %1485 = vmatprep.subr.bf16.mxu0 0
        %1486 = vmatpush1.bf16.msra.mxu0 0
        %1487 = vmatprep.subr.bf16.mxu0 0
        %1488 = vmatpush1.bf16.msra.mxu0 0
        %1489 = vmatprep.mubr.bf16.mxu0 0
        %1490 = vmatmul.mubr.bf16.gmra.mrb[0].mxu0 %v1278
        %v1491 = vpop.f32.mrb[0].mxu0
        %v1492 = vadd.f32 %v1317, %v1491
        %v1493 = vpop.f32.mrb[0].mxu0
        %v1494 = vadd.f32 %v1321, %v1493
        %v1495 = vpop.f32.mrb[0].mxu0
        %v1496 = vadd.f32 %v1317, %v1495
        %v1497 = vpop.f32.mrb[0].mxu0
        %v1498 = vadd.f32 %v1321, %v1497
        %1499 = vmatprep.mubr.bf16.mxu0 0
        %1500 = vmatmul.mubr.bf16.gmra.mrb[0].mxu0 %v1279
        %v1501 = vpop.f32.mrb[0].mxu0
        %v1502 = vadd.f32 %v1317, %v1501
        %v1503 = vpop.f32.mrb[0].mxu0
        %v1504 = vadd.f32 %v1321, %v1503
        %v1505 = vpop.f32.mrb[0].mxu0
        %v1506 = vadd.f32 %v1317, %v1505
        %v1507 = vpop.f32.mrb[0].mxu0
        %v1508 = vadd.f32 %v1321, %v1507
        %1509 = vdwg.mxu0
        %1510 = vmatprep.subr.bf16.mxu0 0
        %1511 = vmatpush1.bf16.msra.mxu0 %v1411
        %1512 = vmatprep.subr.bf16.mxu0 0
        %1513 = vmatpush1.bf16.msra.mxu0 %v1414
        %1514 = vmatprep.subr.bf16.mxu0 0
        %1515 = vmatpush1.bf16.msra.mxu0 %v1417
        %1516 = vmatprep.subr.bf16.mxu0 0
        %1517 = vmatpush1.bf16.msra.mxu0 %v1420
        %1518 = vmatprep.subr.bf16.mxu0 0
        %1519 = vmatpush1.bf16.msra.mxu0 %v1423
        %1520 = vmatprep.subr.bf16.mxu0 0
        %1521 = vmatpush1.bf16.msra.mxu0 %v1426
        %1522 = vmatprep.subr.bf16.mxu0 0
        %1523 = vmatpush1.bf16.msra.mxu0 %v1429
        %1524 = vmatprep.subr.bf16.mxu0 0
        %1525 = vmatpush1.bf16.msra.mxu0 %v1432
        %1526 = vmatprep.subr.bf16.mxu0 0
        %1527 = vmatpush1.bf16.msra.mxu0 0
        %1528 = vmatprep.subr.bf16.mxu0 0
        %1529 = vmatpush1.bf16.msra.mxu0 0
        %1530 = vmatprep.subr.bf16.mxu0 0
        %1531 = vmatpush1.bf16.msra.mxu0 0
        %1532 = vmatprep.subr.bf16.mxu0 0
        %1533 = vmatpush1.bf16.msra.mxu0 0
        %1534 = vmatprep.subr.bf16.mxu0 0
        %1535 = vmatpush1.bf16.msra.mxu0 0
        %1536 = vmatprep.subr.bf16.mxu0 0
        %1537 = vmatpush1.bf16.msra.mxu0 0
        %1538 = vmatprep.subr.bf16.mxu0 0
        %1539 = vmatpush1.bf16.msra.mxu0 0
        %1540 = vmatprep.subr.bf16.mxu0 0
        %1541 = vmatpush1.bf16.msra.mxu0 0
        %1542 = vmatprep.mubr.bf16.mxu0 0
        %1543 = vmatmul.mubr.bf16.gmra.mrb[0].mxu0 %v1278
        %v1544 = vpop.f32.mrb[0].mxu0
        %v1545 = vadd.f32 %v1325, %v1544
        %v1546 = vpop.f32.mrb[0].mxu0
        %v1547 = vpop.f32.mrb[0].mxu0
        %v1548 = vadd.f32 %v1325, %v1547
        %v1549 = vpop.f32.mrb[0].mxu0
        %1550 = vmatprep.mubr.bf16.mxu0 0
        %1551 = vmatmul.mubr.bf16.gmra.mrb[0].mxu0 %v1279
        %v1552 = vpop.f32.mrb[0].mxu0
        %v1553 = vadd.f32 %v1325, %v1552
        %v1554 = vpop.f32.mrb[0].mxu0
        %v1555 = vpop.f32.mrb[0].mxu0
        %v1556 = vadd.f32 %v1325, %v1555
        %v1557 = vpop.f32.mrb[0].mxu0
        %1558 = vdwg.mxu0
        %1563 = vrot.lane.b32.xlu0 %v1492, 96
        %v1564 = vpop.permute.xlu0 %1563
        %1565 = vrot.lane.b32.xlu0 %v1496, 96
        %v1566 = vpop.permute.xlu0 %1565
        %1567 = vrot.lane.b32.xlu0 %v1502, 96
        %v1568 = vpop.permute.xlu0 %1567
        %1569 = vrot.lane.b32.xlu0 %v1506, 96
        %v1570 = vpop.permute.xlu0 %1569
        %1575 = vrot.lane.b32.xlu0 %v1492, 64
        %v1576 = vpop.permute.xlu0 %1575
        %1577 = vrot.lane.b32.xlu0 %v1496, 64
        %v1578 = vpop.permute.xlu0 %1577
        %1579 = vrot.lane.b32.xlu0 %v1502, 64
        %v1580 = vpop.permute.xlu0 %1579
        %1581 = vrot.lane.b32.xlu0 %v1506, 64
        %v1582 = vpop.permute.xlu0 %1581
        %1587 = vrot.lane.b32.xlu0 %v1492, 32
        %v1588 = vpop.permute.xlu0 %1587
        %1589 = vrot.lane.b32.xlu0 %v1496, 32
        %v1590 = vpop.permute.xlu0 %1589
        %1591 = vrot.lane.b32.xlu0 %v1502, 32
        %v1592 = vpop.permute.xlu0 %1591
        %1593 = vrot.lane.b32.xlu0 %v1506, 32
        %v1594 = vpop.permute.xlu0 %1593
        %v1599 = vcombine.low %v1492, %v1576
        %v1600 = vcombine.high %v1492, %v1576
        %v1602 = vunpack.c.l.s4 1983009808
        %v1603 = vunpack.c.0.s8 %v1602
        %v1604 = vlaneseq
        %v1605 = vshrl.u32 %v1604, 7
        %v1606 = vsub.s32 %v1603, %v1605
        %v1607 = vrot.slane %v1599, %v1606
        %v1609 = vunpack.c.l.s4 1983009808
        %v1610 = vunpack.c.0.s8 %v1609
        %v1611 = vlaneseq
        %v1612 = vshrl.u32 %v1611, 7
        %v1613 = vsub.s32 %v1610, %v1612
        %v1614 = vrot.slane %v1600, %v1613
        %v1615 = vcombine.low %v1564, %v1588
        %v1616 = vcombine.high %v1564, %v1588
        %v1618 = vunpack.c.l.s4 1983009808
        %v1619 = vunpack.c.0.s8 %v1618
        %v1620 = vlaneseq
        %v1621 = vshrl.u32 %v1620, 7
        %v1622 = vsub.s32 %v1619, %v1621
        %v1623 = vrot.slane %v1615, %v1622
        %v1625 = vunpack.c.l.s4 1983009808
        %v1626 = vunpack.c.0.s8 %v1625
        %v1627 = vlaneseq
        %v1628 = vshrl.u32 %v1627, 7
        %v1629 = vsub.s32 %v1626, %v1628
        %v1630 = vrot.slane %v1616, %v1629
        %v1631 = vcombine.low %v1607, %v1623
        %v1632 = vcombine.high %v1607, %v1623
        %v1634 = vunpack.c.l.s4 1934713408
        %v1635 = vunpack.c.0.s8 %v1634
        %v1636 = vlaneseq
        %v1637 = vshrl.u32 %v1636, 7
        %v1638 = vsub.s32 %v1635, %v1637
        %v1639 = vrot.slane %v1631, %v1638
        %v1641 = vunpack.c.l.s4 1934713408
        %v1642 = vunpack.c.0.s8 %v1641
        %v1643 = vlaneseq
        %v1644 = vshrl.u32 %v1643, 7
        %v1645 = vsub.s32 %v1642, %v1644
        %v1646 = vrot.slane %v1632, %v1645
        %v1647 = vcombine.low %v1614, %v1630
        %v1648 = vcombine.high %v1614, %v1630
        %v1650 = vunpack.c.l.s4 1934713408
        %v1651 = vunpack.c.0.s8 %v1650
        %v1652 = vlaneseq
        %v1653 = vshrl.u32 %v1652, 7
        %v1654 = vsub.s32 %v1651, %v1653
        %v1655 = vrot.slane %v1647, %v1654
        %v1657 = vunpack.c.l.s4 1934713408
        %v1658 = vunpack.c.0.s8 %v1657
        %v1659 = vlaneseq
        %v1660 = vshrl.u32 %v1659, 7
        %v1661 = vsub.s32 %v1658, %v1660
        %v1662 = vrot.slane %v1648, %v1661
        %v1663 = vcombine.high %v1639, 0.0
        %v1664 = vcombine.high %v1646, 0.0
        %v1665 = vcombine.high %v1655, 0.0
        %v1666 = vcombine.high %v1662, 0.0
        %v1667 = vcombine.low %v1496, %v1578
        %v1668 = vcombine.high %v1496, %v1578
        %v1670 = vunpack.c.l.s4 1983009808
        %v1671 = vunpack.c.0.s8 %v1670
        %v1672 = vlaneseq
        %v1673 = vshrl.u32 %v1672, 7
        %v1674 = vsub.s32 %v1671, %v1673
        %v1675 = vrot.slane %v1667, %v1674
        %v1677 = vunpack.c.l.s4 1983009808
        %v1678 = vunpack.c.0.s8 %v1677
        %v1679 = vlaneseq
        %v1680 = vshrl.u32 %v1679, 7
        %v1681 = vsub.s32 %v1678, %v1680
        %v1682 = vrot.slane %v1668, %v1681
        %v1683 = vcombine.low %v1566, %v1590
        %v1684 = vcombine.high %v1566, %v1590
        %v1686 = vunpack.c.l.s4 1983009808
        %v1687 = vunpack.c.0.s8 %v1686
        %v1688 = vlaneseq
        %v1689 = vshrl.u32 %v1688, 7
        %v1690 = vsub.s32 %v1687, %v1689
        %v1691 = vrot.slane %v1683, %v1690
        %v1693 = vunpack.c.l.s4 1983009808
        %v1694 = vunpack.c.0.s8 %v1693
        %v1695 = vlaneseq
        %v1696 = vshrl.u32 %v1695, 7
        %v1697 = vsub.s32 %v1694, %v1696
        %v1698 = vrot.slane %v1684, %v1697
        %v1699 = vcombine.low %v1675, %v1691
        %v1700 = vcombine.high %v1675, %v1691
        %v1702 = vunpack.c.l.s4 1934713408
        %v1703 = vunpack.c.0.s8 %v1702
        %v1704 = vlaneseq
        %v1705 = vshrl.u32 %v1704, 7
        %v1706 = vsub.s32 %v1703, %v1705
        %v1707 = vrot.slane %v1699, %v1706
        %v1709 = vunpack.c.l.s4 1934713408
        %v1710 = vunpack.c.0.s8 %v1709
        %v1711 = vlaneseq
        %v1712 = vshrl.u32 %v1711, 7
        %v1713 = vsub.s32 %v1710, %v1712
        %v1714 = vrot.slane %v1700, %v1713
        %v1715 = vcombine.low %v1682, %v1698
        %v1716 = vcombine.high %v1682, %v1698
        %v1718 = vunpack.c.l.s4 1934713408
        %v1719 = vunpack.c.0.s8 %v1718
        %v1720 = vlaneseq
        %v1721 = vshrl.u32 %v1720, 7
        %v1722 = vsub.s32 %v1719, %v1721
        %v1723 = vrot.slane %v1715, %v1722
        %v1725 = vunpack.c.l.s4 1934713408
        %v1726 = vunpack.c.0.s8 %v1725
        %v1727 = vlaneseq
        %v1728 = vshrl.u32 %v1727, 7
        %v1729 = vsub.s32 %v1726, %v1728
        %v1730 = vrot.slane %v1716, %v1729
        %v1731 = vcombine.high %v1707, 0.0
        %v1732 = vcombine.high %v1714, 0.0
        %v1733 = vcombine.high %v1723, 0.0
        %v1734 = vcombine.high %v1730, 0.0
        %v1735 = vcombine.low %v1502, %v1580
        %v1736 = vcombine.high %v1502, %v1580
        %v1738 = vunpack.c.l.s4 1983009808
        %v1739 = vunpack.c.0.s8 %v1738
        %v1740 = vlaneseq
        %v1741 = vshrl.u32 %v1740, 7
        %v1742 = vsub.s32 %v1739, %v1741
        %v1743 = vrot.slane %v1735, %v1742
        %v1745 = vunpack.c.l.s4 1983009808
        %v1746 = vunpack.c.0.s8 %v1745
        %v1747 = vlaneseq
        %v1748 = vshrl.u32 %v1747, 7
        %v1749 = vsub.s32 %v1746, %v1748
        %v1750 = vrot.slane %v1736, %v1749
        %v1751 = vcombine.low %v1568, %v1592
        %v1752 = vcombine.high %v1568, %v1592
        %v1754 = vunpack.c.l.s4 1983009808
        %v1755 = vunpack.c.0.s8 %v1754
        %v1756 = vlaneseq
        %v1757 = vshrl.u32 %v1756, 7
        %v1758 = vsub.s32 %v1755, %v1757
        %v1759 = vrot.slane %v1751, %v1758
        %v1761 = vunpack.c.l.s4 1983009808
        %v1762 = vunpack.c.0.s8 %v1761
        %v1763 = vlaneseq
        %v1764 = vshrl.u32 %v1763, 7
        %v1765 = vsub.s32 %v1762, %v1764
        %v1766 = vrot.slane %v1752, %v1765
        %v1767 = vcombine.low %v1743, %v1759
        %v1768 = vcombine.high %v1743, %v1759
        %v1770 = vunpack.c.l.s4 1934713408
        %v1771 = vunpack.c.0.s8 %v1770
        %v1772 = vlaneseq
        %v1773 = vshrl.u32 %v1772, 7
        %v1774 = vsub.s32 %v1771, %v1773
        %v1775 = vrot.slane %v1767, %v1774
        %v1777 = vunpack.c.l.s4 1934713408
        %v1778 = vunpack.c.0.s8 %v1777
        %v1779 = vlaneseq
        %v1780 = vshrl.u32 %v1779, 7
        %v1781 = vsub.s32 %v1778, %v1780
        %v1782 = vrot.slane %v1768, %v1781
        %v1783 = vcombine.low %v1750, %v1766
        %v1784 = vcombine.high %v1750, %v1766
        %v1786 = vunpack.c.l.s4 1934713408
        %v1787 = vunpack.c.0.s8 %v1786
        %v1788 = vlaneseq
        %v1789 = vshrl.u32 %v1788, 7
        %v1790 = vsub.s32 %v1787, %v1789
        %v1791 = vrot.slane %v1783, %v1790
        %v1793 = vunpack.c.l.s4 1934713408
        %v1794 = vunpack.c.0.s8 %v1793
        %v1795 = vlaneseq
        %v1796 = vshrl.u32 %v1795, 7
        %v1797 = vsub.s32 %v1794, %v1796
        %v1798 = vrot.slane %v1784, %v1797
        %v1799 = vcombine.high %v1775, 0.0
        %v1800 = vcombine.high %v1782, 0.0
        %v1801 = vcombine.high %v1791, 0.0
        %v1802 = vcombine.high %v1798, 0.0
        %v1803 = vcombine.low %v1506, %v1582
        %v1804 = vcombine.high %v1506, %v1582
        %v1806 = vunpack.c.l.s4 1983009808
        %v1807 = vunpack.c.0.s8 %v1806
        %v1808 = vlaneseq
        %v1809 = vshrl.u32 %v1808, 7
        %v1810 = vsub.s32 %v1807, %v1809
        %v1811 = vrot.slane %v1803, %v1810
        %v1813 = vunpack.c.l.s4 1983009808
        %v1814 = vunpack.c.0.s8 %v1813
        %v1815 = vlaneseq
        %v1816 = vshrl.u32 %v1815, 7
        %v1817 = vsub.s32 %v1814, %v1816
        %v1818 = vrot.slane %v1804, %v1817
        %v1819 = vcombine.low %v1570, %v1594
        %v1820 = vcombine.high %v1570, %v1594
        %v1822 = vunpack.c.l.s4 1983009808
        %v1823 = vunpack.c.0.s8 %v1822
        %v1824 = vlaneseq
        %v1825 = vshrl.u32 %v1824, 7
        %v1826 = vsub.s32 %v1823, %v1825
        %v1827 = vrot.slane %v1819, %v1826
        %v1829 = vunpack.c.l.s4 1983009808
        %v1830 = vunpack.c.0.s8 %v1829
        %v1831 = vlaneseq
        %v1832 = vshrl.u32 %v1831, 7
        %v1833 = vsub.s32 %v1830, %v1832
        %v1834 = vrot.slane %v1820, %v1833
        %v1835 = vcombine.low %v1811, %v1827
        %v1836 = vcombine.high %v1811, %v1827
        %v1838 = vunpack.c.l.s4 1934713408
        %v1839 = vunpack.c.0.s8 %v1838
        %v1840 = vlaneseq
        %v1841 = vshrl.u32 %v1840, 7
        %v1842 = vsub.s32 %v1839, %v1841
        %v1843 = vrot.slane %v1835, %v1842
        %v1845 = vunpack.c.l.s4 1934713408
        %v1846 = vunpack.c.0.s8 %v1845
        %v1847 = vlaneseq
        %v1848 = vshrl.u32 %v1847, 7
        %v1849 = vsub.s32 %v1846, %v1848
        %v1850 = vrot.slane %v1836, %v1849
        %v1851 = vcombine.low %v1818, %v1834
        %v1852 = vcombine.high %v1818, %v1834
        %v1854 = vunpack.c.l.s4 1934713408
        %v1855 = vunpack.c.0.s8 %v1854
        %v1856 = vlaneseq
        %v1857 = vshrl.u32 %v1856, 7
        %v1858 = vsub.s32 %v1855, %v1857
        %v1859 = vrot.slane %v1851, %v1858
        %v1861 = vunpack.c.l.s4 1934713408
        %v1862 = vunpack.c.0.s8 %v1861
        %v1863 = vlaneseq
        %v1864 = vshrl.u32 %v1863, 7
        %v1865 = vsub.s32 %v1862, %v1864
        %v1866 = vrot.slane %v1852, %v1865
        %v1867 = vcombine.high %v1843, 0.0
        %v1868 = vcombine.high %v1850, 0.0
        %v1869 = vcombine.high %v1859, 0.0
        %v1870 = vcombine.high %v1866, 0.0
        %v1871 = vcombine.low %v1639, %v1646
        %v1873 = vunpack.c.l.s4 1983009808
        %v1874 = vunpack.c.0.s8 %v1873
        %v1875 = vlaneseq
        %v1876 = vshrl.u32 %v1875, 7
        %v1877 = vsub.s32 %v1874, %v1876
        %v1878 = vrot.slane %v1871, %v1877
        %v1879 = vcombine.low %v1663, %v1664
        %v1881 = vunpack.c.l.s4 1983009808
        %v1882 = vunpack.c.0.s8 %v1881
        %v1883 = vlaneseq
        %v1884 = vshrl.u32 %v1883, 7
        %v1885 = vsub.s32 %v1882, %v1884
        %v1886 = vrot.slane %v1879, %v1885
        %v1887 = vcombine.low %v1655, %v1662
        %v1889 = vunpack.c.l.s4 1983009808
        %v1890 = vunpack.c.0.s8 %v1889
        %v1891 = vlaneseq
        %v1892 = vshrl.u32 %v1891, 7
        %v1893 = vsub.s32 %v1890, %v1892
        %v1894 = vrot.slane %v1887, %v1893
        %v1895 = vcombine.low %v1665, %v1666
        %v1897 = vunpack.c.l.s4 1983009808
        %v1898 = vunpack.c.0.s8 %v1897
        %v1899 = vlaneseq
        %v1900 = vshrl.u32 %v1899, 7
        %v1901 = vsub.s32 %v1898, %v1900
        %v1902 = vrot.slane %v1895, %v1901
        %v1903 = vcombine.low %v1878, %v1886
        %v1904 = vcombine.high %v1878, %v1886
        %v1906 = vunpack.c.l.s4 1934713408
        %v1907 = vunpack.c.0.s8 %v1906
        %v1908 = vlaneseq
        %v1909 = vshrl.u32 %v1908, 7
        %v1910 = vsub.s32 %v1907, %v1909
        %v1911 = vrot.slane %v1903, %v1910
        %v1913 = vunpack.c.l.s4 1934713408
        %v1914 = vunpack.c.0.s8 %v1913
        %v1915 = vlaneseq
        %v1916 = vshrl.u32 %v1915, 7
        %v1917 = vsub.s32 %v1914, %v1916
        %v1918 = vrot.slane %v1904, %v1917
        %v1919 = vcombine.low %v1894, %v1902
        %v1920 = vcombine.high %v1894, %v1902
        %v1922 = vunpack.c.l.s4 1934713408
        %v1923 = vunpack.c.0.s8 %v1922
        %v1924 = vlaneseq
        %v1925 = vshrl.u32 %v1924, 7
        %v1926 = vsub.s32 %v1923, %v1925
        %v1927 = vrot.slane %v1919, %v1926
        %v1929 = vunpack.c.l.s4 1934713408
        %v1930 = vunpack.c.0.s8 %v1929
        %v1931 = vlaneseq
        %v1932 = vshrl.u32 %v1931, 7
        %v1933 = vsub.s32 %v1930, %v1932
        %v1934 = vrot.slane %v1920, %v1933
        %v1935 = vcombine.low %v1911, %v1927
        %v1936 = vcombine.high %v1911, %v1927
        %v1937 = vcombine.low %v1918, %v1934
        %v1938 = vcombine.high %v1918, %v1934
        %v1939 = vcombine.low %v1707, %v1714
        %v1941 = vunpack.c.l.s4 1983009808
        %v1942 = vunpack.c.0.s8 %v1941
        %v1943 = vlaneseq
        %v1944 = vshrl.u32 %v1943, 7
        %v1945 = vsub.s32 %v1942, %v1944
        %v1946 = vrot.slane %v1939, %v1945
        %v1947 = vcombine.low %v1731, %v1732
        %v1949 = vunpack.c.l.s4 1983009808
        %v1950 = vunpack.c.0.s8 %v1949
        %v1951 = vlaneseq
        %v1952 = vshrl.u32 %v1951, 7
        %v1953 = vsub.s32 %v1950, %v1952
        %v1954 = vrot.slane %v1947, %v1953
        %v1955 = vcombine.low %v1723, %v1730
        %v1957 = vunpack.c.l.s4 1983009808
        %v1958 = vunpack.c.0.s8 %v1957
        %v1959 = vlaneseq
        %v1960 = vshrl.u32 %v1959, 7
        %v1961 = vsub.s32 %v1958, %v1960
        %v1962 = vrot.slane %v1955, %v1961
        %v1963 = vcombine.low %v1733, %v1734
        %v1965 = vunpack.c.l.s4 1983009808
        %v1966 = vunpack.c.0.s8 %v1965
        %v1967 = vlaneseq
        %v1968 = vshrl.u32 %v1967, 7
        %v1969 = vsub.s32 %v1966, %v1968
        %v1970 = vrot.slane %v1963, %v1969
        %v1971 = vcombine.low %v1946, %v1954
        %v1972 = vcombine.high %v1946, %v1954
        %v1974 = vunpack.c.l.s4 1934713408
        %v1975 = vunpack.c.0.s8 %v1974
        %v1976 = vlaneseq
        %v1977 = vshrl.u32 %v1976, 7
        %v1978 = vsub.s32 %v1975, %v1977
        %v1979 = vrot.slane %v1971, %v1978
        %v1981 = vunpack.c.l.s4 1934713408
        %v1982 = vunpack.c.0.s8 %v1981
        %v1983 = vlaneseq
        %v1984 = vshrl.u32 %v1983, 7
        %v1985 = vsub.s32 %v1982, %v1984
        %v1986 = vrot.slane %v1972, %v1985
        %v1987 = vcombine.low %v1962, %v1970
        %v1988 = vcombine.high %v1962, %v1970
        %v1990 = vunpack.c.l.s4 1934713408
        %v1991 = vunpack.c.0.s8 %v1990
        %v1992 = vlaneseq
        %v1993 = vshrl.u32 %v1992, 7
        %v1994 = vsub.s32 %v1991, %v1993
        %v1995 = vrot.slane %v1987, %v1994
        %v1997 = vunpack.c.l.s4 1934713408
        %v1998 = vunpack.c.0.s8 %v1997
        %v1999 = vlaneseq
        %v2000 = vshrl.u32 %v1999, 7
        %v2001 = vsub.s32 %v1998, %v2000
        %v2002 = vrot.slane %v1988, %v2001
        %v2003 = vcombine.low %v1979, %v1995
        %v2004 = vcombine.high %v1979, %v1995
        %v2005 = vcombine.low %v1986, %v2002
        %v2006 = vcombine.high %v1986, %v2002
        %v2007 = vcombine.low %v1775, %v1782
        %v2009 = vunpack.c.l.s4 1983009808
        %v2010 = vunpack.c.0.s8 %v2009
        %v2011 = vlaneseq
        %v2012 = vshrl.u32 %v2011, 7
        %v2013 = vsub.s32 %v2010, %v2012
        %v2014 = vrot.slane %v2007, %v2013
        %v2015 = vcombine.low %v1799, %v1800
        %v2017 = vunpack.c.l.s4 1983009808
        %v2018 = vunpack.c.0.s8 %v2017
        %v2019 = vlaneseq
        %v2020 = vshrl.u32 %v2019, 7
        %v2021 = vsub.s32 %v2018, %v2020
        %v2022 = vrot.slane %v2015, %v2021
        %v2023 = vcombine.low %v1791, %v1798
        %v2025 = vunpack.c.l.s4 1983009808
        %v2026 = vunpack.c.0.s8 %v2025
        %v2027 = vlaneseq
        %v2028 = vshrl.u32 %v2027, 7
        %v2029 = vsub.s32 %v2026, %v2028
        %v2030 = vrot.slane %v2023, %v2029
        %v2031 = vcombine.low %v1801, %v1802
        %v2033 = vunpack.c.l.s4 1983009808
        %v2034 = vunpack.c.0.s8 %v2033
        %v2035 = vlaneseq
        %v2036 = vshrl.u32 %v2035, 7
        %v2037 = vsub.s32 %v2034, %v2036
        %v2038 = vrot.slane %v2031, %v2037
        %v2039 = vcombine.low %v2014, %v2022
        %v2040 = vcombine.high %v2014, %v2022
        %v2042 = vunpack.c.l.s4 1934713408
        %v2043 = vunpack.c.0.s8 %v2042
        %v2044 = vlaneseq
        %v2045 = vshrl.u32 %v2044, 7
        %v2046 = vsub.s32 %v2043, %v2045
        %v2047 = vrot.slane %v2039, %v2046
        %v2049 = vunpack.c.l.s4 1934713408
        %v2050 = vunpack.c.0.s8 %v2049
        %v2051 = vlaneseq
        %v2052 = vshrl.u32 %v2051, 7
        %v2053 = vsub.s32 %v2050, %v2052
        %v2054 = vrot.slane %v2040, %v2053
        %v2055 = vcombine.low %v2030, %v2038
        %v2056 = vcombine.high %v2030, %v2038
        %v2058 = vunpack.c.l.s4 1934713408
        %v2059 = vunpack.c.0.s8 %v2058
        %v2060 = vlaneseq
        %v2061 = vshrl.u32 %v2060, 7
        %v2062 = vsub.s32 %v2059, %v2061
        %v2063 = vrot.slane %v2055, %v2062
        %v2065 = vunpack.c.l.s4 1934713408
        %v2066 = vunpack.c.0.s8 %v2065
        %v2067 = vlaneseq
        %v2068 = vshrl.u32 %v2067, 7
        %v2069 = vsub.s32 %v2066, %v2068
        %v2070 = vrot.slane %v2056, %v2069
        %v2071 = vcombine.low %v2047, %v2063
        %v2072 = vcombine.high %v2047, %v2063
        %v2073 = vcombine.low %v2054, %v2070
        %v2074 = vcombine.high %v2054, %v2070
        %v2075 = vcombine.low %v1843, %v1850
        %v2077 = vunpack.c.l.s4 1983009808
        %v2078 = vunpack.c.0.s8 %v2077
        %v2079 = vlaneseq
        %v2080 = vshrl.u32 %v2079, 7
        %v2081 = vsub.s32 %v2078, %v2080
        %v2082 = vrot.slane %v2075, %v2081
        %v2083 = vcombine.low %v1867, %v1868
        %v2085 = vunpack.c.l.s4 1983009808
        %v2086 = vunpack.c.0.s8 %v2085
        %v2087 = vlaneseq
        %v2088 = vshrl.u32 %v2087, 7
        %v2089 = vsub.s32 %v2086, %v2088
        %v2090 = vrot.slane %v2083, %v2089
        %v2091 = vcombine.low %v1859, %v1866
        %v2093 = vunpack.c.l.s4 1983009808
        %v2094 = vunpack.c.0.s8 %v2093
        %v2095 = vlaneseq
        %v2096 = vshrl.u32 %v2095, 7
        %v2097 = vsub.s32 %v2094, %v2096
        %v2098 = vrot.slane %v2091, %v2097
        %v2099 = vcombine.low %v1869, %v1870
        %v2101 = vunpack.c.l.s4 1983009808
        %v2102 = vunpack.c.0.s8 %v2101
        %v2103 = vlaneseq
        %v2104 = vshrl.u32 %v2103, 7
        %v2105 = vsub.s32 %v2102, %v2104
        %v2106 = vrot.slane %v2099, %v2105
        %v2107 = vcombine.low %v2082, %v2090
        %v2108 = vcombine.high %v2082, %v2090
        %v2110 = vunpack.c.l.s4 1934713408
        %v2111 = vunpack.c.0.s8 %v2110
        %v2112 = vlaneseq
        %v2113 = vshrl.u32 %v2112, 7
        %v2114 = vsub.s32 %v2111, %v2113
        %v2115 = vrot.slane %v2107, %v2114
        %v2117 = vunpack.c.l.s4 1934713408
        %v2118 = vunpack.c.0.s8 %v2117
        %v2119 = vlaneseq
        %v2120 = vshrl.u32 %v2119, 7
        %v2121 = vsub.s32 %v2118, %v2120
        %v2122 = vrot.slane %v2108, %v2121
        %v2123 = vcombine.low %v2098, %v2106
        %v2124 = vcombine.high %v2098, %v2106
        %v2126 = vunpack.c.l.s4 1934713408
        %v2127 = vunpack.c.0.s8 %v2126
        %v2128 = vlaneseq
        %v2129 = vshrl.u32 %v2128, 7
        %v2130 = vsub.s32 %v2127, %v2129
        %v2131 = vrot.slane %v2123, %v2130
        %v2133 = vunpack.c.l.s4 1934713408
        %v2134 = vunpack.c.0.s8 %v2133
        %v2135 = vlaneseq
        %v2136 = vshrl.u32 %v2135, 7
        %v2137 = vsub.s32 %v2134, %v2136
        %v2138 = vrot.slane %v2124, %v2137
        %v2139 = vcombine.low %v2115, %v2131
        %v2140 = vcombine.high %v2115, %v2131
        %v2141 = vcombine.low %v2122, %v2138
        %v2142 = vcombine.high %v2122, %v2138
        %v2143 = vpack.c.bf16 %v2003, %v1935
        %v2144 = vpack.c.bf16 %v2004, %v1936
        %v2145 = vpack.c.bf16 %v2005, %v1937
        %v2146 = vpack.c.bf16 %v2006, %v1938
        %v2147 = vpack.c.bf16 %v2139, %v2071
        %v2148 = vpack.c.bf16 %v2140, %v2072
        %v2149 = vpack.c.bf16 %v2141, %v2073
        %v2150 = vpack.c.bf16 %v2142, %v2074
        %2155 = vrot.lane.b32.xlu0 %v1494, 96
        %v2156 = vpop.permute.xlu0 %2155
        %2157 = vrot.lane.b32.xlu0 %v1498, 96
        %v2158 = vpop.permute.xlu0 %2157
        %2159 = vrot.lane.b32.xlu0 %v1504, 96
        %v2160 = vpop.permute.xlu0 %2159
        %2161 = vrot.lane.b32.xlu0 %v1508, 96
        %v2162 = vpop.permute.xlu0 %2161
        %2167 = vrot.lane.b32.xlu0 %v1494, 64
        %v2168 = vpop.permute.xlu0 %2167
        %2169 = vrot.lane.b32.xlu0 %v1498, 64
        %v2170 = vpop.permute.xlu0 %2169
        %2171 = vrot.lane.b32.xlu0 %v1504, 64
        %v2172 = vpop.permute.xlu0 %2171
        %2173 = vrot.lane.b32.xlu0 %v1508, 64
        %v2174 = vpop.permute.xlu0 %2173
        %2179 = vrot.lane.b32.xlu0 %v1494, 32
        %v2180 = vpop.permute.xlu0 %2179
        %2181 = vrot.lane.b32.xlu0 %v1498, 32
        %v2182 = vpop.permute.xlu0 %2181
        %2183 = vrot.lane.b32.xlu0 %v1504, 32
        %v2184 = vpop.permute.xlu0 %2183
        %2185 = vrot.lane.b32.xlu0 %v1508, 32
        %v2186 = vpop.permute.xlu0 %2185
        %v2191 = vcombine.low %v1494, %v2168
        %v2192 = vcombine.high %v1494, %v2168
        %v2194 = vunpack.c.l.s4 1983009808
        %v2195 = vunpack.c.0.s8 %v2194
        %v2196 = vlaneseq
        %v2197 = vshrl.u32 %v2196, 7
        %v2198 = vsub.s32 %v2195, %v2197
        %v2199 = vrot.slane %v2191, %v2198
        %v2201 = vunpack.c.l.s4 1983009808
        %v2202 = vunpack.c.0.s8 %v2201
        %v2203 = vlaneseq
        %v2204 = vshrl.u32 %v2203, 7
        %v2205 = vsub.s32 %v2202, %v2204
        %v2206 = vrot.slane %v2192, %v2205
        %v2207 = vcombine.low %v2156, %v2180
        %v2208 = vcombine.high %v2156, %v2180
        %v2210 = vunpack.c.l.s4 1983009808
        %v2211 = vunpack.c.0.s8 %v2210
        %v2212 = vlaneseq
        %v2213 = vshrl.u32 %v2212, 7
        %v2214 = vsub.s32 %v2211, %v2213
        %v2215 = vrot.slane %v2207, %v2214
        %v2217 = vunpack.c.l.s4 1983009808
        %v2218 = vunpack.c.0.s8 %v2217
        %v2219 = vlaneseq
        %v2220 = vshrl.u32 %v2219, 7
        %v2221 = vsub.s32 %v2218, %v2220
        %v2222 = vrot.slane %v2208, %v2221
        %v2223 = vcombine.low %v2199, %v2215
        %v2224 = vcombine.high %v2199, %v2215
        %v2226 = vunpack.c.l.s4 1934713408
        %v2227 = vunpack.c.0.s8 %v2226
        %v2228 = vlaneseq
        %v2229 = vshrl.u32 %v2228, 7
        %v2230 = vsub.s32 %v2227, %v2229
        %v2231 = vrot.slane %v2223, %v2230
        %v2233 = vunpack.c.l.s4 1934713408
        %v2234 = vunpack.c.0.s8 %v2233
        %v2235 = vlaneseq
        %v2236 = vshrl.u32 %v2235, 7
        %v2237 = vsub.s32 %v2234, %v2236
        %v2238 = vrot.slane %v2224, %v2237
        %v2239 = vcombine.low %v2206, %v2222
        %v2240 = vcombine.high %v2206, %v2222
        %v2242 = vunpack.c.l.s4 1934713408
        %v2243 = vunpack.c.0.s8 %v2242
        %v2244 = vlaneseq
        %v2245 = vshrl.u32 %v2244, 7
        %v2246 = vsub.s32 %v2243, %v2245
        %v2247 = vrot.slane %v2239, %v2246
        %v2249 = vunpack.c.l.s4 1934713408
        %v2250 = vunpack.c.0.s8 %v2249
        %v2251 = vlaneseq
        %v2252 = vshrl.u32 %v2251, 7
        %v2253 = vsub.s32 %v2250, %v2252
        %v2254 = vrot.slane %v2240, %v2253
        %v2255 = vcombine.high %v2231, 0.0
        %v2256 = vcombine.high %v2238, 0.0
        %v2257 = vcombine.high %v2247, 0.0
        %v2258 = vcombine.high %v2254, 0.0
        %v2259 = vcombine.low %v1498, %v2170
        %v2260 = vcombine.high %v1498, %v2170
        %v2262 = vunpack.c.l.s4 1983009808
        %v2263 = vunpack.c.0.s8 %v2262
        %v2264 = vlaneseq
        %v2265 = vshrl.u32 %v2264, 7
        %v2266 = vsub.s32 %v2263, %v2265
        %v2267 = vrot.slane %v2259, %v2266
        %v2269 = vunpack.c.l.s4 1983009808
        %v2270 = vunpack.c.0.s8 %v2269
        %v2271 = vlaneseq
        %v2272 = vshrl.u32 %v2271, 7
        %v2273 = vsub.s32 %v2270, %v2272
        %v2274 = vrot.slane %v2260, %v2273
        %v2275 = vcombine.low %v2158, %v2182
        %v2276 = vcombine.high %v2158, %v2182
        %v2278 = vunpack.c.l.s4 1983009808
        %v2279 = vunpack.c.0.s8 %v2278
        %v2280 = vlaneseq
        %v2281 = vshrl.u32 %v2280, 7
        %v2282 = vsub.s32 %v2279, %v2281
        %v2283 = vrot.slane %v2275, %v2282
        %v2285 = vunpack.c.l.s4 1983009808
        %v2286 = vunpack.c.0.s8 %v2285
        %v2287 = vlaneseq
        %v2288 = vshrl.u32 %v2287, 7
        %v2289 = vsub.s32 %v2286, %v2288
        %v2290 = vrot.slane %v2276, %v2289
        %v2291 = vcombine.low %v2267, %v2283
        %v2292 = vcombine.high %v2267, %v2283
        %v2294 = vunpack.c.l.s4 1934713408
        %v2295 = vunpack.c.0.s8 %v2294
        %v2296 = vlaneseq
        %v2297 = vshrl.u32 %v2296, 7
        %v2298 = vsub.s32 %v2295, %v2297
        %v2299 = vrot.slane %v2291, %v2298
        %v2301 = vunpack.c.l.s4 1934713408
        %v2302 = vunpack.c.0.s8 %v2301
        %v2303 = vlaneseq
        %v2304 = vshrl.u32 %v2303, 7
        %v2305 = vsub.s32 %v2302, %v2304
        %v2306 = vrot.slane %v2292, %v2305
        %v2307 = vcombine.low %v2274, %v2290
        %v2308 = vcombine.high %v2274, %v2290
        %v2310 = vunpack.c.l.s4 1934713408
        %v2311 = vunpack.c.0.s8 %v2310
        %v2312 = vlaneseq
        %v2313 = vshrl.u32 %v2312, 7
        %v2314 = vsub.s32 %v2311, %v2313
        %v2315 = vrot.slane %v2307, %v2314
        %v2317 = vunpack.c.l.s4 1934713408
        %v2318 = vunpack.c.0.s8 %v2317
        %v2319 = vlaneseq
        %v2320 = vshrl.u32 %v2319, 7
        %v2321 = vsub.s32 %v2318, %v2320
        %v2322 = vrot.slane %v2308, %v2321
        %v2323 = vcombine.high %v2299, 0.0
        %v2324 = vcombine.high %v2306, 0.0
        %v2325 = vcombine.high %v2315, 0.0
        %v2326 = vcombine.high %v2322, 0.0
        %v2327 = vcombine.low %v1504, %v2172
        %v2328 = vcombine.high %v1504, %v2172
        %v2330 = vunpack.c.l.s4 1983009808
        %v2331 = vunpack.c.0.s8 %v2330
        %v2332 = vlaneseq
        %v2333 = vshrl.u32 %v2332, 7
        %v2334 = vsub.s32 %v2331, %v2333
        %v2335 = vrot.slane %v2327, %v2334
        %v2337 = vunpack.c.l.s4 1983009808
        %v2338 = vunpack.c.0.s8 %v2337
        %v2339 = vlaneseq
        %v2340 = vshrl.u32 %v2339, 7
        %v2341 = vsub.s32 %v2338, %v2340
        %v2342 = vrot.slane %v2328, %v2341
        %v2343 = vcombine.low %v2160, %v2184
        %v2344 = vcombine.high %v2160, %v2184
        %v2346 = vunpack.c.l.s4 1983009808
        %v2347 = vunpack.c.0.s8 %v2346
        %v2348 = vlaneseq
        %v2349 = vshrl.u32 %v2348, 7
        %v2350 = vsub.s32 %v2347, %v2349
        %v2351 = vrot.slane %v2343, %v2350
        %v2353 = vunpack.c.l.s4 1983009808
        %v2354 = vunpack.c.0.s8 %v2353
        %v2355 = vlaneseq
        %v2356 = vshrl.u32 %v2355, 7
        %v2357 = vsub.s32 %v2354, %v2356
        %v2358 = vrot.slane %v2344, %v2357
        %v2359 = vcombine.low %v2335, %v2351
        %v2360 = vcombine.high %v2335, %v2351
        %v2362 = vunpack.c.l.s4 1934713408
        %v2363 = vunpack.c.0.s8 %v2362
        %v2364 = vlaneseq
        %v2365 = vshrl.u32 %v2364, 7
        %v2366 = vsub.s32 %v2363, %v2365
        %v2367 = vrot.slane %v2359, %v2366
        %v2369 = vunpack.c.l.s4 1934713408
        %v2370 = vunpack.c.0.s8 %v2369
        %v2371 = vlaneseq
        %v2372 = vshrl.u32 %v2371, 7
        %v2373 = vsub.s32 %v2370, %v2372
        %v2374 = vrot.slane %v2360, %v2373
        %v2375 = vcombine.low %v2342, %v2358
        %v2376 = vcombine.high %v2342, %v2358
        %v2378 = vunpack.c.l.s4 1934713408
        %v2379 = vunpack.c.0.s8 %v2378
        %v2380 = vlaneseq
        %v2381 = vshrl.u32 %v2380, 7
        %v2382 = vsub.s32 %v2379, %v2381
        %v2383 = vrot.slane %v2375, %v2382
        %v2385 = vunpack.c.l.s4 1934713408
        %v2386 = vunpack.c.0.s8 %v2385
        %v2387 = vlaneseq
        %v2388 = vshrl.u32 %v2387, 7
        %v2389 = vsub.s32 %v2386, %v2388
        %v2390 = vrot.slane %v2376, %v2389
        %v2391 = vcombine.high %v2367, 0.0
        %v2392 = vcombine.high %v2374, 0.0
        %v2393 = vcombine.high %v2383, 0.0
        %v2394 = vcombine.high %v2390, 0.0
        %v2395 = vcombine.low %v1508, %v2174
        %v2396 = vcombine.high %v1508, %v2174
        %v2398 = vunpack.c.l.s4 1983009808
        %v2399 = vunpack.c.0.s8 %v2398
        %v2400 = vlaneseq
        %v2401 = vshrl.u32 %v2400, 7
        %v2402 = vsub.s32 %v2399, %v2401
        %v2403 = vrot.slane %v2395, %v2402
        %v2405 = vunpack.c.l.s4 1983009808
        %v2406 = vunpack.c.0.s8 %v2405
        %v2407 = vlaneseq
        %v2408 = vshrl.u32 %v2407, 7
        %v2409 = vsub.s32 %v2406, %v2408
        %v2410 = vrot.slane %v2396, %v2409
        %v2411 = vcombine.low %v2162, %v2186
        %v2412 = vcombine.high %v2162, %v2186
        %v2414 = vunpack.c.l.s4 1983009808
        %v2415 = vunpack.c.0.s8 %v2414
        %v2416 = vlaneseq
        %v2417 = vshrl.u32 %v2416, 7
        %v2418 = vsub.s32 %v2415, %v2417
        %v2419 = vrot.slane %v2411, %v2418
        %v2421 = vunpack.c.l.s4 1983009808
        %v2422 = vunpack.c.0.s8 %v2421
        %v2423 = vlaneseq
        %v2424 = vshrl.u32 %v2423, 7
        %v2425 = vsub.s32 %v2422, %v2424
        %v2426 = vrot.slane %v2412, %v2425
        %v2427 = vcombine.low %v2403, %v2419
        %v2428 = vcombine.high %v2403, %v2419
        %v2430 = vunpack.c.l.s4 1934713408
        %v2431 = vunpack.c.0.s8 %v2430
        %v2432 = vlaneseq
        %v2433 = vshrl.u32 %v2432, 7
        %v2434 = vsub.s32 %v2431, %v2433
        %v2435 = vrot.slane %v2427, %v2434
        %v2437 = vunpack.c.l.s4 1934713408
        %v2438 = vunpack.c.0.s8 %v2437
        %v2439 = vlaneseq
        %v2440 = vshrl.u32 %v2439, 7
        %v2441 = vsub.s32 %v2438, %v2440
        %v2442 = vrot.slane %v2428, %v2441
        %v2443 = vcombine.low %v2410, %v2426
        %v2444 = vcombine.high %v2410, %v2426
        %v2446 = vunpack.c.l.s4 1934713408
        %v2447 = vunpack.c.0.s8 %v2446
        %v2448 = vlaneseq
        %v2449 = vshrl.u32 %v2448, 7
        %v2450 = vsub.s32 %v2447, %v2449
        %v2451 = vrot.slane %v2443, %v2450
        %v2453 = vunpack.c.l.s4 1934713408
        %v2454 = vunpack.c.0.s8 %v2453
        %v2455 = vlaneseq
        %v2456 = vshrl.u32 %v2455, 7
        %v2457 = vsub.s32 %v2454, %v2456
        %v2458 = vrot.slane %v2444, %v2457
        %v2459 = vcombine.high %v2435, 0.0
        %v2460 = vcombine.high %v2442, 0.0
        %v2461 = vcombine.high %v2451, 0.0
        %v2462 = vcombine.high %v2458, 0.0
        %v2463 = vcombine.low %v2231, %v2238
        %v2465 = vunpack.c.l.s4 1983009808
        %v2466 = vunpack.c.0.s8 %v2465
        %v2467 = vlaneseq
        %v2468 = vshrl.u32 %v2467, 7
        %v2469 = vsub.s32 %v2466, %v2468
        %v2470 = vrot.slane %v2463, %v2469
        %v2471 = vcombine.low %v2255, %v2256
        %v2473 = vunpack.c.l.s4 1983009808
        %v2474 = vunpack.c.0.s8 %v2473
        %v2475 = vlaneseq
        %v2476 = vshrl.u32 %v2475, 7
        %v2477 = vsub.s32 %v2474, %v2476
        %v2478 = vrot.slane %v2471, %v2477
        %v2479 = vcombine.low %v2247, %v2254
        %v2481 = vunpack.c.l.s4 1983009808
        %v2482 = vunpack.c.0.s8 %v2481
        %v2483 = vlaneseq
        %v2484 = vshrl.u32 %v2483, 7
        %v2485 = vsub.s32 %v2482, %v2484
        %v2486 = vrot.slane %v2479, %v2485
        %v2487 = vcombine.low %v2257, %v2258
        %v2489 = vunpack.c.l.s4 1983009808
        %v2490 = vunpack.c.0.s8 %v2489
        %v2491 = vlaneseq
        %v2492 = vshrl.u32 %v2491, 7
        %v2493 = vsub.s32 %v2490, %v2492
        %v2494 = vrot.slane %v2487, %v2493
        %v2495 = vcombine.low %v2470, %v2478
        %v2496 = vcombine.high %v2470, %v2478
        %v2498 = vunpack.c.l.s4 1934713408
        %v2499 = vunpack.c.0.s8 %v2498
        %v2500 = vlaneseq
        %v2501 = vshrl.u32 %v2500, 7
        %v2502 = vsub.s32 %v2499, %v2501
        %v2503 = vrot.slane %v2495, %v2502
        %v2505 = vunpack.c.l.s4 1934713408
        %v2506 = vunpack.c.0.s8 %v2505
        %v2507 = vlaneseq
        %v2508 = vshrl.u32 %v2507, 7
        %v2509 = vsub.s32 %v2506, %v2508
        %v2510 = vrot.slane %v2496, %v2509
        %v2511 = vcombine.low %v2486, %v2494
        %v2512 = vcombine.high %v2486, %v2494
        %v2514 = vunpack.c.l.s4 1934713408
        %v2515 = vunpack.c.0.s8 %v2514
        %v2516 = vlaneseq
        %v2517 = vshrl.u32 %v2516, 7
        %v2518 = vsub.s32 %v2515, %v2517
        %v2519 = vrot.slane %v2511, %v2518
        %v2521 = vunpack.c.l.s4 1934713408
        %v2522 = vunpack.c.0.s8 %v2521
        %v2523 = vlaneseq
        %v2524 = vshrl.u32 %v2523, 7
        %v2525 = vsub.s32 %v2522, %v2524
        %v2526 = vrot.slane %v2512, %v2525
        %v2527 = vcombine.low %v2503, %v2519
        %v2528 = vcombine.high %v2503, %v2519
        %v2529 = vcombine.low %v2510, %v2526
        %v2530 = vcombine.high %v2510, %v2526
        %v2531 = vcombine.low %v2299, %v2306
        %v2533 = vunpack.c.l.s4 1983009808
        %v2534 = vunpack.c.0.s8 %v2533
        %v2535 = vlaneseq
        %v2536 = vshrl.u32 %v2535, 7
        %v2537 = vsub.s32 %v2534, %v2536
        %v2538 = vrot.slane %v2531, %v2537
        %v2539 = vcombine.low %v2323, %v2324
        %v2541 = vunpack.c.l.s4 1983009808
        %v2542 = vunpack.c.0.s8 %v2541
        %v2543 = vlaneseq
        %v2544 = vshrl.u32 %v2543, 7
        %v2545 = vsub.s32 %v2542, %v2544
        %v2546 = vrot.slane %v2539, %v2545
        %v2547 = vcombine.low %v2315, %v2322
        %v2549 = vunpack.c.l.s4 1983009808
        %v2550 = vunpack.c.0.s8 %v2549
        %v2551 = vlaneseq
        %v2552 = vshrl.u32 %v2551, 7
        %v2553 = vsub.s32 %v2550, %v2552
        %v2554 = vrot.slane %v2547, %v2553
        %v2555 = vcombine.low %v2325, %v2326
        %v2557 = vunpack.c.l.s4 1983009808
        %v2558 = vunpack.c.0.s8 %v2557
        %v2559 = vlaneseq
        %v2560 = vshrl.u32 %v2559, 7
        %v2561 = vsub.s32 %v2558, %v2560
        %v2562 = vrot.slane %v2555, %v2561
        %v2563 = vcombine.low %v2538, %v2546
        %v2564 = vcombine.high %v2538, %v2546
        %v2566 = vunpack.c.l.s4 1934713408
        %v2567 = vunpack.c.0.s8 %v2566
        %v2568 = vlaneseq
        %v2569 = vshrl.u32 %v2568, 7
        %v2570 = vsub.s32 %v2567, %v2569
        %v2571 = vrot.slane %v2563, %v2570
        %v2573 = vunpack.c.l.s4 1934713408
        %v2574 = vunpack.c.0.s8 %v2573
        %v2575 = vlaneseq
        %v2576 = vshrl.u32 %v2575, 7
        %v2577 = vsub.s32 %v2574, %v2576
        %v2578 = vrot.slane %v2564, %v2577
        %v2579 = vcombine.low %v2554, %v2562
        %v2580 = vcombine.high %v2554, %v2562
        %v2582 = vunpack.c.l.s4 1934713408
        %v2583 = vunpack.c.0.s8 %v2582
        %v2584 = vlaneseq
        %v2585 = vshrl.u32 %v2584, 7
        %v2586 = vsub.s32 %v2583, %v2585
        %v2587 = vrot.slane %v2579, %v2586
        %v2589 = vunpack.c.l.s4 1934713408
        %v2590 = vunpack.c.0.s8 %v2589
        %v2591 = vlaneseq
        %v2592 = vshrl.u32 %v2591, 7
        %v2593 = vsub.s32 %v2590, %v2592
        %v2594 = vrot.slane %v2580, %v2593
        %v2595 = vcombine.low %v2571, %v2587
        %v2596 = vcombine.high %v2571, %v2587
        %v2597 = vcombine.low %v2578, %v2594
        %v2598 = vcombine.high %v2578, %v2594
        %v2599 = vcombine.low %v2367, %v2374
        %v2601 = vunpack.c.l.s4 1983009808
        %v2602 = vunpack.c.0.s8 %v2601
        %v2603 = vlaneseq
        %v2604 = vshrl.u32 %v2603, 7
        %v2605 = vsub.s32 %v2602, %v2604
        %v2606 = vrot.slane %v2599, %v2605
        %v2607 = vcombine.low %v2391, %v2392
        %v2609 = vunpack.c.l.s4 1983009808
        %v2610 = vunpack.c.0.s8 %v2609
        %v2611 = vlaneseq
        %v2612 = vshrl.u32 %v2611, 7
        %v2613 = vsub.s32 %v2610, %v2612
        %v2614 = vrot.slane %v2607, %v2613
        %v2615 = vcombine.low %v2383, %v2390
        %v2617 = vunpack.c.l.s4 1983009808
        %v2618 = vunpack.c.0.s8 %v2617
        %v2619 = vlaneseq
        %v2620 = vshrl.u32 %v2619, 7
        %v2621 = vsub.s32 %v2618, %v2620
        %v2622 = vrot.slane %v2615, %v2621
        %v2623 = vcombine.low %v2393, %v2394
        %v2625 = vunpack.c.l.s4 1983009808
        %v2626 = vunpack.c.0.s8 %v2625
        %v2627 = vlaneseq
        %v2628 = vshrl.u32 %v2627, 7
        %v2629 = vsub.s32 %v2626, %v2628
        %v2630 = vrot.slane %v2623, %v2629
        %v2631 = vcombine.low %v2606, %v2614
        %v2632 = vcombine.high %v2606, %v2614
        %v2634 = vunpack.c.l.s4 1934713408
        %v2635 = vunpack.c.0.s8 %v2634
        %v2636 = vlaneseq
        %v2637 = vshrl.u32 %v2636, 7
        %v2638 = vsub.s32 %v2635, %v2637
        %v2639 = vrot.slane %v2631, %v2638
        %v2641 = vunpack.c.l.s4 1934713408
        %v2642 = vunpack.c.0.s8 %v2641
        %v2643 = vlaneseq
        %v2644 = vshrl.u32 %v2643, 7
        %v2645 = vsub.s32 %v2642, %v2644
        %v2646 = vrot.slane %v2632, %v2645
        %v2647 = vcombine.low %v2622, %v2630
        %v2648 = vcombine.high %v2622, %v2630
        %v2650 = vunpack.c.l.s4 1934713408
        %v2651 = vunpack.c.0.s8 %v2650
        %v2652 = vlaneseq
        %v2653 = vshrl.u32 %v2652, 7
        %v2654 = vsub.s32 %v2651, %v2653
        %v2655 = vrot.slane %v2647, %v2654
        %v2657 = vunpack.c.l.s4 1934713408
        %v2658 = vunpack.c.0.s8 %v2657
        %v2659 = vlaneseq
        %v2660 = vshrl.u32 %v2659, 7
        %v2661 = vsub.s32 %v2658, %v2660
        %v2662 = vrot.slane %v2648, %v2661
        %v2663 = vcombine.low %v2639, %v2655
        %v2664 = vcombine.high %v2639, %v2655
        %v2665 = vcombine.low %v2646, %v2662
        %v2666 = vcombine.high %v2646, %v2662
        %v2667 = vcombine.low %v2435, %v2442
        %v2669 = vunpack.c.l.s4 1983009808
        %v2670 = vunpack.c.0.s8 %v2669
        %v2671 = vlaneseq
        %v2672 = vshrl.u32 %v2671, 7
        %v2673 = vsub.s32 %v2670, %v2672
        %v2674 = vrot.slane %v2667, %v2673
        %v2675 = vcombine.low %v2459, %v2460
        %v2677 = vunpack.c.l.s4 1983009808
        %v2678 = vunpack.c.0.s8 %v2677
        %v2679 = vlaneseq
        %v2680 = vshrl.u32 %v2679, 7
        %v2681 = vsub.s32 %v2678, %v2680
        %v2682 = vrot.slane %v2675, %v2681
        %v2683 = vcombine.low %v2451, %v2458
        %v2685 = vunpack.c.l.s4 1983009808
        %v2686 = vunpack.c.0.s8 %v2685
        %v2687 = vlaneseq
        %v2688 = vshrl.u32 %v2687, 7
        %v2689 = vsub.s32 %v2686, %v2688
        %v2690 = vrot.slane %v2683, %v2689
        %v2691 = vcombine.low %v2461, %v2462
        %v2693 = vunpack.c.l.s4 1983009808
        %v2694 = vunpack.c.0.s8 %v2693
        %v2695 = vlaneseq
        %v2696 = vshrl.u32 %v2695, 7
        %v2697 = vsub.s32 %v2694, %v2696
        %v2698 = vrot.slane %v2691, %v2697
        %v2699 = vcombine.low %v2674, %v2682
        %v2700 = vcombine.high %v2674, %v2682
        %v2702 = vunpack.c.l.s4 1934713408
        %v2703 = vunpack.c.0.s8 %v2702
        %v2704 = vlaneseq
        %v2705 = vshrl.u32 %v2704, 7
        %v2706 = vsub.s32 %v2703, %v2705
        %v2707 = vrot.slane %v2699, %v2706
        %v2709 = vunpack.c.l.s4 1934713408
        %v2710 = vunpack.c.0.s8 %v2709
        %v2711 = vlaneseq
        %v2712 = vshrl.u32 %v2711, 7
        %v2713 = vsub.s32 %v2710, %v2712
        %v2714 = vrot.slane %v2700, %v2713
        %v2715 = vcombine.low %v2690, %v2698
        %v2716 = vcombine.high %v2690, %v2698
        %v2718 = vunpack.c.l.s4 1934713408
        %v2719 = vunpack.c.0.s8 %v2718
        %v2720 = vlaneseq
        %v2721 = vshrl.u32 %v2720, 7
        %v2722 = vsub.s32 %v2719, %v2721
        %v2723 = vrot.slane %v2715, %v2722
        %v2725 = vunpack.c.l.s4 1934713408
        %v2726 = vunpack.c.0.s8 %v2725
        %v2727 = vlaneseq
        %v2728 = vshrl.u32 %v2727, 7
        %v2729 = vsub.s32 %v2726, %v2728
        %v2730 = vrot.slane %v2716, %v2729
        %v2731 = vcombine.low %v2707, %v2723
        %v2732 = vcombine.high %v2707, %v2723
        %v2733 = vcombine.low %v2714, %v2730
        %v2734 = vcombine.high %v2714, %v2730
        %v2735 = vpack.c.bf16 %v2595, %v2527
        %v2736 = vpack.c.bf16 %v2596, %v2528
        %v2737 = vpack.c.bf16 %v2597, %v2529
        %v2738 = vpack.c.bf16 %v2598, %v2530
        %v2739 = vpack.c.bf16 %v2731, %v2663
        %v2740 = vpack.c.bf16 %v2732, %v2664
        %v2741 = vpack.c.bf16 %v2733, %v2665
        %v2742 = vpack.c.bf16 %v2734, %v2666
        %2747 = vrot.lane.b32.xlu0 %v1545, 96
        %v2748 = vpop.permute.xlu0 %2747
        %2749 = vrot.lane.b32.xlu0 %v1548, 96
        %v2750 = vpop.permute.xlu0 %2749
        %2751 = vrot.lane.b32.xlu0 %v1553, 96
        %v2752 = vpop.permute.xlu0 %2751
        %2753 = vrot.lane.b32.xlu0 %v1556, 96
        %v2754 = vpop.permute.xlu0 %2753
        %2759 = vrot.lane.b32.xlu0 %v1545, 64
        %v2760 = vpop.permute.xlu0 %2759
        %2761 = vrot.lane.b32.xlu0 %v1548, 64
        %v2762 = vpop.permute.xlu0 %2761
        %2763 = vrot.lane.b32.xlu0 %v1553, 64
        %v2764 = vpop.permute.xlu0 %2763
        %2765 = vrot.lane.b32.xlu0 %v1556, 64
        %v2766 = vpop.permute.xlu0 %2765
        %2771 = vrot.lane.b32.xlu0 %v1545, 32
        %v2772 = vpop.permute.xlu0 %2771
        %2773 = vrot.lane.b32.xlu0 %v1548, 32
        %v2774 = vpop.permute.xlu0 %2773
        %2775 = vrot.lane.b32.xlu0 %v1553, 32
        %v2776 = vpop.permute.xlu0 %2775
        %2777 = vrot.lane.b32.xlu0 %v1556, 32
        %v2778 = vpop.permute.xlu0 %2777
        %v2783 = vcombine.low %v1545, %v2760
        %v2784 = vcombine.high %v1545, %v2760
        %v2786 = vunpack.c.l.s4 1983009808
        %v2787 = vunpack.c.0.s8 %v2786
        %v2788 = vlaneseq
        %v2789 = vshrl.u32 %v2788, 7
        %v2790 = vsub.s32 %v2787, %v2789
        %v2791 = vrot.slane %v2783, %v2790
        %v2793 = vunpack.c.l.s4 1983009808
        %v2794 = vunpack.c.0.s8 %v2793
        %v2795 = vlaneseq
        %v2796 = vshrl.u32 %v2795, 7
        %v2797 = vsub.s32 %v2794, %v2796
        %v2798 = vrot.slane %v2784, %v2797
        %v2799 = vcombine.low %v2748, %v2772
        %v2800 = vcombine.high %v2748, %v2772
        %v2802 = vunpack.c.l.s4 1983009808
        %v2803 = vunpack.c.0.s8 %v2802
        %v2804 = vlaneseq
        %v2805 = vshrl.u32 %v2804, 7
        %v2806 = vsub.s32 %v2803, %v2805
        %v2807 = vrot.slane %v2799, %v2806
        %v2809 = vunpack.c.l.s4 1983009808
        %v2810 = vunpack.c.0.s8 %v2809
        %v2811 = vlaneseq
        %v2812 = vshrl.u32 %v2811, 7
        %v2813 = vsub.s32 %v2810, %v2812
        %v2814 = vrot.slane %v2800, %v2813
        %v2815 = vcombine.low %v2791, %v2807
        %v2816 = vcombine.high %v2791, %v2807
        %v2818 = vunpack.c.l.s4 1934713408
        %v2819 = vunpack.c.0.s8 %v2818
        %v2820 = vlaneseq
        %v2821 = vshrl.u32 %v2820, 7
        %v2822 = vsub.s32 %v2819, %v2821
        %v2823 = vrot.slane %v2815, %v2822
        %v2825 = vunpack.c.l.s4 1934713408
        %v2826 = vunpack.c.0.s8 %v2825
        %v2827 = vlaneseq
        %v2828 = vshrl.u32 %v2827, 7
        %v2829 = vsub.s32 %v2826, %v2828
        %v2830 = vrot.slane %v2816, %v2829
        %v2831 = vcombine.low %v2798, %v2814
        %v2832 = vcombine.high %v2798, %v2814
        %v2834 = vunpack.c.l.s4 1934713408
        %v2835 = vunpack.c.0.s8 %v2834
        %v2836 = vlaneseq
        %v2837 = vshrl.u32 %v2836, 7
        %v2838 = vsub.s32 %v2835, %v2837
        %v2839 = vrot.slane %v2831, %v2838
        %v2841 = vunpack.c.l.s4 1934713408
        %v2842 = vunpack.c.0.s8 %v2841
        %v2843 = vlaneseq
        %v2844 = vshrl.u32 %v2843, 7
        %v2845 = vsub.s32 %v2842, %v2844
        %v2846 = vrot.slane %v2832, %v2845
        %v2847 = vcombine.high %v2823, 0.0
        %v2848 = vcombine.high %v2830, 0.0
        %v2849 = vcombine.high %v2839, 0.0
        %v2850 = vcombine.high %v2846, 0.0
        %v2851 = vcombine.low %v1548, %v2762
        %v2852 = vcombine.high %v1548, %v2762
        %v2854 = vunpack.c.l.s4 1983009808
        %v2855 = vunpack.c.0.s8 %v2854
        %v2856 = vlaneseq
        %v2857 = vshrl.u32 %v2856, 7
        %v2858 = vsub.s32 %v2855, %v2857
        %v2859 = vrot.slane %v2851, %v2858
        %v2861 = vunpack.c.l.s4 1983009808
        %v2862 = vunpack.c.0.s8 %v2861
        %v2863 = vlaneseq
        %v2864 = vshrl.u32 %v2863, 7
        %v2865 = vsub.s32 %v2862, %v2864
        %v2866 = vrot.slane %v2852, %v2865
        %v2867 = vcombine.low %v2750, %v2774
        %v2868 = vcombine.high %v2750, %v2774
        %v2870 = vunpack.c.l.s4 1983009808
        %v2871 = vunpack.c.0.s8 %v2870
        %v2872 = vlaneseq
        %v2873 = vshrl.u32 %v2872, 7
        %v2874 = vsub.s32 %v2871, %v2873
        %v2875 = vrot.slane %v2867, %v2874
        %v2877 = vunpack.c.l.s4 1983009808
        %v2878 = vunpack.c.0.s8 %v2877
        %v2879 = vlaneseq
        %v2880 = vshrl.u32 %v2879, 7
        %v2881 = vsub.s32 %v2878, %v2880
        %v2882 = vrot.slane %v2868, %v2881
        %v2883 = vcombine.low %v2859, %v2875
        %v2884 = vcombine.high %v2859, %v2875
        %v2886 = vunpack.c.l.s4 1934713408
        %v2887 = vunpack.c.0.s8 %v2886
        %v2888 = vlaneseq
        %v2889 = vshrl.u32 %v2888, 7
        %v2890 = vsub.s32 %v2887, %v2889
        %v2891 = vrot.slane %v2883, %v2890
        %v2893 = vunpack.c.l.s4 1934713408
        %v2894 = vunpack.c.0.s8 %v2893
        %v2895 = vlaneseq
        %v2896 = vshrl.u32 %v2895, 7
        %v2897 = vsub.s32 %v2894, %v2896
        %v2898 = vrot.slane %v2884, %v2897
        %v2899 = vcombine.low %v2866, %v2882
        %v2900 = vcombine.high %v2866, %v2882
        %v2902 = vunpack.c.l.s4 1934713408
        %v2903 = vunpack.c.0.s8 %v2902
        %v2904 = vlaneseq
        %v2905 = vshrl.u32 %v2904, 7
        %v2906 = vsub.s32 %v2903, %v2905
        %v2907 = vrot.slane %v2899, %v2906
        %v2909 = vunpack.c.l.s4 1934713408
        %v2910 = vunpack.c.0.s8 %v2909
        %v2911 = vlaneseq
        %v2912 = vshrl.u32 %v2911, 7
        %v2913 = vsub.s32 %v2910, %v2912
        %v2914 = vrot.slane %v2900, %v2913
        %v2915 = vcombine.high %v2891, 0.0
        %v2916 = vcombine.high %v2898, 0.0
        %v2917 = vcombine.high %v2907, 0.0
        %v2918 = vcombine.high %v2914, 0.0
        %v2919 = vcombine.low %v1553, %v2764
        %v2920 = vcombine.high %v1553, %v2764
        %v2922 = vunpack.c.l.s4 1983009808
        %v2923 = vunpack.c.0.s8 %v2922
        %v2924 = vlaneseq
        %v2925 = vshrl.u32 %v2924, 7
        %v2926 = vsub.s32 %v2923, %v2925
        %v2927 = vrot.slane %v2919, %v2926
        %v2929 = vunpack.c.l.s4 1983009808
        %v2930 = vunpack.c.0.s8 %v2929
        %v2931 = vlaneseq
        %v2932 = vshrl.u32 %v2931, 7
        %v2933 = vsub.s32 %v2930, %v2932
        %v2934 = vrot.slane %v2920, %v2933
        %v2935 = vcombine.low %v2752, %v2776
        %v2936 = vcombine.high %v2752, %v2776
        %v2938 = vunpack.c.l.s4 1983009808
        %v2939 = vunpack.c.0.s8 %v2938
        %v2940 = vlaneseq
        %v2941 = vshrl.u32 %v2940, 7
        %v2942 = vsub.s32 %v2939, %v2941
        %v2943 = vrot.slane %v2935, %v2942
        %v2945 = vunpack.c.l.s4 1983009808
        %v2946 = vunpack.c.0.s8 %v2945
        %v2947 = vlaneseq
        %v2948 = vshrl.u32 %v2947, 7
        %v2949 = vsub.s32 %v2946, %v2948
        %v2950 = vrot.slane %v2936, %v2949
        %v2951 = vcombine.low %v2927, %v2943
        %v2952 = vcombine.high %v2927, %v2943
        %v2954 = vunpack.c.l.s4 1934713408
        %v2955 = vunpack.c.0.s8 %v2954
        %v2956 = vlaneseq
        %v2957 = vshrl.u32 %v2956, 7
        %v2958 = vsub.s32 %v2955, %v2957
        %v2959 = vrot.slane %v2951, %v2958
        %v2961 = vunpack.c.l.s4 1934713408
        %v2962 = vunpack.c.0.s8 %v2961
        %v2963 = vlaneseq
        %v2964 = vshrl.u32 %v2963, 7
        %v2965 = vsub.s32 %v2962, %v2964
        %v2966 = vrot.slane %v2952, %v2965
        %v2967 = vcombine.low %v2934, %v2950
        %v2968 = vcombine.high %v2934, %v2950
        %v2970 = vunpack.c.l.s4 1934713408
        %v2971 = vunpack.c.0.s8 %v2970
        %v2972 = vlaneseq
        %v2973 = vshrl.u32 %v2972, 7
        %v2974 = vsub.s32 %v2971, %v2973
        %v2975 = vrot.slane %v2967, %v2974
        %v2977 = vunpack.c.l.s4 1934713408
        %v2978 = vunpack.c.0.s8 %v2977
        %v2979 = vlaneseq
        %v2980 = vshrl.u32 %v2979, 7
        %v2981 = vsub.s32 %v2978, %v2980
        %v2982 = vrot.slane %v2968, %v2981
        %v2983 = vcombine.high %v2959, 0.0
        %v2984 = vcombine.high %v2966, 0.0
        %v2985 = vcombine.high %v2975, 0.0
        %v2986 = vcombine.high %v2982, 0.0
        %v2987 = vcombine.low %v1556, %v2766
        %v2988 = vcombine.high %v1556, %v2766
        %v2990 = vunpack.c.l.s4 1983009808
        %v2991 = vunpack.c.0.s8 %v2990
        %v2992 = vlaneseq
        %v2993 = vshrl.u32 %v2992, 7
        %v2994 = vsub.s32 %v2991, %v2993
        %v2995 = vrot.slane %v2987, %v2994
        %v2997 = vunpack.c.l.s4 1983009808
        %v2998 = vunpack.c.0.s8 %v2997
        %v2999 = vlaneseq
        %v3000 = vshrl.u32 %v2999, 7
        %v3001 = vsub.s32 %v2998, %v3000
        %v3002 = vrot.slane %v2988, %v3001
        %v3003 = vcombine.low %v2754, %v2778
        %v3004 = vcombine.high %v2754, %v2778
        %v3006 = vunpack.c.l.s4 1983009808
        %v3007 = vunpack.c.0.s8 %v3006
        %v3008 = vlaneseq
        %v3009 = vshrl.u32 %v3008, 7
        %v3010 = vsub.s32 %v3007, %v3009
        %v3011 = vrot.slane %v3003, %v3010
        %v3013 = vunpack.c.l.s4 1983009808
        %v3014 = vunpack.c.0.s8 %v3013
        %v3015 = vlaneseq
        %v3016 = vshrl.u32 %v3015, 7
        %v3017 = vsub.s32 %v3014, %v3016
        %v3018 = vrot.slane %v3004, %v3017
        %v3019 = vcombine.low %v2995, %v3011
        %v3020 = vcombine.high %v2995, %v3011
        %v3022 = vunpack.c.l.s4 1934713408
        %v3023 = vunpack.c.0.s8 %v3022
        %v3024 = vlaneseq
        %v3025 = vshrl.u32 %v3024, 7
        %v3026 = vsub.s32 %v3023, %v3025
        %v3027 = vrot.slane %v3019, %v3026
        %v3029 = vunpack.c.l.s4 1934713408
        %v3030 = vunpack.c.0.s8 %v3029
        %v3031 = vlaneseq
        %v3032 = vshrl.u32 %v3031, 7
        %v3033 = vsub.s32 %v3030, %v3032
        %v3034 = vrot.slane %v3020, %v3033
        %v3035 = vcombine.low %v3002, %v3018
        %v3036 = vcombine.high %v3002, %v3018
        %v3038 = vunpack.c.l.s4 1934713408
        %v3039 = vunpack.c.0.s8 %v3038
        %v3040 = vlaneseq
        %v3041 = vshrl.u32 %v3040, 7
        %v3042 = vsub.s32 %v3039, %v3041
        %v3043 = vrot.slane %v3035, %v3042
        %v3045 = vunpack.c.l.s4 1934713408
        %v3046 = vunpack.c.0.s8 %v3045
        %v3047 = vlaneseq
        %v3048 = vshrl.u32 %v3047, 7
        %v3049 = vsub.s32 %v3046, %v3048
        %v3050 = vrot.slane %v3036, %v3049
        %v3051 = vcombine.high %v3027, 0.0
        %v3052 = vcombine.high %v3034, 0.0
        %v3053 = vcombine.high %v3043, 0.0
        %v3054 = vcombine.high %v3050, 0.0
        %v3055 = vcombine.low %v2823, %v2830
        %v3057 = vunpack.c.l.s4 1983009808
        %v3058 = vunpack.c.0.s8 %v3057
        %v3059 = vlaneseq
        %v3060 = vshrl.u32 %v3059, 7
        %v3061 = vsub.s32 %v3058, %v3060
        %v3062 = vrot.slane %v3055, %v3061
        %v3063 = vcombine.low %v2847, %v2848
        %v3065 = vunpack.c.l.s4 1983009808
        %v3066 = vunpack.c.0.s8 %v3065
        %v3067 = vlaneseq
        %v3068 = vshrl.u32 %v3067, 7
        %v3069 = vsub.s32 %v3066, %v3068
        %v3070 = vrot.slane %v3063, %v3069
        %v3071 = vcombine.low %v2839, %v2846
        %v3073 = vunpack.c.l.s4 1983009808
        %v3074 = vunpack.c.0.s8 %v3073
        %v3075 = vlaneseq
        %v3076 = vshrl.u32 %v3075, 7
        %v3077 = vsub.s32 %v3074, %v3076
        %v3078 = vrot.slane %v3071, %v3077
        %v3079 = vcombine.low %v2849, %v2850
        %v3081 = vunpack.c.l.s4 1983009808
        %v3082 = vunpack.c.0.s8 %v3081
        %v3083 = vlaneseq
        %v3084 = vshrl.u32 %v3083, 7
        %v3085 = vsub.s32 %v3082, %v3084
        %v3086 = vrot.slane %v3079, %v3085
        %v3087 = vcombine.low %v3062, %v3070
        %v3088 = vcombine.high %v3062, %v3070
        %v3090 = vunpack.c.l.s4 1934713408
        %v3091 = vunpack.c.0.s8 %v3090
        %v3092 = vlaneseq
        %v3093 = vshrl.u32 %v3092, 7
        %v3094 = vsub.s32 %v3091, %v3093
        %v3095 = vrot.slane %v3087, %v3094
        %v3097 = vunpack.c.l.s4 1934713408
        %v3098 = vunpack.c.0.s8 %v3097
        %v3099 = vlaneseq
        %v3100 = vshrl.u32 %v3099, 7
        %v3101 = vsub.s32 %v3098, %v3100
        %v3102 = vrot.slane %v3088, %v3101
        %v3103 = vcombine.low %v3078, %v3086
        %v3104 = vcombine.high %v3078, %v3086
        %v3106 = vunpack.c.l.s4 1934713408
        %v3107 = vunpack.c.0.s8 %v3106
        %v3108 = vlaneseq
        %v3109 = vshrl.u32 %v3108, 7
        %v3110 = vsub.s32 %v3107, %v3109
        %v3111 = vrot.slane %v3103, %v3110
        %v3113 = vunpack.c.l.s4 1934713408
        %v3114 = vunpack.c.0.s8 %v3113
        %v3115 = vlaneseq
        %v3116 = vshrl.u32 %v3115, 7
        %v3117 = vsub.s32 %v3114, %v3116
        %v3118 = vrot.slane %v3104, %v3117
        %v3119 = vcombine.low %v3095, %v3111
        %v3120 = vcombine.high %v3095, %v3111
        %v3121 = vcombine.low %v3102, %v3118
        %v3122 = vcombine.high %v3102, %v3118
        %v3123 = vcombine.low %v2891, %v2898
        %v3125 = vunpack.c.l.s4 1983009808
        %v3126 = vunpack.c.0.s8 %v3125
        %v3127 = vlaneseq
        %v3128 = vshrl.u32 %v3127, 7
        %v3129 = vsub.s32 %v3126, %v3128
        %v3130 = vrot.slane %v3123, %v3129
        %v3131 = vcombine.low %v2915, %v2916
        %v3133 = vunpack.c.l.s4 1983009808
        %v3134 = vunpack.c.0.s8 %v3133
        %v3135 = vlaneseq
        %v3136 = vshrl.u32 %v3135, 7
        %v3137 = vsub.s32 %v3134, %v3136
        %v3138 = vrot.slane %v3131, %v3137
        %v3139 = vcombine.low %v2907, %v2914
        %v3141 = vunpack.c.l.s4 1983009808
        %v3142 = vunpack.c.0.s8 %v3141
        %v3143 = vlaneseq
        %v3144 = vshrl.u32 %v3143, 7
        %v3145 = vsub.s32 %v3142, %v3144
        %v3146 = vrot.slane %v3139, %v3145
        %v3147 = vcombine.low %v2917, %v2918
        %v3149 = vunpack.c.l.s4 1983009808
        %v3150 = vunpack.c.0.s8 %v3149
        %v3151 = vlaneseq
        %v3152 = vshrl.u32 %v3151, 7
        %v3153 = vsub.s32 %v3150, %v3152
        %v3154 = vrot.slane %v3147, %v3153
        %v3155 = vcombine.low %v3130, %v3138
        %v3156 = vcombine.high %v3130, %v3138
        %v3158 = vunpack.c.l.s4 1934713408
        %v3159 = vunpack.c.0.s8 %v3158
        %v3160 = vlaneseq
        %v3161 = vshrl.u32 %v3160, 7
        %v3162 = vsub.s32 %v3159, %v3161
        %v3163 = vrot.slane %v3155, %v3162
        %v3165 = vunpack.c.l.s4 1934713408
        %v3166 = vunpack.c.0.s8 %v3165
        %v3167 = vlaneseq
        %v3168 = vshrl.u32 %v3167, 7
        %v3169 = vsub.s32 %v3166, %v3168
        %v3170 = vrot.slane %v3156, %v3169
        %v3171 = vcombine.low %v3146, %v3154
        %v3172 = vcombine.high %v3146, %v3154
        %v3174 = vunpack.c.l.s4 1934713408
        %v3175 = vunpack.c.0.s8 %v3174
        %v3176 = vlaneseq
        %v3177 = vshrl.u32 %v3176, 7
        %v3178 = vsub.s32 %v3175, %v3177
        %v3179 = vrot.slane %v3171, %v3178
        %v3181 = vunpack.c.l.s4 1934713408
        %v3182 = vunpack.c.0.s8 %v3181
        %v3183 = vlaneseq
        %v3184 = vshrl.u32 %v3183, 7
        %v3185 = vsub.s32 %v3182, %v3184
        %v3186 = vrot.slane %v3172, %v3185
        %v3187 = vcombine.low %v3163, %v3179
        %v3188 = vcombine.high %v3163, %v3179
        %v3189 = vcombine.low %v3170, %v3186
        %v3190 = vcombine.high %v3170, %v3186
        %v3191 = vcombine.low %v2959, %v2966
        %v3193 = vunpack.c.l.s4 1983009808
        %v3194 = vunpack.c.0.s8 %v3193
        %v3195 = vlaneseq
        %v3196 = vshrl.u32 %v3195, 7
        %v3197 = vsub.s32 %v3194, %v3196
        %v3198 = vrot.slane %v3191, %v3197
        %v3199 = vcombine.low %v2983, %v2984
        %v3201 = vunpack.c.l.s4 1983009808
        %v3202 = vunpack.c.0.s8 %v3201
        %v3203 = vlaneseq
        %v3204 = vshrl.u32 %v3203, 7
        %v3205 = vsub.s32 %v3202, %v3204
        %v3206 = vrot.slane %v3199, %v3205
        %v3207 = vcombine.low %v2975, %v2982
        %v3209 = vunpack.c.l.s4 1983009808
        %v3210 = vunpack.c.0.s8 %v3209
        %v3211 = vlaneseq
        %v3212 = vshrl.u32 %v3211, 7
        %v3213 = vsub.s32 %v3210, %v3212
        %v3214 = vrot.slane %v3207, %v3213
        %v3215 = vcombine.low %v2985, %v2986
        %v3217 = vunpack.c.l.s4 1983009808
        %v3218 = vunpack.c.0.s8 %v3217
        %v3219 = vlaneseq
        %v3220 = vshrl.u32 %v3219, 7
        %v3221 = vsub.s32 %v3218, %v3220
        %v3222 = vrot.slane %v3215, %v3221
        %v3223 = vcombine.low %v3198, %v3206
        %v3224 = vcombine.high %v3198, %v3206
        %v3226 = vunpack.c.l.s4 1934713408
        %v3227 = vunpack.c.0.s8 %v3226
        %v3228 = vlaneseq
        %v3229 = vshrl.u32 %v3228, 7
        %v3230 = vsub.s32 %v3227, %v3229
        %v3231 = vrot.slane %v3223, %v3230
        %v3233 = vunpack.c.l.s4 1934713408
        %v3234 = vunpack.c.0.s8 %v3233
        %v3235 = vlaneseq
        %v3236 = vshrl.u32 %v3235, 7
        %v3237 = vsub.s32 %v3234, %v3236
        %v3238 = vrot.slane %v3224, %v3237
        %v3239 = vcombine.low %v3214, %v3222
        %v3240 = vcombine.high %v3214, %v3222
        %v3242 = vunpack.c.l.s4 1934713408
        %v3243 = vunpack.c.0.s8 %v3242
        %v3244 = vlaneseq
        %v3245 = vshrl.u32 %v3244, 7
        %v3246 = vsub.s32 %v3243, %v3245
        %v3247 = vrot.slane %v3239, %v3246
        %v3249 = vunpack.c.l.s4 1934713408
        %v3250 = vunpack.c.0.s8 %v3249
        %v3251 = vlaneseq
        %v3252 = vshrl.u32 %v3251, 7
        %v3253 = vsub.s32 %v3250, %v3252
        %v3254 = vrot.slane %v3240, %v3253
        %v3255 = vcombine.low %v3231, %v3247
        %v3256 = vcombine.high %v3231, %v3247
        %v3257 = vcombine.low %v3238, %v3254
        %v3258 = vcombine.high %v3238, %v3254
        %v3259 = vcombine.low %v3027, %v3034
        %v3261 = vunpack.c.l.s4 1983009808
        %v3262 = vunpack.c.0.s8 %v3261
        %v3263 = vlaneseq
        %v3264 = vshrl.u32 %v3263, 7
        %v3265 = vsub.s32 %v3262, %v3264
        %v3266 = vrot.slane %v3259, %v3265
        %v3267 = vcombine.low %v3051, %v3052
        %v3269 = vunpack.c.l.s4 1983009808
        %v3270 = vunpack.c.0.s8 %v3269
        %v3271 = vlaneseq
        %v3272 = vshrl.u32 %v3271, 7
        %v3273 = vsub.s32 %v3270, %v3272
        %v3274 = vrot.slane %v3267, %v3273
        %v3275 = vcombine.low %v3043, %v3050
        %v3277 = vunpack.c.l.s4 1983009808
        %v3278 = vunpack.c.0.s8 %v3277
        %v3279 = vlaneseq
        %v3280 = vshrl.u32 %v3279, 7
        %v3281 = vsub.s32 %v3278, %v3280
        %v3282 = vrot.slane %v3275, %v3281
        %v3283 = vcombine.low %v3053, %v3054
        %v3285 = vunpack.c.l.s4 1983009808
        %v3286 = vunpack.c.0.s8 %v3285
        %v3287 = vlaneseq
        %v3288 = vshrl.u32 %v3287, 7
        %v3289 = vsub.s32 %v3286, %v3288
        %v3290 = vrot.slane %v3283, %v3289
        %v3291 = vcombine.low %v3266, %v3274
        %v3292 = vcombine.high %v3266, %v3274
        %v3294 = vunpack.c.l.s4 1934713408
        %v3295 = vunpack.c.0.s8 %v3294
        %v3296 = vlaneseq
        %v3297 = vshrl.u32 %v3296, 7
        %v3298 = vsub.s32 %v3295, %v3297
        %v3299 = vrot.slane %v3291, %v3298
        %v3301 = vunpack.c.l.s4 1934713408
        %v3302 = vunpack.c.0.s8 %v3301
        %v3303 = vlaneseq
        %v3304 = vshrl.u32 %v3303, 7
        %v3305 = vsub.s32 %v3302, %v3304
        %v3306 = vrot.slane %v3292, %v3305
        %v3307 = vcombine.low %v3282, %v3290
        %v3308 = vcombine.high %v3282, %v3290
        %v3310 = vunpack.c.l.s4 1934713408
        %v3311 = vunpack.c.0.s8 %v3310
        %v3312 = vlaneseq
        %v3313 = vshrl.u32 %v3312, 7
        %v3314 = vsub.s32 %v3311, %v3313
        %v3315 = vrot.slane %v3307, %v3314
        %v3317 = vunpack.c.l.s4 1934713408
        %v3318 = vunpack.c.0.s8 %v3317
        %v3319 = vlaneseq
        %v3320 = vshrl.u32 %v3319, 7
        %v3321 = vsub.s32 %v3318, %v3320
        %v3322 = vrot.slane %v3308, %v3321
        %v3323 = vcombine.low %v3299, %v3315
        %v3324 = vcombine.high %v3299, %v3315
        %v3325 = vcombine.low %v3306, %v3322
        %v3326 = vcombine.high %v3306, %v3322
        %v3327 = vpack.c.bf16 %v3187, %v3119
        %v3328 = vpack.c.bf16 %v3188, %v3120
        %v3329 = vpack.c.bf16 %v3189, %v3121
        %v3330 = vpack.c.bf16 %v3190, %v3122
        %v3331 = vpack.c.bf16 %v3323, %v3255
        %v3332 = vpack.c.bf16 %v3324, %v3256
        %v3333 = vpack.c.bf16 %v3325, %v3257
        %v3334 = vpack.c.bf16 %v3326, %v3258
        %vm3335 = vcmask 261120
        %v3337 = vsel %vm3335, %v2143, 0
        %v3340 = vsel %vm3335, %v2735, 0
        %3342 = vmatprep.subr.bf16.mxu0 0
        %3343 = vmatpush1.bf16.xpose.msra.mxu0 %v3340
        %3344 = vmatprep.subr.bf16.mxu0 0
        %3345 = vmatpush1.bf16.xpose.msra.mxu0 0
        %3346 = vmatprep.subr.bf16.mxu0 0
        %3347 = vmatpush1.bf16.xpose.msra.mxu0 0
        %3348 = vmatprep.subr.bf16.mxu0 0
        %3349 = vmatpush1.bf16.xpose.msra.mxu0 0
        %3350 = vmatprep.subr.bf16.mxu0 0
        %3351 = vmatpush1.bf16.xpose.msra.mxu0 0
        %3352 = vmatprep.subr.bf16.mxu0 0
        %3353 = vmatpush1.bf16.xpose.msra.mxu0 0
        %3354 = vmatprep.subr.bf16.mxu0 0
        %3355 = vmatpush1.bf16.xpose.msra.mxu0 0
        %3356 = vmatprep.subr.bf16.mxu0 0
        %3357 = vmatpush1.bf16.xpose.msra.mxu0 0
        %3358 = vmatprep.subr.bf16.mxu0 0
        %3359 = vmatpush1.bf16.xpose.msra.mxu0 0
        %3360 = vmatprep.subr.bf16.mxu0 0
        %3361 = vmatpush1.bf16.xpose.msra.mxu0 0
        %3362 = vmatprep.subr.bf16.mxu0 0
        %3363 = vmatpush1.bf16.xpose.msra.mxu0 0
        %3364 = vmatprep.subr.bf16.mxu0 0
        %3365 = vmatpush1.bf16.xpose.msra.mxu0 0
        %3366 = vmatprep.subr.bf16.mxu0 0
        %3367 = vmatpush1.bf16.xpose.msra.mxu0 0
        %3368 = vmatprep.subr.bf16.mxu0 0
        %3369 = vmatpush1.bf16.xpose.msra.mxu0 0
        %3370 = vmatprep.subr.bf16.mxu0 0
        %3371 = vmatpush1.bf16.xpose.msra.mxu0 0
        %3372 = vmatprep.subr.bf16.mxu0 0
        %3373 = vmatpush1.bf16.xpose.msra.mxu0 0
        %3374 = vmatprep.mubr.bf16.mxu0 0
        %3375 = vmatmul.mubr.bf16.gmra.mrb[0].mxu0 %v3337
        %v3376 = vpop.f32.mrb[0].mxu0
        %v3377 = vadd.f32 %v1274, %v3376
        %v3378 = vpop.f32.mrb[0].mxu0
        %v3379 = vpop.f32.mrb[0].mxu0
        %v3380 = vadd.f32 %v1275, %v3379
        %v3381 = vpop.f32.mrb[0].mxu0
        %3382 = vdwg.mxu0
        %v3384 = vsel %vm3335, %v2144, 0
        %v3387 = vsel %vm3335, %v2736, 0
        %3389 = vmatprep.subr.bf16.mxu0 0
        %3390 = vmatpush1.bf16.xpose.msra.mxu0 %v3387
        %3391 = vmatprep.subr.bf16.mxu0 0
        %3392 = vmatpush1.bf16.xpose.msra.mxu0 0
        %3393 = vmatprep.subr.bf16.mxu0 0
        %3394 = vmatpush1.bf16.xpose.msra.mxu0 0
        %3395 = vmatprep.subr.bf16.mxu0 0
        %3396 = vmatpush1.bf16.xpose.msra.mxu0 0
        %3397 = vmatprep.subr.bf16.mxu0 0
        %3398 = vmatpush1.bf16.xpose.msra.mxu0 0
        %3399 = vmatprep.subr.bf16.mxu0 0
        %3400 = vmatpush1.bf16.xpose.msra.mxu0 0
        %3401 = vmatprep.subr.bf16.mxu0 0
        %3402 = vmatpush1.bf16.xpose.msra.mxu0 0
        %3403 = vmatprep.subr.bf16.mxu0 0
        %3404 = vmatpush1.bf16.xpose.msra.mxu0 0
        %3405 = vmatprep.subr.bf16.mxu0 0
        %3406 = vmatpush1.bf16.xpose.msra.mxu0 0
        %3407 = vmatprep.subr.bf16.mxu0 0
        %3408 = vmatpush1.bf16.xpose.msra.mxu0 0
        %3409 = vmatprep.subr.bf16.mxu0 0
        %3410 = vmatpush1.bf16.xpose.msra.mxu0 0
        %3411 = vmatprep.subr.bf16.mxu0 0
        %3412 = vmatpush1.bf16.xpose.msra.mxu0 0
        %3413 = vmatprep.subr.bf16.mxu0 0
        %3414 = vmatpush1.bf16.xpose.msra.mxu0 0
        %3415 = vmatprep.subr.bf16.mxu0 0
        %3416 = vmatpush1.bf16.xpose.msra.mxu0 0
        %3417 = vmatprep.subr.bf16.mxu0 0
        %3418 = vmatpush1.bf16.xpose.msra.mxu0 0
        %3419 = vmatprep.subr.bf16.mxu0 0
        %3420 = vmatpush1.bf16.xpose.msra.mxu0 0
        %3421 = vmatprep.mubr.bf16.mxu0 0
        %3422 = vmatmul.mubr.bf16.gmra.mrb[0].mxu0 %v3384
        %v3423 = vpop.f32.mrb[0].mxu0
        %v3424 = vadd.f32 %v1274, %v3423
        %v3425 = vpop.f32.mrb[0].mxu0
        %v3426 = vpop.f32.mrb[0].mxu0
        %v3427 = vadd.f32 %v1275, %v3426
        %v3428 = vpop.f32.mrb[0].mxu0
        %3429 = vdwg.mxu0
        %v3431 = vsel %vm3335, %v2145, 0
        %v3434 = vsel %vm3335, %v2737, 0
        %3436 = vmatprep.subr.bf16.mxu0 0
        %3437 = vmatpush1.bf16.xpose.msra.mxu0 %v3434
        %3438 = vmatprep.subr.bf16.mxu0 0
        %3439 = vmatpush1.bf16.xpose.msra.mxu0 0
        %3440 = vmatprep.subr.bf16.mxu0 0
        %3441 = vmatpush1.bf16.xpose.msra.mxu0 0
        %3442 = vmatprep.subr.bf16.mxu0 0
        %3443 = vmatpush1.bf16.xpose.msra.mxu0 0
        %3444 = vmatprep.subr.bf16.mxu0 0
        %3445 = vmatpush1.bf16.xpose.msra.mxu0 0
        %3446 = vmatprep.subr.bf16.mxu0 0
        %3447 = vmatpush1.bf16.xpose.msra.mxu0 0
        %3448 = vmatprep.subr.bf16.mxu0 0
        %3449 = vmatpush1.bf16.xpose.msra.mxu0 0
        %3450 = vmatprep.subr.bf16.mxu0 0
        %3451 = vmatpush1.bf16.xpose.msra.mxu0 0
        %3452 = vmatprep.subr.bf16.mxu0 0
        %3453 = vmatpush1.bf16.xpose.msra.mxu0 0
        %3454 = vmatprep.subr.bf16.mxu0 0
        %3455 = vmatpush1.bf16.xpose.msra.mxu0 0
        %3456 = vmatprep.subr.bf16.mxu0 0
        %3457 = vmatpush1.bf16.xpose.msra.mxu0 0
        %3458 = vmatprep.subr.bf16.mxu0 0
        %3459 = vmatpush1.bf16.xpose.msra.mxu0 0
        %3460 = vmatprep.subr.bf16.mxu0 0
        %3461 = vmatpush1.bf16.xpose.msra.mxu0 0
        %3462 = vmatprep.subr.bf16.mxu0 0
        %3463 = vmatpush1.bf16.xpose.msra.mxu0 0
        %3464 = vmatprep.subr.bf16.mxu0 0
        %3465 = vmatpush1.bf16.xpose.msra.mxu0 0
        %3466 = vmatprep.subr.bf16.mxu0 0
        %3467 = vmatpush1.bf16.xpose.msra.mxu0 0
        %3468 = vmatprep.mubr.bf16.mxu0 0
        %3469 = vmatmul.mubr.bf16.gmra.mrb[0].mxu0 %v3431
        %v3470 = vpop.f32.mrb[0].mxu0
        %v3471 = vadd.f32 %v1274, %v3470
        %v3472 = vpop.f32.mrb[0].mxu0
        %v3473 = vpop.f32.mrb[0].mxu0
        %v3474 = vadd.f32 %v1275, %v3473
        %v3475 = vpop.f32.mrb[0].mxu0
        %3476 = vdwg.mxu0
        %v3478 = vsel %vm3335, %v2146, 0
        %v3481 = vsel %vm3335, %v2738, 0
        %3483 = vmatprep.subr.bf16.mxu0 0
        %3484 = vmatpush1.bf16.xpose.msra.mxu0 %v3481
        %3485 = vmatprep.subr.bf16.mxu0 0
        %3486 = vmatpush1.bf16.xpose.msra.mxu0 0
        %3487 = vmatprep.subr.bf16.mxu0 0
        %3488 = vmatpush1.bf16.xpose.msra.mxu0 0
        %3489 = vmatprep.subr.bf16.mxu0 0
        %3490 = vmatpush1.bf16.xpose.msra.mxu0 0
        %3491 = vmatprep.subr.bf16.mxu0 0
        %3492 = vmatpush1.bf16.xpose.msra.mxu0 0
        %3493 = vmatprep.subr.bf16.mxu0 0
        %3494 = vmatpush1.bf16.xpose.msra.mxu0 0
        %3495 = vmatprep.subr.bf16.mxu0 0
        %3496 = vmatpush1.bf16.xpose.msra.mxu0 0
        %3497 = vmatprep.subr.bf16.mxu0 0
        %3498 = vmatpush1.bf16.xpose.msra.mxu0 0
        %3499 = vmatprep.subr.bf16.mxu0 0
        %3500 = vmatpush1.bf16.xpose.msra.mxu0 0
        %3501 = vmatprep.subr.bf16.mxu0 0
        %3502 = vmatpush1.bf16.xpose.msra.mxu0 0
        %3503 = vmatprep.subr.bf16.mxu0 0
        %3504 = vmatpush1.bf16.xpose.msra.mxu0 0
        %3505 = vmatprep.subr.bf16.mxu0 0
        %3506 = vmatpush1.bf16.xpose.msra.mxu0 0
        %3507 = vmatprep.subr.bf16.mxu0 0
        %3508 = vmatpush1.bf16.xpose.msra.mxu0 0
        %3509 = vmatprep.subr.bf16.mxu0 0
        %3510 = vmatpush1.bf16.xpose.msra.mxu0 0
        %3511 = vmatprep.subr.bf16.mxu0 0
        %3512 = vmatpush1.bf16.xpose.msra.mxu0 0
        %3513 = vmatprep.subr.bf16.mxu0 0
        %3514 = vmatpush1.bf16.xpose.msra.mxu0 0
        %3515 = vmatprep.mubr.bf16.mxu0 0
        %3516 = vmatmul.mubr.bf16.gmra.mrb[0].mxu0 %v3478
        %v3517 = vpop.f32.mrb[0].mxu0
        %v3518 = vadd.f32 %v1274, %v3517
        %v3519 = vpop.f32.mrb[0].mxu0
        %v3520 = vpop.f32.mrb[0].mxu0
        %v3521 = vadd.f32 %v1275, %v3520
        %v3522 = vpop.f32.mrb[0].mxu0
        %3523 = vdwg.mxu0
        %v3525 = vsel %vm3335, %v2147, 0
        %v3528 = vsel %vm3335, %v2739, 0
        %3530 = vmatprep.subr.bf16.mxu0 0
        %3531 = vmatpush1.bf16.xpose.msra.mxu0 %v3528
        %3532 = vmatprep.subr.bf16.mxu0 0
        %3533 = vmatpush1.bf16.xpose.msra.mxu0 0
        %3534 = vmatprep.subr.bf16.mxu0 0
        %3535 = vmatpush1.bf16.xpose.msra.mxu0 0
        %3536 = vmatprep.subr.bf16.mxu0 0
        %3537 = vmatpush1.bf16.xpose.msra.mxu0 0
        %3538 = vmatprep.subr.bf16.mxu0 0
        %3539 = vmatpush1.bf16.xpose.msra.mxu0 0
        %3540 = vmatprep.subr.bf16.mxu0 0
        %3541 = vmatpush1.bf16.xpose.msra.mxu0 0
        %3542 = vmatprep.subr.bf16.mxu0 0
        %3543 = vmatpush1.bf16.xpose.msra.mxu0 0
        %3544 = vmatprep.subr.bf16.mxu0 0
        %3545 = vmatpush1.bf16.xpose.msra.mxu0 0
        %3546 = vmatprep.subr.bf16.mxu0 0
        %3547 = vmatpush1.bf16.xpose.msra.mxu0 0
        %3548 = vmatprep.subr.bf16.mxu0 0
        %3549 = vmatpush1.bf16.xpose.msra.mxu0 0
        %3550 = vmatprep.subr.bf16.mxu0 0
        %3551 = vmatpush1.bf16.xpose.msra.mxu0 0
        %3552 = vmatprep.subr.bf16.mxu0 0
        %3553 = vmatpush1.bf16.xpose.msra.mxu0 0
        %3554 = vmatprep.subr.bf16.mxu0 0
        %3555 = vmatpush1.bf16.xpose.msra.mxu0 0
        %3556 = vmatprep.subr.bf16.mxu0 0
        %3557 = vmatpush1.bf16.xpose.msra.mxu0 0
        %3558 = vmatprep.subr.bf16.mxu0 0
        %3559 = vmatpush1.bf16.xpose.msra.mxu0 0
        %3560 = vmatprep.subr.bf16.mxu0 0
        %3561 = vmatpush1.bf16.xpose.msra.mxu0 0
        %3562 = vmatprep.mubr.bf16.mxu0 0
        %3563 = vmatmul.mubr.bf16.gmra.mrb[0].mxu0 %v3525
        %v3564 = vpop.f32.mrb[0].mxu0
        %v3565 = vadd.f32 %v1274, %v3564
        %v3566 = vpop.f32.mrb[0].mxu0
        %v3567 = vpop.f32.mrb[0].mxu0
        %v3568 = vadd.f32 %v1275, %v3567
        %v3569 = vpop.f32.mrb[0].mxu0
        %3570 = vdwg.mxu0
        %v3572 = vsel %vm3335, %v2148, 0
        %v3575 = vsel %vm3335, %v2740, 0
        %3577 = vmatprep.subr.bf16.mxu0 0
        %3578 = vmatpush1.bf16.xpose.msra.mxu0 %v3575
        %3579 = vmatprep.subr.bf16.mxu0 0
        %3580 = vmatpush1.bf16.xpose.msra.mxu0 0
        %3581 = vmatprep.subr.bf16.mxu0 0
        %3582 = vmatpush1.bf16.xpose.msra.mxu0 0
        %3583 = vmatprep.subr.bf16.mxu0 0
        %3584 = vmatpush1.bf16.xpose.msra.mxu0 0
        %3585 = vmatprep.subr.bf16.mxu0 0
        %3586 = vmatpush1.bf16.xpose.msra.mxu0 0
        %3587 = vmatprep.subr.bf16.mxu0 0
        %3588 = vmatpush1.bf16.xpose.msra.mxu0 0
        %3589 = vmatprep.subr.bf16.mxu0 0
        %3590 = vmatpush1.bf16.xpose.msra.mxu0 0
        %3591 = vmatprep.subr.bf16.mxu0 0
        %3592 = vmatpush1.bf16.xpose.msra.mxu0 0
        %3593 = vmatprep.subr.bf16.mxu0 0
        %3594 = vmatpush1.bf16.xpose.msra.mxu0 0
        %3595 = vmatprep.subr.bf16.mxu0 0
        %3596 = vmatpush1.bf16.xpose.msra.mxu0 0
        %3597 = vmatprep.subr.bf16.mxu0 0
        %3598 = vmatpush1.bf16.xpose.msra.mxu0 0
        %3599 = vmatprep.subr.bf16.mxu0 0
        %3600 = vmatpush1.bf16.xpose.msra.mxu0 0
        %3601 = vmatprep.subr.bf16.mxu0 0
        %3602 = vmatpush1.bf16.xpose.msra.mxu0 0
        %3603 = vmatprep.subr.bf16.mxu0 0
        %3604 = vmatpush1.bf16.xpose.msra.mxu0 0
        %3605 = vmatprep.subr.bf16.mxu0 0
        %3606 = vmatpush1.bf16.xpose.msra.mxu0 0
        %3607 = vmatprep.subr.bf16.mxu0 0
        %3608 = vmatpush1.bf16.xpose.msra.mxu0 0
        %3609 = vmatprep.mubr.bf16.mxu0 0
        %3610 = vmatmul.mubr.bf16.gmra.mrb[0].mxu0 %v3572
        %v3611 = vpop.f32.mrb[0].mxu0
        %v3612 = vadd.f32 %v1274, %v3611
        %v3613 = vpop.f32.mrb[0].mxu0
        %v3614 = vpop.f32.mrb[0].mxu0
        %v3615 = vadd.f32 %v1275, %v3614
        %v3616 = vpop.f32.mrb[0].mxu0
        %3617 = vdwg.mxu0
        %v3619 = vsel %vm3335, %v2149, 0
        %v3622 = vsel %vm3335, %v2741, 0
        %3624 = vmatprep.subr.bf16.mxu0 0
        %3625 = vmatpush1.bf16.xpose.msra.mxu0 %v3622
        %3626 = vmatprep.subr.bf16.mxu0 0
        %3627 = vmatpush1.bf16.xpose.msra.mxu0 0
        %3628 = vmatprep.subr.bf16.mxu0 0
        %3629 = vmatpush1.bf16.xpose.msra.mxu0 0
        %3630 = vmatprep.subr.bf16.mxu0 0
        %3631 = vmatpush1.bf16.xpose.msra.mxu0 0
        %3632 = vmatprep.subr.bf16.mxu0 0
        %3633 = vmatpush1.bf16.xpose.msra.mxu0 0
        %3634 = vmatprep.subr.bf16.mxu0 0
        %3635 = vmatpush1.bf16.xpose.msra.mxu0 0
        %3636 = vmatprep.subr.bf16.mxu0 0
        %3637 = vmatpush1.bf16.xpose.msra.mxu0 0
        %3638 = vmatprep.subr.bf16.mxu0 0
        %3639 = vmatpush1.bf16.xpose.msra.mxu0 0
        %3640 = vmatprep.subr.bf16.mxu0 0
        %3641 = vmatpush1.bf16.xpose.msra.mxu0 0
        %3642 = vmatprep.subr.bf16.mxu0 0
        %3643 = vmatpush1.bf16.xpose.msra.mxu0 0
        %3644 = vmatprep.subr.bf16.mxu0 0
        %3645 = vmatpush1.bf16.xpose.msra.mxu0 0
        %3646 = vmatprep.subr.bf16.mxu0 0
        %3647 = vmatpush1.bf16.xpose.msra.mxu0 0
        %3648 = vmatprep.subr.bf16.mxu0 0
        %3649 = vmatpush1.bf16.xpose.msra.mxu0 0
        %3650 = vmatprep.subr.bf16.mxu0 0
        %3651 = vmatpush1.bf16.xpose.msra.mxu0 0
        %3652 = vmatprep.subr.bf16.mxu0 0
        %3653 = vmatpush1.bf16.xpose.msra.mxu0 0
        %3654 = vmatprep.subr.bf16.mxu0 0
        %3655 = vmatpush1.bf16.xpose.msra.mxu0 0
        %3656 = vmatprep.mubr.bf16.mxu0 0
        %3657 = vmatmul.mubr.bf16.gmra.mrb[0].mxu0 %v3619
        %v3658 = vpop.f32.mrb[0].mxu0
        %v3659 = vadd.f32 %v1274, %v3658
        %v3660 = vpop.f32.mrb[0].mxu0
        %v3661 = vpop.f32.mrb[0].mxu0
        %v3662 = vadd.f32 %v1275, %v3661
        %v3663 = vpop.f32.mrb[0].mxu0
        %3664 = vdwg.mxu0
        %v3666 = vsel %vm3335, %v2150, 0
        %v3669 = vsel %vm3335, %v2742, 0
        %3671 = vmatprep.subr.bf16.mxu0 0
        %3672 = vmatpush1.bf16.xpose.msra.mxu0 %v3669
        %3673 = vmatprep.subr.bf16.mxu0 0
        %3674 = vmatpush1.bf16.xpose.msra.mxu0 0
        %3675 = vmatprep.subr.bf16.mxu0 0
        %3676 = vmatpush1.bf16.xpose.msra.mxu0 0
        %3677 = vmatprep.subr.bf16.mxu0 0
        %3678 = vmatpush1.bf16.xpose.msra.mxu0 0
        %3679 = vmatprep.subr.bf16.mxu0 0
        %3680 = vmatpush1.bf16.xpose.msra.mxu0 0
        %3681 = vmatprep.subr.bf16.mxu0 0
        %3682 = vmatpush1.bf16.xpose.msra.mxu0 0
        %3683 = vmatprep.subr.bf16.mxu0 0
        %3684 = vmatpush1.bf16.xpose.msra.mxu0 0
        %3685 = vmatprep.subr.bf16.mxu0 0
        %3686 = vmatpush1.bf16.xpose.msra.mxu0 0
        %3687 = vmatprep.subr.bf16.mxu0 0
        %3688 = vmatpush1.bf16.xpose.msra.mxu0 0
        %3689 = vmatprep.subr.bf16.mxu0 0
        %3690 = vmatpush1.bf16.xpose.msra.mxu0 0
        %3691 = vmatprep.subr.bf16.mxu0 0
        %3692 = vmatpush1.bf16.xpose.msra.mxu0 0
        %3693 = vmatprep.subr.bf16.mxu0 0
        %3694 = vmatpush1.bf16.xpose.msra.mxu0 0
        %3695 = vmatprep.subr.bf16.mxu0 0
        %3696 = vmatpush1.bf16.xpose.msra.mxu0 0
        %3697 = vmatprep.subr.bf16.mxu0 0
        %3698 = vmatpush1.bf16.xpose.msra.mxu0 0
        %3699 = vmatprep.subr.bf16.mxu0 0
        %3700 = vmatpush1.bf16.xpose.msra.mxu0 0
        %3701 = vmatprep.subr.bf16.mxu0 0
        %3702 = vmatpush1.bf16.xpose.msra.mxu0 0
        %3703 = vmatprep.mubr.bf16.mxu0 0
        %3704 = vmatmul.mubr.bf16.gmra.mrb[0].mxu0 %v3666
        %v3705 = vpop.f32.mrb[0].mxu0
        %v3706 = vadd.f32 %v1274, %v3705
        %v3707 = vpop.f32.mrb[0].mxu0
        %v3708 = vpop.f32.mrb[0].mxu0
        %v3709 = vadd.f32 %v1275, %v3708
        %v3710 = vpop.f32.mrb[0].mxu0
        %3711 = vdwg.mxu0
        %vm3712 = vcmask 130048
        %v3713 = vsel %vm3712, %v3377, -inf
        %3714 = vmax.xlane.f32.xlu0 %v3713
        %v3715 = vpop.xlane.xlu0 %3714
        %v3716 = vsel %vm3712, %v3380, -inf
        %3717 = vmax.xlane.f32.xlu0 %v3716
        %v3718 = vpop.xlane.xlu0 %3717
        %v3719 = vsel %vm3712, %v3424, -inf
        %3720 = vmax.xlane.f32.xlu0 %v3719
        %v3721 = vpop.xlane.xlu0 %3720
        %v3722 = vsel %vm3712, %v3427, -inf
        %3723 = vmax.xlane.f32.xlu0 %v3722
        %v3724 = vpop.xlane.xlu0 %3723
        %v3725 = vsel %vm3712, %v3471, -inf
        %3726 = vmax.xlane.f32.xlu0 %v3725
        %v3727 = vpop.xlane.xlu0 %3726
        %v3728 = vsel %vm3712, %v3474, -inf
        %3729 = vmax.xlane.f32.xlu0 %v3728
        %v3730 = vpop.xlane.xlu0 %3729
        %v3731 = vsel %vm3712, %v3518, -inf
        %3732 = vmax.xlane.f32.xlu0 %v3731
        %v3733 = vpop.xlane.xlu0 %3732
        %v3734 = vsel %vm3712, %v3521, -inf
        %3735 = vmax.xlane.f32.xlu0 %v3734
        %v3736 = vpop.xlane.xlu0 %3735
        %v3737 = vsel %vm3712, %v3565, -inf
        %3738 = vmax.xlane.f32.xlu0 %v3737
        %v3739 = vpop.xlane.xlu0 %3738
        %v3740 = vsel %vm3712, %v3568, -inf
        %3741 = vmax.xlane.f32.xlu0 %v3740
        %v3742 = vpop.xlane.xlu0 %3741
        %v3743 = vsel %vm3712, %v3612, -inf
        %3744 = vmax.xlane.f32.xlu0 %v3743
        %v3745 = vpop.xlane.xlu0 %3744
        %v3746 = vsel %vm3712, %v3615, -inf
        %3747 = vmax.xlane.f32.xlu0 %v3746
        %v3748 = vpop.xlane.xlu0 %3747
        %v3749 = vsel %vm3712, %v3659, -inf
        %3750 = vmax.xlane.f32.xlu0 %v3749
        %v3751 = vpop.xlane.xlu0 %3750
        %v3752 = vsel %vm3712, %v3662, -inf
        %3753 = vmax.xlane.f32.xlu0 %v3752
        %v3754 = vpop.xlane.xlu0 %3753
        %v3755 = vsel %vm3712, %v3706, -inf
        %3756 = vmax.xlane.f32.xlu0 %v3755
        %v3757 = vpop.xlane.xlu0 %3756
        %v3758 = vsel %vm3712, %v3709, -inf
        %3759 = vmax.xlane.f32.xlu0 %v3758
        %v3760 = vpop.xlane.xlu0 %3759
        %v3761 = vsub.f32 %v3377, %v3715
        %v3762 = vsub.f32 %v3380, %v3718
        %v3763 = vsub.f32 %v3424, %v3721
        %v3764 = vsub.f32 %v3427, %v3724
        %v3765 = vsub.f32 %v3471, %v3727
        %v3766 = vsub.f32 %v3474, %v3730
        %v3767 = vsub.f32 %v3518, %v3733
        %v3768 = vsub.f32 %v3521, %v3736
        %v3769 = vsub.f32 %v3565, %v3739
        %v3770 = vsub.f32 %v3568, %v3742
        %v3771 = vsub.f32 %v3612, %v3745
        %v3772 = vsub.f32 %v3615, %v3748
        %v3773 = vsub.f32 %v3659, %v3751
        %v3774 = vsub.f32 %v3662, %v3754
        %v3775 = vsub.f32 %v3706, %v3757
        %v3776 = vsub.f32 %v3709, %v3760
        %v3777 = vmul.f32 %v3761, 1.442695
        %v3778 = vpow.pop %v3777
        %v3779 = vmul.f32 %v3762, 1.442695
        %v3780 = vpow.pop %v3779
        %v3781 = vmul.f32 %v3763, 1.442695
        %v3782 = vpow.pop %v3781
        %v3783 = vmul.f32 %v3764, 1.442695
        %v3784 = vpow.pop %v3783
        %v3785 = vmul.f32 %v3765, 1.442695
        %v3786 = vpow.pop %v3785
        %v3787 = vmul.f32 %v3766, 1.442695
        %v3788 = vpow.pop %v3787
        %v3789 = vmul.f32 %v3767, 1.442695
        %v3790 = vpow.pop %v3789
        %v3791 = vmul.f32 %v3768, 1.442695
        %v3792 = vpow.pop %v3791
        %v3793 = vmul.f32 %v3769, 1.442695
        %v3794 = vpow.pop %v3793
        %v3795 = vmul.f32 %v3770, 1.442695
        %v3796 = vpow.pop %v3795
        %v3797 = vmul.f32 %v3771, 1.442695
        %v3798 = vpow.pop %v3797
        %v3799 = vmul.f32 %v3772, 1.442695
        %v3800 = vpow.pop %v3799
        %v3801 = vmul.f32 %v3773, 1.442695
        %v3802 = vpow.pop %v3801
        %v3803 = vmul.f32 %v3774, 1.442695
        %v3804 = vpow.pop %v3803
        %v3805 = vmul.f32 %v3775, 1.442695
        %v3806 = vpow.pop %v3805
        %v3807 = vmul.f32 %v3776, 1.442695
        %v3808 = vpow.pop %v3807
        %v3809 = vsel %vm3712, %v3778, 0.0
        %3810 = vadd.xlane.f32.xlu0 %v3809
        %v3811 = vpop.xlane.xlu0 %3810
        %v3812 = vsel %vm3712, %v3780, 0.0
        %3813 = vadd.xlane.f32.xlu0 %v3812
        %v3814 = vpop.xlane.xlu0 %3813
        %v3815 = vsel %vm3712, %v3782, 0.0
        %3816 = vadd.xlane.f32.xlu0 %v3815
        %v3817 = vpop.xlane.xlu0 %3816
        %v3818 = vsel %vm3712, %v3784, 0.0
        %3819 = vadd.xlane.f32.xlu0 %v3818
        %v3820 = vpop.xlane.xlu0 %3819
        %v3821 = vsel %vm3712, %v3786, 0.0
        %3822 = vadd.xlane.f32.xlu0 %v3821
        %v3823 = vpop.xlane.xlu0 %3822
        %v3824 = vsel %vm3712, %v3788, 0.0
        %3825 = vadd.xlane.f32.xlu0 %v3824
        %v3826 = vpop.xlane.xlu0 %3825
        %v3827 = vsel %vm3712, %v3790, 0.0
        %3828 = vadd.xlane.f32.xlu0 %v3827
        %v3829 = vpop.xlane.xlu0 %3828
        %v3830 = vsel %vm3712, %v3792, 0.0
        %3831 = vadd.xlane.f32.xlu0 %v3830
        %v3832 = vpop.xlane.xlu0 %3831
        %v3833 = vsel %vm3712, %v3794, 0.0
        %3834 = vadd.xlane.f32.xlu0 %v3833
        %v3835 = vpop.xlane.xlu0 %3834
        %v3836 = vsel %vm3712, %v3796, 0.0
        %3837 = vadd.xlane.f32.xlu0 %v3836
        %v3838 = vpop.xlane.xlu0 %3837
        %v3839 = vsel %vm3712, %v3798, 0.0
        %3840 = vadd.xlane.f32.xlu0 %v3839
        %v3841 = vpop.xlane.xlu0 %3840
        %v3842 = vsel %vm3712, %v3800, 0.0
        %3843 = vadd.xlane.f32.xlu0 %v3842
        %v3844 = vpop.xlane.xlu0 %3843
        %v3845 = vsel %vm3712, %v3802, 0.0
        %3846 = vadd.xlane.f32.xlu0 %v3845
        %v3847 = vpop.xlane.xlu0 %3846
        %v3848 = vsel %vm3712, %v3804, 0.0
        %3849 = vadd.xlane.f32.xlu0 %v3848
        %v3850 = vpop.xlane.xlu0 %3849
        %v3851 = vsel %vm3712, %v3806, 0.0
        %3852 = vadd.xlane.f32.xlu0 %v3851
        %v3853 = vpop.xlane.xlu0 %3852
        %v3854 = vsel %vm3712, %v3808, 0.0
        %3855 = vadd.xlane.f32.xlu0 %v3854
        %v3856 = vpop.xlane.xlu0 %3855
        %v3857 = vrcp.pop %v3811
        %v3858 = vrcp.pop %v3814
        %v3859 = vrcp.pop %v3817
        %v3860 = vrcp.pop %v3820
        %v3861 = vrcp.pop %v3823
        %v3862 = vrcp.pop %v3826
        %v3863 = vrcp.pop %v3829
        %v3864 = vrcp.pop %v3832
        %v3865 = vrcp.pop %v3835
        %v3866 = vrcp.pop %v3838
        %v3867 = vrcp.pop %v3841
        %v3868 = vrcp.pop %v3844
        %v3869 = vrcp.pop %v3847
        %v3870 = vrcp.pop %v3850
        %v3871 = vrcp.pop %v3853
        %v3872 = vrcp.pop %v3856
        %v3873 = vmul.f32 %v3778, %v3857
        %v3874 = vmul.f32 %v3780, %v3858
        %v3875 = vmul.f32 %v3782, %v3859
        %v3876 = vmul.f32 %v3784, %v3860
        %v3877 = vmul.f32 %v3786, %v3861
        %v3878 = vmul.f32 %v3788, %v3862
        %v3879 = vmul.f32 %v3790, %v3863
        %v3880 = vmul.f32 %v3792, %v3864
        %v3881 = vmul.f32 %v3794, %v3865
        %v3882 = vmul.f32 %v3796, %v3866
        %v3883 = vmul.f32 %v3798, %v3867
        %v3884 = vmul.f32 %v3800, %v3868
        %v3885 = vmul.f32 %v3802, %v3869
        %v3886 = vmul.f32 %v3804, %v3870
        %v3887 = vmul.f32 %v3806, %v3871
        %v3888 = vmul.f32 %v3808, %v3872
        %v3889 = vpack.c.bf16 %v3874, %v3873
        %v3890 = vpack.c.bf16 %v3876, %v3875
        %v3891 = vpack.c.bf16 %v3878, %v3877
        %v3892 = vpack.c.bf16 %v3880, %v3879
        %v3893 = vpack.c.bf16 %v3882, %v3881
        %v3894 = vpack.c.bf16 %v3884, %v3883
        %v3895 = vpack.c.bf16 %v3886, %v3885
        %v3896 = vpack.c.bf16 %v3888, %v3887
        %v3898 = vsel %vm3712, %v3889, 0
        %3900 = vmatprep.subr.bf16.mxu0 0
        %3901 = vmatpush1.bf16.msra.mxu0 %v3327
        %3902 = vmatprep.subr.bf16.mxu0 0
        %3903 = vmatpush1.bf16.msra.mxu0 0
        %3904 = vmatprep.subr.bf16.mxu0 0
        %3905 = vmatpush1.bf16.msra.mxu0 0
        %3906 = vmatprep.subr.bf16.mxu0 0
        %3907 = vmatpush1.bf16.msra.mxu0 0
        %3908 = vmatprep.subr.bf16.mxu0 0
        %3909 = vmatpush1.bf16.msra.mxu0 0
        %3910 = vmatprep.subr.bf16.mxu0 0
        %3911 = vmatpush1.bf16.msra.mxu0 0
        %3912 = vmatprep.subr.bf16.mxu0 0
        %3913 = vmatpush1.bf16.msra.mxu0 0
        %3914 = vmatprep.subr.bf16.mxu0 0
        %3915 = vmatpush1.bf16.msra.mxu0 0
        %3916 = vmatprep.subr.bf16.mxu0 0
        %3917 = vmatpush1.bf16.msra.mxu0 0
        %3918 = vmatprep.subr.bf16.mxu0 0
        %3919 = vmatpush1.bf16.msra.mxu0 0
        %3920 = vmatprep.subr.bf16.mxu0 0
        %3921 = vmatpush1.bf16.msra.mxu0 0
        %3922 = vmatprep.subr.bf16.mxu0 0
        %3923 = vmatpush1.bf16.msra.mxu0 0
        %3924 = vmatprep.subr.bf16.mxu0 0
        %3925 = vmatpush1.bf16.msra.mxu0 0
        %3926 = vmatprep.subr.bf16.mxu0 0
        %3927 = vmatpush1.bf16.msra.mxu0 0
        %3928 = vmatprep.subr.bf16.mxu0 0
        %3929 = vmatpush1.bf16.msra.mxu0 0
        %3930 = vmatprep.subr.bf16.mxu0 0
        %3931 = vmatpush1.bf16.msra.mxu0 0
        %3932 = vmatprep.mubr.bf16.mxu0 0
        %3933 = vmatmul.mubr.bf16.gmra.mrb[0].mxu0 %v3898
        %v3934 = vpop.f32.mrb[0].mxu0
        %v3935 = vadd.f32 0.0, %v3934
        %v3936 = vpop.f32.mrb[0].mxu0
        %v3937 = vpop.f32.mrb[0].mxu0
        %v3938 = vadd.f32 0.0, %v3937
        %v3939 = vpop.f32.mrb[0].mxu0
        %3940 = vdwg.mxu0
        %v3942 = vsel %vm3712, %v3890, 0
        %3944 = vmatprep.subr.bf16.mxu0 0
        %3945 = vmatpush1.bf16.msra.mxu0 %v3328
        %3946 = vmatprep.subr.bf16.mxu0 0
        %3947 = vmatpush1.bf16.msra.mxu0 0
        %3948 = vmatprep.subr.bf16.mxu0 0
        %3949 = vmatpush1.bf16.msra.mxu0 0
        %3950 = vmatprep.subr.bf16.mxu0 0
        %3951 = vmatpush1.bf16.msra.mxu0 0
        %3952 = vmatprep.subr.bf16.mxu0 0
        %3953 = vmatpush1.bf16.msra.mxu0 0
        %3954 = vmatprep.subr.bf16.mxu0 0
        %3955 = vmatpush1.bf16.msra.mxu0 0
        %3956 = vmatprep.subr.bf16.mxu0 0
        %3957 = vmatpush1.bf16.msra.mxu0 0
        %3958 = vmatprep.subr.bf16.mxu0 0
        %3959 = vmatpush1.bf16.msra.mxu0 0
        %3960 = vmatprep.subr.bf16.mxu0 0
        %3961 = vmatpush1.bf16.msra.mxu0 0
        %3962 = vmatprep.subr.bf16.mxu0 0
        %3963 = vmatpush1.bf16.msra.mxu0 0
        %3964 = vmatprep.subr.bf16.mxu0 0
        %3965 = vmatpush1.bf16.msra.mxu0 0
        %3966 = vmatprep.subr.bf16.mxu0 0
        %3967 = vmatpush1.bf16.msra.mxu0 0
        %3968 = vmatprep.subr.bf16.mxu0 0
        %3969 = vmatpush1.bf16.msra.mxu0 0
        %3970 = vmatprep.subr.bf16.mxu0 0
        %3971 = vmatpush1.bf16.msra.mxu0 0
        %3972 = vmatprep.subr.bf16.mxu0 0
        %3973 = vmatpush1.bf16.msra.mxu0 0
        %3974 = vmatprep.subr.bf16.mxu0 0
        %3975 = vmatpush1.bf16.msra.mxu0 0
        %3976 = vmatprep.mubr.bf16.mxu0 0
        %3977 = vmatmul.mubr.bf16.gmra.mrb[0].mxu0 %v3942
        %v3978 = vpop.f32.mrb[0].mxu0
        %v3979 = vadd.f32 0.0, %v3978
        %v3980 = vpop.f32.mrb[0].mxu0
        %v3981 = vpop.f32.mrb[0].mxu0
        %v3982 = vadd.f32 0.0, %v3981
        %v3983 = vpop.f32.mrb[0].mxu0
        %3984 = vdwg.mxu0
        %v3986 = vsel %vm3712, %v3891, 0
        %3988 = vmatprep.subr.bf16.mxu0 0
        %3989 = vmatpush1.bf16.msra.mxu0 %v3329
        %3990 = vmatprep.subr.bf16.mxu0 0
        %3991 = vmatpush1.bf16.msra.mxu0 0
        %3992 = vmatprep.subr.bf16.mxu0 0
        %3993 = vmatpush1.bf16.msra.mxu0 0
        %3994 = vmatprep.subr.bf16.mxu0 0
        %3995 = vmatpush1.bf16.msra.mxu0 0
        %3996 = vmatprep.subr.bf16.mxu0 0
        %3997 = vmatpush1.bf16.msra.mxu0 0
        %3998 = vmatprep.subr.bf16.mxu0 0
        %3999 = vmatpush1.bf16.msra.mxu0 0
        %4000 = vmatprep.subr.bf16.mxu0 0
        %4001 = vmatpush1.bf16.msra.mxu0 0
        %4002 = vmatprep.subr.bf16.mxu0 0
        %4003 = vmatpush1.bf16.msra.mxu0 0
        %4004 = vmatprep.subr.bf16.mxu0 0
        %4005 = vmatpush1.bf16.msra.mxu0 0
        %4006 = vmatprep.subr.bf16.mxu0 0
        %4007 = vmatpush1.bf16.msra.mxu0 0
        %4008 = vmatprep.subr.bf16.mxu0 0
        %4009 = vmatpush1.bf16.msra.mxu0 0
        %4010 = vmatprep.subr.bf16.mxu0 0
        %4011 = vmatpush1.bf16.msra.mxu0 0
        %4012 = vmatprep.subr.bf16.mxu0 0
        %4013 = vmatpush1.bf16.msra.mxu0 0
        %4014 = vmatprep.subr.bf16.mxu0 0
        %4015 = vmatpush1.bf16.msra.mxu0 0
        %4016 = vmatprep.subr.bf16.mxu0 0
        %4017 = vmatpush1.bf16.msra.mxu0 0
        %4018 = vmatprep.subr.bf16.mxu0 0
        %4019 = vmatpush1.bf16.msra.mxu0 0
        %4020 = vmatprep.mubr.bf16.mxu0 0
        %4021 = vmatmul.mubr.bf16.gmra.mrb[0].mxu0 %v3986
        %v4022 = vpop.f32.mrb[0].mxu0
        %v4023 = vadd.f32 0.0, %v4022
        %v4024 = vpop.f32.mrb[0].mxu0
        %v4025 = vpop.f32.mrb[0].mxu0
        %v4026 = vadd.f32 0.0, %v4025
        %v4027 = vpop.f32.mrb[0].mxu0
        %4028 = vdwg.mxu0
        %v4030 = vsel %vm3712, %v3892, 0
        %4032 = vmatprep.subr.bf16.mxu0 0
        %4033 = vmatpush1.bf16.msra.mxu0 %v3330
        %4034 = vmatprep.subr.bf16.mxu0 0
        %4035 = vmatpush1.bf16.msra.mxu0 0
        %4036 = vmatprep.subr.bf16.mxu0 0
        %4037 = vmatpush1.bf16.msra.mxu0 0
        %4038 = vmatprep.subr.bf16.mxu0 0
        %4039 = vmatpush1.bf16.msra.mxu0 0
        %4040 = vmatprep.subr.bf16.mxu0 0
        %4041 = vmatpush1.bf16.msra.mxu0 0
        %4042 = vmatprep.subr.bf16.mxu0 0
        %4043 = vmatpush1.bf16.msra.mxu0 0
        %4044 = vmatprep.subr.bf16.mxu0 0
        %4045 = vmatpush1.bf16.msra.mxu0 0
        %4046 = vmatprep.subr.bf16.mxu0 0
        %4047 = vmatpush1.bf16.msra.mxu0 0
        %4048 = vmatprep.subr.bf16.mxu0 0
        %4049 = vmatpush1.bf16.msra.mxu0 0
        %4050 = vmatprep.subr.bf16.mxu0 0
        %4051 = vmatpush1.bf16.msra.mxu0 0
        %4052 = vmatprep.subr.bf16.mxu0 0
        %4053 = vmatpush1.bf16.msra.mxu0 0
        %4054 = vmatprep.subr.bf16.mxu0 0
        %4055 = vmatpush1.bf16.msra.mxu0 0
        %4056 = vmatprep.subr.bf16.mxu0 0
        %4057 = vmatpush1.bf16.msra.mxu0 0
        %4058 = vmatprep.subr.bf16.mxu0 0
        %4059 = vmatpush1.bf16.msra.mxu0 0
        %4060 = vmatprep.subr.bf16.mxu0 0
        %4061 = vmatpush1.bf16.msra.mxu0 0
        %4062 = vmatprep.subr.bf16.mxu0 0
        %4063 = vmatpush1.bf16.msra.mxu0 0
        %4064 = vmatprep.mubr.bf16.mxu0 0
        %4065 = vmatmul.mubr.bf16.gmra.mrb[0].mxu0 %v4030
        %v4066 = vpop.f32.mrb[0].mxu0
        %v4067 = vadd.f32 0.0, %v4066
        %v4068 = vpop.f32.mrb[0].mxu0
        %v4069 = vpop.f32.mrb[0].mxu0
        %v4070 = vadd.f32 0.0, %v4069
        %v4071 = vpop.f32.mrb[0].mxu0
        %4072 = vdwg.mxu0
        %v4074 = vsel %vm3712, %v3893, 0
        %4076 = vmatprep.subr.bf16.mxu0 0
        %4077 = vmatpush1.bf16.msra.mxu0 %v3331
        %4078 = vmatprep.subr.bf16.mxu0 0
        %4079 = vmatpush1.bf16.msra.mxu0 0
        %4080 = vmatprep.subr.bf16.mxu0 0
        %4081 = vmatpush1.bf16.msra.mxu0 0
        %4082 = vmatprep.subr.bf16.mxu0 0
        %4083 = vmatpush1.bf16.msra.mxu0 0
        %4084 = vmatprep.subr.bf16.mxu0 0
        %4085 = vmatpush1.bf16.msra.mxu0 0
        %4086 = vmatprep.subr.bf16.mxu0 0
        %4087 = vmatpush1.bf16.msra.mxu0 0
        %4088 = vmatprep.subr.bf16.mxu0 0
        %4089 = vmatpush1.bf16.msra.mxu0 0
        %4090 = vmatprep.subr.bf16.mxu0 0
        %4091 = vmatpush1.bf16.msra.mxu0 0
        %4092 = vmatprep.subr.bf16.mxu0 0
        %4093 = vmatpush1.bf16.msra.mxu0 0
        %4094 = vmatprep.subr.bf16.mxu0 0
        %4095 = vmatpush1.bf16.msra.mxu0 0
        %4096 = vmatprep.subr.bf16.mxu0 0
        %4097 = vmatpush1.bf16.msra.mxu0 0
        %4098 = vmatprep.subr.bf16.mxu0 0
        %4099 = vmatpush1.bf16.msra.mxu0 0
        %4100 = vmatprep.subr.bf16.mxu0 0
        %4101 = vmatpush1.bf16.msra.mxu0 0
        %4102 = vmatprep.subr.bf16.mxu0 0
        %4103 = vmatpush1.bf16.msra.mxu0 0
        %4104 = vmatprep.subr.bf16.mxu0 0
        %4105 = vmatpush1.bf16.msra.mxu0 0
        %4106 = vmatprep.subr.bf16.mxu0 0
        %4107 = vmatpush1.bf16.msra.mxu0 0
        %4108 = vmatprep.mubr.bf16.mxu0 0
        %4109 = vmatmul.mubr.bf16.gmra.mrb[0].mxu0 %v4074
        %v4110 = vpop.f32.mrb[0].mxu0
        %v4111 = vadd.f32 0.0, %v4110
        %v4112 = vpop.f32.mrb[0].mxu0
        %v4113 = vpop.f32.mrb[0].mxu0
        %v4114 = vadd.f32 0.0, %v4113
        %v4115 = vpop.f32.mrb[0].mxu0
        %4116 = vdwg.mxu0
        %v4118 = vsel %vm3712, %v3894, 0
        %4120 = vmatprep.subr.bf16.mxu0 0
        %4121 = vmatpush1.bf16.msra.mxu0 %v3332
        %4122 = vmatprep.subr.bf16.mxu0 0
        %4123 = vmatpush1.bf16.msra.mxu0 0
        %4124 = vmatprep.subr.bf16.mxu0 0
        %4125 = vmatpush1.bf16.msra.mxu0 0
        %4126 = vmatprep.subr.bf16.mxu0 0
        %4127 = vmatpush1.bf16.msra.mxu0 0
        %4128 = vmatprep.subr.bf16.mxu0 0
        %4129 = vmatpush1.bf16.msra.mxu0 0
        %4130 = vmatprep.subr.bf16.mxu0 0
        %4131 = vmatpush1.bf16.msra.mxu0 0
        %4132 = vmatprep.subr.bf16.mxu0 0
        %4133 = vmatpush1.bf16.msra.mxu0 0
        %4134 = vmatprep.subr.bf16.mxu0 0
        %4135 = vmatpush1.bf16.msra.mxu0 0
        %4136 = vmatprep.subr.bf16.mxu0 0
        %4137 = vmatpush1.bf16.msra.mxu0 0
        %4138 = vmatprep.subr.bf16.mxu0 0
        %4139 = vmatpush1.bf16.msra.mxu0 0
        %4140 = vmatprep.subr.bf16.mxu0 0
        %4141 = vmatpush1.bf16.msra.mxu0 0
        %4142 = vmatprep.subr.bf16.mxu0 0
        %4143 = vmatpush1.bf16.msra.mxu0 0
        %4144 = vmatprep.subr.bf16.mxu0 0
        %4145 = vmatpush1.bf16.msra.mxu0 0
        %4146 = vmatprep.subr.bf16.mxu0 0
        %4147 = vmatpush1.bf16.msra.mxu0 0
        %4148 = vmatprep.subr.bf16.mxu0 0
        %4149 = vmatpush1.bf16.msra.mxu0 0
        %4150 = vmatprep.subr.bf16.mxu0 0
        %4151 = vmatpush1.bf16.msra.mxu0 0
        %4152 = vmatprep.mubr.bf16.mxu0 0
        %4153 = vmatmul.mubr.bf16.gmra.mrb[0].mxu0 %v4118
        %v4154 = vpop.f32.mrb[0].mxu0
        %v4155 = vadd.f32 0.0, %v4154
        %v4156 = vpop.f32.mrb[0].mxu0
        %v4157 = vpop.f32.mrb[0].mxu0
        %v4158 = vadd.f32 0.0, %v4157
        %v4159 = vpop.f32.mrb[0].mxu0
        %4160 = vdwg.mxu0
        %v4162 = vsel %vm3712, %v3895, 0
        %4164 = vmatprep.subr.bf16.mxu0 0
        %4165 = vmatpush1.bf16.msra.mxu0 %v3333
        %4166 = vmatprep.subr.bf16.mxu0 0
        %4167 = vmatpush1.bf16.msra.mxu0 0
        %4168 = vmatprep.subr.bf16.mxu0 0
        %4169 = vmatpush1.bf16.msra.mxu0 0
        %4170 = vmatprep.subr.bf16.mxu0 0
        %4171 = vmatpush1.bf16.msra.mxu0 0
        %4172 = vmatprep.subr.bf16.mxu0 0
        %4173 = vmatpush1.bf16.msra.mxu0 0
        %4174 = vmatprep.subr.bf16.mxu0 0
        %4175 = vmatpush1.bf16.msra.mxu0 0
        %4176 = vmatprep.subr.bf16.mxu0 0
        %4177 = vmatpush1.bf16.msra.mxu0 0
        %4178 = vmatprep.subr.bf16.mxu0 0
        %4179 = vmatpush1.bf16.msra.mxu0 0
        %4180 = vmatprep.subr.bf16.mxu0 0
        %4181 = vmatpush1.bf16.msra.mxu0 0
        %4182 = vmatprep.subr.bf16.mxu0 0
        %4183 = vmatpush1.bf16.msra.mxu0 0
        %4184 = vmatprep.subr.bf16.mxu0 0
        %4185 = vmatpush1.bf16.msra.mxu0 0
        %4186 = vmatprep.subr.bf16.mxu0 0
        %4187 = vmatpush1.bf16.msra.mxu0 0
        %4188 = vmatprep.subr.bf16.mxu0 0
        %4189 = vmatpush1.bf16.msra.mxu0 0
        %4190 = vmatprep.subr.bf16.mxu0 0
        %4191 = vmatpush1.bf16.msra.mxu0 0
        %4192 = vmatprep.subr.bf16.mxu0 0
        %4193 = vmatpush1.bf16.msra.mxu0 0
        %4194 = vmatprep.subr.bf16.mxu0 0
        %4195 = vmatpush1.bf16.msra.mxu0 0
        %4196 = vmatprep.mubr.bf16.mxu0 0
        %4197 = vmatmul.mubr.bf16.gmra.mrb[0].mxu0 %v4162
        %v4198 = vpop.f32.mrb[0].mxu0
        %v4199 = vadd.f32 0.0, %v4198
        %v4200 = vpop.f32.mrb[0].mxu0
        %v4201 = vpop.f32.mrb[0].mxu0
        %v4202 = vadd.f32 0.0, %v4201
        %v4203 = vpop.f32.mrb[0].mxu0
        %4204 = vdwg.mxu0
        %v4206 = vsel %vm3712, %v3896, 0
        %4208 = vmatprep.subr.bf16.mxu0 0
        %4209 = vmatpush1.bf16.msra.mxu0 %v3334
        %4210 = vmatprep.subr.bf16.mxu0 0
        %4211 = vmatpush1.bf16.msra.mxu0 0
        %4212 = vmatprep.subr.bf16.mxu0 0
        %4213 = vmatpush1.bf16.msra.mxu0 0
        %4214 = vmatprep.subr.bf16.mxu0 0
        %4215 = vmatpush1.bf16.msra.mxu0 0
        %4216 = vmatprep.subr.bf16.mxu0 0
        %4217 = vmatpush1.bf16.msra.mxu0 0
        %4218 = vmatprep.subr.bf16.mxu0 0
        %4219 = vmatpush1.bf16.msra.mxu0 0
        %4220 = vmatprep.subr.bf16.mxu0 0
        %4221 = vmatpush1.bf16.msra.mxu0 0
        %4222 = vmatprep.subr.bf16.mxu0 0
        %4223 = vmatpush1.bf16.msra.mxu0 0
        %4224 = vmatprep.subr.bf16.mxu0 0
        %4225 = vmatpush1.bf16.msra.mxu0 0
        %4226 = vmatprep.subr.bf16.mxu0 0
        %4227 = vmatpush1.bf16.msra.mxu0 0
        %4228 = vmatprep.subr.bf16.mxu0 0
        %4229 = vmatpush1.bf16.msra.mxu0 0
        %4230 = vmatprep.subr.bf16.mxu0 0
        %4231 = vmatpush1.bf16.msra.mxu0 0
        %4232 = vmatprep.subr.bf16.mxu0 0
        %4233 = vmatpush1.bf16.msra.mxu0 0
        %4234 = vmatprep.subr.bf16.mxu0 0
        %4235 = vmatpush1.bf16.msra.mxu0 0
        %4236 = vmatprep.subr.bf16.mxu0 0
        %4237 = vmatpush1.bf16.msra.mxu0 0
        %4238 = vmatprep.subr.bf16.mxu0 0
        %4239 = vmatpush1.bf16.msra.mxu0 0
        %4240 = vmatprep.mubr.bf16.mxu0 0
        %4241 = vmatmul.mubr.bf16.gmra.mrb[0].mxu0 %v4206
        %v4242 = vpop.f32.mrb[0].mxu0
        %v4243 = vadd.f32 0.0, %v4242
        %v4244 = vpop.f32.mrb[0].mxu0
        %v4245 = vpop.f32.mrb[0].mxu0
        %v4246 = vadd.f32 0.0, %v4245
        %v4247 = vpop.f32.mrb[0].mxu0
        %4248 = vdwg.mxu0
        %v4249 = vcombine.low %v3935, %v4023
        %v4250 = vcombine.high %v3935, %v4023
        %v4252 = vunpack.c.l.s4 1983009808
        %v4253 = vunpack.c.0.s8 %v4252
        %v4254 = vlaneseq
        %v4255 = vshrl.u32 %v4254, 7
        %v4256 = vsub.s32 %v4253, %v4255
        %v4257 = vrot.slane %v4249, %v4256
        %v4259 = vunpack.c.l.s4 1983009808
        %v4260 = vunpack.c.0.s8 %v4259
        %v4261 = vlaneseq
        %v4262 = vshrl.u32 %v4261, 7
        %v4263 = vsub.s32 %v4260, %v4262
        %v4264 = vrot.slane %v4250, %v4263
        %v4265 = vcombine.low %v3979, %v4067
        %v4266 = vcombine.high %v3979, %v4067
        %v4268 = vunpack.c.l.s4 1983009808
        %v4269 = vunpack.c.0.s8 %v4268
        %v4270 = vlaneseq
        %v4271 = vshrl.u32 %v4270, 7
        %v4272 = vsub.s32 %v4269, %v4271
        %v4273 = vrot.slane %v4265, %v4272
        %v4275 = vunpack.c.l.s4 1983009808
        %v4276 = vunpack.c.0.s8 %v4275
        %v4277 = vlaneseq
        %v4278 = vshrl.u32 %v4277, 7
        %v4279 = vsub.s32 %v4276, %v4278
        %v4280 = vrot.slane %v4266, %v4279
        %v4281 = vcombine.low %v4257, %v4273
        %v4282 = vcombine.high %v4257, %v4273
        %v4284 = vunpack.c.l.s4 1934713408
        %v4285 = vunpack.c.0.s8 %v4284
        %v4286 = vlaneseq
        %v4287 = vshrl.u32 %v4286, 7
        %v4288 = vsub.s32 %v4285, %v4287
        %v4289 = vrot.slane %v4281, %v4288
        %v4291 = vunpack.c.l.s4 1934713408
        %v4292 = vunpack.c.0.s8 %v4291
        %v4293 = vlaneseq
        %v4294 = vshrl.u32 %v4293, 7
        %v4295 = vsub.s32 %v4292, %v4294
        %v4296 = vrot.slane %v4282, %v4295
        %v4297 = vcombine.low %v4264, %v4280
        %v4298 = vcombine.high %v4264, %v4280
        %v4300 = vunpack.c.l.s4 1934713408
        %v4301 = vunpack.c.0.s8 %v4300
        %v4302 = vlaneseq
        %v4303 = vshrl.u32 %v4302, 7
        %v4304 = vsub.s32 %v4301, %v4303
        %v4305 = vrot.slane %v4297, %v4304
        %v4307 = vunpack.c.l.s4 1934713408
        %v4308 = vunpack.c.0.s8 %v4307
        %v4309 = vlaneseq
        %v4310 = vshrl.u32 %v4309, 7
        %v4311 = vsub.s32 %v4308, %v4310
        %v4312 = vrot.slane %v4298, %v4311
        %v4313 = vcombine.high %v4289, 0.0
        %v4314 = vcombine.high %v4296, 0.0
        %v4315 = vcombine.high %v4305, 0.0
        %v4316 = vcombine.high %v4312, 0.0
        %v4317 = vcombine.low %v3938, %v4026
        %v4318 = vcombine.high %v3938, %v4026
        %v4320 = vunpack.c.l.s4 1983009808
        %v4321 = vunpack.c.0.s8 %v4320
        %v4322 = vlaneseq
        %v4323 = vshrl.u32 %v4322, 7
        %v4324 = vsub.s32 %v4321, %v4323
        %v4325 = vrot.slane %v4317, %v4324
        %v4327 = vunpack.c.l.s4 1983009808
        %v4328 = vunpack.c.0.s8 %v4327
        %v4329 = vlaneseq
        %v4330 = vshrl.u32 %v4329, 7
        %v4331 = vsub.s32 %v4328, %v4330
        %v4332 = vrot.slane %v4318, %v4331
        %v4333 = vcombine.low %v3982, %v4070
        %v4334 = vcombine.high %v3982, %v4070
        %v4336 = vunpack.c.l.s4 1983009808
        %v4337 = vunpack.c.0.s8 %v4336
        %v4338 = vlaneseq
        %v4339 = vshrl.u32 %v4338, 7
        %v4340 = vsub.s32 %v4337, %v4339
        %v4341 = vrot.slane %v4333, %v4340
        %v4343 = vunpack.c.l.s4 1983009808
        %v4344 = vunpack.c.0.s8 %v4343
        %v4345 = vlaneseq
        %v4346 = vshrl.u32 %v4345, 7
        %v4347 = vsub.s32 %v4344, %v4346
        %v4348 = vrot.slane %v4334, %v4347
        %v4349 = vcombine.low %v4325, %v4341
        %v4350 = vcombine.high %v4325, %v4341
        %v4352 = vunpack.c.l.s4 1934713408
        %v4353 = vunpack.c.0.s8 %v4352
        %v4354 = vlaneseq
        %v4355 = vshrl.u32 %v4354, 7
        %v4356 = vsub.s32 %v4353, %v4355
        %v4357 = vrot.slane %v4349, %v4356
        %v4359 = vunpack.c.l.s4 1934713408
        %v4360 = vunpack.c.0.s8 %v4359
        %v4361 = vlaneseq
        %v4362 = vshrl.u32 %v4361, 7
        %v4363 = vsub.s32 %v4360, %v4362
        %v4364 = vrot.slane %v4350, %v4363
        %v4365 = vcombine.low %v4332, %v4348
        %v4366 = vcombine.high %v4332, %v4348
        %v4368 = vunpack.c.l.s4 1934713408
        %v4369 = vunpack.c.0.s8 %v4368
        %v4370 = vlaneseq
        %v4371 = vshrl.u32 %v4370, 7
        %v4372 = vsub.s32 %v4369, %v4371
        %v4373 = vrot.slane %v4365, %v4372
        %v4375 = vunpack.c.l.s4 1934713408
        %v4376 = vunpack.c.0.s8 %v4375
        %v4377 = vlaneseq
        %v4378 = vshrl.u32 %v4377, 7
        %v4379 = vsub.s32 %v4376, %v4378
        %v4380 = vrot.slane %v4366, %v4379
        %v4381 = vcombine.high %v4357, 0.0
        %v4382 = vcombine.high %v4364, 0.0
        %v4383 = vcombine.high %v4373, 0.0
        %v4384 = vcombine.high %v4380, 0.0
        %v4385 = vcombine.low %v4111, %v4199
        %v4386 = vcombine.high %v4111, %v4199
        %v4388 = vunpack.c.l.s4 1983009808
        %v4389 = vunpack.c.0.s8 %v4388
        %v4390 = vlaneseq
        %v4391 = vshrl.u32 %v4390, 7
        %v4392 = vsub.s32 %v4389, %v4391
        %v4393 = vrot.slane %v4385, %v4392
        %v4395 = vunpack.c.l.s4 1983009808
        %v4396 = vunpack.c.0.s8 %v4395
        %v4397 = vlaneseq
        %v4398 = vshrl.u32 %v4397, 7
        %v4399 = vsub.s32 %v4396, %v4398
        %v4400 = vrot.slane %v4386, %v4399
        %v4401 = vcombine.low %v4155, %v4243
        %v4402 = vcombine.high %v4155, %v4243
        %v4404 = vunpack.c.l.s4 1983009808
        %v4405 = vunpack.c.0.s8 %v4404
        %v4406 = vlaneseq
        %v4407 = vshrl.u32 %v4406, 7
        %v4408 = vsub.s32 %v4405, %v4407
        %v4409 = vrot.slane %v4401, %v4408
        %v4411 = vunpack.c.l.s4 1983009808
        %v4412 = vunpack.c.0.s8 %v4411
        %v4413 = vlaneseq
        %v4414 = vshrl.u32 %v4413, 7
        %v4415 = vsub.s32 %v4412, %v4414
        %v4416 = vrot.slane %v4402, %v4415
        %v4417 = vcombine.low %v4393, %v4409
        %v4418 = vcombine.high %v4393, %v4409
        %v4420 = vunpack.c.l.s4 1934713408
        %v4421 = vunpack.c.0.s8 %v4420
        %v4422 = vlaneseq
        %v4423 = vshrl.u32 %v4422, 7
        %v4424 = vsub.s32 %v4421, %v4423
        %v4425 = vrot.slane %v4417, %v4424
        %v4427 = vunpack.c.l.s4 1934713408
        %v4428 = vunpack.c.0.s8 %v4427
        %v4429 = vlaneseq
        %v4430 = vshrl.u32 %v4429, 7
        %v4431 = vsub.s32 %v4428, %v4430
        %v4432 = vrot.slane %v4418, %v4431
        %v4433 = vcombine.low %v4400, %v4416
        %v4434 = vcombine.high %v4400, %v4416
        %v4436 = vunpack.c.l.s4 1934713408
        %v4437 = vunpack.c.0.s8 %v4436
        %v4438 = vlaneseq
        %v4439 = vshrl.u32 %v4438, 7
        %v4440 = vsub.s32 %v4437, %v4439
        %v4441 = vrot.slane %v4433, %v4440
        %v4443 = vunpack.c.l.s4 1934713408
        %v4444 = vunpack.c.0.s8 %v4443
        %v4445 = vlaneseq
        %v4446 = vshrl.u32 %v4445, 7
        %v4447 = vsub.s32 %v4444, %v4446
        %v4448 = vrot.slane %v4434, %v4447
        %v4449 = vcombine.high %v4425, 0.0
        %v4450 = vcombine.high %v4432, 0.0
        %v4451 = vcombine.high %v4441, 0.0
        %v4452 = vcombine.high %v4448, 0.0
        %v4453 = vcombine.low %v4114, %v4202
        %v4454 = vcombine.high %v4114, %v4202
        %v4456 = vunpack.c.l.s4 1983009808
        %v4457 = vunpack.c.0.s8 %v4456
        %v4458 = vlaneseq
        %v4459 = vshrl.u32 %v4458, 7
        %v4460 = vsub.s32 %v4457, %v4459
        %v4461 = vrot.slane %v4453, %v4460
        %v4463 = vunpack.c.l.s4 1983009808
        %v4464 = vunpack.c.0.s8 %v4463
        %v4465 = vlaneseq
        %v4466 = vshrl.u32 %v4465, 7
        %v4467 = vsub.s32 %v4464, %v4466
        %v4468 = vrot.slane %v4454, %v4467
        %v4469 = vcombine.low %v4158, %v4246
        %v4470 = vcombine.high %v4158, %v4246
        %v4472 = vunpack.c.l.s4 1983009808
        %v4473 = vunpack.c.0.s8 %v4472
        %v4474 = vlaneseq
        %v4475 = vshrl.u32 %v4474, 7
        %v4476 = vsub.s32 %v4473, %v4475
        %v4477 = vrot.slane %v4469, %v4476
        %v4479 = vunpack.c.l.s4 1983009808
        %v4480 = vunpack.c.0.s8 %v4479
        %v4481 = vlaneseq
        %v4482 = vshrl.u32 %v4481, 7
        %v4483 = vsub.s32 %v4480, %v4482
        %v4484 = vrot.slane %v4470, %v4483
        %v4485 = vcombine.low %v4461, %v4477
        %v4486 = vcombine.high %v4461, %v4477
        %v4488 = vunpack.c.l.s4 1934713408
        %v4489 = vunpack.c.0.s8 %v4488
        %v4490 = vlaneseq
        %v4491 = vshrl.u32 %v4490, 7
        %v4492 = vsub.s32 %v4489, %v4491
        %v4493 = vrot.slane %v4485, %v4492
        %v4495 = vunpack.c.l.s4 1934713408
        %v4496 = vunpack.c.0.s8 %v4495
        %v4497 = vlaneseq
        %v4498 = vshrl.u32 %v4497, 7
        %v4499 = vsub.s32 %v4496, %v4498
        %v4500 = vrot.slane %v4486, %v4499
        %v4501 = vcombine.low %v4468, %v4484
        %v4502 = vcombine.high %v4468, %v4484
        %v4504 = vunpack.c.l.s4 1934713408
        %v4505 = vunpack.c.0.s8 %v4504
        %v4506 = vlaneseq
        %v4507 = vshrl.u32 %v4506, 7
        %v4508 = vsub.s32 %v4505, %v4507
        %v4509 = vrot.slane %v4501, %v4508
        %v4511 = vunpack.c.l.s4 1934713408
        %v4512 = vunpack.c.0.s8 %v4511
        %v4513 = vlaneseq
        %v4514 = vshrl.u32 %v4513, 7
        %v4515 = vsub.s32 %v4512, %v4514
        %v4516 = vrot.slane %v4502, %v4515
        %v4517 = vcombine.high %v4493, 0.0
        %v4518 = vcombine.high %v4500, 0.0
        %v4519 = vcombine.high %v4509, 0.0
        %v4520 = vcombine.high %v4516, 0.0
        %v4521 = vcombine.low %v4289, %v4296
        %v4523 = vunpack.c.l.s4 1983009808
        %v4524 = vunpack.c.0.s8 %v4523
        %v4525 = vlaneseq
        %v4526 = vshrl.u32 %v4525, 7
        %v4527 = vsub.s32 %v4524, %v4526
        %v4528 = vrot.slane %v4521, %v4527
        %v4529 = vcombine.low %v4313, %v4314
        %v4531 = vunpack.c.l.s4 1983009808
        %v4532 = vunpack.c.0.s8 %v4531
        %v4533 = vlaneseq
        %v4534 = vshrl.u32 %v4533, 7
        %v4535 = vsub.s32 %v4532, %v4534
        %v4536 = vrot.slane %v4529, %v4535
        %v4537 = vcombine.low %v4305, %v4312
        %v4539 = vunpack.c.l.s4 1983009808
        %v4540 = vunpack.c.0.s8 %v4539
        %v4541 = vlaneseq
        %v4542 = vshrl.u32 %v4541, 7
        %v4543 = vsub.s32 %v4540, %v4542
        %v4544 = vrot.slane %v4537, %v4543
        %v4545 = vcombine.low %v4315, %v4316
        %v4547 = vunpack.c.l.s4 1983009808
        %v4548 = vunpack.c.0.s8 %v4547
        %v4549 = vlaneseq
        %v4550 = vshrl.u32 %v4549, 7
        %v4551 = vsub.s32 %v4548, %v4550
        %v4552 = vrot.slane %v4545, %v4551
        %v4553 = vcombine.low %v4528, %v4536
        %v4554 = vcombine.high %v4528, %v4536
        %v4556 = vunpack.c.l.s4 1934713408
        %v4557 = vunpack.c.0.s8 %v4556
        %v4558 = vlaneseq
        %v4559 = vshrl.u32 %v4558, 7
        %v4560 = vsub.s32 %v4557, %v4559
        %v4561 = vrot.slane %v4553, %v4560
        %v4563 = vunpack.c.l.s4 1934713408
        %v4564 = vunpack.c.0.s8 %v4563
        %v4565 = vlaneseq
        %v4566 = vshrl.u32 %v4565, 7
        %v4567 = vsub.s32 %v4564, %v4566
        %v4568 = vrot.slane %v4554, %v4567
        %v4569 = vcombine.low %v4544, %v4552
        %v4570 = vcombine.high %v4544, %v4552
        %v4572 = vunpack.c.l.s4 1934713408
        %v4573 = vunpack.c.0.s8 %v4572
        %v4574 = vlaneseq
        %v4575 = vshrl.u32 %v4574, 7
        %v4576 = vsub.s32 %v4573, %v4575
        %v4577 = vrot.slane %v4569, %v4576
        %v4579 = vunpack.c.l.s4 1934713408
        %v4580 = vunpack.c.0.s8 %v4579
        %v4581 = vlaneseq
        %v4582 = vshrl.u32 %v4581, 7
        %v4583 = vsub.s32 %v4580, %v4582
        %v4584 = vrot.slane %v4570, %v4583
        %v4585 = vcombine.low %v4561, %v4577
        %v4586 = vcombine.high %v4561, %v4577
        %v4587 = vcombine.low %v4568, %v4584
        %v4588 = vcombine.high %v4568, %v4584
        %v4589 = vcombine.low %v4357, %v4364
        %v4591 = vunpack.c.l.s4 1983009808
        %v4592 = vunpack.c.0.s8 %v4591
        %v4593 = vlaneseq
        %v4594 = vshrl.u32 %v4593, 7
        %v4595 = vsub.s32 %v4592, %v4594
        %v4596 = vrot.slane %v4589, %v4595
        %v4597 = vcombine.low %v4381, %v4382
        %v4599 = vunpack.c.l.s4 1983009808
        %v4600 = vunpack.c.0.s8 %v4599
        %v4601 = vlaneseq
        %v4602 = vshrl.u32 %v4601, 7
        %v4603 = vsub.s32 %v4600, %v4602
        %v4604 = vrot.slane %v4597, %v4603
        %v4605 = vcombine.low %v4373, %v4380
        %v4607 = vunpack.c.l.s4 1983009808
        %v4608 = vunpack.c.0.s8 %v4607
        %v4609 = vlaneseq
        %v4610 = vshrl.u32 %v4609, 7
        %v4611 = vsub.s32 %v4608, %v4610
        %v4612 = vrot.slane %v4605, %v4611
        %v4613 = vcombine.low %v4383, %v4384
        %v4615 = vunpack.c.l.s4 1983009808
        %v4616 = vunpack.c.0.s8 %v4615
        %v4617 = vlaneseq
        %v4618 = vshrl.u32 %v4617, 7
        %v4619 = vsub.s32 %v4616, %v4618
        %v4620 = vrot.slane %v4613, %v4619
        %v4621 = vcombine.low %v4596, %v4604
        %v4622 = vcombine.high %v4596, %v4604
        %v4624 = vunpack.c.l.s4 1934713408
        %v4625 = vunpack.c.0.s8 %v4624
        %v4626 = vlaneseq
        %v4627 = vshrl.u32 %v4626, 7
        %v4628 = vsub.s32 %v4625, %v4627
        %v4629 = vrot.slane %v4621, %v4628
        %v4631 = vunpack.c.l.s4 1934713408
        %v4632 = vunpack.c.0.s8 %v4631
        %v4633 = vlaneseq
        %v4634 = vshrl.u32 %v4633, 7
        %v4635 = vsub.s32 %v4632, %v4634
        %v4636 = vrot.slane %v4622, %v4635
        %v4637 = vcombine.low %v4612, %v4620
        %v4638 = vcombine.high %v4612, %v4620
        %v4640 = vunpack.c.l.s4 1934713408
        %v4641 = vunpack.c.0.s8 %v4640
        %v4642 = vlaneseq
        %v4643 = vshrl.u32 %v4642, 7
        %v4644 = vsub.s32 %v4641, %v4643
        %v4645 = vrot.slane %v4637, %v4644
        %v4647 = vunpack.c.l.s4 1934713408
        %v4648 = vunpack.c.0.s8 %v4647
        %v4649 = vlaneseq
        %v4650 = vshrl.u32 %v4649, 7
        %v4651 = vsub.s32 %v4648, %v4650
        %v4652 = vrot.slane %v4638, %v4651
        %v4653 = vcombine.low %v4629, %v4645
        %v4654 = vcombine.high %v4629, %v4645
        %v4655 = vcombine.low %v4636, %v4652
        %v4656 = vcombine.high %v4636, %v4652
        %v4657 = vcombine.low %v4425, %v4432
        %v4659 = vunpack.c.l.s4 1983009808
        %v4660 = vunpack.c.0.s8 %v4659
        %v4661 = vlaneseq
        %v4662 = vshrl.u32 %v4661, 7
        %v4663 = vsub.s32 %v4660, %v4662
        %v4664 = vrot.slane %v4657, %v4663
        %v4665 = vcombine.low %v4449, %v4450
        %v4667 = vunpack.c.l.s4 1983009808
        %v4668 = vunpack.c.0.s8 %v4667
        %v4669 = vlaneseq
        %v4670 = vshrl.u32 %v4669, 7
        %v4671 = vsub.s32 %v4668, %v4670
        %v4672 = vrot.slane %v4665, %v4671
        %v4673 = vcombine.low %v4441, %v4448
        %v4675 = vunpack.c.l.s4 1983009808
        %v4676 = vunpack.c.0.s8 %v4675
        %v4677 = vlaneseq
        %v4678 = vshrl.u32 %v4677, 7
        %v4679 = vsub.s32 %v4676, %v4678
        %v4680 = vrot.slane %v4673, %v4679
        %v4681 = vcombine.low %v4451, %v4452
        %v4683 = vunpack.c.l.s4 1983009808
        %v4684 = vunpack.c.0.s8 %v4683
        %v4685 = vlaneseq
        %v4686 = vshrl.u32 %v4685, 7
        %v4687 = vsub.s32 %v4684, %v4686
        %v4688 = vrot.slane %v4681, %v4687
        %v4689 = vcombine.low %v4664, %v4672
        %v4690 = vcombine.high %v4664, %v4672
        %v4692 = vunpack.c.l.s4 1934713408
        %v4693 = vunpack.c.0.s8 %v4692
        %v4694 = vlaneseq
        %v4695 = vshrl.u32 %v4694, 7
        %v4696 = vsub.s32 %v4693, %v4695
        %v4697 = vrot.slane %v4689, %v4696
        %v4699 = vunpack.c.l.s4 1934713408
        %v4700 = vunpack.c.0.s8 %v4699
        %v4701 = vlaneseq
        %v4702 = vshrl.u32 %v4701, 7
        %v4703 = vsub.s32 %v4700, %v4702
        %v4704 = vrot.slane %v4690, %v4703
        %v4705 = vcombine.low %v4680, %v4688
        %v4706 = vcombine.high %v4680, %v4688
        %v4708 = vunpack.c.l.s4 1934713408
        %v4709 = vunpack.c.0.s8 %v4708
        %v4710 = vlaneseq
        %v4711 = vshrl.u32 %v4710, 7
        %v4712 = vsub.s32 %v4709, %v4711
        %v4713 = vrot.slane %v4705, %v4712
        %v4715 = vunpack.c.l.s4 1934713408
        %v4716 = vunpack.c.0.s8 %v4715
        %v4717 = vlaneseq
        %v4718 = vshrl.u32 %v4717, 7
        %v4719 = vsub.s32 %v4716, %v4718
        %v4720 = vrot.slane %v4706, %v4719
        %v4721 = vcombine.low %v4697, %v4713
        %v4722 = vcombine.high %v4697, %v4713
        %v4723 = vcombine.low %v4704, %v4720
        %v4724 = vcombine.high %v4704, %v4720
        %v4725 = vcombine.low %v4493, %v4500
        %v4727 = vunpack.c.l.s4 1983009808
        %v4728 = vunpack.c.0.s8 %v4727
        %v4729 = vlaneseq
        %v4730 = vshrl.u32 %v4729, 7
        %v4731 = vsub.s32 %v4728, %v4730
        %v4732 = vrot.slane %v4725, %v4731
        %v4733 = vcombine.low %v4517, %v4518
        %v4735 = vunpack.c.l.s4 1983009808
        %v4736 = vunpack.c.0.s8 %v4735
        %v4737 = vlaneseq
        %v4738 = vshrl.u32 %v4737, 7
        %v4739 = vsub.s32 %v4736, %v4738
        %v4740 = vrot.slane %v4733, %v4739
        %v4741 = vcombine.low %v4509, %v4516
        %v4743 = vunpack.c.l.s4 1983009808
        %v4744 = vunpack.c.0.s8 %v4743
        %v4745 = vlaneseq
        %v4746 = vshrl.u32 %v4745, 7
        %v4747 = vsub.s32 %v4744, %v4746
        %v4748 = vrot.slane %v4741, %v4747
        %v4749 = vcombine.low %v4519, %v4520
        %v4751 = vunpack.c.l.s4 1983009808
        %v4752 = vunpack.c.0.s8 %v4751
        %v4753 = vlaneseq
        %v4754 = vshrl.u32 %v4753, 7
        %v4755 = vsub.s32 %v4752, %v4754
        %v4756 = vrot.slane %v4749, %v4755
        %v4757 = vcombine.low %v4732, %v4740
        %v4758 = vcombine.high %v4732, %v4740
        %v4760 = vunpack.c.l.s4 1934713408
        %v4761 = vunpack.c.0.s8 %v4760
        %v4762 = vlaneseq
        %v4763 = vshrl.u32 %v4762, 7
        %v4764 = vsub.s32 %v4761, %v4763
        %v4765 = vrot.slane %v4757, %v4764
        %v4767 = vunpack.c.l.s4 1934713408
        %v4768 = vunpack.c.0.s8 %v4767
        %v4769 = vlaneseq
        %v4770 = vshrl.u32 %v4769, 7
        %v4771 = vsub.s32 %v4768, %v4770
        %v4772 = vrot.slane %v4758, %v4771
        %v4773 = vcombine.low %v4748, %v4756
        %v4774 = vcombine.high %v4748, %v4756
        %v4776 = vunpack.c.l.s4 1934713408
        %v4777 = vunpack.c.0.s8 %v4776
        %v4778 = vlaneseq
        %v4779 = vshrl.u32 %v4778, 7
        %v4780 = vsub.s32 %v4777, %v4779
        %v4781 = vrot.slane %v4773, %v4780
        %v4783 = vunpack.c.l.s4 1934713408
        %v4784 = vunpack.c.0.s8 %v4783
        %v4785 = vlaneseq
        %v4786 = vshrl.u32 %v4785, 7
        %v4787 = vsub.s32 %v4784, %v4786
        %v4788 = vrot.slane %v4774, %v4787
        %v4789 = vcombine.low %v4765, %v4781
        %v4790 = vcombine.high %v4765, %v4781
        %v4791 = vcombine.low %v4772, %v4788
        %v4792 = vcombine.high %v4772, %v4788
        %4797 = vrot.lane.b32.xlu0 %v4586, 32
        %v4798 = vpop.permute.xlu0 %4797
        %4799 = vrot.lane.b32.xlu0 %v4654, 32
        %v4800 = vpop.permute.xlu0 %4799
        %4801 = vrot.lane.b32.xlu0 %v4722, 32
        %v4802 = vpop.permute.xlu0 %4801
        %4803 = vrot.lane.b32.xlu0 %v4790, 32
        %v4804 = vpop.permute.xlu0 %4803
        %4813 = vrot.lane.b32.xlu0 %v4587, 64
        %v4814 = vpop.permute.xlu0 %4813
        %4815 = vrot.lane.b32.xlu0 %v4655, 64
        %v4816 = vpop.permute.xlu0 %4815
        %4817 = vrot.lane.b32.xlu0 %v4723, 64
        %v4818 = vpop.permute.xlu0 %4817
        %4819 = vrot.lane.b32.xlu0 %v4791, 64
        %v4820 = vpop.permute.xlu0 %4819
        %4829 = vrot.lane.b32.xlu0 %v4588, 96
        %v4830 = vpop.permute.xlu0 %4829
        %4831 = vrot.lane.b32.xlu0 %v4656, 96
        %v4832 = vpop.permute.xlu0 %4831
        %4833 = vrot.lane.b32.xlu0 %v4724, 96
        %v4834 = vpop.permute.xlu0 %4833
        %4835 = vrot.lane.b32.xlu0 %v4792, 96
        %v4836 = vpop.permute.xlu0 %4835
        %v4841 = vsel %vm3335, %v4585, %v4798
        %v4842 = vsel %vm3335, %v4653, %v4800
        %v4843 = vsel %vm3335, %v4721, %v4802
        %v4844 = vsel %vm3335, %v4789, %v4804
        %vm4845 = vcmask 523264
        %v4846 = vsel %vm4845, %v4841, %v4814
        %v4847 = vsel %vm4845, %v4842, %v4816
        %v4848 = vsel %vm4845, %v4843, %v4818
        %v4849 = vsel %vm4845, %v4844, %v4820
        %vm4850 = vcmask 785408
        %v4851 = vsel %vm4850, %v4846, %v4830
        %v4852 = vsel %vm4850, %v4847, %v4832
        %v4853 = vsel %vm4850, %v4848, %v4834
        %v4854 = vsel %vm4850, %v4849, %v4836
        %v4855 = vpack.c.bf16 %v4852, %v4851
        %v4856 = vpack.c.bf16 %v4854, %v4853
        %v4857 = vld [vmem:[%s1029] sm:$0xf]
        %v4858 = vld [vmem:[%s1029 + $0x4] sm:$0xf]
        %v4859 = vld [vmem:[%s1029 + $0x8] sm:$0xf]
        %v4860 = vld [vmem:[%s1029 + $0xc] sm:$0xf]
        %v4861 = vld [vmem:[%s1029 + $0x10] sm:$0xf]
        %v4862 = vld [vmem:[%s1029 + $0x14] sm:$0xf]
        %v4863 = vld [vmem:[%s1029 + $0x18] sm:$0xf]
        %v4864 = vld [vmem:[%s1029 + $0x1c] sm:$0xf]
        %v4865 = vld [vmem:[%s1029 + $0x20] sm:$0xf]
        %v4866 = vld [vmem:[%s1029 + $0x24] sm:$0xf]
        %v4867 = vld [vmem:[%s1029 + $0x28] sm:$0xf]
        %v4868 = vld [vmem:[%s1029 + $0x2c] sm:$0xf]
        %v4869 = vld [vmem:[%s1029 + $0x30] sm:$0xf]
        %v4870 = vld [vmem:[%s1029 + $0x34] sm:$0xf]
        %v4871 = vld [vmem:[%s1029 + $0x38] sm:$0xf]
        %v4872 = vld [vmem:[%s1029 + $0x3c] sm:$0xf]
        %v4873 = vld [vmem:[%s1214] sm:$0x1]
        %v4875 = vlaneseq
        %v4876 = vshrl.u32 %v4875, 7
        %v4877 = vsub.s32 0, %v4876
        %v4878 = vrot.slane %v4873, %v4877
        %v4896 = vunpack.c.l.b16 %v4857
        %v4897 = vunpack.c.l.b16 %v4858
        %v4898 = vunpack.c.l.b16 %v4859
        %v4899 = vunpack.c.l.b16 %v4860
        %v4900 = vunpack.c.l.b16 %v4861
        %v4901 = vunpack.c.l.b16 %v4862
        %v4902 = vunpack.c.l.b16 %v4863
        %v4903 = vunpack.c.l.b16 %v4864
        %v4904 = vunpack.c.l.b16 %v4865
        %v4905 = vunpack.c.l.b16 %v4866
        %v4906 = vunpack.c.l.b16 %v4867
        %v4907 = vunpack.c.l.b16 %v4868
        %v4908 = vunpack.c.l.b16 %v4869
        %v4909 = vunpack.c.l.b16 %v4870
        %v4910 = vunpack.c.l.b16 %v4871
        %v4911 = vunpack.c.l.b16 %v4872
        %v4912 = vpack.c.b16 %v4897, %v4896
        %v4913 = vpack.c.b16 %v4899, %v4898
        %v4914 = vpack.c.b16 %v4901, %v4900
        %v4915 = vpack.c.b16 %v4903, %v4902
        %v4916 = vpack.c.b16 %v4905, %v4904
        %v4917 = vpack.c.b16 %v4907, %v4906
        %v4918 = vpack.c.b16 %v4909, %v4908
        %v4919 = vpack.c.b16 %v4911, %v4910
        %4928 = vmatprep.subr.bf16.mxu0 0
        %4929 = vmatpush1.bf16.msra.mxu0 %v4912
        %4930 = vmatprep.subr.bf16.mxu0 0
        %4931 = vmatpush1.bf16.msra.mxu0 %v4913
        %4932 = vmatprep.subr.bf16.mxu0 0
        %4933 = vmatpush1.bf16.msra.mxu0 %v4914
        %4934 = vmatprep.subr.bf16.mxu0 0
        %4935 = vmatpush1.bf16.msra.mxu0 %v4915
        %4936 = vmatprep.subr.bf16.mxu0 0
        %4937 = vmatpush1.bf16.msra.mxu0 %v4916
        %4938 = vmatprep.subr.bf16.mxu0 0
        %4939 = vmatpush1.bf16.msra.mxu0 %v4917
        %4940 = vmatprep.subr.bf16.mxu0 0
        %4941 = vmatpush1.bf16.msra.mxu0 %v4918
        %4942 = vmatprep.subr.bf16.mxu0 0
        %4943 = vmatpush1.bf16.msra.mxu0 %v4919
        %4944 = vmatprep.subr.bf16.mxu0 0
        %4945 = vmatpush1.bf16.msra.mxu0 0
        %4946 = vmatprep.subr.bf16.mxu0 0
        %4947 = vmatpush1.bf16.msra.mxu0 0
        %4948 = vmatprep.subr.bf16.mxu0 0
        %4949 = vmatpush1.bf16.msra.mxu0 0
        %4950 = vmatprep.subr.bf16.mxu0 0
        %4951 = vmatpush1.bf16.msra.mxu0 0
        %4952 = vmatprep.subr.bf16.mxu0 0
        %4953 = vmatpush1.bf16.msra.mxu0 0
        %4954 = vmatprep.subr.bf16.mxu0 0
        %4955 = vmatpush1.bf16.msra.mxu0 0
        %4956 = vmatprep.subr.bf16.mxu0 0
        %4957 = vmatpush1.bf16.msra.mxu0 0
        %4958 = vmatprep.subr.bf16.mxu0 0
        %4959 = vmatpush1.bf16.msra.mxu0 0
        %4960 = vmatprep.mubr.bf16.mxu0 0
        %4961 = vmatmul.mubr.bf16.gmra.mrb[0].mxu0 %v4855
        %v4962 = vpop.f32.mrb[0].mxu0
        %v4963 = vadd.f32 %v4878, %v4962
        %v4964 = vpop.f32.mrb[0].mxu0
        %v4965 = vpop.f32.mrb[0].mxu0
        %v4966 = vadd.f32 %v4878, %v4965
        %v4967 = vpop.f32.mrb[0].mxu0
        %4968 = vmatprep.mubr.bf16.mxu0 0
        %4969 = vmatmul.mubr.bf16.gmra.mrb[0].mxu0 %v4856
        %v4970 = vpop.f32.mrb[0].mxu0
        %v4971 = vadd.f32 %v4878, %v4970
        %v4972 = vpop.f32.mrb[0].mxu0
        %v4973 = vpop.f32.mrb[0].mxu0
        %v4974 = vadd.f32 %v4878, %v4973
        %v4975 = vpop.f32.mrb[0].mxu0
        %4976 = vdwg.mxu0
        %v4977 = vadd.f32 %v1264, %v4963
        %v4978 = vadd.f32 %v1265, %v4966
        %v4979 = vadd.f32 %v1266, %v4971
        %v4980 = vadd.f32 %v1267, %v4974
        %4981 = vadd.xlane.f32.xlu0 %v4977
        %v4982 = vpop.xlane.xlu0 %4981
        %4983 = vadd.xlane.f32.xlu0 %v4978
        %v4984 = vpop.xlane.xlu0 %4983
        %4985 = vadd.xlane.f32.xlu0 %v4979
        %v4986 = vpop.xlane.xlu0 %4985
        %4987 = vadd.xlane.f32.xlu0 %v4980
        %v4988 = vpop.xlane.xlu0 %4987
        %v4989 = vrcp.pop 128.0
        %v4990 = vmul.f32 %v4982, %v4989
        %v4991 = vmul.f32 %v4984, %v4989
        %v4992 = vmul.f32 %v4986, %v4989
        %v4993 = vmul.f32 %v4988, %v4989
        %v4994 = vsub.f32 %v4977, %v4990
        %v4995 = vsub.f32 %v4978, %v4991
        %v4996 = vsub.f32 %v4979, %v4992
        %v4997 = vsub.f32 %v4980, %v4993
        %v4998 = vmul.f32 %v4994, %v4994
        %v4999 = vmul.f32 %v4995, %v4995
        %v5000 = vmul.f32 %v4996, %v4996
        %v5001 = vmul.f32 %v4997, %v4997
        %5002 = vadd.xlane.f32.xlu0 %v4998
        %v5003 = vpop.xlane.xlu0 %5002
        %5004 = vadd.xlane.f32.xlu0 %v4999
        %v5005 = vpop.xlane.xlu0 %5004
        %5006 = vadd.xlane.f32.xlu0 %v5000
        %v5007 = vpop.xlane.xlu0 %5006
        %5008 = vadd.xlane.f32.xlu0 %v5001
        %v5009 = vpop.xlane.xlu0 %5008
        %v5010 = vmul.f32 %v5003, %v4989
        %v5011 = vmul.f32 %v5005, %v4989
        %v5012 = vmul.f32 %v5007, %v4989
        %v5013 = vmul.f32 %v5009, %v4989
        %v5014 = vadd.f32 %v5010, 1e-05
        %v5015 = vadd.f32 %v5011, 1e-05
        %v5016 = vadd.f32 %v5012, 1e-05
        %v5017 = vadd.f32 %v5013, 1e-05
        %v5018 = vrsqrt.pop %v5014
        %v5019 = vrsqrt.pop %v5015
        %v5020 = vrsqrt.pop %v5016
        %v5021 = vrsqrt.pop %v5017
        %v5022 = vmul.f32 %v4994, %v5018
        %v5023 = vmul.f32 %v4995, %v5019
        %v5024 = vmul.f32 %v4996, %v5020
        %v5025 = vmul.f32 %v4997, %v5021
        %v5026 = vld [vmem:[%s1234] sm:$0x1]
        %v5028 = vlaneseq
        %v5029 = vshrl.u32 %v5028, 7
        %v5030 = vsub.s32 0, %v5029
        %v5031 = vrot.slane %v5026, %v5030
        %v5033 = vmul.f32 %v5022, %v5031
        %v5034 = vmul.f32 %v5023, %v5031
        %v5035 = vmul.f32 %v5024, %v5031
        %v5036 = vmul.f32 %v5025, %v5031
        %v5037 = vld [vmem:[%s1237] sm:$0x1]
        %v5039 = vlaneseq
        %v5040 = vshrl.u32 %v5039, 7
        %v5041 = vsub.s32 0, %v5040
        %v5042 = vrot.slane %v5037, %v5041
        %v5044 = vadd.f32 %v5033, %v5042
        %v5045 = vadd.f32 %v5034, %v5042
        %v5046 = vadd.f32 %v5035, %v5042
        %v5047 = vadd.f32 %v5036, %v5042
        %v5048 = vpack.c.bf16 %v5045, %v5044
        %v5049 = vpack.c.bf16 %v5047, %v5046
        %v5050 = vld [vmem:[%s1038] sm:$0xf]
        %v5051 = vld [vmem:[%s1038 + $0x4] sm:$0xf]
        %v5052 = vld [vmem:[%s1038 + $0x8] sm:$0xf]
        %v5053 = vld [vmem:[%s1038 + $0xc] sm:$0xf]
        %v5054 = vld [vmem:[%s1038 + $0x10] sm:$0xf]
        %v5055 = vld [vmem:[%s1038 + $0x14] sm:$0xf]
        %v5056 = vld [vmem:[%s1038 + $0x18] sm:$0xf]
        %v5057 = vld [vmem:[%s1038 + $0x1c] sm:$0xf]
        %v5058 = vld [vmem:[%s1038 + $0x20] sm:$0xf]
        %v5059 = vld [vmem:[%s1038 + $0x24] sm:$0xf]
        %v5060 = vld [vmem:[%s1038 + $0x28] sm:$0xf]
        %v5061 = vld [vmem:[%s1038 + $0x2c] sm:$0xf]
        %v5062 = vld [vmem:[%s1038 + $0x30] sm:$0xf]
        %v5063 = vld [vmem:[%s1038 + $0x34] sm:$0xf]
        %v5064 = vld [vmem:[%s1038 + $0x38] sm:$0xf]
        %v5065 = vld [vmem:[%s1038 + $0x3c] sm:$0xf]
        %v5066 = vld [vmem:[%s1217] sm:$0x1]
        %v5068 = vlaneseq
        %v5069 = vshrl.u32 %v5068, 7
        %v5070 = vsub.s32 0, %v5069
        %v5071 = vrot.slane %v5066, %v5070
        %v5089 = vunpack.c.l.b16 %v5050
        %v5090 = vunpack.c.l.b16 %v5051
        %v5091 = vunpack.c.l.b16 %v5052
        %v5092 = vunpack.c.l.b16 %v5053
        %v5093 = vunpack.c.l.b16 %v5054
        %v5094 = vunpack.c.l.b16 %v5055
        %v5095 = vunpack.c.l.b16 %v5056
        %v5096 = vunpack.c.l.b16 %v5057
        %v5097 = vunpack.c.l.b16 %v5058
        %v5098 = vunpack.c.l.b16 %v5059
        %v5099 = vunpack.c.l.b16 %v5060
        %v5100 = vunpack.c.l.b16 %v5061
        %v5101 = vunpack.c.l.b16 %v5062
        %v5102 = vunpack.c.l.b16 %v5063
        %v5103 = vunpack.c.l.b16 %v5064
        %v5104 = vunpack.c.l.b16 %v5065
        %v5105 = vpack.c.b16 %v5090, %v5089
        %v5106 = vpack.c.b16 %v5092, %v5091
        %v5107 = vpack.c.b16 %v5094, %v5093
        %v5108 = vpack.c.b16 %v5096, %v5095
        %v5109 = vpack.c.b16 %v5098, %v5097
        %v5110 = vpack.c.b16 %v5100, %v5099
        %v5111 = vpack.c.b16 %v5102, %v5101
        %v5112 = vpack.c.b16 %v5104, %v5103
        %5121 = vmatprep.subr.bf16.mxu0 0
        %5122 = vmatpush1.bf16.msra.mxu0 %v5105
        %5123 = vmatprep.subr.bf16.mxu0 0
        %5124 = vmatpush1.bf16.msra.mxu0 %v5106
        %5125 = vmatprep.subr.bf16.mxu0 0
        %5126 = vmatpush1.bf16.msra.mxu0 %v5107
        %5127 = vmatprep.subr.bf16.mxu0 0
        %5128 = vmatpush1.bf16.msra.mxu0 %v5108
        %5129 = vmatprep.subr.bf16.mxu0 0
        %5130 = vmatpush1.bf16.msra.mxu0 %v5109
        %5131 = vmatprep.subr.bf16.mxu0 0
        %5132 = vmatpush1.bf16.msra.mxu0 %v5110
        %5133 = vmatprep.subr.bf16.mxu0 0
        %5134 = vmatpush1.bf16.msra.mxu0 %v5111
        %5135 = vmatprep.subr.bf16.mxu0 0
        %5136 = vmatpush1.bf16.msra.mxu0 %v5112
        %5137 = vmatprep.subr.bf16.mxu0 0
        %5138 = vmatpush1.bf16.msra.mxu0 0
        %5139 = vmatprep.subr.bf16.mxu0 0
        %5140 = vmatpush1.bf16.msra.mxu0 0
        %5141 = vmatprep.subr.bf16.mxu0 0
        %5142 = vmatpush1.bf16.msra.mxu0 0
        %5143 = vmatprep.subr.bf16.mxu0 0
        %5144 = vmatpush1.bf16.msra.mxu0 0
        %5145 = vmatprep.subr.bf16.mxu0 0
        %5146 = vmatpush1.bf16.msra.mxu0 0
        %5147 = vmatprep.subr.bf16.mxu0 0
        %5148 = vmatpush1.bf16.msra.mxu0 0
        %5149 = vmatprep.subr.bf16.mxu0 0
        %5150 = vmatpush1.bf16.msra.mxu0 0
        %5151 = vmatprep.subr.bf16.mxu0 0
        %5152 = vmatpush1.bf16.msra.mxu0 0
        %5153 = vmatprep.mubr.bf16.mxu0 0
        %5154 = vmatmul.mubr.bf16.gmra.mrb[0].mxu0 %v5048
        %v5155 = vpop.f32.mrb[0].mxu0
        %v5156 = vadd.f32 %v5071, %v5155
        %v5157 = vpop.f32.mrb[0].mxu0
        %v5158 = vpop.f32.mrb[0].mxu0
        %v5159 = vadd.f32 %v5071, %v5158
        %v5160 = vpop.f32.mrb[0].mxu0
        %5161 = vmatprep.mubr.bf16.mxu0 0
        %5162 = vmatmul.mubr.bf16.gmra.mrb[0].mxu0 %v5049
        %v5163 = vpop.f32.mrb[0].mxu0
        %v5164 = vadd.f32 %v5071, %v5163
        %v5165 = vpop.f32.mrb[0].mxu0
        %v5166 = vpop.f32.mrb[0].mxu0
        %v5167 = vadd.f32 %v5071, %v5166
        %v5168 = vpop.f32.mrb[0].mxu0
        %5169 = vdwg.mxu0
        %v5170 = vld [vmem:[%s1047] sm:$0xff]
        %v5171 = vld [vmem:[%s1047 + $0x8] sm:$0xff]
        %v5172 = vld [vmem:[%s1047 + $0x10] sm:$0xff]
        %v5173 = vld [vmem:[%s1047 + $0x18] sm:$0xff]
        %v5174 = vld [vmem:[%s1047 + $0x20] sm:$0xff]
        %v5175 = vld [vmem:[%s1047 + $0x28] sm:$0xff]
        %v5176 = vld [vmem:[%s1047 + $0x30] sm:$0xff]
        %v5177 = vld [vmem:[%s1047 + $0x38] sm:$0xff]
        %v5178 = vld [vmem:[%s1047 + $0x40] sm:$0xff]
        %v5179 = vld [vmem:[%s1047 + $0x48] sm:$0xff]
        %v5180 = vld [vmem:[%s1047 + $0x50] sm:$0xff]
        %v5181 = vld [vmem:[%s1047 + $0x58] sm:$0xff]
        %v5182 = vld [vmem:[%s1047 + $0x60] sm:$0xff]
        %v5183 = vld [vmem:[%s1047 + $0x68] sm:$0xff]
        %v5184 = vld [vmem:[%s1047 + $0x70] sm:$0xff]
        %v5185 = vld [vmem:[%s1047 + $0x78] sm:$0xff]
        %v5186 = vld [vmem:[%s1221] sm:$0x3]
        %v5188 = vlaneseq
        %v5189 = vshrl.u32 %v5188, 7
        %v5190 = vsub.s32 0, %v5189
        %v5191 = vrot.slane %v5186, %v5190
        %v5192 = vlaneseq
        %v5193 = vshrl.u32 %v5192, 7
        %v5194 = vsub.s32 1, %v5193
        %v5195 = vrot.slane %v5186, %v5194
        %v5204 = vunpack.c.l.b16 %v1268
        %v5205 = vunpack.c.l.b16 %v1269
        %v5206 = vunpack.c.l.b16 %v1270
        %v5207 = vunpack.c.l.b16 %v1271
        %v5208 = vunpack.c.l.b16 %v1272
        %v5209 = vunpack.c.l.b16 %v1273
        %v5210 = vpack.c.b16 %v5205, %v5204
        %v5211 = vpack.c.b16 %v5207, %v5206
        %v5212 = vpack.c.b16 %v5209, %v5208
        %v5232 = vunpack.c.l.b16 %v5170
        %v5233 = vunpack.c.h.b16 %v5170
        %v5234 = vunpack.c.l.b16 %v5171
        %v5235 = vunpack.c.h.b16 %v5171
        %v5236 = vunpack.c.l.b16 %v5172
        %v5237 = vunpack.c.h.b16 %v5172
        %v5238 = vunpack.c.l.b16 %v5173
        %v5239 = vunpack.c.h.b16 %v5173
        %v5240 = vunpack.c.l.b16 %v5174
        %v5241 = vunpack.c.h.b16 %v5174
        %v5242 = vunpack.c.l.b16 %v5175
        %v5243 = vunpack.c.h.b16 %v5175
        %v5244 = vunpack.c.l.b16 %v5176
        %v5245 = vunpack.c.h.b16 %v5176
        %v5246 = vunpack.c.l.b16 %v5177
        %v5247 = vunpack.c.h.b16 %v5177
        %v5248 = vunpack.c.l.b16 %v5178
        %v5249 = vunpack.c.h.b16 %v5178
        %v5250 = vunpack.c.l.b16 %v5179
        %v5251 = vunpack.c.h.b16 %v5179
        %v5252 = vunpack.c.l.b16 %v5180
        %v5253 = vunpack.c.h.b16 %v5180
        %v5254 = vunpack.c.l.b16 %v5181
        %v5255 = vunpack.c.h.b16 %v5181
        %v5256 = vunpack.c.l.b16 %v5182
        %v5257 = vunpack.c.h.b16 %v5182
        %v5258 = vunpack.c.l.b16 %v5183
        %v5259 = vunpack.c.h.b16 %v5183
        %v5260 = vunpack.c.l.b16 %v5184
        %v5261 = vunpack.c.h.b16 %v5184
        %v5262 = vunpack.c.l.b16 %v5185
        %v5263 = vunpack.c.h.b16 %v5185
        %v5264 = vpack.c.b16 %v5234, %v5232
        %v5265 = vpack.c.b16 %v5235, %v5233
        %v5266 = vpack.c.b16 %v5238, %v5236
        %v5267 = vpack.c.b16 %v5239, %v5237
        %v5268 = vpack.c.b16 %v5242, %v5240
        %v5269 = vpack.c.b16 %v5243, %v5241
        %v5270 = vpack.c.b16 %v5246, %v5244
        %v5271 = vpack.c.b16 %v5247, %v5245
        %v5272 = vpack.c.b16 %v5250, %v5248
        %v5273 = vpack.c.b16 %v5251, %v5249
        %v5274 = vpack.c.b16 %v5254, %v5252
        %v5275 = vpack.c.b16 %v5255, %v5253
        %v5276 = vpack.c.b16 %v5258, %v5256
        %v5277 = vpack.c.b16 %v5259, %v5257
        %v5278 = vpack.c.b16 %v5262, %v5260
        %v5279 = vpack.c.b16 %v5263, %v5261
        %5296 = vmatprep.subr.bf16.mxu0 %v5265
        %5297 = vmatpush1.bf16.msra.mxu0 %v5264
        %5298 = vmatprep.subr.bf16.mxu0 %v5267
        %5299 = vmatpush1.bf16.msra.mxu0 %v5266
        %5300 = vmatprep.subr.bf16.mxu0 %v5269
        %5301 = vmatpush1.bf16.msra.mxu0 %v5268
        %5302 = vmatprep.subr.bf16.mxu0 %v5271
        %5303 = vmatpush1.bf16.msra.mxu0 %v5270
        %5304 = vmatprep.subr.bf16.mxu0 %v5273
        %5305 = vmatpush1.bf16.msra.mxu0 %v5272
        %5306 = vmatprep.subr.bf16.mxu0 %v5275
        %5307 = vmatpush1.bf16.msra.mxu0 %v5274
        %5308 = vmatprep.subr.bf16.mxu0 %v5277
        %5309 = vmatpush1.bf16.msra.mxu0 %v5276
        %5310 = vmatprep.subr.bf16.mxu0 %v5279
        %5311 = vmatpush1.bf16.msra.mxu0 %v5278
        %5312 = vmatprep.subr.bf16.mxu0 0
        %5313 = vmatpush1.bf16.msra.mxu0 0
        %5314 = vmatprep.subr.bf16.mxu0 0
        %5315 = vmatpush1.bf16.msra.mxu0 0
        %5316 = vmatprep.subr.bf16.mxu0 0
        %5317 = vmatpush1.bf16.msra.mxu0 0
        %5318 = vmatprep.subr.bf16.mxu0 0
        %5319 = vmatpush1.bf16.msra.mxu0 0
        %5320 = vmatprep.subr.bf16.mxu0 0
        %5321 = vmatpush1.bf16.msra.mxu0 0
        %5322 = vmatprep.subr.bf16.mxu0 0
        %5323 = vmatpush1.bf16.msra.mxu0 0
        %5324 = vmatprep.subr.bf16.mxu0 0
        %5325 = vmatpush1.bf16.msra.mxu0 0
        %5326 = vmatprep.subr.bf16.mxu0 0
        %5327 = vmatpush1.bf16.msra.mxu0 0
        %5328 = vmatprep.mubr.bf16.mxu0 0
        %5329 = vmatmul.mubr.bf16.gmra.mrb[0].mxu0 %v5210
        %v5330 = vpop.f32.mrb[0].mxu0
        %v5331 = vadd.f32 %v5191, %v5330
        %v5332 = vpop.f32.mrb[0].mxu0
        %v5333 = vadd.f32 %v5195, %v5332
        %v5334 = vpop.f32.mrb[0].mxu0
        %v5335 = vadd.f32 %v5191, %v5334
        %v5336 = vpop.f32.mrb[0].mxu0
        %v5337 = vadd.f32 %v5195, %v5336
        %5338 = vmatprep.mubr.bf16.mxu0 0
        %5339 = vmatmul.mubr.bf16.gmra.mrb[0].mxu0 %v5211
        %v5340 = vpop.f32.mrb[0].mxu0
        %v5341 = vadd.f32 %v5191, %v5340
        %v5342 = vpop.f32.mrb[0].mxu0
        %v5343 = vadd.f32 %v5195, %v5342
        %v5344 = vpop.f32.mrb[0].mxu0
        %v5345 = vadd.f32 %v5191, %v5344
        %v5346 = vpop.f32.mrb[0].mxu0
        %v5347 = vadd.f32 %v5195, %v5346
        %5348 = vmatprep.mubr.bf16.mxu0 0
        %5349 = vmatmul.mubr.bf16.gmra.mrb[0].mxu0 %v5212
        %v5350 = vpop.f32.mrb[0].mxu0
        %v5351 = vadd.f32 %v5191, %v5350
        %v5352 = vpop.f32.mrb[0].mxu0
        %v5353 = vadd.f32 %v5195, %v5352
        %v5354 = vpop.f32.mrb[0].mxu0
        %v5355 = vadd.f32 %v5191, %v5354
        %v5356 = vpop.f32.mrb[0].mxu0
        %v5357 = vadd.f32 %v5195, %v5356
        %5358 = vdwg.mxu0
        %5363 = vrot.lane.b32.xlu0 %v5156, 96
        %v5364 = vpop.permute.xlu0 %5363
        %5365 = vrot.lane.b32.xlu0 %v5159, 96
        %v5366 = vpop.permute.xlu0 %5365
        %5367 = vrot.lane.b32.xlu0 %v5164, 96
        %v5368 = vpop.permute.xlu0 %5367
        %5369 = vrot.lane.b32.xlu0 %v5167, 96
        %v5370 = vpop.permute.xlu0 %5369
        %5375 = vrot.lane.b32.xlu0 %v5156, 64
        %v5376 = vpop.permute.xlu0 %5375
        %5377 = vrot.lane.b32.xlu0 %v5159, 64
        %v5378 = vpop.permute.xlu0 %5377
        %5379 = vrot.lane.b32.xlu0 %v5164, 64
        %v5380 = vpop.permute.xlu0 %5379
        %5381 = vrot.lane.b32.xlu0 %v5167, 64
        %v5382 = vpop.permute.xlu0 %5381
        %5387 = vrot.lane.b32.xlu0 %v5156, 32
        %v5388 = vpop.permute.xlu0 %5387
        %5389 = vrot.lane.b32.xlu0 %v5159, 32
        %v5390 = vpop.permute.xlu0 %5389
        %5391 = vrot.lane.b32.xlu0 %v5164, 32
        %v5392 = vpop.permute.xlu0 %5391
        %5393 = vrot.lane.b32.xlu0 %v5167, 32
        %v5394 = vpop.permute.xlu0 %5393
        %v5399 = vcombine.low %v5156, %v5376
        %v5400 = vcombine.high %v5156, %v5376
        %v5402 = vunpack.c.l.s4 1983009808
        %v5403 = vunpack.c.0.s8 %v5402
        %v5404 = vlaneseq
        %v5405 = vshrl.u32 %v5404, 7
        %v5406 = vsub.s32 %v5403, %v5405
        %v5407 = vrot.slane %v5399, %v5406
        %v5409 = vunpack.c.l.s4 1983009808
        %v5410 = vunpack.c.0.s8 %v5409
        %v5411 = vlaneseq
        %v5412 = vshrl.u32 %v5411, 7
        %v5413 = vsub.s32 %v5410, %v5412
        %v5414 = vrot.slane %v5400, %v5413
        %v5415 = vcombine.low %v5364, %v5388
        %v5416 = vcombine.high %v5364, %v5388
        %v5418 = vunpack.c.l.s4 1983009808
        %v5419 = vunpack.c.0.s8 %v5418
        %v5420 = vlaneseq
        %v5421 = vshrl.u32 %v5420, 7
        %v5422 = vsub.s32 %v5419, %v5421
        %v5423 = vrot.slane %v5415, %v5422
        %v5425 = vunpack.c.l.s4 1983009808
        %v5426 = vunpack.c.0.s8 %v5425
        %v5427 = vlaneseq
        %v5428 = vshrl.u32 %v5427, 7
        %v5429 = vsub.s32 %v5426, %v5428
        %v5430 = vrot.slane %v5416, %v5429
        %v5431 = vcombine.low %v5407, %v5423
        %v5432 = vcombine.high %v5407, %v5423
        %v5434 = vunpack.c.l.s4 1934713408
        %v5435 = vunpack.c.0.s8 %v5434
        %v5436 = vlaneseq
        %v5437 = vshrl.u32 %v5436, 7
        %v5438 = vsub.s32 %v5435, %v5437
        %v5439 = vrot.slane %v5431, %v5438
        %v5441 = vunpack.c.l.s4 1934713408
        %v5442 = vunpack.c.0.s8 %v5441
        %v5443 = vlaneseq
        %v5444 = vshrl.u32 %v5443, 7
        %v5445 = vsub.s32 %v5442, %v5444
        %v5446 = vrot.slane %v5432, %v5445
        %v5447 = vcombine.low %v5414, %v5430
        %v5448 = vcombine.high %v5414, %v5430
        %v5450 = vunpack.c.l.s4 1934713408
        %v5451 = vunpack.c.0.s8 %v5450
        %v5452 = vlaneseq
        %v5453 = vshrl.u32 %v5452, 7
        %v5454 = vsub.s32 %v5451, %v5453
        %v5455 = vrot.slane %v5447, %v5454
        %v5457 = vunpack.c.l.s4 1934713408
        %v5458 = vunpack.c.0.s8 %v5457
        %v5459 = vlaneseq
        %v5460 = vshrl.u32 %v5459, 7
        %v5461 = vsub.s32 %v5458, %v5460
        %v5462 = vrot.slane %v5448, %v5461
        %v5463 = vcombine.high %v5439, 0.0
        %v5464 = vcombine.high %v5446, 0.0
        %v5465 = vcombine.high %v5455, 0.0
        %v5466 = vcombine.high %v5462, 0.0
        %v5467 = vcombine.low %v5159, %v5378
        %v5468 = vcombine.high %v5159, %v5378
        %v5470 = vunpack.c.l.s4 1983009808
        %v5471 = vunpack.c.0.s8 %v5470
        %v5472 = vlaneseq
        %v5473 = vshrl.u32 %v5472, 7
        %v5474 = vsub.s32 %v5471, %v5473
        %v5475 = vrot.slane %v5467, %v5474
        %v5477 = vunpack.c.l.s4 1983009808
        %v5478 = vunpack.c.0.s8 %v5477
        %v5479 = vlaneseq
        %v5480 = vshrl.u32 %v5479, 7
        %v5481 = vsub.s32 %v5478, %v5480
        %v5482 = vrot.slane %v5468, %v5481
        %v5483 = vcombine.low %v5366, %v5390
        %v5484 = vcombine.high %v5366, %v5390
        %v5486 = vunpack.c.l.s4 1983009808
        %v5487 = vunpack.c.0.s8 %v5486
        %v5488 = vlaneseq
        %v5489 = vshrl.u32 %v5488, 7
        %v5490 = vsub.s32 %v5487, %v5489
        %v5491 = vrot.slane %v5483, %v5490
        %v5493 = vunpack.c.l.s4 1983009808
        %v5494 = vunpack.c.0.s8 %v5493
        %v5495 = vlaneseq
        %v5496 = vshrl.u32 %v5495, 7
        %v5497 = vsub.s32 %v5494, %v5496
        %v5498 = vrot.slane %v5484, %v5497
        %v5499 = vcombine.low %v5475, %v5491
        %v5500 = vcombine.high %v5475, %v5491
        %v5502 = vunpack.c.l.s4 1934713408
        %v5503 = vunpack.c.0.s8 %v5502
        %v5504 = vlaneseq
        %v5505 = vshrl.u32 %v5504, 7
        %v5506 = vsub.s32 %v5503, %v5505
        %v5507 = vrot.slane %v5499, %v5506
        %v5509 = vunpack.c.l.s4 1934713408
        %v5510 = vunpack.c.0.s8 %v5509
        %v5511 = vlaneseq
        %v5512 = vshrl.u32 %v5511, 7
        %v5513 = vsub.s32 %v5510, %v5512
        %v5514 = vrot.slane %v5500, %v5513
        %v5515 = vcombine.low %v5482, %v5498
        %v5516 = vcombine.high %v5482, %v5498
        %v5518 = vunpack.c.l.s4 1934713408
        %v5519 = vunpack.c.0.s8 %v5518
        %v5520 = vlaneseq
        %v5521 = vshrl.u32 %v5520, 7
        %v5522 = vsub.s32 %v5519, %v5521
        %v5523 = vrot.slane %v5515, %v5522
        %v5525 = vunpack.c.l.s4 1934713408
        %v5526 = vunpack.c.0.s8 %v5525
        %v5527 = vlaneseq
        %v5528 = vshrl.u32 %v5527, 7
        %v5529 = vsub.s32 %v5526, %v5528
        %v5530 = vrot.slane %v5516, %v5529
        %v5531 = vcombine.high %v5507, 0.0
        %v5532 = vcombine.high %v5514, 0.0
        %v5533 = vcombine.high %v5523, 0.0
        %v5534 = vcombine.high %v5530, 0.0
        %v5535 = vcombine.low %v5164, %v5380
        %v5536 = vcombine.high %v5164, %v5380
        %v5538 = vunpack.c.l.s4 1983009808
        %v5539 = vunpack.c.0.s8 %v5538
        %v5540 = vlaneseq
        %v5541 = vshrl.u32 %v5540, 7
        %v5542 = vsub.s32 %v5539, %v5541
        %v5543 = vrot.slane %v5535, %v5542
        %v5545 = vunpack.c.l.s4 1983009808
        %v5546 = vunpack.c.0.s8 %v5545
        %v5547 = vlaneseq
        %v5548 = vshrl.u32 %v5547, 7
        %v5549 = vsub.s32 %v5546, %v5548
        %v5550 = vrot.slane %v5536, %v5549
        %v5551 = vcombine.low %v5368, %v5392
        %v5552 = vcombine.high %v5368, %v5392
        %v5554 = vunpack.c.l.s4 1983009808
        %v5555 = vunpack.c.0.s8 %v5554
        %v5556 = vlaneseq
        %v5557 = vshrl.u32 %v5556, 7
        %v5558 = vsub.s32 %v5555, %v5557
        %v5559 = vrot.slane %v5551, %v5558
        %v5561 = vunpack.c.l.s4 1983009808
        %v5562 = vunpack.c.0.s8 %v5561
        %v5563 = vlaneseq
        %v5564 = vshrl.u32 %v5563, 7
        %v5565 = vsub.s32 %v5562, %v5564
        %v5566 = vrot.slane %v5552, %v5565
        %v5567 = vcombine.low %v5543, %v5559
        %v5568 = vcombine.high %v5543, %v5559
        %v5570 = vunpack.c.l.s4 1934713408
        %v5571 = vunpack.c.0.s8 %v5570
        %v5572 = vlaneseq
        %v5573 = vshrl.u32 %v5572, 7
        %v5574 = vsub.s32 %v5571, %v5573
        %v5575 = vrot.slane %v5567, %v5574
        %v5577 = vunpack.c.l.s4 1934713408
        %v5578 = vunpack.c.0.s8 %v5577
        %v5579 = vlaneseq
        %v5580 = vshrl.u32 %v5579, 7
        %v5581 = vsub.s32 %v5578, %v5580
        %v5582 = vrot.slane %v5568, %v5581
        %v5583 = vcombine.low %v5550, %v5566
        %v5584 = vcombine.high %v5550, %v5566
        %v5586 = vunpack.c.l.s4 1934713408
        %v5587 = vunpack.c.0.s8 %v5586
        %v5588 = vlaneseq
        %v5589 = vshrl.u32 %v5588, 7
        %v5590 = vsub.s32 %v5587, %v5589
        %v5591 = vrot.slane %v5583, %v5590
        %v5593 = vunpack.c.l.s4 1934713408
        %v5594 = vunpack.c.0.s8 %v5593
        %v5595 = vlaneseq
        %v5596 = vshrl.u32 %v5595, 7
        %v5597 = vsub.s32 %v5594, %v5596
        %v5598 = vrot.slane %v5584, %v5597
        %v5599 = vcombine.high %v5575, 0.0
        %v5600 = vcombine.high %v5582, 0.0
        %v5601 = vcombine.high %v5591, 0.0
        %v5602 = vcombine.high %v5598, 0.0
        %v5603 = vcombine.low %v5167, %v5382
        %v5604 = vcombine.high %v5167, %v5382
        %v5606 = vunpack.c.l.s4 1983009808
        %v5607 = vunpack.c.0.s8 %v5606
        %v5608 = vlaneseq
        %v5609 = vshrl.u32 %v5608, 7
        %v5610 = vsub.s32 %v5607, %v5609
        %v5611 = vrot.slane %v5603, %v5610
        %v5613 = vunpack.c.l.s4 1983009808
        %v5614 = vunpack.c.0.s8 %v5613
        %v5615 = vlaneseq
        %v5616 = vshrl.u32 %v5615, 7
        %v5617 = vsub.s32 %v5614, %v5616
        %v5618 = vrot.slane %v5604, %v5617
        %v5619 = vcombine.low %v5370, %v5394
        %v5620 = vcombine.high %v5370, %v5394
        %v5622 = vunpack.c.l.s4 1983009808
        %v5623 = vunpack.c.0.s8 %v5622
        %v5624 = vlaneseq
        %v5625 = vshrl.u32 %v5624, 7
        %v5626 = vsub.s32 %v5623, %v5625
        %v5627 = vrot.slane %v5619, %v5626
        %v5629 = vunpack.c.l.s4 1983009808
        %v5630 = vunpack.c.0.s8 %v5629
        %v5631 = vlaneseq
        %v5632 = vshrl.u32 %v5631, 7
        %v5633 = vsub.s32 %v5630, %v5632
        %v5634 = vrot.slane %v5620, %v5633
        %v5635 = vcombine.low %v5611, %v5627
        %v5636 = vcombine.high %v5611, %v5627
        %v5638 = vunpack.c.l.s4 1934713408
        %v5639 = vunpack.c.0.s8 %v5638
        %v5640 = vlaneseq
        %v5641 = vshrl.u32 %v5640, 7
        %v5642 = vsub.s32 %v5639, %v5641
        %v5643 = vrot.slane %v5635, %v5642
        %v5645 = vunpack.c.l.s4 1934713408
        %v5646 = vunpack.c.0.s8 %v5645
        %v5647 = vlaneseq
        %v5648 = vshrl.u32 %v5647, 7
        %v5649 = vsub.s32 %v5646, %v5648
        %v5650 = vrot.slane %v5636, %v5649
        %v5651 = vcombine.low %v5618, %v5634
        %v5652 = vcombine.high %v5618, %v5634
        %v5654 = vunpack.c.l.s4 1934713408
        %v5655 = vunpack.c.0.s8 %v5654
        %v5656 = vlaneseq
        %v5657 = vshrl.u32 %v5656, 7
        %v5658 = vsub.s32 %v5655, %v5657
        %v5659 = vrot.slane %v5651, %v5658
        %v5661 = vunpack.c.l.s4 1934713408
        %v5662 = vunpack.c.0.s8 %v5661
        %v5663 = vlaneseq
        %v5664 = vshrl.u32 %v5663, 7
        %v5665 = vsub.s32 %v5662, %v5664
        %v5666 = vrot.slane %v5652, %v5665
        %v5667 = vcombine.high %v5643, 0.0
        %v5668 = vcombine.high %v5650, 0.0
        %v5669 = vcombine.high %v5659, 0.0
        %v5670 = vcombine.high %v5666, 0.0
        %v5671 = vcombine.low %v5439, %v5446
        %v5673 = vunpack.c.l.s4 1983009808
        %v5674 = vunpack.c.0.s8 %v5673
        %v5675 = vlaneseq
        %v5676 = vshrl.u32 %v5675, 7
        %v5677 = vsub.s32 %v5674, %v5676
        %v5678 = vrot.slane %v5671, %v5677
        %v5679 = vcombine.low %v5463, %v5464
        %v5681 = vunpack.c.l.s4 1983009808
        %v5682 = vunpack.c.0.s8 %v5681
        %v5683 = vlaneseq
        %v5684 = vshrl.u32 %v5683, 7
        %v5685 = vsub.s32 %v5682, %v5684
        %v5686 = vrot.slane %v5679, %v5685
        %v5687 = vcombine.low %v5455, %v5462
        %v5689 = vunpack.c.l.s4 1983009808
        %v5690 = vunpack.c.0.s8 %v5689
        %v5691 = vlaneseq
        %v5692 = vshrl.u32 %v5691, 7
        %v5693 = vsub.s32 %v5690, %v5692
        %v5694 = vrot.slane %v5687, %v5693
        %v5695 = vcombine.low %v5465, %v5466
        %v5697 = vunpack.c.l.s4 1983009808
        %v5698 = vunpack.c.0.s8 %v5697
        %v5699 = vlaneseq
        %v5700 = vshrl.u32 %v5699, 7
        %v5701 = vsub.s32 %v5698, %v5700
        %v5702 = vrot.slane %v5695, %v5701
        %v5703 = vcombine.low %v5678, %v5686
        %v5704 = vcombine.high %v5678, %v5686
        %v5706 = vunpack.c.l.s4 1934713408
        %v5707 = vunpack.c.0.s8 %v5706
        %v5708 = vlaneseq
        %v5709 = vshrl.u32 %v5708, 7
        %v5710 = vsub.s32 %v5707, %v5709
        %v5711 = vrot.slane %v5703, %v5710
        %v5713 = vunpack.c.l.s4 1934713408
        %v5714 = vunpack.c.0.s8 %v5713
        %v5715 = vlaneseq
        %v5716 = vshrl.u32 %v5715, 7
        %v5717 = vsub.s32 %v5714, %v5716
        %v5718 = vrot.slane %v5704, %v5717
        %v5719 = vcombine.low %v5694, %v5702
        %v5720 = vcombine.high %v5694, %v5702
        %v5722 = vunpack.c.l.s4 1934713408
        %v5723 = vunpack.c.0.s8 %v5722
        %v5724 = vlaneseq
        %v5725 = vshrl.u32 %v5724, 7
        %v5726 = vsub.s32 %v5723, %v5725
        %v5727 = vrot.slane %v5719, %v5726
        %v5729 = vunpack.c.l.s4 1934713408
        %v5730 = vunpack.c.0.s8 %v5729
        %v5731 = vlaneseq
        %v5732 = vshrl.u32 %v5731, 7
        %v5733 = vsub.s32 %v5730, %v5732
        %v5734 = vrot.slane %v5720, %v5733
        %v5735 = vcombine.low %v5711, %v5727
        %v5736 = vcombine.high %v5711, %v5727
        %v5737 = vcombine.low %v5718, %v5734
        %v5738 = vcombine.high %v5718, %v5734
        %v5739 = vcombine.low %v5507, %v5514
        %v5741 = vunpack.c.l.s4 1983009808
        %v5742 = vunpack.c.0.s8 %v5741
        %v5743 = vlaneseq
        %v5744 = vshrl.u32 %v5743, 7
        %v5745 = vsub.s32 %v5742, %v5744
        %v5746 = vrot.slane %v5739, %v5745
        %v5747 = vcombine.low %v5531, %v5532
        %v5749 = vunpack.c.l.s4 1983009808
        %v5750 = vunpack.c.0.s8 %v5749
        %v5751 = vlaneseq
        %v5752 = vshrl.u32 %v5751, 7
        %v5753 = vsub.s32 %v5750, %v5752
        %v5754 = vrot.slane %v5747, %v5753
        %v5755 = vcombine.low %v5523, %v5530
        %v5757 = vunpack.c.l.s4 1983009808
        %v5758 = vunpack.c.0.s8 %v5757
        %v5759 = vlaneseq
        %v5760 = vshrl.u32 %v5759, 7
        %v5761 = vsub.s32 %v5758, %v5760
        %v5762 = vrot.slane %v5755, %v5761
        %v5763 = vcombine.low %v5533, %v5534
        %v5765 = vunpack.c.l.s4 1983009808
        %v5766 = vunpack.c.0.s8 %v5765
        %v5767 = vlaneseq
        %v5768 = vshrl.u32 %v5767, 7
        %v5769 = vsub.s32 %v5766, %v5768
        %v5770 = vrot.slane %v5763, %v5769
        %v5771 = vcombine.low %v5746, %v5754
        %v5772 = vcombine.high %v5746, %v5754
        %v5774 = vunpack.c.l.s4 1934713408
        %v5775 = vunpack.c.0.s8 %v5774
        %v5776 = vlaneseq
        %v5777 = vshrl.u32 %v5776, 7
        %v5778 = vsub.s32 %v5775, %v5777
        %v5779 = vrot.slane %v5771, %v5778
        %v5781 = vunpack.c.l.s4 1934713408
        %v5782 = vunpack.c.0.s8 %v5781
        %v5783 = vlaneseq
        %v5784 = vshrl.u32 %v5783, 7
        %v5785 = vsub.s32 %v5782, %v5784
        %v5786 = vrot.slane %v5772, %v5785
        %v5787 = vcombine.low %v5762, %v5770
        %v5788 = vcombine.high %v5762, %v5770
        %v5790 = vunpack.c.l.s4 1934713408
        %v5791 = vunpack.c.0.s8 %v5790
        %v5792 = vlaneseq
        %v5793 = vshrl.u32 %v5792, 7
        %v5794 = vsub.s32 %v5791, %v5793
        %v5795 = vrot.slane %v5787, %v5794
        %v5797 = vunpack.c.l.s4 1934713408
        %v5798 = vunpack.c.0.s8 %v5797
        %v5799 = vlaneseq
        %v5800 = vshrl.u32 %v5799, 7
        %v5801 = vsub.s32 %v5798, %v5800
        %v5802 = vrot.slane %v5788, %v5801
        %v5803 = vcombine.low %v5779, %v5795
        %v5804 = vcombine.high %v5779, %v5795
        %v5805 = vcombine.low %v5786, %v5802
        %v5806 = vcombine.high %v5786, %v5802
        %v5807 = vcombine.low %v5575, %v5582
        %v5809 = vunpack.c.l.s4 1983009808
        %v5810 = vunpack.c.0.s8 %v5809
        %v5811 = vlaneseq
        %v5812 = vshrl.u32 %v5811, 7
        %v5813 = vsub.s32 %v5810, %v5812
        %v5814 = vrot.slane %v5807, %v5813
        %v5815 = vcombine.low %v5599, %v5600
        %v5817 = vunpack.c.l.s4 1983009808
        %v5818 = vunpack.c.0.s8 %v5817
        %v5819 = vlaneseq
        %v5820 = vshrl.u32 %v5819, 7
        %v5821 = vsub.s32 %v5818, %v5820
        %v5822 = vrot.slane %v5815, %v5821
        %v5823 = vcombine.low %v5591, %v5598
        %v5825 = vunpack.c.l.s4 1983009808
        %v5826 = vunpack.c.0.s8 %v5825
        %v5827 = vlaneseq
        %v5828 = vshrl.u32 %v5827, 7
        %v5829 = vsub.s32 %v5826, %v5828
        %v5830 = vrot.slane %v5823, %v5829
        %v5831 = vcombine.low %v5601, %v5602
        %v5833 = vunpack.c.l.s4 1983009808
        %v5834 = vunpack.c.0.s8 %v5833
        %v5835 = vlaneseq
        %v5836 = vshrl.u32 %v5835, 7
        %v5837 = vsub.s32 %v5834, %v5836
        %v5838 = vrot.slane %v5831, %v5837
        %v5839 = vcombine.low %v5814, %v5822
        %v5840 = vcombine.high %v5814, %v5822
        %v5842 = vunpack.c.l.s4 1934713408
        %v5843 = vunpack.c.0.s8 %v5842
        %v5844 = vlaneseq
        %v5845 = vshrl.u32 %v5844, 7
        %v5846 = vsub.s32 %v5843, %v5845
        %v5847 = vrot.slane %v5839, %v5846
        %v5849 = vunpack.c.l.s4 1934713408
        %v5850 = vunpack.c.0.s8 %v5849
        %v5851 = vlaneseq
        %v5852 = vshrl.u32 %v5851, 7
        %v5853 = vsub.s32 %v5850, %v5852
        %v5854 = vrot.slane %v5840, %v5853
        %v5855 = vcombine.low %v5830, %v5838
        %v5856 = vcombine.high %v5830, %v5838
        %v5858 = vunpack.c.l.s4 1934713408
        %v5859 = vunpack.c.0.s8 %v5858
        %v5860 = vlaneseq
        %v5861 = vshrl.u32 %v5860, 7
        %v5862 = vsub.s32 %v5859, %v5861
        %v5863 = vrot.slane %v5855, %v5862
        %v5865 = vunpack.c.l.s4 1934713408
        %v5866 = vunpack.c.0.s8 %v5865
        %v5867 = vlaneseq
        %v5868 = vshrl.u32 %v5867, 7
        %v5869 = vsub.s32 %v5866, %v5868
        %v5870 = vrot.slane %v5856, %v5869
        %v5871 = vcombine.low %v5847, %v5863
        %v5872 = vcombine.high %v5847, %v5863
        %v5873 = vcombine.low %v5854, %v5870
        %v5874 = vcombine.high %v5854, %v5870
        %v5875 = vcombine.low %v5643, %v5650
        %v5877 = vunpack.c.l.s4 1983009808
        %v5878 = vunpack.c.0.s8 %v5877
        %v5879 = vlaneseq
        %v5880 = vshrl.u32 %v5879, 7
        %v5881 = vsub.s32 %v5878, %v5880
        %v5882 = vrot.slane %v5875, %v5881
        %v5883 = vcombine.low %v5667, %v5668
        %v5885 = vunpack.c.l.s4 1983009808
        %v5886 = vunpack.c.0.s8 %v5885
        %v5887 = vlaneseq
        %v5888 = vshrl.u32 %v5887, 7
        %v5889 = vsub.s32 %v5886, %v5888
        %v5890 = vrot.slane %v5883, %v5889
        %v5891 = vcombine.low %v5659, %v5666
        %v5893 = vunpack.c.l.s4 1983009808
        %v5894 = vunpack.c.0.s8 %v5893
        %v5895 = vlaneseq
        %v5896 = vshrl.u32 %v5895, 7
        %v5897 = vsub.s32 %v5894, %v5896
        %v5898 = vrot.slane %v5891, %v5897
        %v5899 = vcombine.low %v5669, %v5670
        %v5901 = vunpack.c.l.s4 1983009808
        %v5902 = vunpack.c.0.s8 %v5901
        %v5903 = vlaneseq
        %v5904 = vshrl.u32 %v5903, 7
        %v5905 = vsub.s32 %v5902, %v5904
        %v5906 = vrot.slane %v5899, %v5905
        %v5907 = vcombine.low %v5882, %v5890
        %v5908 = vcombine.high %v5882, %v5890
        %v5910 = vunpack.c.l.s4 1934713408
        %v5911 = vunpack.c.0.s8 %v5910
        %v5912 = vlaneseq
        %v5913 = vshrl.u32 %v5912, 7
        %v5914 = vsub.s32 %v5911, %v5913
        %v5915 = vrot.slane %v5907, %v5914
        %v5917 = vunpack.c.l.s4 1934713408
        %v5918 = vunpack.c.0.s8 %v5917
        %v5919 = vlaneseq
        %v5920 = vshrl.u32 %v5919, 7
        %v5921 = vsub.s32 %v5918, %v5920
        %v5922 = vrot.slane %v5908, %v5921
        %v5923 = vcombine.low %v5898, %v5906
        %v5924 = vcombine.high %v5898, %v5906
        %v5926 = vunpack.c.l.s4 1934713408
        %v5927 = vunpack.c.0.s8 %v5926
        %v5928 = vlaneseq
        %v5929 = vshrl.u32 %v5928, 7
        %v5930 = vsub.s32 %v5927, %v5929
        %v5931 = vrot.slane %v5923, %v5930
        %v5933 = vunpack.c.l.s4 1934713408
        %v5934 = vunpack.c.0.s8 %v5933
        %v5935 = vlaneseq
        %v5936 = vshrl.u32 %v5935, 7
        %v5937 = vsub.s32 %v5934, %v5936
        %v5938 = vrot.slane %v5924, %v5937
        %v5939 = vcombine.low %v5915, %v5931
        %v5940 = vcombine.high %v5915, %v5931
        %v5941 = vcombine.low %v5922, %v5938
        %v5942 = vcombine.high %v5922, %v5938
        %v5943 = vpack.c.bf16 %v5803, %v5735
        %v5944 = vpack.c.bf16 %v5804, %v5736
        %v5945 = vpack.c.bf16 %v5805, %v5737
        %v5946 = vpack.c.bf16 %v5806, %v5738
        %v5947 = vpack.c.bf16 %v5939, %v5871
        %v5948 = vpack.c.bf16 %v5940, %v5872
        %v5949 = vpack.c.bf16 %v5941, %v5873
        %v5950 = vpack.c.bf16 %v5942, %v5874
        %5957 = vrot.lane.b32.xlu0 %v5331, 96
        %v5958 = vpop.permute.xlu0 %5957
        %5959 = vrot.lane.b32.xlu0 %v5335, 96
        %v5960 = vpop.permute.xlu0 %5959
        %5961 = vrot.lane.b32.xlu0 %v5341, 96
        %v5962 = vpop.permute.xlu0 %5961
        %5963 = vrot.lane.b32.xlu0 %v5345, 96
        %v5964 = vpop.permute.xlu0 %5963
        %5965 = vrot.lane.b32.xlu0 %v5351, 96
        %v5966 = vpop.permute.xlu0 %5965
        %5967 = vrot.lane.b32.xlu0 %v5355, 96
        %v5968 = vpop.permute.xlu0 %5967
        %5975 = vrot.lane.b32.xlu0 %v5331, 64
        %v5976 = vpop.permute.xlu0 %5975
        %5977 = vrot.lane.b32.xlu0 %v5335, 64
        %v5978 = vpop.permute.xlu0 %5977
        %5979 = vrot.lane.b32.xlu0 %v5341, 64
        %v5980 = vpop.permute.xlu0 %5979
        %5981 = vrot.lane.b32.xlu0 %v5345, 64
        %v5982 = vpop.permute.xlu0 %5981
        %5983 = vrot.lane.b32.xlu0 %v5351, 64
        %v5984 = vpop.permute.xlu0 %5983
        %5985 = vrot.lane.b32.xlu0 %v5355, 64
        %v5986 = vpop.permute.xlu0 %5985
        %5993 = vrot.lane.b32.xlu0 %v5331, 32
        %v5994 = vpop.permute.xlu0 %5993
        %5995 = vrot.lane.b32.xlu0 %v5335, 32
        %v5996 = vpop.permute.xlu0 %5995
        %5997 = vrot.lane.b32.xlu0 %v5341, 32
        %v5998 = vpop.permute.xlu0 %5997
        %5999 = vrot.lane.b32.xlu0 %v5345, 32
        %v6000 = vpop.permute.xlu0 %5999
        %6001 = vrot.lane.b32.xlu0 %v5351, 32
        %v6002 = vpop.permute.xlu0 %6001
        %6003 = vrot.lane.b32.xlu0 %v5355, 32
        %v6004 = vpop.permute.xlu0 %6003
        %v6011 = vcombine.low %v5331, %v5976
        %v6012 = vcombine.high %v5331, %v5976
        %v6014 = vunpack.c.l.s4 1983009808
        %v6015 = vunpack.c.0.s8 %v6014
        %v6016 = vlaneseq
        %v6017 = vshrl.u32 %v6016, 7
        %v6018 = vsub.s32 %v6015, %v6017
        %v6019 = vrot.slane %v6011, %v6018
        %v6021 = vunpack.c.l.s4 1983009808
        %v6022 = vunpack.c.0.s8 %v6021
        %v6023 = vlaneseq
        %v6024 = vshrl.u32 %v6023, 7
        %v6025 = vsub.s32 %v6022, %v6024
        %v6026 = vrot.slane %v6012, %v6025
        %v6027 = vcombine.low %v5958, %v5994
        %v6028 = vcombine.high %v5958, %v5994
        %v6030 = vunpack.c.l.s4 1983009808
        %v6031 = vunpack.c.0.s8 %v6030
        %v6032 = vlaneseq
        %v6033 = vshrl.u32 %v6032, 7
        %v6034 = vsub.s32 %v6031, %v6033
        %v6035 = vrot.slane %v6027, %v6034
        %v6037 = vunpack.c.l.s4 1983009808
        %v6038 = vunpack.c.0.s8 %v6037
        %v6039 = vlaneseq
        %v6040 = vshrl.u32 %v6039, 7
        %v6041 = vsub.s32 %v6038, %v6040
        %v6042 = vrot.slane %v6028, %v6041
        %v6043 = vcombine.low %v6019, %v6035
        %v6044 = vcombine.high %v6019, %v6035
        %v6046 = vunpack.c.l.s4 1934713408
        %v6047 = vunpack.c.0.s8 %v6046
        %v6048 = vlaneseq
        %v6049 = vshrl.u32 %v6048, 7
        %v6050 = vsub.s32 %v6047, %v6049
        %v6051 = vrot.slane %v6043, %v6050
        %v6053 = vunpack.c.l.s4 1934713408
        %v6054 = vunpack.c.0.s8 %v6053
        %v6055 = vlaneseq
        %v6056 = vshrl.u32 %v6055, 7
        %v6057 = vsub.s32 %v6054, %v6056
        %v6058 = vrot.slane %v6044, %v6057
        %v6059 = vcombine.low %v6026, %v6042
        %v6060 = vcombine.high %v6026, %v6042
        %v6062 = vunpack.c.l.s4 1934713408
        %v6063 = vunpack.c.0.s8 %v6062
        %v6064 = vlaneseq
        %v6065 = vshrl.u32 %v6064, 7
        %v6066 = vsub.s32 %v6063, %v6065
        %v6067 = vrot.slane %v6059, %v6066
        %v6069 = vunpack.c.l.s4 1934713408
        %v6070 = vunpack.c.0.s8 %v6069
        %v6071 = vlaneseq
        %v6072 = vshrl.u32 %v6071, 7
        %v6073 = vsub.s32 %v6070, %v6072
        %v6074 = vrot.slane %v6060, %v6073
        %v6075 = vcombine.high %v6051, 0.0
        %v6076 = vcombine.high %v6058, 0.0
        %v6077 = vcombine.high %v6067, 0.0
        %v6078 = vcombine.high %v6074, 0.0
        %v6079 = vcombine.low %v5335, %v5978
        %v6080 = vcombine.high %v5335, %v5978
        %v6082 = vunpack.c.l.s4 1983009808
        %v6083 = vunpack.c.0.s8 %v6082
        %v6084 = vlaneseq
        %v6085 = vshrl.u32 %v6084, 7
        %v6086 = vsub.s32 %v6083, %v6085
        %v6087 = vrot.slane %v6079, %v6086
        %v6089 = vunpack.c.l.s4 1983009808
        %v6090 = vunpack.c.0.s8 %v6089
        %v6091 = vlaneseq
        %v6092 = vshrl.u32 %v6091, 7
        %v6093 = vsub.s32 %v6090, %v6092
        %v6094 = vrot.slane %v6080, %v6093
        %v6095 = vcombine.low %v5960, %v5996
        %v6096 = vcombine.high %v5960, %v5996
        %v6098 = vunpack.c.l.s4 1983009808
        %v6099 = vunpack.c.0.s8 %v6098
        %v6100 = vlaneseq
        %v6101 = vshrl.u32 %v6100, 7
        %v6102 = vsub.s32 %v6099, %v6101
        %v6103 = vrot.slane %v6095, %v6102
        %v6105 = vunpack.c.l.s4 1983009808
        %v6106 = vunpack.c.0.s8 %v6105
        %v6107 = vlaneseq
        %v6108 = vshrl.u32 %v6107, 7
        %v6109 = vsub.s32 %v6106, %v6108
        %v6110 = vrot.slane %v6096, %v6109
        %v6111 = vcombine.low %v6087, %v6103
        %v6112 = vcombine.high %v6087, %v6103
        %v6114 = vunpack.c.l.s4 1934713408
        %v6115 = vunpack.c.0.s8 %v6114
        %v6116 = vlaneseq
        %v6117 = vshrl.u32 %v6116, 7
        %v6118 = vsub.s32 %v6115, %v6117
        %v6119 = vrot.slane %v6111, %v6118
        %v6121 = vunpack.c.l.s4 1934713408
        %v6122 = vunpack.c.0.s8 %v6121
        %v6123 = vlaneseq
        %v6124 = vshrl.u32 %v6123, 7
        %v6125 = vsub.s32 %v6122, %v6124
        %v6126 = vrot.slane %v6112, %v6125
        %v6127 = vcombine.low %v6094, %v6110
        %v6128 = vcombine.high %v6094, %v6110
        %v6130 = vunpack.c.l.s4 1934713408
        %v6131 = vunpack.c.0.s8 %v6130
        %v6132 = vlaneseq
        %v6133 = vshrl.u32 %v6132, 7
        %v6134 = vsub.s32 %v6131, %v6133
        %v6135 = vrot.slane %v6127, %v6134
        %v6137 = vunpack.c.l.s4 1934713408
        %v6138 = vunpack.c.0.s8 %v6137
        %v6139 = vlaneseq
        %v6140 = vshrl.u32 %v6139, 7
        %v6141 = vsub.s32 %v6138, %v6140
        %v6142 = vrot.slane %v6128, %v6141
        %v6143 = vcombine.high %v6119, 0.0
        %v6144 = vcombine.high %v6126, 0.0
        %v6145 = vcombine.high %v6135, 0.0
        %v6146 = vcombine.high %v6142, 0.0
        %v6147 = vcombine.low %v5341, %v5980
        %v6148 = vcombine.high %v5341, %v5980
        %v6150 = vunpack.c.l.s4 1983009808
        %v6151 = vunpack.c.0.s8 %v6150
        %v6152 = vlaneseq
        %v6153 = vshrl.u32 %v6152, 7
        %v6154 = vsub.s32 %v6151, %v6153
        %v6155 = vrot.slane %v6147, %v6154
        %v6157 = vunpack.c.l.s4 1983009808
        %v6158 = vunpack.c.0.s8 %v6157
        %v6159 = vlaneseq
        %v6160 = vshrl.u32 %v6159, 7
        %v6161 = vsub.s32 %v6158, %v6160
        %v6162 = vrot.slane %v6148, %v6161
        %v6163 = vcombine.low %v5962, %v5998
        %v6164 = vcombine.high %v5962, %v5998
        %v6166 = vunpack.c.l.s4 1983009808
        %v6167 = vunpack.c.0.s8 %v6166
        %v6168 = vlaneseq
        %v6169 = vshrl.u32 %v6168, 7
        %v6170 = vsub.s32 %v6167, %v6169
        %v6171 = vrot.slane %v6163, %v6170
        %v6173 = vunpack.c.l.s4 1983009808
        %v6174 = vunpack.c.0.s8 %v6173
        %v6175 = vlaneseq
        %v6176 = vshrl.u32 %v6175, 7
        %v6177 = vsub.s32 %v6174, %v6176
        %v6178 = vrot.slane %v6164, %v6177
        %v6179 = vcombine.low %v6155, %v6171
        %v6180 = vcombine.high %v6155, %v6171
        %v6182 = vunpack.c.l.s4 1934713408
        %v6183 = vunpack.c.0.s8 %v6182
        %v6184 = vlaneseq
        %v6185 = vshrl.u32 %v6184, 7
        %v6186 = vsub.s32 %v6183, %v6185
        %v6187 = vrot.slane %v6179, %v6186
        %v6189 = vunpack.c.l.s4 1934713408
        %v6190 = vunpack.c.0.s8 %v6189
        %v6191 = vlaneseq
        %v6192 = vshrl.u32 %v6191, 7
        %v6193 = vsub.s32 %v6190, %v6192
        %v6194 = vrot.slane %v6180, %v6193
        %v6195 = vcombine.low %v6162, %v6178
        %v6196 = vcombine.high %v6162, %v6178
        %v6198 = vunpack.c.l.s4 1934713408
        %v6199 = vunpack.c.0.s8 %v6198
        %v6200 = vlaneseq
        %v6201 = vshrl.u32 %v6200, 7
        %v6202 = vsub.s32 %v6199, %v6201
        %v6203 = vrot.slane %v6195, %v6202
        %v6205 = vunpack.c.l.s4 1934713408
        %v6206 = vunpack.c.0.s8 %v6205
        %v6207 = vlaneseq
        %v6208 = vshrl.u32 %v6207, 7
        %v6209 = vsub.s32 %v6206, %v6208
        %v6210 = vrot.slane %v6196, %v6209
        %v6211 = vcombine.high %v6187, 0.0
        %v6212 = vcombine.high %v6194, 0.0
        %v6213 = vcombine.high %v6203, 0.0
        %v6214 = vcombine.high %v6210, 0.0
        %v6215 = vcombine.low %v5345, %v5982
        %v6216 = vcombine.high %v5345, %v5982
        %v6218 = vunpack.c.l.s4 1983009808
        %v6219 = vunpack.c.0.s8 %v6218
        %v6220 = vlaneseq
        %v6221 = vshrl.u32 %v6220, 7
        %v6222 = vsub.s32 %v6219, %v6221
        %v6223 = vrot.slane %v6215, %v6222
        %v6225 = vunpack.c.l.s4 1983009808
        %v6226 = vunpack.c.0.s8 %v6225
        %v6227 = vlaneseq
        %v6228 = vshrl.u32 %v6227, 7
        %v6229 = vsub.s32 %v6226, %v6228
        %v6230 = vrot.slane %v6216, %v6229
        %v6231 = vcombine.low %v5964, %v6000
        %v6232 = vcombine.high %v5964, %v6000
        %v6234 = vunpack.c.l.s4 1983009808
        %v6235 = vunpack.c.0.s8 %v6234
        %v6236 = vlaneseq
        %v6237 = vshrl.u32 %v6236, 7
        %v6238 = vsub.s32 %v6235, %v6237
        %v6239 = vrot.slane %v6231, %v6238
        %v6241 = vunpack.c.l.s4 1983009808
        %v6242 = vunpack.c.0.s8 %v6241
        %v6243 = vlaneseq
        %v6244 = vshrl.u32 %v6243, 7
        %v6245 = vsub.s32 %v6242, %v6244
        %v6246 = vrot.slane %v6232, %v6245
        %v6247 = vcombine.low %v6223, %v6239
        %v6248 = vcombine.high %v6223, %v6239
        %v6250 = vunpack.c.l.s4 1934713408
        %v6251 = vunpack.c.0.s8 %v6250
        %v6252 = vlaneseq
        %v6253 = vshrl.u32 %v6252, 7
        %v6254 = vsub.s32 %v6251, %v6253
        %v6255 = vrot.slane %v6247, %v6254
        %v6257 = vunpack.c.l.s4 1934713408
        %v6258 = vunpack.c.0.s8 %v6257
        %v6259 = vlaneseq
        %v6260 = vshrl.u32 %v6259, 7
        %v6261 = vsub.s32 %v6258, %v6260
        %v6262 = vrot.slane %v6248, %v6261
        %v6263 = vcombine.low %v6230, %v6246
        %v6264 = vcombine.high %v6230, %v6246
        %v6266 = vunpack.c.l.s4 1934713408
        %v6267 = vunpack.c.0.s8 %v6266
        %v6268 = vlaneseq
        %v6269 = vshrl.u32 %v6268, 7
        %v6270 = vsub.s32 %v6267, %v6269
        %v6271 = vrot.slane %v6263, %v6270
        %v6273 = vunpack.c.l.s4 1934713408
        %v6274 = vunpack.c.0.s8 %v6273
        %v6275 = vlaneseq
        %v6276 = vshrl.u32 %v6275, 7
        %v6277 = vsub.s32 %v6274, %v6276
        %v6278 = vrot.slane %v6264, %v6277
        %v6279 = vcombine.high %v6255, 0.0
        %v6280 = vcombine.high %v6262, 0.0
        %v6281 = vcombine.high %v6271, 0.0
        %v6282 = vcombine.high %v6278, 0.0
        %v6283 = vcombine.low %v5351, %v5984
        %v6284 = vcombine.high %v5351, %v5984
        %v6286 = vunpack.c.l.s4 1983009808
        %v6287 = vunpack.c.0.s8 %v6286
        %v6288 = vlaneseq
        %v6289 = vshrl.u32 %v6288, 7
        %v6290 = vsub.s32 %v6287, %v6289
        %v6291 = vrot.slane %v6283, %v6290
        %v6293 = vunpack.c.l.s4 1983009808
        %v6294 = vunpack.c.0.s8 %v6293
        %v6295 = vlaneseq
        %v6296 = vshrl.u32 %v6295, 7
        %v6297 = vsub.s32 %v6294, %v6296
        %v6298 = vrot.slane %v6284, %v6297
        %v6299 = vcombine.low %v5966, %v6002
        %v6300 = vcombine.high %v5966, %v6002
        %v6302 = vunpack.c.l.s4 1983009808
        %v6303 = vunpack.c.0.s8 %v6302
        %v6304 = vlaneseq
        %v6305 = vshrl.u32 %v6304, 7
        %v6306 = vsub.s32 %v6303, %v6305
        %v6307 = vrot.slane %v6299, %v6306
        %v6309 = vunpack.c.l.s4 1983009808
        %v6310 = vunpack.c.0.s8 %v6309
        %v6311 = vlaneseq
        %v6312 = vshrl.u32 %v6311, 7
        %v6313 = vsub.s32 %v6310, %v6312
        %v6314 = vrot.slane %v6300, %v6313
        %v6315 = vcombine.low %v6291, %v6307
        %v6316 = vcombine.high %v6291, %v6307
        %v6318 = vunpack.c.l.s4 1934713408
        %v6319 = vunpack.c.0.s8 %v6318
        %v6320 = vlaneseq
        %v6321 = vshrl.u32 %v6320, 7
        %v6322 = vsub.s32 %v6319, %v6321
        %v6323 = vrot.slane %v6315, %v6322
        %v6325 = vunpack.c.l.s4 1934713408
        %v6326 = vunpack.c.0.s8 %v6325
        %v6327 = vlaneseq
        %v6328 = vshrl.u32 %v6327, 7
        %v6329 = vsub.s32 %v6326, %v6328
        %v6330 = vrot.slane %v6316, %v6329
        %v6331 = vcombine.low %v6298, %v6314
        %v6332 = vcombine.high %v6298, %v6314
        %v6334 = vunpack.c.l.s4 1934713408
        %v6335 = vunpack.c.0.s8 %v6334
        %v6336 = vlaneseq
        %v6337 = vshrl.u32 %v6336, 7
        %v6338 = vsub.s32 %v6335, %v6337
        %v6339 = vrot.slane %v6331, %v6338
        %v6341 = vunpack.c.l.s4 1934713408
        %v6342 = vunpack.c.0.s8 %v6341
        %v6343 = vlaneseq
        %v6344 = vshrl.u32 %v6343, 7
        %v6345 = vsub.s32 %v6342, %v6344
        %v6346 = vrot.slane %v6332, %v6345
        %v6347 = vcombine.high %v6323, 0.0
        %v6348 = vcombine.high %v6330, 0.0
        %v6349 = vcombine.high %v6339, 0.0
        %v6350 = vcombine.high %v6346, 0.0
        %v6351 = vcombine.low %v5355, %v5986
        %v6352 = vcombine.high %v5355, %v5986
        %v6354 = vunpack.c.l.s4 1983009808
        %v6355 = vunpack.c.0.s8 %v6354
        %v6356 = vlaneseq
        %v6357 = vshrl.u32 %v6356, 7
        %v6358 = vsub.s32 %v6355, %v6357
        %v6359 = vrot.slane %v6351, %v6358
        %v6361 = vunpack.c.l.s4 1983009808
        %v6362 = vunpack.c.0.s8 %v6361
        %v6363 = vlaneseq
        %v6364 = vshrl.u32 %v6363, 7
        %v6365 = vsub.s32 %v6362, %v6364
        %v6366 = vrot.slane %v6352, %v6365
        %v6367 = vcombine.low %v5968, %v6004
        %v6368 = vcombine.high %v5968, %v6004
        %v6370 = vunpack.c.l.s4 1983009808
        %v6371 = vunpack.c.0.s8 %v6370
        %v6372 = vlaneseq
        %v6373 = vshrl.u32 %v6372, 7
        %v6374 = vsub.s32 %v6371, %v6373
        %v6375 = vrot.slane %v6367, %v6374
        %v6377 = vunpack.c.l.s4 1983009808
        %v6378 = vunpack.c.0.s8 %v6377
        %v6379 = vlaneseq
        %v6380 = vshrl.u32 %v6379, 7
        %v6381 = vsub.s32 %v6378, %v6380
        %v6382 = vrot.slane %v6368, %v6381
        %v6383 = vcombine.low %v6359, %v6375
        %v6384 = vcombine.high %v6359, %v6375
        %v6386 = vunpack.c.l.s4 1934713408
        %v6387 = vunpack.c.0.s8 %v6386
        %v6388 = vlaneseq
        %v6389 = vshrl.u32 %v6388, 7
        %v6390 = vsub.s32 %v6387, %v6389
        %v6391 = vrot.slane %v6383, %v6390
        %v6393 = vunpack.c.l.s4 1934713408
        %v6394 = vunpack.c.0.s8 %v6393
        %v6395 = vlaneseq
        %v6396 = vshrl.u32 %v6395, 7
        %v6397 = vsub.s32 %v6394, %v6396
        %v6398 = vrot.slane %v6384, %v6397
        %v6399 = vcombine.low %v6366, %v6382
        %v6400 = vcombine.high %v6366, %v6382
        %v6402 = vunpack.c.l.s4 1934713408
        %v6403 = vunpack.c.0.s8 %v6402
        %v6404 = vlaneseq
        %v6405 = vshrl.u32 %v6404, 7
        %v6406 = vsub.s32 %v6403, %v6405
        %v6407 = vrot.slane %v6399, %v6406
        %v6409 = vunpack.c.l.s4 1934713408
        %v6410 = vunpack.c.0.s8 %v6409
        %v6411 = vlaneseq
        %v6412 = vshrl.u32 %v6411, 7
        %v6413 = vsub.s32 %v6410, %v6412
        %v6414 = vrot.slane %v6400, %v6413
        %v6415 = vcombine.high %v6391, 0.0
        %v6416 = vcombine.high %v6398, 0.0
        %v6417 = vcombine.high %v6407, 0.0
        %v6418 = vcombine.high %v6414, 0.0
        %v6419 = vcombine.low %v6051, %v6058
        %v6421 = vunpack.c.l.s4 1983009808
        %v6422 = vunpack.c.0.s8 %v6421
        %v6423 = vlaneseq
        %v6424 = vshrl.u32 %v6423, 7
        %v6425 = vsub.s32 %v6422, %v6424
        %v6426 = vrot.slane %v6419, %v6425
        %v6427 = vcombine.low %v6075, %v6076
        %v6429 = vunpack.c.l.s4 1983009808
        %v6430 = vunpack.c.0.s8 %v6429
        %v6431 = vlaneseq
        %v6432 = vshrl.u32 %v6431, 7
        %v6433 = vsub.s32 %v6430, %v6432
        %v6434 = vrot.slane %v6427, %v6433
        %v6435 = vcombine.low %v6067, %v6074
        %v6437 = vunpack.c.l.s4 1983009808
        %v6438 = vunpack.c.0.s8 %v6437
        %v6439 = vlaneseq
        %v6440 = vshrl.u32 %v6439, 7
        %v6441 = vsub.s32 %v6438, %v6440
        %v6442 = vrot.slane %v6435, %v6441
        %v6443 = vcombine.low %v6077, %v6078
        %v6445 = vunpack.c.l.s4 1983009808
        %v6446 = vunpack.c.0.s8 %v6445
        %v6447 = vlaneseq
        %v6448 = vshrl.u32 %v6447, 7
        %v6449 = vsub.s32 %v6446, %v6448
        %v6450 = vrot.slane %v6443, %v6449
        %v6451 = vcombine.low %v6426, %v6434
        %v6452 = vcombine.high %v6426, %v6434
        %v6454 = vunpack.c.l.s4 1934713408
        %v6455 = vunpack.c.0.s8 %v6454
        %v6456 = vlaneseq
        %v6457 = vshrl.u32 %v6456, 7
        %v6458 = vsub.s32 %v6455, %v6457
        %v6459 = vrot.slane %v6451, %v6458
        %v6461 = vunpack.c.l.s4 1934713408
        %v6462 = vunpack.c.0.s8 %v6461
        %v6463 = vlaneseq
        %v6464 = vshrl.u32 %v6463, 7
        %v6465 = vsub.s32 %v6462, %v6464
        %v6466 = vrot.slane %v6452, %v6465
        %v6467 = vcombine.low %v6442, %v6450
        %v6468 = vcombine.high %v6442, %v6450
        %v6470 = vunpack.c.l.s4 1934713408
        %v6471 = vunpack.c.0.s8 %v6470
        %v6472 = vlaneseq
        %v6473 = vshrl.u32 %v6472, 7
        %v6474 = vsub.s32 %v6471, %v6473
        %v6475 = vrot.slane %v6467, %v6474
        %v6477 = vunpack.c.l.s4 1934713408
        %v6478 = vunpack.c.0.s8 %v6477
        %v6479 = vlaneseq
        %v6480 = vshrl.u32 %v6479, 7
        %v6481 = vsub.s32 %v6478, %v6480
        %v6482 = vrot.slane %v6468, %v6481
        %v6483 = vcombine.low %v6459, %v6475
        %v6484 = vcombine.high %v6459, %v6475
        %v6485 = vcombine.low %v6466, %v6482
        %v6486 = vcombine.high %v6466, %v6482
        %v6487 = vcombine.low %v6119, %v6126
        %v6489 = vunpack.c.l.s4 1983009808
        %v6490 = vunpack.c.0.s8 %v6489
        %v6491 = vlaneseq
        %v6492 = vshrl.u32 %v6491, 7
        %v6493 = vsub.s32 %v6490, %v6492
        %v6494 = vrot.slane %v6487, %v6493
        %v6495 = vcombine.low %v6143, %v6144
        %v6497 = vunpack.c.l.s4 1983009808
        %v6498 = vunpack.c.0.s8 %v6497
        %v6499 = vlaneseq
        %v6500 = vshrl.u32 %v6499, 7
        %v6501 = vsub.s32 %v6498, %v6500
        %v6502 = vrot.slane %v6495, %v6501
        %v6503 = vcombine.low %v6135, %v6142
        %v6505 = vunpack.c.l.s4 1983009808
        %v6506 = vunpack.c.0.s8 %v6505
        %v6507 = vlaneseq
        %v6508 = vshrl.u32 %v6507, 7
        %v6509 = vsub.s32 %v6506, %v6508
        %v6510 = vrot.slane %v6503, %v6509
        %v6511 = vcombine.low %v6145, %v6146
        %v6513 = vunpack.c.l.s4 1983009808
        %v6514 = vunpack.c.0.s8 %v6513
        %v6515 = vlaneseq
        %v6516 = vshrl.u32 %v6515, 7
        %v6517 = vsub.s32 %v6514, %v6516
        %v6518 = vrot.slane %v6511, %v6517
        %v6519 = vcombine.low %v6494, %v6502
        %v6520 = vcombine.high %v6494, %v6502
        %v6522 = vunpack.c.l.s4 1934713408
        %v6523 = vunpack.c.0.s8 %v6522
        %v6524 = vlaneseq
        %v6525 = vshrl.u32 %v6524, 7
        %v6526 = vsub.s32 %v6523, %v6525
        %v6527 = vrot.slane %v6519, %v6526
        %v6529 = vunpack.c.l.s4 1934713408
        %v6530 = vunpack.c.0.s8 %v6529
        %v6531 = vlaneseq
        %v6532 = vshrl.u32 %v6531, 7
        %v6533 = vsub.s32 %v6530, %v6532
        %v6534 = vrot.slane %v6520, %v6533
        %v6535 = vcombine.low %v6510, %v6518
        %v6536 = vcombine.high %v6510, %v6518
        %v6538 = vunpack.c.l.s4 1934713408
        %v6539 = vunpack.c.0.s8 %v6538
        %v6540 = vlaneseq
        %v6541 = vshrl.u32 %v6540, 7
        %v6542 = vsub.s32 %v6539, %v6541
        %v6543 = vrot.slane %v6535, %v6542
        %v6545 = vunpack.c.l.s4 1934713408
        %v6546 = vunpack.c.0.s8 %v6545
        %v6547 = vlaneseq
        %v6548 = vshrl.u32 %v6547, 7
        %v6549 = vsub.s32 %v6546, %v6548
        %v6550 = vrot.slane %v6536, %v6549
        %v6551 = vcombine.low %v6527, %v6543
        %v6552 = vcombine.high %v6527, %v6543
        %v6553 = vcombine.low %v6534, %v6550
        %v6554 = vcombine.high %v6534, %v6550
        %v6555 = vcombine.low %v6187, %v6194
        %v6557 = vunpack.c.l.s4 1983009808
        %v6558 = vunpack.c.0.s8 %v6557
        %v6559 = vlaneseq
        %v6560 = vshrl.u32 %v6559, 7
        %v6561 = vsub.s32 %v6558, %v6560
        %v6562 = vrot.slane %v6555, %v6561
        %v6563 = vcombine.low %v6211, %v6212
        %v6565 = vunpack.c.l.s4 1983009808
        %v6566 = vunpack.c.0.s8 %v6565
        %v6567 = vlaneseq
        %v6568 = vshrl.u32 %v6567, 7
        %v6569 = vsub.s32 %v6566, %v6568
        %v6570 = vrot.slane %v6563, %v6569
        %v6571 = vcombine.low %v6203, %v6210
        %v6573 = vunpack.c.l.s4 1983009808
        %v6574 = vunpack.c.0.s8 %v6573
        %v6575 = vlaneseq
        %v6576 = vshrl.u32 %v6575, 7
        %v6577 = vsub.s32 %v6574, %v6576
        %v6578 = vrot.slane %v6571, %v6577
        %v6579 = vcombine.low %v6213, %v6214
        %v6581 = vunpack.c.l.s4 1983009808
        %v6582 = vunpack.c.0.s8 %v6581
        %v6583 = vlaneseq
        %v6584 = vshrl.u32 %v6583, 7
        %v6585 = vsub.s32 %v6582, %v6584
        %v6586 = vrot.slane %v6579, %v6585
        %v6587 = vcombine.low %v6562, %v6570
        %v6588 = vcombine.high %v6562, %v6570
        %v6590 = vunpack.c.l.s4 1934713408
        %v6591 = vunpack.c.0.s8 %v6590
        %v6592 = vlaneseq
        %v6593 = vshrl.u32 %v6592, 7
        %v6594 = vsub.s32 %v6591, %v6593
        %v6595 = vrot.slane %v6587, %v6594
        %v6597 = vunpack.c.l.s4 1934713408
        %v6598 = vunpack.c.0.s8 %v6597
        %v6599 = vlaneseq
        %v6600 = vshrl.u32 %v6599, 7
        %v6601 = vsub.s32 %v6598, %v6600
        %v6602 = vrot.slane %v6588, %v6601
        %v6603 = vcombine.low %v6578, %v6586
        %v6604 = vcombine.high %v6578, %v6586
        %v6606 = vunpack.c.l.s4 1934713408
        %v6607 = vunpack.c.0.s8 %v6606
        %v6608 = vlaneseq
        %v6609 = vshrl.u32 %v6608, 7
        %v6610 = vsub.s32 %v6607, %v6609
        %v6611 = vrot.slane %v6603, %v6610
        %v6613 = vunpack.c.l.s4 1934713408
        %v6614 = vunpack.c.0.s8 %v6613
        %v6615 = vlaneseq
        %v6616 = vshrl.u32 %v6615, 7
        %v6617 = vsub.s32 %v6614, %v6616
        %v6618 = vrot.slane %v6604, %v6617
        %v6619 = vcombine.low %v6595, %v6611
        %v6620 = vcombine.high %v6595, %v6611
        %v6621 = vcombine.low %v6602, %v6618
        %v6622 = vcombine.high %v6602, %v6618
        %v6623 = vcombine.low %v6255, %v6262
        %v6625 = vunpack.c.l.s4 1983009808
        %v6626 = vunpack.c.0.s8 %v6625
        %v6627 = vlaneseq
        %v6628 = vshrl.u32 %v6627, 7
        %v6629 = vsub.s32 %v6626, %v6628
        %v6630 = vrot.slane %v6623, %v6629
        %v6631 = vcombine.low %v6279, %v6280
        %v6633 = vunpack.c.l.s4 1983009808
        %v6634 = vunpack.c.0.s8 %v6633
        %v6635 = vlaneseq
        %v6636 = vshrl.u32 %v6635, 7
        %v6637 = vsub.s32 %v6634, %v6636
        %v6638 = vrot.slane %v6631, %v6637
        %v6639 = vcombine.low %v6271, %v6278
        %v6641 = vunpack.c.l.s4 1983009808
        %v6642 = vunpack.c.0.s8 %v6641
        %v6643 = vlaneseq
        %v6644 = vshrl.u32 %v6643, 7
        %v6645 = vsub.s32 %v6642, %v6644
        %v6646 = vrot.slane %v6639, %v6645
        %v6647 = vcombine.low %v6281, %v6282
        %v6649 = vunpack.c.l.s4 1983009808
        %v6650 = vunpack.c.0.s8 %v6649
        %v6651 = vlaneseq
        %v6652 = vshrl.u32 %v6651, 7
        %v6653 = vsub.s32 %v6650, %v6652
        %v6654 = vrot.slane %v6647, %v6653
        %v6655 = vcombine.low %v6630, %v6638
        %v6656 = vcombine.high %v6630, %v6638
        %v6658 = vunpack.c.l.s4 1934713408
        %v6659 = vunpack.c.0.s8 %v6658
        %v6660 = vlaneseq
        %v6661 = vshrl.u32 %v6660, 7
        %v6662 = vsub.s32 %v6659, %v6661
        %v6663 = vrot.slane %v6655, %v6662
        %v6665 = vunpack.c.l.s4 1934713408
        %v6666 = vunpack.c.0.s8 %v6665
        %v6667 = vlaneseq
        %v6668 = vshrl.u32 %v6667, 7
        %v6669 = vsub.s32 %v6666, %v6668
        %v6670 = vrot.slane %v6656, %v6669
        %v6671 = vcombine.low %v6646, %v6654
        %v6672 = vcombine.high %v6646, %v6654
        %v6674 = vunpack.c.l.s4 1934713408
        %v6675 = vunpack.c.0.s8 %v6674
        %v6676 = vlaneseq
        %v6677 = vshrl.u32 %v6676, 7
        %v6678 = vsub.s32 %v6675, %v6677
        %v6679 = vrot.slane %v6671, %v6678
        %v6681 = vunpack.c.l.s4 1934713408
        %v6682 = vunpack.c.0.s8 %v6681
        %v6683 = vlaneseq
        %v6684 = vshrl.u32 %v6683, 7
        %v6685 = vsub.s32 %v6682, %v6684
        %v6686 = vrot.slane %v6672, %v6685
        %v6687 = vcombine.low %v6663, %v6679
        %v6688 = vcombine.high %v6663, %v6679
        %v6689 = vcombine.low %v6670, %v6686
        %v6690 = vcombine.high %v6670, %v6686
        %v6691 = vcombine.low %v6323, %v6330
        %v6693 = vunpack.c.l.s4 1983009808
        %v6694 = vunpack.c.0.s8 %v6693
        %v6695 = vlaneseq
        %v6696 = vshrl.u32 %v6695, 7
        %v6697 = vsub.s32 %v6694, %v6696
        %v6698 = vrot.slane %v6691, %v6697
        %v6699 = vcombine.low %v6347, %v6348
        %v6701 = vunpack.c.l.s4 1983009808
        %v6702 = vunpack.c.0.s8 %v6701
        %v6703 = vlaneseq
        %v6704 = vshrl.u32 %v6703, 7
        %v6705 = vsub.s32 %v6702, %v6704
        %v6706 = vrot.slane %v6699, %v6705
        %v6707 = vcombine.low %v6339, %v6346
        %v6709 = vunpack.c.l.s4 1983009808
        %v6710 = vunpack.c.0.s8 %v6709
        %v6711 = vlaneseq
        %v6712 = vshrl.u32 %v6711, 7
        %v6713 = vsub.s32 %v6710, %v6712
        %v6714 = vrot.slane %v6707, %v6713
        %v6715 = vcombine.low %v6349, %v6350
        %v6717 = vunpack.c.l.s4 1983009808
        %v6718 = vunpack.c.0.s8 %v6717
        %v6719 = vlaneseq
        %v6720 = vshrl.u32 %v6719, 7
        %v6721 = vsub.s32 %v6718, %v6720
        %v6722 = vrot.slane %v6715, %v6721
        %v6723 = vcombine.low %v6698, %v6706
        %v6724 = vcombine.high %v6698, %v6706
        %v6726 = vunpack.c.l.s4 1934713408
        %v6727 = vunpack.c.0.s8 %v6726
        %v6728 = vlaneseq
        %v6729 = vshrl.u32 %v6728, 7
        %v6730 = vsub.s32 %v6727, %v6729
        %v6731 = vrot.slane %v6723, %v6730
        %v6733 = vunpack.c.l.s4 1934713408
        %v6734 = vunpack.c.0.s8 %v6733
        %v6735 = vlaneseq
        %v6736 = vshrl.u32 %v6735, 7
        %v6737 = vsub.s32 %v6734, %v6736
        %v6738 = vrot.slane %v6724, %v6737
        %v6739 = vcombine.low %v6714, %v6722
        %v6740 = vcombine.high %v6714, %v6722
        %v6742 = vunpack.c.l.s4 1934713408
        %v6743 = vunpack.c.0.s8 %v6742
        %v6744 = vlaneseq
        %v6745 = vshrl.u32 %v6744, 7
        %v6746 = vsub.s32 %v6743, %v6745
        %v6747 = vrot.slane %v6739, %v6746
        %v6749 = vunpack.c.l.s4 1934713408
        %v6750 = vunpack.c.0.s8 %v6749
        %v6751 = vlaneseq
        %v6752 = vshrl.u32 %v6751, 7
        %v6753 = vsub.s32 %v6750, %v6752
        %v6754 = vrot.slane %v6740, %v6753
        %v6755 = vcombine.low %v6731, %v6747
        %v6756 = vcombine.high %v6731, %v6747
        %v6757 = vcombine.low %v6738, %v6754
        %v6758 = vcombine.high %v6738, %v6754
        %v6759 = vcombine.low %v6391, %v6398
        %v6761 = vunpack.c.l.s4 1983009808
        %v6762 = vunpack.c.0.s8 %v6761
        %v6763 = vlaneseq
        %v6764 = vshrl.u32 %v6763, 7
        %v6765 = vsub.s32 %v6762, %v6764
        %v6766 = vrot.slane %v6759, %v6765
        %v6767 = vcombine.low %v6415, %v6416
        %v6769 = vunpack.c.l.s4 1983009808
        %v6770 = vunpack.c.0.s8 %v6769
        %v6771 = vlaneseq
        %v6772 = vshrl.u32 %v6771, 7
        %v6773 = vsub.s32 %v6770, %v6772
        %v6774 = vrot.slane %v6767, %v6773
        %v6775 = vcombine.low %v6407, %v6414
        %v6777 = vunpack.c.l.s4 1983009808
        %v6778 = vunpack.c.0.s8 %v6777
        %v6779 = vlaneseq
        %v6780 = vshrl.u32 %v6779, 7
        %v6781 = vsub.s32 %v6778, %v6780
        %v6782 = vrot.slane %v6775, %v6781
        %v6783 = vcombine.low %v6417, %v6418
        %v6785 = vunpack.c.l.s4 1983009808
        %v6786 = vunpack.c.0.s8 %v6785
        %v6787 = vlaneseq
        %v6788 = vshrl.u32 %v6787, 7
        %v6789 = vsub.s32 %v6786, %v6788
        %v6790 = vrot.slane %v6783, %v6789
        %v6791 = vcombine.low %v6766, %v6774
        %v6792 = vcombine.high %v6766, %v6774
        %v6794 = vunpack.c.l.s4 1934713408
        %v6795 = vunpack.c.0.s8 %v6794
        %v6796 = vlaneseq
        %v6797 = vshrl.u32 %v6796, 7
        %v6798 = vsub.s32 %v6795, %v6797
        %v6799 = vrot.slane %v6791, %v6798
        %v6801 = vunpack.c.l.s4 1934713408
        %v6802 = vunpack.c.0.s8 %v6801
        %v6803 = vlaneseq
        %v6804 = vshrl.u32 %v6803, 7
        %v6805 = vsub.s32 %v6802, %v6804
        %v6806 = vrot.slane %v6792, %v6805
        %v6807 = vcombine.low %v6782, %v6790
        %v6808 = vcombine.high %v6782, %v6790
        %v6810 = vunpack.c.l.s4 1934713408
        %v6811 = vunpack.c.0.s8 %v6810
        %v6812 = vlaneseq
        %v6813 = vshrl.u32 %v6812, 7
        %v6814 = vsub.s32 %v6811, %v6813
        %v6815 = vrot.slane %v6807, %v6814
        %v6817 = vunpack.c.l.s4 1934713408
        %v6818 = vunpack.c.0.s8 %v6817
        %v6819 = vlaneseq
        %v6820 = vshrl.u32 %v6819, 7
        %v6821 = vsub.s32 %v6818, %v6820
        %v6822 = vrot.slane %v6808, %v6821
        %v6823 = vcombine.low %v6799, %v6815
        %v6824 = vcombine.high %v6799, %v6815
        %v6825 = vcombine.low %v6806, %v6822
        %v6826 = vcombine.high %v6806, %v6822
        %v6827 = vpack.c.bf16 %v6551, %v6483
        %v6828 = vpack.c.bf16 %v6619, %v6619
        %v6829 = vpack.c.bf16 %v6552, %v6484
        %v6830 = vpack.c.bf16 %v6620, %v6620
        %v6831 = vpack.c.bf16 %v6553, %v6485
        %v6832 = vpack.c.bf16 %v6621, %v6621
        %v6833 = vpack.c.bf16 %v6554, %v6486
        %v6834 = vpack.c.bf16 %v6622, %v6622
        %v6835 = vpack.c.bf16 %v6755, %v6687
        %v6836 = vpack.c.bf16 %v6823, %v6823
        %v6837 = vpack.c.bf16 %v6756, %v6688
        %v6838 = vpack.c.bf16 %v6824, %v6824
        %v6839 = vpack.c.bf16 %v6757, %v6689
        %v6840 = vpack.c.bf16 %v6825, %v6825
        %v6841 = vpack.c.bf16 %v6758, %v6690
        %v6842 = vpack.c.bf16 %v6826, %v6826
        %6849 = vrot.lane.b32.xlu0 %v5333, 96
        %v6850 = vpop.permute.xlu0 %6849
        %6851 = vrot.lane.b32.xlu0 %v5337, 96
        %v6852 = vpop.permute.xlu0 %6851
        %6853 = vrot.lane.b32.xlu0 %v5343, 96
        %v6854 = vpop.permute.xlu0 %6853
        %6855 = vrot.lane.b32.xlu0 %v5347, 96
        %v6856 = vpop.permute.xlu0 %6855
        %6857 = vrot.lane.b32.xlu0 %v5353, 96
        %v6858 = vpop.permute.xlu0 %6857
        %6859 = vrot.lane.b32.xlu0 %v5357, 96
        %v6860 = vpop.permute.xlu0 %6859
        %6867 = vrot.lane.b32.xlu0 %v5333, 64
        %v6868 = vpop.permute.xlu0 %6867
        %6869 = vrot.lane.b32.xlu0 %v5337, 64
        %v6870 = vpop.permute.xlu0 %6869
        %6871 = vrot.lane.b32.xlu0 %v5343, 64
        %v6872 = vpop.permute.xlu0 %6871
        %6873 = vrot.lane.b32.xlu0 %v5347, 64
        %v6874 = vpop.permute.xlu0 %6873
        %6875 = vrot.lane.b32.xlu0 %v5353, 64
        %v6876 = vpop.permute.xlu0 %6875
        %6877 = vrot.lane.b32.xlu0 %v5357, 64
        %v6878 = vpop.permute.xlu0 %6877
        %6885 = vrot.lane.b32.xlu0 %v5333, 32
        %v6886 = vpop.permute.xlu0 %6885
        %6887 = vrot.lane.b32.xlu0 %v5337, 32
        %v6888 = vpop.permute.xlu0 %6887
        %6889 = vrot.lane.b32.xlu0 %v5343, 32
        %v6890 = vpop.permute.xlu0 %6889
        %6891 = vrot.lane.b32.xlu0 %v5347, 32
        %v6892 = vpop.permute.xlu0 %6891
        %6893 = vrot.lane.b32.xlu0 %v5353, 32
        %v6894 = vpop.permute.xlu0 %6893
        %6895 = vrot.lane.b32.xlu0 %v5357, 32
        %v6896 = vpop.permute.xlu0 %6895
        %v6903 = vcombine.low %v5333, %v6868
        %v6904 = vcombine.high %v5333, %v6868
        %v6906 = vunpack.c.l.s4 1983009808
        %v6907 = vunpack.c.0.s8 %v6906
        %v6908 = vlaneseq
        %v6909 = vshrl.u32 %v6908, 7
        %v6910 = vsub.s32 %v6907, %v6909
        %v6911 = vrot.slane %v6903, %v6910
        %v6913 = vunpack.c.l.s4 1983009808
        %v6914 = vunpack.c.0.s8 %v6913
        %v6915 = vlaneseq
        %v6916 = vshrl.u32 %v6915, 7
        %v6917 = vsub.s32 %v6914, %v6916
        %v6918 = vrot.slane %v6904, %v6917
        %v6919 = vcombine.low %v6850, %v6886
        %v6920 = vcombine.high %v6850, %v6886
        %v6922 = vunpack.c.l.s4 1983009808
        %v6923 = vunpack.c.0.s8 %v6922
        %v6924 = vlaneseq
        %v6925 = vshrl.u32 %v6924, 7
        %v6926 = vsub.s32 %v6923, %v6925
        %v6927 = vrot.slane %v6919, %v6926
        %v6929 = vunpack.c.l.s4 1983009808
        %v6930 = vunpack.c.0.s8 %v6929
        %v6931 = vlaneseq
        %v6932 = vshrl.u32 %v6931, 7
        %v6933 = vsub.s32 %v6930, %v6932
        %v6934 = vrot.slane %v6920, %v6933
        %v6935 = vcombine.low %v6911, %v6927
        %v6936 = vcombine.high %v6911, %v6927
        %v6938 = vunpack.c.l.s4 1934713408
        %v6939 = vunpack.c.0.s8 %v6938
        %v6940 = vlaneseq
        %v6941 = vshrl.u32 %v6940, 7
        %v6942 = vsub.s32 %v6939, %v6941
        %v6943 = vrot.slane %v6935, %v6942
        %v6945 = vunpack.c.l.s4 1934713408
        %v6946 = vunpack.c.0.s8 %v6945
        %v6947 = vlaneseq
        %v6948 = vshrl.u32 %v6947, 7
        %v6949 = vsub.s32 %v6946, %v6948
        %v6950 = vrot.slane %v6936, %v6949
        %v6951 = vcombine.low %v6918, %v6934
        %v6952 = vcombine.high %v6918, %v6934
        %v6954 = vunpack.c.l.s4 1934713408
        %v6955 = vunpack.c.0.s8 %v6954
        %v6956 = vlaneseq
        %v6957 = vshrl.u32 %v6956, 7
        %v6958 = vsub.s32 %v6955, %v6957
        %v6959 = vrot.slane %v6951, %v6958
        %v6961 = vunpack.c.l.s4 1934713408
        %v6962 = vunpack.c.0.s8 %v6961
        %v6963 = vlaneseq
        %v6964 = vshrl.u32 %v6963, 7
        %v6965 = vsub.s32 %v6962, %v6964
        %v6966 = vrot.slane %v6952, %v6965
        %v6967 = vcombine.high %v6943, 0.0
        %v6968 = vcombine.high %v6950, 0.0
        %v6969 = vcombine.high %v6959, 0.0
        %v6970 = vcombine.high %v6966, 0.0
        %v6971 = vcombine.low %v5337, %v6870
        %v6972 = vcombine.high %v5337, %v6870
        %v6974 = vunpack.c.l.s4 1983009808
        %v6975 = vunpack.c.0.s8 %v6974
        %v6976 = vlaneseq
        %v6977 = vshrl.u32 %v6976, 7
        %v6978 = vsub.s32 %v6975, %v6977
        %v6979 = vrot.slane %v6971, %v6978
        %v6981 = vunpack.c.l.s4 1983009808
        %v6982 = vunpack.c.0.s8 %v6981
        %v6983 = vlaneseq
        %v6984 = vshrl.u32 %v6983, 7
        %v6985 = vsub.s32 %v6982, %v6984
        %v6986 = vrot.slane %v6972, %v6985
        %v6987 = vcombine.low %v6852, %v6888
        %v6988 = vcombine.high %v6852, %v6888
        %v6990 = vunpack.c.l.s4 1983009808
        %v6991 = vunpack.c.0.s8 %v6990
        %v6992 = vlaneseq
        %v6993 = vshrl.u32 %v6992, 7
        %v6994 = vsub.s32 %v6991, %v6993
        %v6995 = vrot.slane %v6987, %v6994
        %v6997 = vunpack.c.l.s4 1983009808
        %v6998 = vunpack.c.0.s8 %v6997
        %v6999 = vlaneseq
        %v7000 = vshrl.u32 %v6999, 7
        %v7001 = vsub.s32 %v6998, %v7000
        %v7002 = vrot.slane %v6988, %v7001
        %v7003 = vcombine.low %v6979, %v6995
        %v7004 = vcombine.high %v6979, %v6995
        %v7006 = vunpack.c.l.s4 1934713408
        %v7007 = vunpack.c.0.s8 %v7006
        %v7008 = vlaneseq
        %v7009 = vshrl.u32 %v7008, 7
        %v7010 = vsub.s32 %v7007, %v7009
        %v7011 = vrot.slane %v7003, %v7010
        %v7013 = vunpack.c.l.s4 1934713408
        %v7014 = vunpack.c.0.s8 %v7013
        %v7015 = vlaneseq
        %v7016 = vshrl.u32 %v7015, 7
        %v7017 = vsub.s32 %v7014, %v7016
        %v7018 = vrot.slane %v7004, %v7017
        %v7019 = vcombine.low %v6986, %v7002
        %v7020 = vcombine.high %v6986, %v7002
        %v7022 = vunpack.c.l.s4 1934713408
        %v7023 = vunpack.c.0.s8 %v7022
        %v7024 = vlaneseq
        %v7025 = vshrl.u32 %v7024, 7
        %v7026 = vsub.s32 %v7023, %v7025
        %v7027 = vrot.slane %v7019, %v7026
        %v7029 = vunpack.c.l.s4 1934713408
        %v7030 = vunpack.c.0.s8 %v7029
        %v7031 = vlaneseq
        %v7032 = vshrl.u32 %v7031, 7
        %v7033 = vsub.s32 %v7030, %v7032
        %v7034 = vrot.slane %v7020, %v7033
        %v7035 = vcombine.high %v7011, 0.0
        %v7036 = vcombine.high %v7018, 0.0
        %v7037 = vcombine.high %v7027, 0.0
        %v7038 = vcombine.high %v7034, 0.0
        %v7039 = vcombine.low %v5343, %v6872
        %v7040 = vcombine.high %v5343, %v6872
        %v7042 = vunpack.c.l.s4 1983009808
        %v7043 = vunpack.c.0.s8 %v7042
        %v7044 = vlaneseq
        %v7045 = vshrl.u32 %v7044, 7
        %v7046 = vsub.s32 %v7043, %v7045
        %v7047 = vrot.slane %v7039, %v7046
        %v7049 = vunpack.c.l.s4 1983009808
        %v7050 = vunpack.c.0.s8 %v7049
        %v7051 = vlaneseq
        %v7052 = vshrl.u32 %v7051, 7
        %v7053 = vsub.s32 %v7050, %v7052
        %v7054 = vrot.slane %v7040, %v7053
        %v7055 = vcombine.low %v6854, %v6890
        %v7056 = vcombine.high %v6854, %v6890
        %v7058 = vunpack.c.l.s4 1983009808
        %v7059 = vunpack.c.0.s8 %v7058
        %v7060 = vlaneseq
        %v7061 = vshrl.u32 %v7060, 7
        %v7062 = vsub.s32 %v7059, %v7061
        %v7063 = vrot.slane %v7055, %v7062
        %v7065 = vunpack.c.l.s4 1983009808
        %v7066 = vunpack.c.0.s8 %v7065
        %v7067 = vlaneseq
        %v7068 = vshrl.u32 %v7067, 7
        %v7069 = vsub.s32 %v7066, %v7068
        %v7070 = vrot.slane %v7056, %v7069
        %v7071 = vcombine.low %v7047, %v7063
        %v7072 = vcombine.high %v7047, %v7063
        %v7074 = vunpack.c.l.s4 1934713408
        %v7075 = vunpack.c.0.s8 %v7074
        %v7076 = vlaneseq
        %v7077 = vshrl.u32 %v7076, 7
        %v7078 = vsub.s32 %v7075, %v7077
        %v7079 = vrot.slane %v7071, %v7078
        %v7081 = vunpack.c.l.s4 1934713408
        %v7082 = vunpack.c.0.s8 %v7081
        %v7083 = vlaneseq
        %v7084 = vshrl.u32 %v7083, 7
        %v7085 = vsub.s32 %v7082, %v7084
        %v7086 = vrot.slane %v7072, %v7085
        %v7087 = vcombine.low %v7054, %v7070
        %v7088 = vcombine.high %v7054, %v7070
        %v7090 = vunpack.c.l.s4 1934713408
        %v7091 = vunpack.c.0.s8 %v7090
        %v7092 = vlaneseq
        %v7093 = vshrl.u32 %v7092, 7
        %v7094 = vsub.s32 %v7091, %v7093
        %v7095 = vrot.slane %v7087, %v7094
        %v7097 = vunpack.c.l.s4 1934713408
        %v7098 = vunpack.c.0.s8 %v7097
        %v7099 = vlaneseq
        %v7100 = vshrl.u32 %v7099, 7
        %v7101 = vsub.s32 %v7098, %v7100
        %v7102 = vrot.slane %v7088, %v7101
        %v7103 = vcombine.high %v7079, 0.0
        %v7104 = vcombine.high %v7086, 0.0
        %v7105 = vcombine.high %v7095, 0.0
        %v7106 = vcombine.high %v7102, 0.0
        %v7107 = vcombine.low %v5347, %v6874
        %v7108 = vcombine.high %v5347, %v6874
        %v7110 = vunpack.c.l.s4 1983009808
        %v7111 = vunpack.c.0.s8 %v7110
        %v7112 = vlaneseq
        %v7113 = vshrl.u32 %v7112, 7
        %v7114 = vsub.s32 %v7111, %v7113
        %v7115 = vrot.slane %v7107, %v7114
        %v7117 = vunpack.c.l.s4 1983009808
        %v7118 = vunpack.c.0.s8 %v7117
        %v7119 = vlaneseq
        %v7120 = vshrl.u32 %v7119, 7
        %v7121 = vsub.s32 %v7118, %v7120
        %v7122 = vrot.slane %v7108, %v7121
        %v7123 = vcombine.low %v6856, %v6892
        %v7124 = vcombine.high %v6856, %v6892
        %v7126 = vunpack.c.l.s4 1983009808
        %v7127 = vunpack.c.0.s8 %v7126
        %v7128 = vlaneseq
        %v7129 = vshrl.u32 %v7128, 7
        %v7130 = vsub.s32 %v7127, %v7129
        %v7131 = vrot.slane %v7123, %v7130
        %v7133 = vunpack.c.l.s4 1983009808
        %v7134 = vunpack.c.0.s8 %v7133
        %v7135 = vlaneseq
        %v7136 = vshrl.u32 %v7135, 7
        %v7137 = vsub.s32 %v7134, %v7136
        %v7138 = vrot.slane %v7124, %v7137
        %v7139 = vcombine.low %v7115, %v7131
        %v7140 = vcombine.high %v7115, %v7131
        %v7142 = vunpack.c.l.s4 1934713408
        %v7143 = vunpack.c.0.s8 %v7142
        %v7144 = vlaneseq
        %v7145 = vshrl.u32 %v7144, 7
        %v7146 = vsub.s32 %v7143, %v7145
        %v7147 = vrot.slane %v7139, %v7146
        %v7149 = vunpack.c.l.s4 1934713408
        %v7150 = vunpack.c.0.s8 %v7149
        %v7151 = vlaneseq
        %v7152 = vshrl.u32 %v7151, 7
        %v7153 = vsub.s32 %v7150, %v7152
        %v7154 = vrot.slane %v7140, %v7153
        %v7155 = vcombine.low %v7122, %v7138
        %v7156 = vcombine.high %v7122, %v7138
        %v7158 = vunpack.c.l.s4 1934713408
        %v7159 = vunpack.c.0.s8 %v7158
        %v7160 = vlaneseq
        %v7161 = vshrl.u32 %v7160, 7
        %v7162 = vsub.s32 %v7159, %v7161
        %v7163 = vrot.slane %v7155, %v7162
        %v7165 = vunpack.c.l.s4 1934713408
        %v7166 = vunpack.c.0.s8 %v7165
        %v7167 = vlaneseq
        %v7168 = vshrl.u32 %v7167, 7
        %v7169 = vsub.s32 %v7166, %v7168
        %v7170 = vrot.slane %v7156, %v7169
        %v7171 = vcombine.high %v7147, 0.0
        %v7172 = vcombine.high %v7154, 0.0
        %v7173 = vcombine.high %v7163, 0.0
        %v7174 = vcombine.high %v7170, 0.0
        %v7175 = vcombine.low %v5353, %v6876
        %v7176 = vcombine.high %v5353, %v6876
        %v7178 = vunpack.c.l.s4 1983009808
        %v7179 = vunpack.c.0.s8 %v7178
        %v7180 = vlaneseq
        %v7181 = vshrl.u32 %v7180, 7
        %v7182 = vsub.s32 %v7179, %v7181
        %v7183 = vrot.slane %v7175, %v7182
        %v7185 = vunpack.c.l.s4 1983009808
        %v7186 = vunpack.c.0.s8 %v7185
        %v7187 = vlaneseq
        %v7188 = vshrl.u32 %v7187, 7
        %v7189 = vsub.s32 %v7186, %v7188
        %v7190 = vrot.slane %v7176, %v7189
        %v7191 = vcombine.low %v6858, %v6894
        %v7192 = vcombine.high %v6858, %v6894
        %v7194 = vunpack.c.l.s4 1983009808
        %v7195 = vunpack.c.0.s8 %v7194
        %v7196 = vlaneseq
        %v7197 = vshrl.u32 %v7196, 7
        %v7198 = vsub.s32 %v7195, %v7197
        %v7199 = vrot.slane %v7191, %v7198
        %v7201 = vunpack.c.l.s4 1983009808
        %v7202 = vunpack.c.0.s8 %v7201
        %v7203 = vlaneseq
        %v7204 = vshrl.u32 %v7203, 7
        %v7205 = vsub.s32 %v7202, %v7204
        %v7206 = vrot.slane %v7192, %v7205
        %v7207 = vcombine.low %v7183, %v7199
        %v7208 = vcombine.high %v7183, %v7199
        %v7210 = vunpack.c.l.s4 1934713408
        %v7211 = vunpack.c.0.s8 %v7210
        %v7212 = vlaneseq
        %v7213 = vshrl.u32 %v7212, 7
        %v7214 = vsub.s32 %v7211, %v7213
        %v7215 = vrot.slane %v7207, %v7214
        %v7217 = vunpack.c.l.s4 1934713408
        %v7218 = vunpack.c.0.s8 %v7217
        %v7219 = vlaneseq
        %v7220 = vshrl.u32 %v7219, 7
        %v7221 = vsub.s32 %v7218, %v7220
        %v7222 = vrot.slane %v7208, %v7221
        %v7223 = vcombine.low %v7190, %v7206
        %v7224 = vcombine.high %v7190, %v7206
        %v7226 = vunpack.c.l.s4 1934713408
        %v7227 = vunpack.c.0.s8 %v7226
        %v7228 = vlaneseq
        %v7229 = vshrl.u32 %v7228, 7
        %v7230 = vsub.s32 %v7227, %v7229
        %v7231 = vrot.slane %v7223, %v7230
        %v7233 = vunpack.c.l.s4 1934713408
        %v7234 = vunpack.c.0.s8 %v7233
        %v7235 = vlaneseq
        %v7236 = vshrl.u32 %v7235, 7
        %v7237 = vsub.s32 %v7234, %v7236
        %v7238 = vrot.slane %v7224, %v7237
        %v7239 = vcombine.high %v7215, 0.0
        %v7240 = vcombine.high %v7222, 0.0
        %v7241 = vcombine.high %v7231, 0.0
        %v7242 = vcombine.high %v7238, 0.0
        %v7243 = vcombine.low %v5357, %v6878
        %v7244 = vcombine.high %v5357, %v6878
        %v7246 = vunpack.c.l.s4 1983009808
        %v7247 = vunpack.c.0.s8 %v7246
        %v7248 = vlaneseq
        %v7249 = vshrl.u32 %v7248, 7
        %v7250 = vsub.s32 %v7247, %v7249
        %v7251 = vrot.slane %v7243, %v7250
        %v7253 = vunpack.c.l.s4 1983009808
        %v7254 = vunpack.c.0.s8 %v7253
        %v7255 = vlaneseq
        %v7256 = vshrl.u32 %v7255, 7
        %v7257 = vsub.s32 %v7254, %v7256
        %v7258 = vrot.slane %v7244, %v7257
        %v7259 = vcombine.low %v6860, %v6896
        %v7260 = vcombine.high %v6860, %v6896
        %v7262 = vunpack.c.l.s4 1983009808
        %v7263 = vunpack.c.0.s8 %v7262
        %v7264 = vlaneseq
        %v7265 = vshrl.u32 %v7264, 7
        %v7266 = vsub.s32 %v7263, %v7265
        %v7267 = vrot.slane %v7259, %v7266
        %v7269 = vunpack.c.l.s4 1983009808
        %v7270 = vunpack.c.0.s8 %v7269
        %v7271 = vlaneseq
        %v7272 = vshrl.u32 %v7271, 7
        %v7273 = vsub.s32 %v7270, %v7272
        %v7274 = vrot.slane %v7260, %v7273
        %v7275 = vcombine.low %v7251, %v7267
        %v7276 = vcombine.high %v7251, %v7267
        %v7278 = vunpack.c.l.s4 1934713408
        %v7279 = vunpack.c.0.s8 %v7278
        %v7280 = vlaneseq
        %v7281 = vshrl.u32 %v7280, 7
        %v7282 = vsub.s32 %v7279, %v7281
        %v7283 = vrot.slane %v7275, %v7282
        %v7285 = vunpack.c.l.s4 1934713408
        %v7286 = vunpack.c.0.s8 %v7285
        %v7287 = vlaneseq
        %v7288 = vshrl.u32 %v7287, 7
        %v7289 = vsub.s32 %v7286, %v7288
        %v7290 = vrot.slane %v7276, %v7289
        %v7291 = vcombine.low %v7258, %v7274
        %v7292 = vcombine.high %v7258, %v7274
        %v7294 = vunpack.c.l.s4 1934713408
        %v7295 = vunpack.c.0.s8 %v7294
        %v7296 = vlaneseq
        %v7297 = vshrl.u32 %v7296, 7
        %v7298 = vsub.s32 %v7295, %v7297
        %v7299 = vrot.slane %v7291, %v7298
        %v7301 = vunpack.c.l.s4 1934713408
        %v7302 = vunpack.c.0.s8 %v7301
        %v7303 = vlaneseq
        %v7304 = vshrl.u32 %v7303, 7
        %v7305 = vsub.s32 %v7302, %v7304
        %v7306 = vrot.slane %v7292, %v7305
        %v7307 = vcombine.high %v7283, 0.0
        %v7308 = vcombine.high %v7290, 0.0
        %v7309 = vcombine.high %v7299, 0.0
        %v7310 = vcombine.high %v7306, 0.0
        %v7311 = vcombine.low %v6943, %v6950
        %v7313 = vunpack.c.l.s4 1983009808
        %v7314 = vunpack.c.0.s8 %v7313
        %v7315 = vlaneseq
        %v7316 = vshrl.u32 %v7315, 7
        %v7317 = vsub.s32 %v7314, %v7316
        %v7318 = vrot.slane %v7311, %v7317
        %v7319 = vcombine.low %v6967, %v6968
        %v7321 = vunpack.c.l.s4 1983009808
        %v7322 = vunpack.c.0.s8 %v7321
        %v7323 = vlaneseq
        %v7324 = vshrl.u32 %v7323, 7
        %v7325 = vsub.s32 %v7322, %v7324
        %v7326 = vrot.slane %v7319, %v7325
        %v7327 = vcombine.low %v6959, %v6966
        %v7329 = vunpack.c.l.s4 1983009808
        %v7330 = vunpack.c.0.s8 %v7329
        %v7331 = vlaneseq
        %v7332 = vshrl.u32 %v7331, 7
        %v7333 = vsub.s32 %v7330, %v7332
        %v7334 = vrot.slane %v7327, %v7333
        %v7335 = vcombine.low %v6969, %v6970
        %v7337 = vunpack.c.l.s4 1983009808
        %v7338 = vunpack.c.0.s8 %v7337
        %v7339 = vlaneseq
        %v7340 = vshrl.u32 %v7339, 7
        %v7341 = vsub.s32 %v7338, %v7340
        %v7342 = vrot.slane %v7335, %v7341
        %v7343 = vcombine.low %v7318, %v7326
        %v7344 = vcombine.high %v7318, %v7326
        %v7346 = vunpack.c.l.s4 1934713408
        %v7347 = vunpack.c.0.s8 %v7346
        %v7348 = vlaneseq
        %v7349 = vshrl.u32 %v7348, 7
        %v7350 = vsub.s32 %v7347, %v7349
        %v7351 = vrot.slane %v7343, %v7350
        %v7353 = vunpack.c.l.s4 1934713408
        %v7354 = vunpack.c.0.s8 %v7353
        %v7355 = vlaneseq
        %v7356 = vshrl.u32 %v7355, 7
        %v7357 = vsub.s32 %v7354, %v7356
        %v7358 = vrot.slane %v7344, %v7357
        %v7359 = vcombine.low %v7334, %v7342
        %v7360 = vcombine.high %v7334, %v7342
        %v7362 = vunpack.c.l.s4 1934713408
        %v7363 = vunpack.c.0.s8 %v7362
        %v7364 = vlaneseq
        %v7365 = vshrl.u32 %v7364, 7
        %v7366 = vsub.s32 %v7363, %v7365
        %v7367 = vrot.slane %v7359, %v7366
        %v7369 = vunpack.c.l.s4 1934713408
        %v7370 = vunpack.c.0.s8 %v7369
        %v7371 = vlaneseq
        %v7372 = vshrl.u32 %v7371, 7
        %v7373 = vsub.s32 %v7370, %v7372
        %v7374 = vrot.slane %v7360, %v7373
        %v7375 = vcombine.low %v7351, %v7367
        %v7376 = vcombine.high %v7351, %v7367
        %v7377 = vcombine.low %v7358, %v7374
        %v7378 = vcombine.high %v7358, %v7374
        %v7379 = vcombine.low %v7011, %v7018
        %v7381 = vunpack.c.l.s4 1983009808
        %v7382 = vunpack.c.0.s8 %v7381
        %v7383 = vlaneseq
        %v7384 = vshrl.u32 %v7383, 7
        %v7385 = vsub.s32 %v7382, %v7384
        %v7386 = vrot.slane %v7379, %v7385
        %v7387 = vcombine.low %v7035, %v7036
        %v7389 = vunpack.c.l.s4 1983009808
        %v7390 = vunpack.c.0.s8 %v7389
        %v7391 = vlaneseq
        %v7392 = vshrl.u32 %v7391, 7
        %v7393 = vsub.s32 %v7390, %v7392
        %v7394 = vrot.slane %v7387, %v7393
        %v7395 = vcombine.low %v7027, %v7034
        %v7397 = vunpack.c.l.s4 1983009808
        %v7398 = vunpack.c.0.s8 %v7397
        %v7399 = vlaneseq
        %v7400 = vshrl.u32 %v7399, 7
        %v7401 = vsub.s32 %v7398, %v7400
        %v7402 = vrot.slane %v7395, %v7401
        %v7403 = vcombine.low %v7037, %v7038
        %v7405 = vunpack.c.l.s4 1983009808
        %v7406 = vunpack.c.0.s8 %v7405
        %v7407 = vlaneseq
        %v7408 = vshrl.u32 %v7407, 7
        %v7409 = vsub.s32 %v7406, %v7408
        %v7410 = vrot.slane %v7403, %v7409
        %v7411 = vcombine.low %v7386, %v7394
        %v7412 = vcombine.high %v7386, %v7394
        %v7414 = vunpack.c.l.s4 1934713408
        %v7415 = vunpack.c.0.s8 %v7414
        %v7416 = vlaneseq
        %v7417 = vshrl.u32 %v7416, 7
        %v7418 = vsub.s32 %v7415, %v7417
        %v7419 = vrot.slane %v7411, %v7418
        %v7421 = vunpack.c.l.s4 1934713408
        %v7422 = vunpack.c.0.s8 %v7421
        %v7423 = vlaneseq
        %v7424 = vshrl.u32 %v7423, 7
        %v7425 = vsub.s32 %v7422, %v7424
        %v7426 = vrot.slane %v7412, %v7425
        %v7427 = vcombine.low %v7402, %v7410
        %v7428 = vcombine.high %v7402, %v7410
        %v7430 = vunpack.c.l.s4 1934713408
        %v7431 = vunpack.c.0.s8 %v7430
        %v7432 = vlaneseq
        %v7433 = vshrl.u32 %v7432, 7
        %v7434 = vsub.s32 %v7431, %v7433
        %v7435 = vrot.slane %v7427, %v7434
        %v7437 = vunpack.c.l.s4 1934713408
        %v7438 = vunpack.c.0.s8 %v7437
        %v7439 = vlaneseq
        %v7440 = vshrl.u32 %v7439, 7
        %v7441 = vsub.s32 %v7438, %v7440
        %v7442 = vrot.slane %v7428, %v7441
        %v7443 = vcombine.low %v7419, %v7435
        %v7444 = vcombine.high %v7419, %v7435
        %v7445 = vcombine.low %v7426, %v7442
        %v7446 = vcombine.high %v7426, %v7442
        %v7447 = vcombine.low %v7079, %v7086
        %v7449 = vunpack.c.l.s4 1983009808
        %v7450 = vunpack.c.0.s8 %v7449
        %v7451 = vlaneseq
        %v7452 = vshrl.u32 %v7451, 7
        %v7453 = vsub.s32 %v7450, %v7452
        %v7454 = vrot.slane %v7447, %v7453
        %v7455 = vcombine.low %v7103, %v7104
        %v7457 = vunpack.c.l.s4 1983009808
        %v7458 = vunpack.c.0.s8 %v7457
        %v7459 = vlaneseq
        %v7460 = vshrl.u32 %v7459, 7
        %v7461 = vsub.s32 %v7458, %v7460
        %v7462 = vrot.slane %v7455, %v7461
        %v7463 = vcombine.low %v7095, %v7102
        %v7465 = vunpack.c.l.s4 1983009808
        %v7466 = vunpack.c.0.s8 %v7465
        %v7467 = vlaneseq
        %v7468 = vshrl.u32 %v7467, 7
        %v7469 = vsub.s32 %v7466, %v7468
        %v7470 = vrot.slane %v7463, %v7469
        %v7471 = vcombine.low %v7105, %v7106
        %v7473 = vunpack.c.l.s4 1983009808
        %v7474 = vunpack.c.0.s8 %v7473
        %v7475 = vlaneseq
        %v7476 = vshrl.u32 %v7475, 7
        %v7477 = vsub.s32 %v7474, %v7476
        %v7478 = vrot.slane %v7471, %v7477
        %v7479 = vcombine.low %v7454, %v7462
        %v7480 = vcombine.high %v7454, %v7462
        %v7482 = vunpack.c.l.s4 1934713408
        %v7483 = vunpack.c.0.s8 %v7482
        %v7484 = vlaneseq
        %v7485 = vshrl.u32 %v7484, 7
        %v7486 = vsub.s32 %v7483, %v7485
        %v7487 = vrot.slane %v7479, %v7486
        %v7489 = vunpack.c.l.s4 1934713408
        %v7490 = vunpack.c.0.s8 %v7489
        %v7491 = vlaneseq
        %v7492 = vshrl.u32 %v7491, 7
        %v7493 = vsub.s32 %v7490, %v7492
        %v7494 = vrot.slane %v7480, %v7493
        %v7495 = vcombine.low %v7470, %v7478
        %v7496 = vcombine.high %v7470, %v7478
        %v7498 = vunpack.c.l.s4 1934713408
        %v7499 = vunpack.c.0.s8 %v7498
        %v7500 = vlaneseq
        %v7501 = vshrl.u32 %v7500, 7
        %v7502 = vsub.s32 %v7499, %v7501
        %v7503 = vrot.slane %v7495, %v7502
        %v7505 = vunpack.c.l.s4 1934713408
        %v7506 = vunpack.c.0.s8 %v7505
        %v7507 = vlaneseq
        %v7508 = vshrl.u32 %v7507, 7
        %v7509 = vsub.s32 %v7506, %v7508
        %v7510 = vrot.slane %v7496, %v7509
        %v7511 = vcombine.low %v7487, %v7503
        %v7512 = vcombine.high %v7487, %v7503
        %v7513 = vcombine.low %v7494, %v7510
        %v7514 = vcombine.high %v7494, %v7510
        %v7515 = vcombine.low %v7147, %v7154
        %v7517 = vunpack.c.l.s4 1983009808
        %v7518 = vunpack.c.0.s8 %v7517
        %v7519 = vlaneseq
        %v7520 = vshrl.u32 %v7519, 7
        %v7521 = vsub.s32 %v7518, %v7520
        %v7522 = vrot.slane %v7515, %v7521
        %v7523 = vcombine.low %v7171, %v7172
        %v7525 = vunpack.c.l.s4 1983009808
        %v7526 = vunpack.c.0.s8 %v7525
        %v7527 = vlaneseq
        %v7528 = vshrl.u32 %v7527, 7
        %v7529 = vsub.s32 %v7526, %v7528
        %v7530 = vrot.slane %v7523, %v7529
        %v7531 = vcombine.low %v7163, %v7170
        %v7533 = vunpack.c.l.s4 1983009808
        %v7534 = vunpack.c.0.s8 %v7533
        %v7535 = vlaneseq
        %v7536 = vshrl.u32 %v7535, 7
        %v7537 = vsub.s32 %v7534, %v7536
        %v7538 = vrot.slane %v7531, %v7537
        %v7539 = vcombine.low %v7173, %v7174
        %v7541 = vunpack.c.l.s4 1983009808
        %v7542 = vunpack.c.0.s8 %v7541
        %v7543 = vlaneseq
        %v7544 = vshrl.u32 %v7543, 7
        %v7545 = vsub.s32 %v7542, %v7544
        %v7546 = vrot.slane %v7539, %v7545
        %v7547 = vcombine.low %v7522, %v7530
        %v7548 = vcombine.high %v7522, %v7530
        %v7550 = vunpack.c.l.s4 1934713408
        %v7551 = vunpack.c.0.s8 %v7550
        %v7552 = vlaneseq
        %v7553 = vshrl.u32 %v7552, 7
        %v7554 = vsub.s32 %v7551, %v7553
        %v7555 = vrot.slane %v7547, %v7554
        %v7557 = vunpack.c.l.s4 1934713408
        %v7558 = vunpack.c.0.s8 %v7557
        %v7559 = vlaneseq
        %v7560 = vshrl.u32 %v7559, 7
        %v7561 = vsub.s32 %v7558, %v7560
        %v7562 = vrot.slane %v7548, %v7561
        %v7563 = vcombine.low %v7538, %v7546
        %v7564 = vcombine.high %v7538, %v7546
        %v7566 = vunpack.c.l.s4 1934713408
        %v7567 = vunpack.c.0.s8 %v7566
        %v7568 = vlaneseq
        %v7569 = vshrl.u32 %v7568, 7
        %v7570 = vsub.s32 %v7567, %v7569
        %v7571 = vrot.slane %v7563, %v7570
        %v7573 = vunpack.c.l.s4 1934713408
        %v7574 = vunpack.c.0.s8 %v7573
        %v7575 = vlaneseq
        %v7576 = vshrl.u32 %v7575, 7
        %v7577 = vsub.s32 %v7574, %v7576
        %v7578 = vrot.slane %v7564, %v7577
        %v7579 = vcombine.low %v7555, %v7571
        %v7580 = vcombine.high %v7555, %v7571
        %v7581 = vcombine.low %v7562, %v7578
        %v7582 = vcombine.high %v7562, %v7578
        %v7583 = vcombine.low %v7215, %v7222
        %v7585 = vunpack.c.l.s4 1983009808
        %v7586 = vunpack.c.0.s8 %v7585
        %v7587 = vlaneseq
        %v7588 = vshrl.u32 %v7587, 7
        %v7589 = vsub.s32 %v7586, %v7588
        %v7590 = vrot.slane %v7583, %v7589
        %v7591 = vcombine.low %v7239, %v7240
        %v7593 = vunpack.c.l.s4 1983009808
        %v7594 = vunpack.c.0.s8 %v7593
        %v7595 = vlaneseq
        %v7596 = vshrl.u32 %v7595, 7
        %v7597 = vsub.s32 %v7594, %v7596
        %v7598 = vrot.slane %v7591, %v7597
        %v7599 = vcombine.low %v7231, %v7238
        %v7601 = vunpack.c.l.s4 1983009808
        %v7602 = vunpack.c.0.s8 %v7601
        %v7603 = vlaneseq
        %v7604 = vshrl.u32 %v7603, 7
        %v7605 = vsub.s32 %v7602, %v7604
        %v7606 = vrot.slane %v7599, %v7605
        %v7607 = vcombine.low %v7241, %v7242
        %v7609 = vunpack.c.l.s4 1983009808
        %v7610 = vunpack.c.0.s8 %v7609
        %v7611 = vlaneseq
        %v7612 = vshrl.u32 %v7611, 7
        %v7613 = vsub.s32 %v7610, %v7612
        %v7614 = vrot.slane %v7607, %v7613
        %v7615 = vcombine.low %v7590, %v7598
        %v7616 = vcombine.high %v7590, %v7598
        %v7618 = vunpack.c.l.s4 1934713408
        %v7619 = vunpack.c.0.s8 %v7618
        %v7620 = vlaneseq
        %v7621 = vshrl.u32 %v7620, 7
        %v7622 = vsub.s32 %v7619, %v7621
        %v7623 = vrot.slane %v7615, %v7622
        %v7625 = vunpack.c.l.s4 1934713408
        %v7626 = vunpack.c.0.s8 %v7625
        %v7627 = vlaneseq
        %v7628 = vshrl.u32 %v7627, 7
        %v7629 = vsub.s32 %v7626, %v7628
        %v7630 = vrot.slane %v7616, %v7629
        %v7631 = vcombine.low %v7606, %v7614
        %v7632 = vcombine.high %v7606, %v7614
        %v7634 = vunpack.c.l.s4 1934713408
        %v7635 = vunpack.c.0.s8 %v7634
        %v7636 = vlaneseq
        %v7637 = vshrl.u32 %v7636, 7
        %v7638 = vsub.s32 %v7635, %v7637
        %v7639 = vrot.slane %v7631, %v7638
        %v7641 = vunpack.c.l.s4 1934713408
        %v7642 = vunpack.c.0.s8 %v7641
        %v7643 = vlaneseq
        %v7644 = vshrl.u32 %v7643, 7
        %v7645 = vsub.s32 %v7642, %v7644
        %v7646 = vrot.slane %v7632, %v7645
        %v7647 = vcombine.low %v7623, %v7639
        %v7648 = vcombine.high %v7623, %v7639
        %v7649 = vcombine.low %v7630, %v7646
        %v7650 = vcombine.high %v7630, %v7646
        %v7651 = vcombine.low %v7283, %v7290
        %v7653 = vunpack.c.l.s4 1983009808
        %v7654 = vunpack.c.0.s8 %v7653
        %v7655 = vlaneseq
        %v7656 = vshrl.u32 %v7655, 7
        %v7657 = vsub.s32 %v7654, %v7656
        %v7658 = vrot.slane %v7651, %v7657
        %v7659 = vcombine.low %v7307, %v7308
        %v7661 = vunpack.c.l.s4 1983009808
        %v7662 = vunpack.c.0.s8 %v7661
        %v7663 = vlaneseq
        %v7664 = vshrl.u32 %v7663, 7
        %v7665 = vsub.s32 %v7662, %v7664
        %v7666 = vrot.slane %v7659, %v7665
        %v7667 = vcombine.low %v7299, %v7306
        %v7669 = vunpack.c.l.s4 1983009808
        %v7670 = vunpack.c.0.s8 %v7669
        %v7671 = vlaneseq
        %v7672 = vshrl.u32 %v7671, 7
        %v7673 = vsub.s32 %v7670, %v7672
        %v7674 = vrot.slane %v7667, %v7673
        %v7675 = vcombine.low %v7309, %v7310
        %v7677 = vunpack.c.l.s4 1983009808
        %v7678 = vunpack.c.0.s8 %v7677
        %v7679 = vlaneseq
        %v7680 = vshrl.u32 %v7679, 7
        %v7681 = vsub.s32 %v7678, %v7680
        %v7682 = vrot.slane %v7675, %v7681
        %v7683 = vcombine.low %v7658, %v7666
        %v7684 = vcombine.high %v7658, %v7666
        %v7686 = vunpack.c.l.s4 1934713408
        %v7687 = vunpack.c.0.s8 %v7686
        %v7688 = vlaneseq
        %v7689 = vshrl.u32 %v7688, 7
        %v7690 = vsub.s32 %v7687, %v7689
        %v7691 = vrot.slane %v7683, %v7690
        %v7693 = vunpack.c.l.s4 1934713408
        %v7694 = vunpack.c.0.s8 %v7693
        %v7695 = vlaneseq
        %v7696 = vshrl.u32 %v7695, 7
        %v7697 = vsub.s32 %v7694, %v7696
        %v7698 = vrot.slane %v7684, %v7697
        %v7699 = vcombine.low %v7674, %v7682
        %v7700 = vcombine.high %v7674, %v7682
        %v7702 = vunpack.c.l.s4 1934713408
        %v7703 = vunpack.c.0.s8 %v7702
        %v7704 = vlaneseq
        %v7705 = vshrl.u32 %v7704, 7
        %v7706 = vsub.s32 %v7703, %v7705
        %v7707 = vrot.slane %v7699, %v7706
        %v7709 = vunpack.c.l.s4 1934713408
        %v7710 = vunpack.c.0.s8 %v7709
        %v7711 = vlaneseq
        %v7712 = vshrl.u32 %v7711, 7
        %v7713 = vsub.s32 %v7710, %v7712
        %v7714 = vrot.slane %v7700, %v7713
        %v7715 = vcombine.low %v7691, %v7707
        %v7716 = vcombine.high %v7691, %v7707
        %v7717 = vcombine.low %v7698, %v7714
        %v7718 = vcombine.high %v7698, %v7714
        %v7719 = vpack.c.bf16 %v7443, %v7375
        %v7720 = vpack.c.bf16 %v7511, %v7511
        %v7721 = vpack.c.bf16 %v7444, %v7376
        %v7722 = vpack.c.bf16 %v7512, %v7512
        %v7723 = vpack.c.bf16 %v7445, %v7377
        %v7724 = vpack.c.bf16 %v7513, %v7513
        %v7725 = vpack.c.bf16 %v7446, %v7378
        %v7726 = vpack.c.bf16 %v7514, %v7514
        %v7727 = vpack.c.bf16 %v7647, %v7579
        %v7728 = vpack.c.bf16 %v7715, %v7715
        %v7729 = vpack.c.bf16 %v7648, %v7580
        %v7730 = vpack.c.bf16 %v7716, %v7716
        %v7731 = vpack.c.bf16 %v7649, %v7581
        %v7732 = vpack.c.bf16 %v7717, %v7717
        %v7733 = vpack.c.bf16 %v7650, %v7582
        %v7734 = vpack.c.bf16 %v7718, %v7718
        %v7736 = vsel %vm3335, %v5943, 0
        %v7739 = vsel %vm3335, %v6827, 0
        %v7742 = vsel %vm3335, %v6828, 0
        %7744 = vmatprep.subr.bf16.mxu0 0
        %7745 = vmatpush1.bf16.xpose.msra.mxu0 %v7739
        %7746 = vmatprep.subr.bf16.mxu0 0
        %7747 = vmatpush1.bf16.xpose.msra.mxu0 %v7742
        %7748 = vmatprep.subr.bf16.mxu0 0
        %7749 = vmatpush1.bf16.xpose.msra.mxu0 0
        %7750 = vmatprep.subr.bf16.mxu0 0
        %7751 = vmatpush1.bf16.xpose.msra.mxu0 0
        %7752 = vmatprep.subr.bf16.mxu0 0
        %7753 = vmatpush1.bf16.xpose.msra.mxu0 0
        %7754 = vmatprep.subr.bf16.mxu0 0
        %7755 = vmatpush1.bf16.xpose.msra.mxu0 0
        %7756 = vmatprep.subr.bf16.mxu0 0
        %7757 = vmatpush1.bf16.xpose.msra.mxu0 0
        %7758 = vmatprep.subr.bf16.mxu0 0
        %7759 = vmatpush1.bf16.xpose.msra.mxu0 0
        %7760 = vmatprep.subr.bf16.mxu0 0
        %7761 = vmatpush1.bf16.xpose.msra.mxu0 0
        %7762 = vmatprep.subr.bf16.mxu0 0
        %7763 = vmatpush1.bf16.xpose.msra.mxu0 0
        %7764 = vmatprep.subr.bf16.mxu0 0
        %7765 = vmatpush1.bf16.xpose.msra.mxu0 0
        %7766 = vmatprep.subr.bf16.mxu0 0
        %7767 = vmatpush1.bf16.xpose.msra.mxu0 0
        %7768 = vmatprep.subr.bf16.mxu0 0
        %7769 = vmatpush1.bf16.xpose.msra.mxu0 0
        %7770 = vmatprep.subr.bf16.mxu0 0
        %7771 = vmatpush1.bf16.xpose.msra.mxu0 0
        %7772 = vmatprep.subr.bf16.mxu0 0
        %7773 = vmatpush1.bf16.xpose.msra.mxu0 0
        %7774 = vmatprep.subr.bf16.mxu0 0
        %7775 = vmatpush1.bf16.xpose.msra.mxu0 0
        %7776 = vmatprep.mubr.bf16.mxu0 0
        %7777 = vmatmul.mubr.bf16.gmra.mrb[0].mxu0 %v7736
        %v7778 = vpop.f32.mrb[0].mxu0
        %v7779 = vadd.f32 %v1276, %v7778
        %v7780 = vpop.f32.mrb[0].mxu0
        %v7781 = vpop.f32.mrb[0].mxu0
        %v7782 = vadd.f32 %v1277, %v7781
        %v7783 = vpop.f32.mrb[0].mxu0
        %7784 = vdwg.mxu0
        %v7786 = vsel %vm3335, %v5944, 0
        %v7789 = vsel %vm3335, %v6829, 0
        %v7792 = vsel %vm3335, %v6830, 0
        %7794 = vmatprep.subr.bf16.mxu0 0
        %7795 = vmatpush1.bf16.xpose.msra.mxu0 %v7789
        %7796 = vmatprep.subr.bf16.mxu0 0
        %7797 = vmatpush1.bf16.xpose.msra.mxu0 %v7792
        %7798 = vmatprep.subr.bf16.mxu0 0
        %7799 = vmatpush1.bf16.xpose.msra.mxu0 0
        %7800 = vmatprep.subr.bf16.mxu0 0
        %7801 = vmatpush1.bf16.xpose.msra.mxu0 0
        %7802 = vmatprep.subr.bf16.mxu0 0
        %7803 = vmatpush1.bf16.xpose.msra.mxu0 0
        %7804 = vmatprep.subr.bf16.mxu0 0
        %7805 = vmatpush1.bf16.xpose.msra.mxu0 0
        %7806 = vmatprep.subr.bf16.mxu0 0
        %7807 = vmatpush1.bf16.xpose.msra.mxu0 0
        %7808 = vmatprep.subr.bf16.mxu0 0
        %7809 = vmatpush1.bf16.xpose.msra.mxu0 0
        %7810 = vmatprep.subr.bf16.mxu0 0
        %7811 = vmatpush1.bf16.xpose.msra.mxu0 0
        %7812 = vmatprep.subr.bf16.mxu0 0
        %7813 = vmatpush1.bf16.xpose.msra.mxu0 0
        %7814 = vmatprep.subr.bf16.mxu0 0
        %7815 = vmatpush1.bf16.xpose.msra.mxu0 0
        %7816 = vmatprep.subr.bf16.mxu0 0
        %7817 = vmatpush1.bf16.xpose.msra.mxu0 0
        %7818 = vmatprep.subr.bf16.mxu0 0
        %7819 = vmatpush1.bf16.xpose.msra.mxu0 0
        %7820 = vmatprep.subr.bf16.mxu0 0
        %7821 = vmatpush1.bf16.xpose.msra.mxu0 0
        %7822 = vmatprep.subr.bf16.mxu0 0
        %7823 = vmatpush1.bf16.xpose.msra.mxu0 0
        %7824 = vmatprep.subr.bf16.mxu0 0
        %7825 = vmatpush1.bf16.xpose.msra.mxu0 0
        %7826 = vmatprep.mubr.bf16.mxu0 0
        %7827 = vmatmul.mubr.bf16.gmra.mrb[0].mxu0 %v7786
        %v7828 = vpop.f32.mrb[0].mxu0
        %v7829 = vadd.f32 %v1276, %v7828
        %v7830 = vpop.f32.mrb[0].mxu0
        %v7831 = vpop.f32.mrb[0].mxu0
        %v7832 = vadd.f32 %v1277, %v7831
        %v7833 = vpop.f32.mrb[0].mxu0
        %7834 = vdwg.mxu0
        %v7836 = vsel %vm3335, %v5945, 0
        %v7839 = vsel %vm3335, %v6831, 0
        %v7842 = vsel %vm3335, %v6832, 0
        %7844 = vmatprep.subr.bf16.mxu0 0
        %7845 = vmatpush1.bf16.xpose.msra.mxu0 %v7839
        %7846 = vmatprep.subr.bf16.mxu0 0
        %7847 = vmatpush1.bf16.xpose.msra.mxu0 %v7842
        %7848 = vmatprep.subr.bf16.mxu0 0
        %7849 = vmatpush1.bf16.xpose.msra.mxu0 0
        %7850 = vmatprep.subr.bf16.mxu0 0
        %7851 = vmatpush1.bf16.xpose.msra.mxu0 0
        %7852 = vmatprep.subr.bf16.mxu0 0
        %7853 = vmatpush1.bf16.xpose.msra.mxu0 0
        %7854 = vmatprep.subr.bf16.mxu0 0
        %7855 = vmatpush1.bf16.xpose.msra.mxu0 0
        %7856 = vmatprep.subr.bf16.mxu0 0
        %7857 = vmatpush1.bf16.xpose.msra.mxu0 0
        %7858 = vmatprep.subr.bf16.mxu0 0
        %7859 = vmatpush1.bf16.xpose.msra.mxu0 0
        %7860 = vmatprep.subr.bf16.mxu0 0
        %7861 = vmatpush1.bf16.xpose.msra.mxu0 0
        %7862 = vmatprep.subr.bf16.mxu0 0
        %7863 = vmatpush1.bf16.xpose.msra.mxu0 0
        %7864 = vmatprep.subr.bf16.mxu0 0
        %7865 = vmatpush1.bf16.xpose.msra.mxu0 0
        %7866 = vmatprep.subr.bf16.mxu0 0
        %7867 = vmatpush1.bf16.xpose.msra.mxu0 0
        %7868 = vmatprep.subr.bf16.mxu0 0
        %7869 = vmatpush1.bf16.xpose.msra.mxu0 0
        %7870 = vmatprep.subr.bf16.mxu0 0
        %7871 = vmatpush1.bf16.xpose.msra.mxu0 0
        %7872 = vmatprep.subr.bf16.mxu0 0
        %7873 = vmatpush1.bf16.xpose.msra.mxu0 0
        %7874 = vmatprep.subr.bf16.mxu0 0
        %7875 = vmatpush1.bf16.xpose.msra.mxu0 0
        %7876 = vmatprep.mubr.bf16.mxu0 0
        %7877 = vmatmul.mubr.bf16.gmra.mrb[0].mxu0 %v7836
        %v7878 = vpop.f32.mrb[0].mxu0
        %v7879 = vadd.f32 %v1276, %v7878
        %v7880 = vpop.f32.mrb[0].mxu0
        %v7881 = vpop.f32.mrb[0].mxu0
        %v7882 = vadd.f32 %v1277, %v7881
        %v7883 = vpop.f32.mrb[0].mxu0
        %7884 = vdwg.mxu0
        %v7886 = vsel %vm3335, %v5946, 0
        %v7889 = vsel %vm3335, %v6833, 0
        %v7892 = vsel %vm3335, %v6834, 0
        %7894 = vmatprep.subr.bf16.mxu0 0
        %7895 = vmatpush1.bf16.xpose.msra.mxu0 %v7889
        %7896 = vmatprep.subr.bf16.mxu0 0
        %7897 = vmatpush1.bf16.xpose.msra.mxu0 %v7892
        %7898 = vmatprep.subr.bf16.mxu0 0
        %7899 = vmatpush1.bf16.xpose.msra.mxu0 0
        %7900 = vmatprep.subr.bf16.mxu0 0
        %7901 = vmatpush1.bf16.xpose.msra.mxu0 0
        %7902 = vmatprep.subr.bf16.mxu0 0
        %7903 = vmatpush1.bf16.xpose.msra.mxu0 0
        %7904 = vmatprep.subr.bf16.mxu0 0
        %7905 = vmatpush1.bf16.xpose.msra.mxu0 0
        %7906 = vmatprep.subr.bf16.mxu0 0
        %7907 = vmatpush1.bf16.xpose.msra.mxu0 0
        %7908 = vmatprep.subr.bf16.mxu0 0
        %7909 = vmatpush1.bf16.xpose.msra.mxu0 0
        %7910 = vmatprep.subr.bf16.mxu0 0
        %7911 = vmatpush1.bf16.xpose.msra.mxu0 0
        %7912 = vmatprep.subr.bf16.mxu0 0
        %7913 = vmatpush1.bf16.xpose.msra.mxu0 0
        %7914 = vmatprep.subr.bf16.mxu0 0
        %7915 = vmatpush1.bf16.xpose.msra.mxu0 0
        %7916 = vmatprep.subr.bf16.mxu0 0
        %7917 = vmatpush1.bf16.xpose.msra.mxu0 0
        %7918 = vmatprep.subr.bf16.mxu0 0
        %7919 = vmatpush1.bf16.xpose.msra.mxu0 0
        %7920 = vmatprep.subr.bf16.mxu0 0
        %7921 = vmatpush1.bf16.xpose.msra.mxu0 0
        %7922 = vmatprep.subr.bf16.mxu0 0
        %7923 = vmatpush1.bf16.xpose.msra.mxu0 0
        %7924 = vmatprep.subr.bf16.mxu0 0
        %7925 = vmatpush1.bf16.xpose.msra.mxu0 0
        %7926 = vmatprep.mubr.bf16.mxu0 0
        %7927 = vmatmul.mubr.bf16.gmra.mrb[0].mxu0 %v7886
        %v7928 = vpop.f32.mrb[0].mxu0
        %v7929 = vadd.f32 %v1276, %v7928
        %v7930 = vpop.f32.mrb[0].mxu0
        %v7931 = vpop.f32.mrb[0].mxu0
        %v7932 = vadd.f32 %v1277, %v7931
        %v7933 = vpop.f32.mrb[0].mxu0
        %7934 = vdwg.mxu0
        %v7936 = vsel %vm3335, %v5947, 0
        %v7939 = vsel %vm3335, %v6835, 0
        %v7942 = vsel %vm3335, %v6836, 0
        %7944 = vmatprep.subr.bf16.mxu0 0
        %7945 = vmatpush1.bf16.xpose.msra.mxu0 %v7939
        %7946 = vmatprep.subr.bf16.mxu0 0
        %7947 = vmatpush1.bf16.xpose.msra.mxu0 %v7942
        %7948 = vmatprep.subr.bf16.mxu0 0
        %7949 = vmatpush1.bf16.xpose.msra.mxu0 0
        %7950 = vmatprep.subr.bf16.mxu0 0
        %7951 = vmatpush1.bf16.xpose.msra.mxu0 0
        %7952 = vmatprep.subr.bf16.mxu0 0
        %7953 = vmatpush1.bf16.xpose.msra.mxu0 0
        %7954 = vmatprep.subr.bf16.mxu0 0
        %7955 = vmatpush1.bf16.xpose.msra.mxu0 0
        %7956 = vmatprep.subr.bf16.mxu0 0
        %7957 = vmatpush1.bf16.xpose.msra.mxu0 0
        %7958 = vmatprep.subr.bf16.mxu0 0
        %7959 = vmatpush1.bf16.xpose.msra.mxu0 0
        %7960 = vmatprep.subr.bf16.mxu0 0
        %7961 = vmatpush1.bf16.xpose.msra.mxu0 0
        %7962 = vmatprep.subr.bf16.mxu0 0
        %7963 = vmatpush1.bf16.xpose.msra.mxu0 0
        %7964 = vmatprep.subr.bf16.mxu0 0
        %7965 = vmatpush1.bf16.xpose.msra.mxu0 0
        %7966 = vmatprep.subr.bf16.mxu0 0
        %7967 = vmatpush1.bf16.xpose.msra.mxu0 0
        %7968 = vmatprep.subr.bf16.mxu0 0
        %7969 = vmatpush1.bf16.xpose.msra.mxu0 0
        %7970 = vmatprep.subr.bf16.mxu0 0
        %7971 = vmatpush1.bf16.xpose.msra.mxu0 0
        %7972 = vmatprep.subr.bf16.mxu0 0
        %7973 = vmatpush1.bf16.xpose.msra.mxu0 0
        %7974 = vmatprep.subr.bf16.mxu0 0
        %7975 = vmatpush1.bf16.xpose.msra.mxu0 0
        %7976 = vmatprep.mubr.bf16.mxu0 0
        %7977 = vmatmul.mubr.bf16.gmra.mrb[0].mxu0 %v7936
        %v7978 = vpop.f32.mrb[0].mxu0
        %v7979 = vadd.f32 %v1276, %v7978
        %v7980 = vpop.f32.mrb[0].mxu0
        %v7981 = vpop.f32.mrb[0].mxu0
        %v7982 = vadd.f32 %v1277, %v7981
        %v7983 = vpop.f32.mrb[0].mxu0
        %7984 = vdwg.mxu0
        %v7986 = vsel %vm3335, %v5948, 0
        %v7989 = vsel %vm3335, %v6837, 0
        %v7992 = vsel %vm3335, %v6838, 0
        %7994 = vmatprep.subr.bf16.mxu0 0
        %7995 = vmatpush1.bf16.xpose.msra.mxu0 %v7989
        %7996 = vmatprep.subr.bf16.mxu0 0
        %7997 = vmatpush1.bf16.xpose.msra.mxu0 %v7992
        %7998 = vmatprep.subr.bf16.mxu0 0
        %7999 = vmatpush1.bf16.xpose.msra.mxu0 0
        %8000 = vmatprep.subr.bf16.mxu0 0
        %8001 = vmatpush1.bf16.xpose.msra.mxu0 0
        %8002 = vmatprep.subr.bf16.mxu0 0
        %8003 = vmatpush1.bf16.xpose.msra.mxu0 0
        %8004 = vmatprep.subr.bf16.mxu0 0
        %8005 = vmatpush1.bf16.xpose.msra.mxu0 0
        %8006 = vmatprep.subr.bf16.mxu0 0
        %8007 = vmatpush1.bf16.xpose.msra.mxu0 0
        %8008 = vmatprep.subr.bf16.mxu0 0
        %8009 = vmatpush1.bf16.xpose.msra.mxu0 0
        %8010 = vmatprep.subr.bf16.mxu0 0
        %8011 = vmatpush1.bf16.xpose.msra.mxu0 0
        %8012 = vmatprep.subr.bf16.mxu0 0
        %8013 = vmatpush1.bf16.xpose.msra.mxu0 0
        %8014 = vmatprep.subr.bf16.mxu0 0
        %8015 = vmatpush1.bf16.xpose.msra.mxu0 0
        %8016 = vmatprep.subr.bf16.mxu0 0
        %8017 = vmatpush1.bf16.xpose.msra.mxu0 0
        %8018 = vmatprep.subr.bf16.mxu0 0
        %8019 = vmatpush1.bf16.xpose.msra.mxu0 0
        %8020 = vmatprep.subr.bf16.mxu0 0
        %8021 = vmatpush1.bf16.xpose.msra.mxu0 0
        %8022 = vmatprep.subr.bf16.mxu0 0
        %8023 = vmatpush1.bf16.xpose.msra.mxu0 0
        %8024 = vmatprep.subr.bf16.mxu0 0
        %8025 = vmatpush1.bf16.xpose.msra.mxu0 0
        %8026 = vmatprep.mubr.bf16.mxu0 0
        %8027 = vmatmul.mubr.bf16.gmra.mrb[0].mxu0 %v7986
        %v8028 = vpop.f32.mrb[0].mxu0
        %v8029 = vadd.f32 %v1276, %v8028
        %v8030 = vpop.f32.mrb[0].mxu0
        %v8031 = vpop.f32.mrb[0].mxu0
        %v8032 = vadd.f32 %v1277, %v8031
        %v8033 = vpop.f32.mrb[0].mxu0
        %8034 = vdwg.mxu0
        %v8036 = vsel %vm3335, %v5949, 0
        %v8039 = vsel %vm3335, %v6839, 0
        %v8042 = vsel %vm3335, %v6840, 0
        %8044 = vmatprep.subr.bf16.mxu0 0
        %8045 = vmatpush1.bf16.xpose.msra.mxu0 %v8039
        %8046 = vmatprep.subr.bf16.mxu0 0
        %8047 = vmatpush1.bf16.xpose.msra.mxu0 %v8042
        %8048 = vmatprep.subr.bf16.mxu0 0
        %8049 = vmatpush1.bf16.xpose.msra.mxu0 0
        %8050 = vmatprep.subr.bf16.mxu0 0
        %8051 = vmatpush1.bf16.xpose.msra.mxu0 0
        %8052 = vmatprep.subr.bf16.mxu0 0
        %8053 = vmatpush1.bf16.xpose.msra.mxu0 0
        %8054 = vmatprep.subr.bf16.mxu0 0
        %8055 = vmatpush1.bf16.xpose.msra.mxu0 0
        %8056 = vmatprep.subr.bf16.mxu0 0
        %8057 = vmatpush1.bf16.xpose.msra.mxu0 0
        %8058 = vmatprep.subr.bf16.mxu0 0
        %8059 = vmatpush1.bf16.xpose.msra.mxu0 0
        %8060 = vmatprep.subr.bf16.mxu0 0
        %8061 = vmatpush1.bf16.xpose.msra.mxu0 0
        %8062 = vmatprep.subr.bf16.mxu0 0
        %8063 = vmatpush1.bf16.xpose.msra.mxu0 0
        %8064 = vmatprep.subr.bf16.mxu0 0
        %8065 = vmatpush1.bf16.xpose.msra.mxu0 0
        %8066 = vmatprep.subr.bf16.mxu0 0
        %8067 = vmatpush1.bf16.xpose.msra.mxu0 0
        %8068 = vmatprep.subr.bf16.mxu0 0
        %8069 = vmatpush1.bf16.xpose.msra.mxu0 0
        %8070 = vmatprep.subr.bf16.mxu0 0
        %8071 = vmatpush1.bf16.xpose.msra.mxu0 0
        %8072 = vmatprep.subr.bf16.mxu0 0
        %8073 = vmatpush1.bf16.xpose.msra.mxu0 0
        %8074 = vmatprep.subr.bf16.mxu0 0
        %8075 = vmatpush1.bf16.xpose.msra.mxu0 0
        %8076 = vmatprep.mubr.bf16.mxu0 0
        %8077 = vmatmul.mubr.bf16.gmra.mrb[0].mxu0 %v8036
        %v8078 = vpop.f32.mrb[0].mxu0
        %v8079 = vadd.f32 %v1276, %v8078
        %v8080 = vpop.f32.mrb[0].mxu0
        %v8081 = vpop.f32.mrb[0].mxu0
        %v8082 = vadd.f32 %v1277, %v8081
        %v8083 = vpop.f32.mrb[0].mxu0
        %8084 = vdwg.mxu0
        %v8086 = vsel %vm3335, %v5950, 0
        %v8089 = vsel %vm3335, %v6841, 0
        %v8092 = vsel %vm3335, %v6842, 0
        %8094 = vmatprep.subr.bf16.mxu0 0
        %8095 = vmatpush1.bf16.xpose.msra.mxu0 %v8089
        %8096 = vmatprep.subr.bf16.mxu0 0
        %8097 = vmatpush1.bf16.xpose.msra.mxu0 %v8092
        %8098 = vmatprep.subr.bf16.mxu0 0
        %8099 = vmatpush1.bf16.xpose.msra.mxu0 0
        %8100 = vmatprep.subr.bf16.mxu0 0
        %8101 = vmatpush1.bf16.xpose.msra.mxu0 0
        %8102 = vmatprep.subr.bf16.mxu0 0
        %8103 = vmatpush1.bf16.xpose.msra.mxu0 0
        %8104 = vmatprep.subr.bf16.mxu0 0
        %8105 = vmatpush1.bf16.xpose.msra.mxu0 0
        %8106 = vmatprep.subr.bf16.mxu0 0
        %8107 = vmatpush1.bf16.xpose.msra.mxu0 0
        %8108 = vmatprep.subr.bf16.mxu0 0
        %8109 = vmatpush1.bf16.xpose.msra.mxu0 0
        %8110 = vmatprep.subr.bf16.mxu0 0
        %8111 = vmatpush1.bf16.xpose.msra.mxu0 0
        %8112 = vmatprep.subr.bf16.mxu0 0
        %8113 = vmatpush1.bf16.xpose.msra.mxu0 0
        %8114 = vmatprep.subr.bf16.mxu0 0
        %8115 = vmatpush1.bf16.xpose.msra.mxu0 0
        %8116 = vmatprep.subr.bf16.mxu0 0
        %8117 = vmatpush1.bf16.xpose.msra.mxu0 0
        %8118 = vmatprep.subr.bf16.mxu0 0
        %8119 = vmatpush1.bf16.xpose.msra.mxu0 0
        %8120 = vmatprep.subr.bf16.mxu0 0
        %8121 = vmatpush1.bf16.xpose.msra.mxu0 0
        %8122 = vmatprep.subr.bf16.mxu0 0
        %8123 = vmatpush1.bf16.xpose.msra.mxu0 0
        %8124 = vmatprep.subr.bf16.mxu0 0
        %8125 = vmatpush1.bf16.xpose.msra.mxu0 0
        %8126 = vmatprep.mubr.bf16.mxu0 0
        %8127 = vmatmul.mubr.bf16.gmra.mrb[0].mxu0 %v8086
        %v8128 = vpop.f32.mrb[0].mxu0
        %v8129 = vadd.f32 %v1276, %v8128
        %v8130 = vpop.f32.mrb[0].mxu0
        %v8131 = vpop.f32.mrb[0].mxu0
        %v8132 = vadd.f32 %v1277, %v8131
        %v8133 = vpop.f32.mrb[0].mxu0
        %8134 = vdwg.mxu0
        %vm8135 = vcmask 195584
        %v8136 = vsel %vm8135, %v7779, -inf
        %8137 = vmax.xlane.f32.xlu0 %v8136
        %v8138 = vpop.xlane.xlu0 %8137
        %v8139 = vsel %vm8135, %v7782, -inf
        %8140 = vmax.xlane.f32.xlu0 %v8139
        %v8141 = vpop.xlane.xlu0 %8140
        %v8142 = vsel %vm8135, %v7829, -inf
        %8143 = vmax.xlane.f32.xlu0 %v8142
        %v8144 = vpop.xlane.xlu0 %8143
        %v8145 = vsel %vm8135, %v7832, -inf
        %8146 = vmax.xlane.f32.xlu0 %v8145
        %v8147 = vpop.xlane.xlu0 %8146
        %v8148 = vsel %vm8135, %v7879, -inf
        %8149 = vmax.xlane.f32.xlu0 %v8148
        %v8150 = vpop.xlane.xlu0 %8149
        %v8151 = vsel %vm8135, %v7882, -inf
        %8152 = vmax.xlane.f32.xlu0 %v8151
        %v8153 = vpop.xlane.xlu0 %8152
        %v8154 = vsel %vm8135, %v7929, -inf
        %8155 = vmax.xlane.f32.xlu0 %v8154
        %v8156 = vpop.xlane.xlu0 %8155
        %v8157 = vsel %vm8135, %v7932, -inf
        %8158 = vmax.xlane.f32.xlu0 %v8157
        %v8159 = vpop.xlane.xlu0 %8158
        %v8160 = vsel %vm8135, %v7979, -inf
        %8161 = vmax.xlane.f32.xlu0 %v8160
        %v8162 = vpop.xlane.xlu0 %8161
        %v8163 = vsel %vm8135, %v7982, -inf
        %8164 = vmax.xlane.f32.xlu0 %v8163
        %v8165 = vpop.xlane.xlu0 %8164
        %v8166 = vsel %vm8135, %v8029, -inf
        %8167 = vmax.xlane.f32.xlu0 %v8166
        %v8168 = vpop.xlane.xlu0 %8167
        %v8169 = vsel %vm8135, %v8032, -inf
        %8170 = vmax.xlane.f32.xlu0 %v8169
        %v8171 = vpop.xlane.xlu0 %8170
        %v8172 = vsel %vm8135, %v8079, -inf
        %8173 = vmax.xlane.f32.xlu0 %v8172
        %v8174 = vpop.xlane.xlu0 %8173
        %v8175 = vsel %vm8135, %v8082, -inf
        %8176 = vmax.xlane.f32.xlu0 %v8175
        %v8177 = vpop.xlane.xlu0 %8176
        %v8178 = vsel %vm8135, %v8129, -inf
        %8179 = vmax.xlane.f32.xlu0 %v8178
        %v8180 = vpop.xlane.xlu0 %8179
        %v8181 = vsel %vm8135, %v8132, -inf
        %8182 = vmax.xlane.f32.xlu0 %v8181
        %v8183 = vpop.xlane.xlu0 %8182
        %v8184 = vsub.f32 %v7779, %v8138
        %v8185 = vsub.f32 %v7782, %v8141
        %v8186 = vsub.f32 %v7829, %v8144
        %v8187 = vsub.f32 %v7832, %v8147
        %v8188 = vsub.f32 %v7879, %v8150
        %v8189 = vsub.f32 %v7882, %v8153
        %v8190 = vsub.f32 %v7929, %v8156
        %v8191 = vsub.f32 %v7932, %v8159
        %v8192 = vsub.f32 %v7979, %v8162
        %v8193 = vsub.f32 %v7982, %v8165
        %v8194 = vsub.f32 %v8029, %v8168
        %v8195 = vsub.f32 %v8032, %v8171
        %v8196 = vsub.f32 %v8079, %v8174
        %v8197 = vsub.f32 %v8082, %v8177
        %v8198 = vsub.f32 %v8129, %v8180
        %v8199 = vsub.f32 %v8132, %v8183
        %v8200 = vmul.f32 %v8184, 1.442695
        %v8201 = vpow.pop %v8200
        %v8202 = vmul.f32 %v8185, 1.442695
        %v8203 = vpow.pop %v8202
        %v8204 = vmul.f32 %v8186, 1.442695
        %v8205 = vpow.pop %v8204
        %v8206 = vmul.f32 %v8187, 1.442695
        %v8207 = vpow.pop %v8206
        %v8208 = vmul.f32 %v8188, 1.442695
        %v8209 = vpow.pop %v8208
        %v8210 = vmul.f32 %v8189, 1.442695
        %v8211 = vpow.pop %v8210
        %v8212 = vmul.f32 %v8190, 1.442695
        %v8213 = vpow.pop %v8212
        %v8214 = vmul.f32 %v8191, 1.442695
        %v8215 = vpow.pop %v8214
        %v8216 = vmul.f32 %v8192, 1.442695
        %v8217 = vpow.pop %v8216
        %v8218 = vmul.f32 %v8193, 1.442695
        %v8219 = vpow.pop %v8218
        %v8220 = vmul.f32 %v8194, 1.442695
        %v8221 = vpow.pop %v8220
        %v8222 = vmul.f32 %v8195, 1.442695
        %v8223 = vpow.pop %v8222
        %v8224 = vmul.f32 %v8196, 1.442695
        %v8225 = vpow.pop %v8224
        %v8226 = vmul.f32 %v8197, 1.442695
        %v8227 = vpow.pop %v8226
        %v8228 = vmul.f32 %v8198, 1.442695
        %v8229 = vpow.pop %v8228
        %v8230 = vmul.f32 %v8199, 1.442695
        %v8231 = vpow.pop %v8230
        %v8232 = vsel %vm8135, %v8201, 0.0
        %8233 = vadd.xlane.f32.xlu0 %v8232
        %v8234 = vpop.xlane.xlu0 %8233
        %v8235 = vsel %vm8135, %v8203, 0.0
        %8236 = vadd.xlane.f32.xlu0 %v8235
        %v8237 = vpop.xlane.xlu0 %8236
        %v8238 = vsel %vm8135, %v8205, 0.0
        %8239 = vadd.xlane.f32.xlu0 %v8238
        %v8240 = vpop.xlane.xlu0 %8239
        %v8241 = vsel %vm8135, %v8207, 0.0
        %8242 = vadd.xlane.f32.xlu0 %v8241
        %v8243 = vpop.xlane.xlu0 %8242
        %v8244 = vsel %vm8135, %v8209, 0.0
        %8245 = vadd.xlane.f32.xlu0 %v8244
        %v8246 = vpop.xlane.xlu0 %8245
        %v8247 = vsel %vm8135, %v8211, 0.0
        %8248 = vadd.xlane.f32.xlu0 %v8247
        %v8249 = vpop.xlane.xlu0 %8248
        %v8250 = vsel %vm8135, %v8213, 0.0
        %8251 = vadd.xlane.f32.xlu0 %v8250
        %v8252 = vpop.xlane.xlu0 %8251
        %v8253 = vsel %vm8135, %v8215, 0.0
        %8254 = vadd.xlane.f32.xlu0 %v8253
        %v8255 = vpop.xlane.xlu0 %8254
        %v8256 = vsel %vm8135, %v8217, 0.0
        %8257 = vadd.xlane.f32.xlu0 %v8256
        %v8258 = vpop.xlane.xlu0 %8257
        %v8259 = vsel %vm8135, %v8219, 0.0
        %8260 = vadd.xlane.f32.xlu0 %v8259
        %v8261 = vpop.xlane.xlu0 %8260
        %v8262 = vsel %vm8135, %v8221, 0.0
        %8263 = vadd.xlane.f32.xlu0 %v8262
        %v8264 = vpop.xlane.xlu0 %8263
        %v8265 = vsel %vm8135, %v8223, 0.0
        %8266 = vadd.xlane.f32.xlu0 %v8265
        %v8267 = vpop.xlane.xlu0 %8266
        %v8268 = vsel %vm8135, %v8225, 0.0
        %8269 = vadd.xlane.f32.xlu0 %v8268
        %v8270 = vpop.xlane.xlu0 %8269
        %v8271 = vsel %vm8135, %v8227, 0.0
        %8272 = vadd.xlane.f32.xlu0 %v8271
        %v8273 = vpop.xlane.xlu0 %8272
        %v8274 = vsel %vm8135, %v8229, 0.0
        %8275 = vadd.xlane.f32.xlu0 %v8274
        %v8276 = vpop.xlane.xlu0 %8275
        %v8277 = vsel %vm8135, %v8231, 0.0
        %8278 = vadd.xlane.f32.xlu0 %v8277
        %v8279 = vpop.xlane.xlu0 %8278
        %v8280 = vrcp.pop %v8234
        %v8281 = vrcp.pop %v8237
        %v8282 = vrcp.pop %v8240
        %v8283 = vrcp.pop %v8243
        %v8284 = vrcp.pop %v8246
        %v8285 = vrcp.pop %v8249
        %v8286 = vrcp.pop %v8252
        %v8287 = vrcp.pop %v8255
        %v8288 = vrcp.pop %v8258
        %v8289 = vrcp.pop %v8261
        %v8290 = vrcp.pop %v8264
        %v8291 = vrcp.pop %v8267
        %v8292 = vrcp.pop %v8270
        %v8293 = vrcp.pop %v8273
        %v8294 = vrcp.pop %v8276
        %v8295 = vrcp.pop %v8279
        %v8296 = vmul.f32 %v8201, %v8280
        %v8297 = vmul.f32 %v8203, %v8281
        %v8298 = vmul.f32 %v8205, %v8282
        %v8299 = vmul.f32 %v8207, %v8283
        %v8300 = vmul.f32 %v8209, %v8284
        %v8301 = vmul.f32 %v8211, %v8285
        %v8302 = vmul.f32 %v8213, %v8286
        %v8303 = vmul.f32 %v8215, %v8287
        %v8304 = vmul.f32 %v8217, %v8288
        %v8305 = vmul.f32 %v8219, %v8289
        %v8306 = vmul.f32 %v8221, %v8290
        %v8307 = vmul.f32 %v8223, %v8291
        %v8308 = vmul.f32 %v8225, %v8292
        %v8309 = vmul.f32 %v8227, %v8293
        %v8310 = vmul.f32 %v8229, %v8294
        %v8311 = vmul.f32 %v8231, %v8295
        %v8312 = vpack.c.bf16 %v8297, %v8296
        %v8313 = vpack.c.bf16 %v8299, %v8298
        %v8314 = vpack.c.bf16 %v8301, %v8300
        %v8315 = vpack.c.bf16 %v8303, %v8302
        %v8316 = vpack.c.bf16 %v8305, %v8304
        %v8317 = vpack.c.bf16 %v8307, %v8306
        %v8318 = vpack.c.bf16 %v8309, %v8308
        %v8319 = vpack.c.bf16 %v8311, %v8310
        %v8321 = vsel %vm8135, %v8312, 0
        %vm8323 = vcmask 1043456
        %v8325 = vsel %vm8323, %v7720, 0
        %8327 = vmatprep.subr.bf16.mxu0 0
        %8328 = vmatpush1.bf16.msra.mxu0 %v7719
        %8329 = vmatprep.subr.bf16.mxu0 0
        %8330 = vmatpush1.bf16.msra.mxu0 %v8325
        %8331 = vmatprep.subr.bf16.mxu0 0
        %8332 = vmatpush1.bf16.msra.mxu0 0
        %8333 = vmatprep.subr.bf16.mxu0 0
        %8334 = vmatpush1.bf16.msra.mxu0 0
        %8335 = vmatprep.subr.bf16.mxu0 0
        %8336 = vmatpush1.bf16.msra.mxu0 0
        %8337 = vmatprep.subr.bf16.mxu0 0
        %8338 = vmatpush1.bf16.msra.mxu0 0
        %8339 = vmatprep.subr.bf16.mxu0 0
        %8340 = vmatpush1.bf16.msra.mxu0 0
        %8341 = vmatprep.subr.bf16.mxu0 0
        %8342 = vmatpush1.bf16.msra.mxu0 0
        %8343 = vmatprep.subr.bf16.mxu0 0
        %8344 = vmatpush1.bf16.msra.mxu0 0
        %8345 = vmatprep.subr.bf16.mxu0 0
        %8346 = vmatpush1.bf16.msra.mxu0 0
        %8347 = vmatprep.subr.bf16.mxu0 0
        %8348 = vmatpush1.bf16.msra.mxu0 0
        %8349 = vmatprep.subr.bf16.mxu0 0
        %8350 = vmatpush1.bf16.msra.mxu0 0
        %8351 = vmatprep.subr.bf16.mxu0 0
        %8352 = vmatpush1.bf16.msra.mxu0 0
        %8353 = vmatprep.subr.bf16.mxu0 0
        %8354 = vmatpush1.bf16.msra.mxu0 0
        %8355 = vmatprep.subr.bf16.mxu0 0
        %8356 = vmatpush1.bf16.msra.mxu0 0
        %8357 = vmatprep.subr.bf16.mxu0 0
        %8358 = vmatpush1.bf16.msra.mxu0 0
        %8359 = vmatprep.mubr.bf16.mxu0 0
        %8360 = vmatmul.mubr.bf16.gmra.mrb[0].mxu0 %v8321
        %v8361 = vpop.f32.mrb[0].mxu0
        %v8362 = vadd.f32 0.0, %v8361
        %v8363 = vpop.f32.mrb[0].mxu0
        %v8364 = vpop.f32.mrb[0].mxu0
        %v8365 = vadd.f32 0.0, %v8364
        %v8366 = vpop.f32.mrb[0].mxu0
        %8367 = vdwg.mxu0
        %v8369 = vsel %vm8135, %v8313, 0
        %v8372 = vsel %vm8323, %v7722, 0
        %8374 = vmatprep.subr.bf16.mxu0 0
        %8375 = vmatpush1.bf16.msra.mxu0 %v7721
        %8376 = vmatprep.subr.bf16.mxu0 0
        %8377 = vmatpush1.bf16.msra.mxu0 %v8372
        %8378 = vmatprep.subr.bf16.mxu0 0
        %8379 = vmatpush1.bf16.msra.mxu0 0
        %8380 = vmatprep.subr.bf16.mxu0 0
        %8381 = vmatpush1.bf16.msra.mxu0 0
        %8382 = vmatprep.subr.bf16.mxu0 0
        %8383 = vmatpush1.bf16.msra.mxu0 0
        %8384 = vmatprep.subr.bf16.mxu0 0
        %8385 = vmatpush1.bf16.msra.mxu0 0
        %8386 = vmatprep.subr.bf16.mxu0 0
        %8387 = vmatpush1.bf16.msra.mxu0 0
        %8388 = vmatprep.subr.bf16.mxu0 0
        %8389 = vmatpush1.bf16.msra.mxu0 0
        %8390 = vmatprep.subr.bf16.mxu0 0
        %8391 = vmatpush1.bf16.msra.mxu0 0
        %8392 = vmatprep.subr.bf16.mxu0 0
        %8393 = vmatpush1.bf16.msra.mxu0 0
        %8394 = vmatprep.subr.bf16.mxu0 0
        %8395 = vmatpush1.bf16.msra.mxu0 0
        %8396 = vmatprep.subr.bf16.mxu0 0
        %8397 = vmatpush1.bf16.msra.mxu0 0
        %8398 = vmatprep.subr.bf16.mxu0 0
        %8399 = vmatpush1.bf16.msra.mxu0 0
        %8400 = vmatprep.subr.bf16.mxu0 0
        %8401 = vmatpush1.bf16.msra.mxu0 0
        %8402 = vmatprep.subr.bf16.mxu0 0
        %8403 = vmatpush1.bf16.msra.mxu0 0
        %8404 = vmatprep.subr.bf16.mxu0 0
        %8405 = vmatpush1.bf16.msra.mxu0 0
        %8406 = vmatprep.mubr.bf16.mxu0 0
        %8407 = vmatmul.mubr.bf16.gmra.mrb[0].mxu0 %v8369
        %v8408 = vpop.f32.mrb[0].mxu0
        %v8409 = vadd.f32 0.0, %v8408
        %v8410 = vpop.f32.mrb[0].mxu0
        %v8411 = vpop.f32.mrb[0].mxu0
        %v8412 = vadd.f32 0.0, %v8411
        %v8413 = vpop.f32.mrb[0].mxu0
        %8414 = vdwg.mxu0
        %v8416 = vsel %vm8135, %v8314, 0
        %v8419 = vsel %vm8323, %v7724, 0
        %8421 = vmatprep.subr.bf16.mxu0 0
        %8422 = vmatpush1.bf16.msra.mxu0 %v7723
        %8423 = vmatprep.subr.bf16.mxu0 0
        %8424 = vmatpush1.bf16.msra.mxu0 %v8419
        %8425 = vmatprep.subr.bf16.mxu0 0
        %8426 = vmatpush1.bf16.msra.mxu0 0
        %8427 = vmatprep.subr.bf16.mxu0 0
        %8428 = vmatpush1.bf16.msra.mxu0 0
        %8429 = vmatprep.subr.bf16.mxu0 0
        %8430 = vmatpush1.bf16.msra.mxu0 0
        %8431 = vmatprep.subr.bf16.mxu0 0
        %8432 = vmatpush1.bf16.msra.mxu0 0
        %8433 = vmatprep.subr.bf16.mxu0 0
        %8434 = vmatpush1.bf16.msra.mxu0 0
        %8435 = vmatprep.subr.bf16.mxu0 0
        %8436 = vmatpush1.bf16.msra.mxu0 0
        %8437 = vmatprep.subr.bf16.mxu0 0
        %8438 = vmatpush1.bf16.msra.mxu0 0
        %8439 = vmatprep.subr.bf16.mxu0 0
        %8440 = vmatpush1.bf16.msra.mxu0 0
        %8441 = vmatprep.subr.bf16.mxu0 0
        %8442 = vmatpush1.bf16.msra.mxu0 0
        %8443 = vmatprep.subr.bf16.mxu0 0
        %8444 = vmatpush1.bf16.msra.mxu0 0
        %8445 = vmatprep.subr.bf16.mxu0 0
        %8446 = vmatpush1.bf16.msra.mxu0 0
        %8447 = vmatprep.subr.bf16.mxu0 0
        %8448 = vmatpush1.bf16.msra.mxu0 0
        %8449 = vmatprep.subr.bf16.mxu0 0
        %8450 = vmatpush1.bf16.msra.mxu0 0
        %8451 = vmatprep.subr.bf16.mxu0 0
        %8452 = vmatpush1.bf16.msra.mxu0 0
        %8453 = vmatprep.mubr.bf16.mxu0 0
        %8454 = vmatmul.mubr.bf16.gmra.mrb[0].mxu0 %v8416
        %v8455 = vpop.f32.mrb[0].mxu0
        %v8456 = vadd.f32 0.0, %v8455
        %v8457 = vpop.f32.mrb[0].mxu0
        %v8458 = vpop.f32.mrb[0].mxu0
        %v8459 = vadd.f32 0.0, %v8458
        %v8460 = vpop.f32.mrb[0].mxu0
        %8461 = vdwg.mxu0
        %v8463 = vsel %vm8135, %v8315, 0
        %v8466 = vsel %vm8323, %v7726, 0
        %8468 = vmatprep.subr.bf16.mxu0 0
        %8469 = vmatpush1.bf16.msra.mxu0 %v7725
        %8470 = vmatprep.subr.bf16.mxu0 0
        %8471 = vmatpush1.bf16.msra.mxu0 %v8466
        %8472 = vmatprep.subr.bf16.mxu0 0
        %8473 = vmatpush1.bf16.msra.mxu0 0
        %8474 = vmatprep.subr.bf16.mxu0 0
        %8475 = vmatpush1.bf16.msra.mxu0 0
        %8476 = vmatprep.subr.bf16.mxu0 0
        %8477 = vmatpush1.bf16.msra.mxu0 0
        %8478 = vmatprep.subr.bf16.mxu0 0
        %8479 = vmatpush1.bf16.msra.mxu0 0
        %8480 = vmatprep.subr.bf16.mxu0 0
        %8481 = vmatpush1.bf16.msra.mxu0 0
        %8482 = vmatprep.subr.bf16.mxu0 0
        %8483 = vmatpush1.bf16.msra.mxu0 0
        %8484 = vmatprep.subr.bf16.mxu0 0
        %8485 = vmatpush1.bf16.msra.mxu0 0
        %8486 = vmatprep.subr.bf16.mxu0 0
        %8487 = vmatpush1.bf16.msra.mxu0 0
        %8488 = vmatprep.subr.bf16.mxu0 0
        %8489 = vmatpush1.bf16.msra.mxu0 0
        %8490 = vmatprep.subr.bf16.mxu0 0
        %8491 = vmatpush1.bf16.msra.mxu0 0
        %8492 = vmatprep.subr.bf16.mxu0 0
        %8493 = vmatpush1.bf16.msra.mxu0 0
        %8494 = vmatprep.subr.bf16.mxu0 0
        %8495 = vmatpush1.bf16.msra.mxu0 0
        %8496 = vmatprep.subr.bf16.mxu0 0
        %8497 = vmatpush1.bf16.msra.mxu0 0
        %8498 = vmatprep.subr.bf16.mxu0 0
        %8499 = vmatpush1.bf16.msra.mxu0 0
        %8500 = vmatprep.mubr.bf16.mxu0 0
        %8501 = vmatmul.mubr.bf16.gmra.mrb[0].mxu0 %v8463
        %v8502 = vpop.f32.mrb[0].mxu0
        %v8503 = vadd.f32 0.0, %v8502
        %v8504 = vpop.f32.mrb[0].mxu0
        %v8505 = vpop.f32.mrb[0].mxu0
        %v8506 = vadd.f32 0.0, %v8505
        %v8507 = vpop.f32.mrb[0].mxu0
        %8508 = vdwg.mxu0
        %v8510 = vsel %vm8135, %v8316, 0
        %v8513 = vsel %vm8323, %v7728, 0
        %8515 = vmatprep.subr.bf16.mxu0 0
        %8516 = vmatpush1.bf16.msra.mxu0 %v7727
        %8517 = vmatprep.subr.bf16.mxu0 0
        %8518 = vmatpush1.bf16.msra.mxu0 %v8513
        %8519 = vmatprep.subr.bf16.mxu0 0
        %8520 = vmatpush1.bf16.msra.mxu0 0
        %8521 = vmatprep.subr.bf16.mxu0 0
        %8522 = vmatpush1.bf16.msra.mxu0 0
        %8523 = vmatprep.subr.bf16.mxu0 0
        %8524 = vmatpush1.bf16.msra.mxu0 0
        %8525 = vmatprep.subr.bf16.mxu0 0
        %8526 = vmatpush1.bf16.msra.mxu0 0
        %8527 = vmatprep.subr.bf16.mxu0 0
        %8528 = vmatpush1.bf16.msra.mxu0 0
        %8529 = vmatprep.subr.bf16.mxu0 0
        %8530 = vmatpush1.bf16.msra.mxu0 0
        %8531 = vmatprep.subr.bf16.mxu0 0
        %8532 = vmatpush1.bf16.msra.mxu0 0
        %8533 = vmatprep.subr.bf16.mxu0 0
        %8534 = vmatpush1.bf16.msra.mxu0 0
        %8535 = vmatprep.subr.bf16.mxu0 0
        %8536 = vmatpush1.bf16.msra.mxu0 0
        %8537 = vmatprep.subr.bf16.mxu0 0
        %8538 = vmatpush1.bf16.msra.mxu0 0
        %8539 = vmatprep.subr.bf16.mxu0 0
        %8540 = vmatpush1.bf16.msra.mxu0 0
        %8541 = vmatprep.subr.bf16.mxu0 0
        %8542 = vmatpush1.bf16.msra.mxu0 0
        %8543 = vmatprep.subr.bf16.mxu0 0
        %8544 = vmatpush1.bf16.msra.mxu0 0
        %8545 = vmatprep.subr.bf16.mxu0 0
        %8546 = vmatpush1.bf16.msra.mxu0 0
        %8547 = vmatprep.mubr.bf16.mxu0 0
        %8548 = vmatmul.mubr.bf16.gmra.mrb[0].mxu0 %v8510
        %v8549 = vpop.f32.mrb[0].mxu0
        %v8550 = vadd.f32 0.0, %v8549
        %v8551 = vpop.f32.mrb[0].mxu0
        %v8552 = vpop.f32.mrb[0].mxu0
        %v8553 = vadd.f32 0.0, %v8552
        %v8554 = vpop.f32.mrb[0].mxu0
        %8555 = vdwg.mxu0
        %v8557 = vsel %vm8135, %v8317, 0
        %v8560 = vsel %vm8323, %v7730, 0
        %8562 = vmatprep.subr.bf16.mxu0 0
        %8563 = vmatpush1.bf16.msra.mxu0 %v7729
        %8564 = vmatprep.subr.bf16.mxu0 0
        %8565 = vmatpush1.bf16.msra.mxu0 %v8560
        %8566 = vmatprep.subr.bf16.mxu0 0
        %8567 = vmatpush1.bf16.msra.mxu0 0
        %8568 = vmatprep.subr.bf16.mxu0 0
        %8569 = vmatpush1.bf16.msra.mxu0 0
        %8570 = vmatprep.subr.bf16.mxu0 0
        %8571 = vmatpush1.bf16.msra.mxu0 0
        %8572 = vmatprep.subr.bf16.mxu0 0
        %8573 = vmatpush1.bf16.msra.mxu0 0
        %8574 = vmatprep.subr.bf16.mxu0 0
        %8575 = vmatpush1.bf16.msra.mxu0 0
        %8576 = vmatprep.subr.bf16.mxu0 0
        %8577 = vmatpush1.bf16.msra.mxu0 0
        %8578 = vmatprep.subr.bf16.mxu0 0
        %8579 = vmatpush1.bf16.msra.mxu0 0
        %8580 = vmatprep.subr.bf16.mxu0 0
        %8581 = vmatpush1.bf16.msra.mxu0 0
        %8582 = vmatprep.subr.bf16.mxu0 0
        %8583 = vmatpush1.bf16.msra.mxu0 0
        %8584 = vmatprep.subr.bf16.mxu0 0
        %8585 = vmatpush1.bf16.msra.mxu0 0
        %8586 = vmatprep.subr.bf16.mxu0 0
        %8587 = vmatpush1.bf16.msra.mxu0 0
        %8588 = vmatprep.subr.bf16.mxu0 0
        %8589 = vmatpush1.bf16.msra.mxu0 0
        %8590 = vmatprep.subr.bf16.mxu0 0
        %8591 = vmatpush1.bf16.msra.mxu0 0
        %8592 = vmatprep.subr.bf16.mxu0 0
        %8593 = vmatpush1.bf16.msra.mxu0 0
        %8594 = vmatprep.mubr.bf16.mxu0 0
        %8595 = vmatmul.mubr.bf16.gmra.mrb[0].mxu0 %v8557
        %v8596 = vpop.f32.mrb[0].mxu0
        %v8597 = vadd.f32 0.0, %v8596
        %v8598 = vpop.f32.mrb[0].mxu0
        %v8599 = vpop.f32.mrb[0].mxu0
        %v8600 = vadd.f32 0.0, %v8599
        %v8601 = vpop.f32.mrb[0].mxu0
        %8602 = vdwg.mxu0
        %v8604 = vsel %vm8135, %v8318, 0
        %v8607 = vsel %vm8323, %v7732, 0
        %8609 = vmatprep.subr.bf16.mxu0 0
        %8610 = vmatpush1.bf16.msra.mxu0 %v7731
        %8611 = vmatprep.subr.bf16.mxu0 0
        %8612 = vmatpush1.bf16.msra.mxu0 %v8607
        %8613 = vmatprep.subr.bf16.mxu0 0
        %8614 = vmatpush1.bf16.msra.mxu0 0
        %8615 = vmatprep.subr.bf16.mxu0 0
        %8616 = vmatpush1.bf16.msra.mxu0 0
        %8617 = vmatprep.subr.bf16.mxu0 0
        %8618 = vmatpush1.bf16.msra.mxu0 0
        %8619 = vmatprep.subr.bf16.mxu0 0
        %8620 = vmatpush1.bf16.msra.mxu0 0
        %8621 = vmatprep.subr.bf16.mxu0 0
        %8622 = vmatpush1.bf16.msra.mxu0 0
        %8623 = vmatprep.subr.bf16.mxu0 0
        %8624 = vmatpush1.bf16.msra.mxu0 0
        %8625 = vmatprep.subr.bf16.mxu0 0
        %8626 = vmatpush1.bf16.msra.mxu0 0
        %8627 = vmatprep.subr.bf16.mxu0 0
        %8628 = vmatpush1.bf16.msra.mxu0 0
        %8629 = vmatprep.subr.bf16.mxu0 0
        %8630 = vmatpush1.bf16.msra.mxu0 0
        %8631 = vmatprep.subr.bf16.mxu0 0
        %8632 = vmatpush1.bf16.msra.mxu0 0
        %8633 = vmatprep.subr.bf16.mxu0 0
        %8634 = vmatpush1.bf16.msra.mxu0 0
        %8635 = vmatprep.subr.bf16.mxu0 0
        %8636 = vmatpush1.bf16.msra.mxu0 0
        %8637 = vmatprep.subr.bf16.mxu0 0
        %8638 = vmatpush1.bf16.msra.mxu0 0
        %8639 = vmatprep.subr.bf16.mxu0 0
        %8640 = vmatpush1.bf16.msra.mxu0 0
        %8641 = vmatprep.mubr.bf16.mxu0 0
        %8642 = vmatmul.mubr.bf16.gmra.mrb[0].mxu0 %v8604
        %v8643 = vpop.f32.mrb[0].mxu0
        %v8644 = vadd.f32 0.0, %v8643
        %v8645 = vpop.f32.mrb[0].mxu0
        %v8646 = vpop.f32.mrb[0].mxu0
        %v8647 = vadd.f32 0.0, %v8646
        %v8648 = vpop.f32.mrb[0].mxu0
        %8649 = vdwg.mxu0
        %v8651 = vsel %vm8135, %v8319, 0
        %v8654 = vsel %vm8323, %v7734, 0
        %8656 = vmatprep.subr.bf16.mxu0 0
        %8657 = vmatpush1.bf16.msra.mxu0 %v7733
        %8658 = vmatprep.subr.bf16.mxu0 0
        %8659 = vmatpush1.bf16.msra.mxu0 %v8654
        %8660 = vmatprep.subr.bf16.mxu0 0
        %8661 = vmatpush1.bf16.msra.mxu0 0
        %8662 = vmatprep.subr.bf16.mxu0 0
        %8663 = vmatpush1.bf16.msra.mxu0 0
        %8664 = vmatprep.subr.bf16.mxu0 0
        %8665 = vmatpush1.bf16.msra.mxu0 0
        %8666 = vmatprep.subr.bf16.mxu0 0
        %8667 = vmatpush1.bf16.msra.mxu0 0
        %8668 = vmatprep.subr.bf16.mxu0 0
        %8669 = vmatpush1.bf16.msra.mxu0 0
        %8670 = vmatprep.subr.bf16.mxu0 0
        %8671 = vmatpush1.bf16.msra.mxu0 0
        %8672 = vmatprep.subr.bf16.mxu0 0
        %8673 = vmatpush1.bf16.msra.mxu0 0
        %8674 = vmatprep.subr.bf16.mxu0 0
        %8675 = vmatpush1.bf16.msra.mxu0 0
        %8676 = vmatprep.subr.bf16.mxu0 0
        %8677 = vmatpush1.bf16.msra.mxu0 0
        %8678 = vmatprep.subr.bf16.mxu0 0
        %8679 = vmatpush1.bf16.msra.mxu0 0
        %8680 = vmatprep.subr.bf16.mxu0 0
        %8681 = vmatpush1.bf16.msra.mxu0 0
        %8682 = vmatprep.subr.bf16.mxu0 0
        %8683 = vmatpush1.bf16.msra.mxu0 0
        %8684 = vmatprep.subr.bf16.mxu0 0
        %8685 = vmatpush1.bf16.msra.mxu0 0
        %8686 = vmatprep.subr.bf16.mxu0 0
        %8687 = vmatpush1.bf16.msra.mxu0 0
        %8688 = vmatprep.mubr.bf16.mxu0 0
        %8689 = vmatmul.mubr.bf16.gmra.mrb[0].mxu0 %v8651
        %v8690 = vpop.f32.mrb[0].mxu0
        %v8691 = vadd.f32 0.0, %v8690
        %v8692 = vpop.f32.mrb[0].mxu0
        %v8693 = vpop.f32.mrb[0].mxu0
        %v8694 = vadd.f32 0.0, %v8693
        %v8695 = vpop.f32.mrb[0].mxu0
        %8696 = vdwg.mxu0
        %v8697 = vcombine.low %v8362, %v8456
        %v8698 = vcombine.high %v8362, %v8456
        %v8700 = vunpack.c.l.s4 1983009808
        %v8701 = vunpack.c.0.s8 %v8700
        %v8702 = vlaneseq
        %v8703 = vshrl.u32 %v8702, 7
        %v8704 = vsub.s32 %v8701, %v8703
        %v8705 = vrot.slane %v8697, %v8704
        %v8707 = vunpack.c.l.s4 1983009808
        %v8708 = vunpack.c.0.s8 %v8707
        %v8709 = vlaneseq
        %v8710 = vshrl.u32 %v8709, 7
        %v8711 = vsub.s32 %v8708, %v8710
        %v8712 = vrot.slane %v8698, %v8711
        %v8713 = vcombine.low %v8409, %v8503
        %v8714 = vcombine.high %v8409, %v8503
        %v8716 = vunpack.c.l.s4 1983009808
        %v8717 = vunpack.c.0.s8 %v8716
        %v8718 = vlaneseq
        %v8719 = vshrl.u32 %v8718, 7
        %v8720 = vsub.s32 %v8717, %v8719
        %v8721 = vrot.slane %v8713, %v8720
        %v8723 = vunpack.c.l.s4 1983009808
        %v8724 = vunpack.c.0.s8 %v8723
        %v8725 = vlaneseq
        %v8726 = vshrl.u32 %v8725, 7
        %v8727 = vsub.s32 %v8724, %v8726
        %v8728 = vrot.slane %v8714, %v8727
        %v8729 = vcombine.low %v8705, %v8721
        %v8730 = vcombine.high %v8705, %v8721
        %v8732 = vunpack.c.l.s4 1934713408
        %v8733 = vunpack.c.0.s8 %v8732
        %v8734 = vlaneseq
        %v8735 = vshrl.u32 %v8734, 7
        %v8736 = vsub.s32 %v8733, %v8735
        %v8737 = vrot.slane %v8729, %v8736
        %v8739 = vunpack.c.l.s4 1934713408
        %v8740 = vunpack.c.0.s8 %v8739
        %v8741 = vlaneseq
        %v8742 = vshrl.u32 %v8741, 7
        %v8743 = vsub.s32 %v8740, %v8742
        %v8744 = vrot.slane %v8730, %v8743
        %v8745 = vcombine.low %v8712, %v8728
        %v8746 = vcombine.high %v8712, %v8728
        %v8748 = vunpack.c.l.s4 1934713408
        %v8749 = vunpack.c.0.s8 %v8748
        %v8750 = vlaneseq
        %v8751 = vshrl.u32 %v8750, 7
        %v8752 = vsub.s32 %v8749, %v8751
        %v8753 = vrot.slane %v8745, %v8752
        %v8755 = vunpack.c.l.s4 1934713408
        %v8756 = vunpack.c.0.s8 %v8755
        %v8757 = vlaneseq
        %v8758 = vshrl.u32 %v8757, 7
        %v8759 = vsub.s32 %v8756, %v8758
        %v8760 = vrot.slane %v8746, %v8759
        %v8761 = vcombine.high %v8737, 0.0
        %v8762 = vcombine.high %v8744, 0.0
        %v8763 = vcombine.high %v8753, 0.0
        %v8764 = vcombine.high %v8760, 0.0
        %v8765 = vcombine.low %v8365, %v8459
        %v8766 = vcombine.high %v8365, %v8459
        %v8768 = vunpack.c.l.s4 1983009808
        %v8769 = vunpack.c.0.s8 %v8768
        %v8770 = vlaneseq
        %v8771 = vshrl.u32 %v8770, 7
        %v8772 = vsub.s32 %v8769, %v8771
        %v8773 = vrot.slane %v8765, %v8772
        %v8775 = vunpack.c.l.s4 1983009808
        %v8776 = vunpack.c.0.s8 %v8775
        %v8777 = vlaneseq
        %v8778 = vshrl.u32 %v8777, 7
        %v8779 = vsub.s32 %v8776, %v8778
        %v8780 = vrot.slane %v8766, %v8779
        %v8781 = vcombine.low %v8412, %v8506
        %v8782 = vcombine.high %v8412, %v8506
        %v8784 = vunpack.c.l.s4 1983009808
        %v8785 = vunpack.c.0.s8 %v8784
        %v8786 = vlaneseq
        %v8787 = vshrl.u32 %v8786, 7
        %v8788 = vsub.s32 %v8785, %v8787
        %v8789 = vrot.slane %v8781, %v8788
        %v8791 = vunpack.c.l.s4 1983009808
        %v8792 = vunpack.c.0.s8 %v8791
        %v8793 = vlaneseq
        %v8794 = vshrl.u32 %v8793, 7
        %v8795 = vsub.s32 %v8792, %v8794
        %v8796 = vrot.slane %v8782, %v8795
        %v8797 = vcombine.low %v8773, %v8789
        %v8798 = vcombine.high %v8773, %v8789
        %v8800 = vunpack.c.l.s4 1934713408
        %v8801 = vunpack.c.0.s8 %v8800
        %v8802 = vlaneseq
        %v8803 = vshrl.u32 %v8802, 7
        %v8804 = vsub.s32 %v8801, %v8803
        %v8805 = vrot.slane %v8797, %v8804
        %v8807 = vunpack.c.l.s4 1934713408
        %v8808 = vunpack.c.0.s8 %v8807
        %v8809 = vlaneseq
        %v8810 = vshrl.u32 %v8809, 7
        %v8811 = vsub.s32 %v8808, %v8810
        %v8812 = vrot.slane %v8798, %v8811
        %v8813 = vcombine.low %v8780, %v8796
        %v8814 = vcombine.high %v8780, %v8796
        %v8816 = vunpack.c.l.s4 1934713408
        %v8817 = vunpack.c.0.s8 %v8816
        %v8818 = vlaneseq
        %v8819 = vshrl.u32 %v8818, 7
        %v8820 = vsub.s32 %v8817, %v8819
        %v8821 = vrot.slane %v8813, %v8820
        %v8823 = vunpack.c.l.s4 1934713408
        %v8824 = vunpack.c.0.s8 %v8823
        %v8825 = vlaneseq
        %v8826 = vshrl.u32 %v8825, 7
        %v8827 = vsub.s32 %v8824, %v8826
        %v8828 = vrot.slane %v8814, %v8827
        %v8829 = vcombine.high %v8805, 0.0
        %v8830 = vcombine.high %v8812, 0.0
        %v8831 = vcombine.high %v8821, 0.0
        %v8832 = vcombine.high %v8828, 0.0
        %v8833 = vcombine.low %v8550, %v8644
        %v8834 = vcombine.high %v8550, %v8644
        %v8836 = vunpack.c.l.s4 1983009808
        %v8837 = vunpack.c.0.s8 %v8836
        %v8838 = vlaneseq
        %v8839 = vshrl.u32 %v8838, 7
        %v8840 = vsub.s32 %v8837, %v8839
        %v8841 = vrot.slane %v8833, %v8840
        %v8843 = vunpack.c.l.s4 1983009808
        %v8844 = vunpack.c.0.s8 %v8843
        %v8845 = vlaneseq
        %v8846 = vshrl.u32 %v8845, 7
        %v8847 = vsub.s32 %v8844, %v8846
        %v8848 = vrot.slane %v8834, %v8847
        %v8849 = vcombine.low %v8597, %v8691
        %v8850 = vcombine.high %v8597, %v8691
        %v8852 = vunpack.c.l.s4 1983009808
        %v8853 = vunpack.c.0.s8 %v8852
        %v8854 = vlaneseq
        %v8855 = vshrl.u32 %v8854, 7
        %v8856 = vsub.s32 %v8853, %v8855
        %v8857 = vrot.slane %v8849, %v8856
        %v8859 = vunpack.c.l.s4 1983009808
        %v8860 = vunpack.c.0.s8 %v8859
        %v8861 = vlaneseq
        %v8862 = vshrl.u32 %v8861, 7
        %v8863 = vsub.s32 %v8860, %v8862
        %v8864 = vrot.slane %v8850, %v8863
        %v8865 = vcombine.low %v8841, %v8857
        %v8866 = vcombine.high %v8841, %v8857
        %v8868 = vunpack.c.l.s4 1934713408
        %v8869 = vunpack.c.0.s8 %v8868
        %v8870 = vlaneseq
        %v8871 = vshrl.u32 %v8870, 7
        %v8872 = vsub.s32 %v8869, %v8871
        %v8873 = vrot.slane %v8865, %v8872
        %v8875 = vunpack.c.l.s4 1934713408
        %v8876 = vunpack.c.0.s8 %v8875
        %v8877 = vlaneseq
        %v8878 = vshrl.u32 %v8877, 7
        %v8879 = vsub.s32 %v8876, %v8878
        %v8880 = vrot.slane %v8866, %v8879
        %v8881 = vcombine.low %v8848, %v8864
        %v8882 = vcombine.high %v8848, %v8864
        %v8884 = vunpack.c.l.s4 1934713408
        %v8885 = vunpack.c.0.s8 %v8884
        %v8886 = vlaneseq
        %v8887 = vshrl.u32 %v8886, 7
        %v8888 = vsub.s32 %v8885, %v8887
        %v8889 = vrot.slane %v8881, %v8888
        %v8891 = vunpack.c.l.s4 1934713408
        %v8892 = vunpack.c.0.s8 %v8891
        %v8893 = vlaneseq
        %v8894 = vshrl.u32 %v8893, 7
        %v8895 = vsub.s32 %v8892, %v8894
        %v8896 = vrot.slane %v8882, %v8895
        %v8897 = vcombine.high %v8873, 0.0
        %v8898 = vcombine.high %v8880, 0.0
        %v8899 = vcombine.high %v8889, 0.0
        %v8900 = vcombine.high %v8896, 0.0
        %v8901 = vcombine.low %v8553, %v8647
        %v8902 = vcombine.high %v8553, %v8647
        %v8904 = vunpack.c.l.s4 1983009808
        %v8905 = vunpack.c.0.s8 %v8904
        %v8906 = vlaneseq
        %v8907 = vshrl.u32 %v8906, 7
        %v8908 = vsub.s32 %v8905, %v8907
        %v8909 = vrot.slane %v8901, %v8908
        %v8911 = vunpack.c.l.s4 1983009808
        %v8912 = vunpack.c.0.s8 %v8911
        %v8913 = vlaneseq
        %v8914 = vshrl.u32 %v8913, 7
        %v8915 = vsub.s32 %v8912, %v8914
        %v8916 = vrot.slane %v8902, %v8915
        %v8917 = vcombine.low %v8600, %v8694
        %v8918 = vcombine.high %v8600, %v8694
        %v8920 = vunpack.c.l.s4 1983009808
        %v8921 = vunpack.c.0.s8 %v8920
        %v8922 = vlaneseq
        %v8923 = vshrl.u32 %v8922, 7
        %v8924 = vsub.s32 %v8921, %v8923
        %v8925 = vrot.slane %v8917, %v8924
        %v8927 = vunpack.c.l.s4 1983009808
        %v8928 = vunpack.c.0.s8 %v8927
        %v8929 = vlaneseq
        %v8930 = vshrl.u32 %v8929, 7
        %v8931 = vsub.s32 %v8928, %v8930
        %v8932 = vrot.slane %v8918, %v8931
        %v8933 = vcombine.low %v8909, %v8925
        %v8934 = vcombine.high %v8909, %v8925
        %v8936 = vunpack.c.l.s4 1934713408
        %v8937 = vunpack.c.0.s8 %v8936
        %v8938 = vlaneseq
        %v8939 = vshrl.u32 %v8938, 7
        %v8940 = vsub.s32 %v8937, %v8939
        %v8941 = vrot.slane %v8933, %v8940
        %v8943 = vunpack.c.l.s4 1934713408
        %v8944 = vunpack.c.0.s8 %v8943
        %v8945 = vlaneseq
        %v8946 = vshrl.u32 %v8945, 7
        %v8947 = vsub.s32 %v8944, %v8946
        %v8948 = vrot.slane %v8934, %v8947
        %v8949 = vcombine.low %v8916, %v8932
        %v8950 = vcombine.high %v8916, %v8932
        %v8952 = vunpack.c.l.s4 1934713408
        %v8953 = vunpack.c.0.s8 %v8952
        %v8954 = vlaneseq
        %v8955 = vshrl.u32 %v8954, 7
        %v8956 = vsub.s32 %v8953, %v8955
        %v8957 = vrot.slane %v8949, %v8956
        %v8959 = vunpack.c.l.s4 1934713408
        %v8960 = vunpack.c.0.s8 %v8959
        %v8961 = vlaneseq
        %v8962 = vshrl.u32 %v8961, 7
        %v8963 = vsub.s32 %v8960, %v8962
        %v8964 = vrot.slane %v8950, %v8963
        %v8965 = vcombine.high %v8941, 0.0
        %v8966 = vcombine.high %v8948, 0.0
        %v8967 = vcombine.high %v8957, 0.0
        %v8968 = vcombine.high %v8964, 0.0
        %v8969 = vcombine.low %v8737, %v8744
        %v8971 = vunpack.c.l.s4 1983009808
        %v8972 = vunpack.c.0.s8 %v8971
        %v8973 = vlaneseq
        %v8974 = vshrl.u32 %v8973, 7
        %v8975 = vsub.s32 %v8972, %v8974
        %v8976 = vrot.slane %v8969, %v8975
        %v8977 = vcombine.low %v8761, %v8762
        %v8979 = vunpack.c.l.s4 1983009808
        %v8980 = vunpack.c.0.s8 %v8979
        %v8981 = vlaneseq
        %v8982 = vshrl.u32 %v8981, 7
        %v8983 = vsub.s32 %v8980, %v8982
        %v8984 = vrot.slane %v8977, %v8983
        %v8985 = vcombine.low %v8753, %v8760
        %v8987 = vunpack.c.l.s4 1983009808
        %v8988 = vunpack.c.0.s8 %v8987
        %v8989 = vlaneseq
        %v8990 = vshrl.u32 %v8989, 7
        %v8991 = vsub.s32 %v8988, %v8990
        %v8992 = vrot.slane %v8985, %v8991
        %v8993 = vcombine.low %v8763, %v8764
        %v8995 = vunpack.c.l.s4 1983009808
        %v8996 = vunpack.c.0.s8 %v8995
        %v8997 = vlaneseq
        %v8998 = vshrl.u32 %v8997, 7
        %v8999 = vsub.s32 %v8996, %v8998
        %v9000 = vrot.slane %v8993, %v8999
        %v9001 = vcombine.low %v8976, %v8984
        %v9002 = vcombine.high %v8976, %v8984
        %v9004 = vunpack.c.l.s4 1934713408
        %v9005 = vunpack.c.0.s8 %v9004
        %v9006 = vlaneseq
        %v9007 = vshrl.u32 %v9006, 7
        %v9008 = vsub.s32 %v9005, %v9007
        %v9009 = vrot.slane %v9001, %v9008
        %v9011 = vunpack.c.l.s4 1934713408
        %v9012 = vunpack.c.0.s8 %v9011
        %v9013 = vlaneseq
        %v9014 = vshrl.u32 %v9013, 7
        %v9015 = vsub.s32 %v9012, %v9014
        %v9016 = vrot.slane %v9002, %v9015
        %v9017 = vcombine.low %v8992, %v9000
        %v9018 = vcombine.high %v8992, %v9000
        %v9020 = vunpack.c.l.s4 1934713408
        %v9021 = vunpack.c.0.s8 %v9020
        %v9022 = vlaneseq
        %v9023 = vshrl.u32 %v9022, 7
        %v9024 = vsub.s32 %v9021, %v9023
        %v9025 = vrot.slane %v9017, %v9024
        %v9027 = vunpack.c.l.s4 1934713408
        %v9028 = vunpack.c.0.s8 %v9027
        %v9029 = vlaneseq
        %v9030 = vshrl.u32 %v9029, 7
        %v9031 = vsub.s32 %v9028, %v9030
        %v9032 = vrot.slane %v9018, %v9031
        %v9033 = vcombine.low %v9009, %v9025
        %v9034 = vcombine.high %v9009, %v9025
        %v9035 = vcombine.low %v9016, %v9032
        %v9036 = vcombine.high %v9016, %v9032
        %v9037 = vcombine.low %v8805, %v8812
        %v9039 = vunpack.c.l.s4 1983009808
        %v9040 = vunpack.c.0.s8 %v9039
        %v9041 = vlaneseq
        %v9042 = vshrl.u32 %v9041, 7
        %v9043 = vsub.s32 %v9040, %v9042
        %v9044 = vrot.slane %v9037, %v9043
        %v9045 = vcombine.low %v8829, %v8830
        %v9047 = vunpack.c.l.s4 1983009808
        %v9048 = vunpack.c.0.s8 %v9047
        %v9049 = vlaneseq
        %v9050 = vshrl.u32 %v9049, 7
        %v9051 = vsub.s32 %v9048, %v9050
        %v9052 = vrot.slane %v9045, %v9051
        %v9053 = vcombine.low %v8821, %v8828
        %v9055 = vunpack.c.l.s4 1983009808
        %v9056 = vunpack.c.0.s8 %v9055
        %v9057 = vlaneseq
        %v9058 = vshrl.u32 %v9057, 7
        %v9059 = vsub.s32 %v9056, %v9058
        %v9060 = vrot.slane %v9053, %v9059
        %v9061 = vcombine.low %v8831, %v8832
        %v9063 = vunpack.c.l.s4 1983009808
        %v9064 = vunpack.c.0.s8 %v9063
        %v9065 = vlaneseq
        %v9066 = vshrl.u32 %v9065, 7
        %v9067 = vsub.s32 %v9064, %v9066
        %v9068 = vrot.slane %v9061, %v9067
        %v9069 = vcombine.low %v9044, %v9052
        %v9070 = vcombine.high %v9044, %v9052
        %v9072 = vunpack.c.l.s4 1934713408
        %v9073 = vunpack.c.0.s8 %v9072
        %v9074 = vlaneseq
        %v9075 = vshrl.u32 %v9074, 7
        %v9076 = vsub.s32 %v9073, %v9075
        %v9077 = vrot.slane %v9069, %v9076
        %v9079 = vunpack.c.l.s4 1934713408
        %v9080 = vunpack.c.0.s8 %v9079
        %v9081 = vlaneseq
        %v9082 = vshrl.u32 %v9081, 7
        %v9083 = vsub.s32 %v9080, %v9082
        %v9084 = vrot.slane %v9070, %v9083
        %v9085 = vcombine.low %v9060, %v9068
        %v9086 = vcombine.high %v9060, %v9068
        %v9088 = vunpack.c.l.s4 1934713408
        %v9089 = vunpack.c.0.s8 %v9088
        %v9090 = vlaneseq
        %v9091 = vshrl.u32 %v9090, 7
        %v9092 = vsub.s32 %v9089, %v9091
        %v9093 = vrot.slane %v9085, %v9092
        %v9095 = vunpack.c.l.s4 1934713408
        %v9096 = vunpack.c.0.s8 %v9095
        %v9097 = vlaneseq
        %v9098 = vshrl.u32 %v9097, 7
        %v9099 = vsub.s32 %v9096, %v9098
        %v9100 = vrot.slane %v9086, %v9099
        %v9101 = vcombine.low %v9077, %v9093
        %v9102 = vcombine.high %v9077, %v9093
        %v9103 = vcombine.low %v9084, %v9100
        %v9104 = vcombine.high %v9084, %v9100
        %v9105 = vcombine.low %v8873, %v8880
        %v9107 = vunpack.c.l.s4 1983009808
        %v9108 = vunpack.c.0.s8 %v9107
        %v9109 = vlaneseq
        %v9110 = vshrl.u32 %v9109, 7
        %v9111 = vsub.s32 %v9108, %v9110
        %v9112 = vrot.slane %v9105, %v9111
        %v9113 = vcombine.low %v8897, %v8898
        %v9115 = vunpack.c.l.s4 1983009808
        %v9116 = vunpack.c.0.s8 %v9115
        %v9117 = vlaneseq
        %v9118 = vshrl.u32 %v9117, 7
        %v9119 = vsub.s32 %v9116, %v9118
        %v9120 = vrot.slane %v9113, %v9119
        %v9121 = vcombine.low %v8889, %v8896
        %v9123 = vunpack.c.l.s4 1983009808
        %v9124 = vunpack.c.0.s8 %v9123
        %v9125 = vlaneseq
        %v9126 = vshrl.u32 %v9125, 7
        %v9127 = vsub.s32 %v9124, %v9126
        %v9128 = vrot.slane %v9121, %v9127
        %v9129 = vcombine.low %v8899, %v8900
        %v9131 = vunpack.c.l.s4 1983009808
        %v9132 = vunpack.c.0.s8 %v9131
        %v9133 = vlaneseq
        %v9134 = vshrl.u32 %v9133, 7
        %v9135 = vsub.s32 %v9132, %v9134
        %v9136 = vrot.slane %v9129, %v9135
        %v9137 = vcombine.low %v9112, %v9120
        %v9138 = vcombine.high %v9112, %v9120
        %v9140 = vunpack.c.l.s4 1934713408
        %v9141 = vunpack.c.0.s8 %v9140
        %v9142 = vlaneseq
        %v9143 = vshrl.u32 %v9142, 7
        %v9144 = vsub.s32 %v9141, %v9143
        %v9145 = vrot.slane %v9137, %v9144
        %v9147 = vunpack.c.l.s4 1934713408
        %v9148 = vunpack.c.0.s8 %v9147
        %v9149 = vlaneseq
        %v9150 = vshrl.u32 %v9149, 7
        %v9151 = vsub.s32 %v9148, %v9150
        %v9152 = vrot.slane %v9138, %v9151
        %v9153 = vcombine.low %v9128, %v9136
        %v9154 = vcombine.high %v9128, %v9136
        %v9156 = vunpack.c.l.s4 1934713408
        %v9157 = vunpack.c.0.s8 %v9156
        %v9158 = vlaneseq
        %v9159 = vshrl.u32 %v9158, 7
        %v9160 = vsub.s32 %v9157, %v9159
        %v9161 = vrot.slane %v9153, %v9160
        %v9163 = vunpack.c.l.s4 1934713408
        %v9164 = vunpack.c.0.s8 %v9163
        %v9165 = vlaneseq
        %v9166 = vshrl.u32 %v9165, 7
        %v9167 = vsub.s32 %v9164, %v9166
        %v9168 = vrot.slane %v9154, %v9167
        %v9169 = vcombine.low %v9145, %v9161
        %v9170 = vcombine.high %v9145, %v9161
        %v9171 = vcombine.low %v9152, %v9168
        %v9172 = vcombine.high %v9152, %v9168
        %v9173 = vcombine.low %v8941, %v8948
        %v9175 = vunpack.c.l.s4 1983009808
        %v9176 = vunpack.c.0.s8 %v9175
        %v9177 = vlaneseq
        %v9178 = vshrl.u32 %v9177, 7
        %v9179 = vsub.s32 %v9176, %v9178
        %v9180 = vrot.slane %v9173, %v9179
        %v9181 = vcombine.low %v8965, %v8966
        %v9183 = vunpack.c.l.s4 1983009808
        %v9184 = vunpack.c.0.s8 %v9183
        %v9185 = vlaneseq
        %v9186 = vshrl.u32 %v9185, 7
        %v9187 = vsub.s32 %v9184, %v9186
        %v9188 = vrot.slane %v9181, %v9187
        %v9189 = vcombine.low %v8957, %v8964
        %v9191 = vunpack.c.l.s4 1983009808
        %v9192 = vunpack.c.0.s8 %v9191
        %v9193 = vlaneseq
        %v9194 = vshrl.u32 %v9193, 7
        %v9195 = vsub.s32 %v9192, %v9194
        %v9196 = vrot.slane %v9189, %v9195
        %v9197 = vcombine.low %v8967, %v8968
        %v9199 = vunpack.c.l.s4 1983009808
        %v9200 = vunpack.c.0.s8 %v9199
        %v9201 = vlaneseq
        %v9202 = vshrl.u32 %v9201, 7
        %v9203 = vsub.s32 %v9200, %v9202
        %v9204 = vrot.slane %v9197, %v9203
        %v9205 = vcombine.low %v9180, %v9188
        %v9206 = vcombine.high %v9180, %v9188
        %v9208 = vunpack.c.l.s4 1934713408
        %v9209 = vunpack.c.0.s8 %v9208
        %v9210 = vlaneseq
        %v9211 = vshrl.u32 %v9210, 7
        %v9212 = vsub.s32 %v9209, %v9211
        %v9213 = vrot.slane %v9205, %v9212
        %v9215 = vunpack.c.l.s4 1934713408
        %v9216 = vunpack.c.0.s8 %v9215
        %v9217 = vlaneseq
        %v9218 = vshrl.u32 %v9217, 7
        %v9219 = vsub.s32 %v9216, %v9218
        %v9220 = vrot.slane %v9206, %v9219
        %v9221 = vcombine.low %v9196, %v9204
        %v9222 = vcombine.high %v9196, %v9204
        %v9224 = vunpack.c.l.s4 1934713408
        %v9225 = vunpack.c.0.s8 %v9224
        %v9226 = vlaneseq
        %v9227 = vshrl.u32 %v9226, 7
        %v9228 = vsub.s32 %v9225, %v9227
        %v9229 = vrot.slane %v9221, %v9228
        %v9231 = vunpack.c.l.s4 1934713408
        %v9232 = vunpack.c.0.s8 %v9231
        %v9233 = vlaneseq
        %v9234 = vshrl.u32 %v9233, 7
        %v9235 = vsub.s32 %v9232, %v9234
        %v9236 = vrot.slane %v9222, %v9235
        %v9237 = vcombine.low %v9213, %v9229
        %v9238 = vcombine.high %v9213, %v9229
        %v9239 = vcombine.low %v9220, %v9236
        %v9240 = vcombine.high %v9220, %v9236
        %9245 = vrot.lane.b32.xlu0 %v9034, 32
        %v9246 = vpop.permute.xlu0 %9245
        %9247 = vrot.lane.b32.xlu0 %v9102, 32
        %v9248 = vpop.permute.xlu0 %9247
        %9249 = vrot.lane.b32.xlu0 %v9170, 32
        %v9250 = vpop.permute.xlu0 %9249
        %9251 = vrot.lane.b32.xlu0 %v9238, 32
        %v9252 = vpop.permute.xlu0 %9251
        %9261 = vrot.lane.b32.xlu0 %v9035, 64
        %v9262 = vpop.permute.xlu0 %9261
        %9263 = vrot.lane.b32.xlu0 %v9103, 64
        %v9264 = vpop.permute.xlu0 %9263
        %9265 = vrot.lane.b32.xlu0 %v9171, 64
        %v9266 = vpop.permute.xlu0 %9265
        %9267 = vrot.lane.b32.xlu0 %v9239, 64
        %v9268 = vpop.permute.xlu0 %9267
        %9277 = vrot.lane.b32.xlu0 %v9036, 96
        %v9278 = vpop.permute.xlu0 %9277
        %9279 = vrot.lane.b32.xlu0 %v9104, 96
        %v9280 = vpop.permute.xlu0 %9279
        %9281 = vrot.lane.b32.xlu0 %v9172, 96
        %v9282 = vpop.permute.xlu0 %9281
        %9283 = vrot.lane.b32.xlu0 %v9240, 96
        %v9284 = vpop.permute.xlu0 %9283
        %v9289 = vsel %vm3335, %v9033, %v9246
        %v9290 = vsel %vm3335, %v9101, %v9248
        %v9291 = vsel %vm3335, %v9169, %v9250
        %v9292 = vsel %vm3335, %v9237, %v9252
        %v9293 = vsel %vm4845, %v9289, %v9262
        %v9294 = vsel %vm4845, %v9290, %v9264
        %v9295 = vsel %vm4845, %v9291, %v9266
        %v9296 = vsel %vm4845, %v9292, %v9268
        %v9297 = vsel %vm4850, %v9293, %v9278
        %v9298 = vsel %vm4850, %v9294, %v9280
        %v9299 = vsel %vm4850, %v9295, %v9282
        %v9300 = vsel %vm4850, %v9296, %v9284
        %v9301 = vpack.c.bf16 %v9298, %v9297
        %v9302 = vpack.c.bf16 %v9300, %v9299
        %v9303 = vld [vmem:[%s1056] sm:$0xf]
        %v9304 = vld [vmem:[%s1056 + $0x4] sm:$0xf]
        %v9305 = vld [vmem:[%s1056 + $0x8] sm:$0xf]
        %v9306 = vld [vmem:[%s1056 + $0xc] sm:$0xf]
        %v9307 = vld [vmem:[%s1056 + $0x10] sm:$0xf]
        %v9308 = vld [vmem:[%s1056 + $0x14] sm:$0xf]
        %v9309 = vld [vmem:[%s1056 + $0x18] sm:$0xf]
        %v9310 = vld [vmem:[%s1056 + $0x1c] sm:$0xf]
        %v9311 = vld [vmem:[%s1056 + $0x20] sm:$0xf]
        %v9312 = vld [vmem:[%s1056 + $0x24] sm:$0xf]
        %v9313 = vld [vmem:[%s1056 + $0x28] sm:$0xf]
        %v9314 = vld [vmem:[%s1056 + $0x2c] sm:$0xf]
        %v9315 = vld [vmem:[%s1056 + $0x30] sm:$0xf]
        %v9316 = vld [vmem:[%s1056 + $0x34] sm:$0xf]
        %v9317 = vld [vmem:[%s1056 + $0x38] sm:$0xf]
        %v9318 = vld [vmem:[%s1056 + $0x3c] sm:$0xf]
        %v9319 = vld [vmem:[%s1224] sm:$0x1]
        %v9321 = vlaneseq
        %v9322 = vshrl.u32 %v9321, 7
        %v9323 = vsub.s32 0, %v9322
        %v9324 = vrot.slane %v9319, %v9323
        %v9342 = vunpack.c.l.b16 %v9303
        %v9343 = vunpack.c.l.b16 %v9304
        %v9344 = vunpack.c.l.b16 %v9305
        %v9345 = vunpack.c.l.b16 %v9306
        %v9346 = vunpack.c.l.b16 %v9307
        %v9347 = vunpack.c.l.b16 %v9308
        %v9348 = vunpack.c.l.b16 %v9309
        %v9349 = vunpack.c.l.b16 %v9310
        %v9350 = vunpack.c.l.b16 %v9311
        %v9351 = vunpack.c.l.b16 %v9312
        %v9352 = vunpack.c.l.b16 %v9313
        %v9353 = vunpack.c.l.b16 %v9314
        %v9354 = vunpack.c.l.b16 %v9315
        %v9355 = vunpack.c.l.b16 %v9316
        %v9356 = vunpack.c.l.b16 %v9317
        %v9357 = vunpack.c.l.b16 %v9318
        %v9358 = vpack.c.b16 %v9343, %v9342
        %v9359 = vpack.c.b16 %v9345, %v9344
        %v9360 = vpack.c.b16 %v9347, %v9346
        %v9361 = vpack.c.b16 %v9349, %v9348
        %v9362 = vpack.c.b16 %v9351, %v9350
        %v9363 = vpack.c.b16 %v9353, %v9352
        %v9364 = vpack.c.b16 %v9355, %v9354
        %v9365 = vpack.c.b16 %v9357, %v9356
        %9374 = vmatprep.subr.bf16.mxu0 0
        %9375 = vmatpush1.bf16.msra.mxu0 %v9358
        %9376 = vmatprep.subr.bf16.mxu0 0
        %9377 = vmatpush1.bf16.msra.mxu0 %v9359
        %9378 = vmatprep.subr.bf16.mxu0 0
        %9379 = vmatpush1.bf16.msra.mxu0 %v9360
        %9380 = vmatprep.subr.bf16.mxu0 0
        %9381 = vmatpush1.bf16.msra.mxu0 %v9361
        %9382 = vmatprep.subr.bf16.mxu0 0
        %9383 = vmatpush1.bf16.msra.mxu0 %v9362
        %9384 = vmatprep.subr.bf16.mxu0 0
        %9385 = vmatpush1.bf16.msra.mxu0 %v9363
        %9386 = vmatprep.subr.bf16.mxu0 0
        %9387 = vmatpush1.bf16.msra.mxu0 %v9364
        %9388 = vmatprep.subr.bf16.mxu0 0
        %9389 = vmatpush1.bf16.msra.mxu0 %v9365
        %9390 = vmatprep.subr.bf16.mxu0 0
        %9391 = vmatpush1.bf16.msra.mxu0 0
        %9392 = vmatprep.subr.bf16.mxu0 0
        %9393 = vmatpush1.bf16.msra.mxu0 0
        %9394 = vmatprep.subr.bf16.mxu0 0
        %9395 = vmatpush1.bf16.msra.mxu0 0
        %9396 = vmatprep.subr.bf16.mxu0 0
        %9397 = vmatpush1.bf16.msra.mxu0 0
        %9398 = vmatprep.subr.bf16.mxu0 0
        %9399 = vmatpush1.bf16.msra.mxu0 0
        %9400 = vmatprep.subr.bf16.mxu0 0
        %9401 = vmatpush1.bf16.msra.mxu0 0
        %9402 = vmatprep.subr.bf16.mxu0 0
        %9403 = vmatpush1.bf16.msra.mxu0 0
        %9404 = vmatprep.subr.bf16.mxu0 0
        %9405 = vmatpush1.bf16.msra.mxu0 0
        %9406 = vmatprep.mubr.bf16.mxu0 0
        %9407 = vmatmul.mubr.bf16.gmra.mrb[0].mxu0 %v9301
        %v9408 = vpop.f32.mrb[0].mxu0
        %v9409 = vadd.f32 %v9324, %v9408
        %v9410 = vpop.f32.mrb[0].mxu0
        %v9411 = vpop.f32.mrb[0].mxu0
        %v9412 = vadd.f32 %v9324, %v9411
        %v9413 = vpop.f32.mrb[0].mxu0
        %9414 = vmatprep.mubr.bf16.mxu0 0
        %9415 = vmatmul.mubr.bf16.gmra.mrb[0].mxu0 %v9302
        %v9416 = vpop.f32.mrb[0].mxu0
        %v9417 = vadd.f32 %v9324, %v9416
        %v9418 = vpop.f32.mrb[0].mxu0
        %v9419 = vpop.f32.mrb[0].mxu0
        %v9420 = vadd.f32 %v9324, %v9419
        %v9421 = vpop.f32.mrb[0].mxu0
        %9422 = vdwg.mxu0
        %v9423 = vadd.f32 %v5044, %v9409
        %v9424 = vadd.f32 %v5045, %v9412
        %v9425 = vadd.f32 %v5046, %v9417
        %v9426 = vadd.f32 %v5047, %v9420
        %9427 = vadd.xlane.f32.xlu0 %v9423
        %v9428 = vpop.xlane.xlu0 %9427
        %9429 = vadd.xlane.f32.xlu0 %v9424
        %v9430 = vpop.xlane.xlu0 %9429
        %9431 = vadd.xlane.f32.xlu0 %v9425
        %v9432 = vpop.xlane.xlu0 %9431
        %9433 = vadd.xlane.f32.xlu0 %v9426
        %v9434 = vpop.xlane.xlu0 %9433
        %v9435 = vmul.f32 %v9428, %v4989
        %v9436 = vmul.f32 %v9430, %v4989
        %v9437 = vmul.f32 %v9432, %v4989
        %v9438 = vmul.f32 %v9434, %v4989
        %v9439 = vsub.f32 %v9423, %v9435
        %v9440 = vsub.f32 %v9424, %v9436
        %v9441 = vsub.f32 %v9425, %v9437
        %v9442 = vsub.f32 %v9426, %v9438
        %v9443 = vmul.f32 %v9439, %v9439
        %v9444 = vmul.f32 %v9440, %v9440
        %v9445 = vmul.f32 %v9441, %v9441
        %v9446 = vmul.f32 %v9442, %v9442
        %9447 = vadd.xlane.f32.xlu0 %v9443
        %v9448 = vpop.xlane.xlu0 %9447
        %9449 = vadd.xlane.f32.xlu0 %v9444
        %v9450 = vpop.xlane.xlu0 %9449
        %9451 = vadd.xlane.f32.xlu0 %v9445
        %v9452 = vpop.xlane.xlu0 %9451
        %9453 = vadd.xlane.f32.xlu0 %v9446
        %v9454 = vpop.xlane.xlu0 %9453
        %v9455 = vmul.f32 %v9448, %v4989
        %v9456 = vmul.f32 %v9450, %v4989
        %v9457 = vmul.f32 %v9452, %v4989
        %v9458 = vmul.f32 %v9454, %v4989
        %v9459 = vadd.f32 %v9455, 1e-05
        %v9460 = vadd.f32 %v9456, 1e-05
        %v9461 = vadd.f32 %v9457, 1e-05
        %v9462 = vadd.f32 %v9458, 1e-05
        %v9463 = vrsqrt.pop %v9459
        %v9464 = vrsqrt.pop %v9460
        %v9465 = vrsqrt.pop %v9461
        %v9466 = vrsqrt.pop %v9462
        %v9467 = vmul.f32 %v9439, %v9463
        %v9468 = vmul.f32 %v9440, %v9464
        %v9469 = vmul.f32 %v9441, %v9465
        %v9470 = vmul.f32 %v9442, %v9466
        %v9471 = vld [vmem:[%s1240] sm:$0x1]
        %v9473 = vlaneseq
        %v9474 = vshrl.u32 %v9473, 7
        %v9475 = vsub.s32 0, %v9474
        %v9476 = vrot.slane %v9471, %v9475
        %v9478 = vmul.f32 %v9467, %v9476
        %v9479 = vmul.f32 %v9468, %v9476
        %v9480 = vmul.f32 %v9469, %v9476
        %v9481 = vmul.f32 %v9470, %v9476
        %v9482 = vld [vmem:[%s1243] sm:$0x1]
        %v9484 = vlaneseq
        %v9485 = vshrl.u32 %v9484, 7
        %v9486 = vsub.s32 0, %v9485
        %v9487 = vrot.slane %v9482, %v9486
        %v9489 = vadd.f32 %v9478, %v9487
        %v9490 = vadd.f32 %v9479, %v9487
        %v9491 = vadd.f32 %v9480, %v9487
        %v9492 = vadd.f32 %v9481, %v9487
        %v9493 = vpack.c.bf16 %v9490, %v9489
        %v9494 = vpack.c.bf16 %v9492, %v9491
        %v9495 = vld [vmem:[%s1065] sm:$0xff]
        %v9496 = vld [vmem:[%s1065 + $0x8] sm:$0xff]
        %v9497 = vld [vmem:[%s1065 + $0x10] sm:$0xff]
        %v9498 = vld [vmem:[%s1065 + $0x18] sm:$0xff]
        %v9499 = vld [vmem:[%s1065 + $0x20] sm:$0xff]
        %v9500 = vld [vmem:[%s1065 + $0x28] sm:$0xff]
        %v9501 = vld [vmem:[%s1065 + $0x30] sm:$0xff]
        %v9502 = vld [vmem:[%s1065 + $0x38] sm:$0xff]
        %v9503 = vld [vmem:[%s1065 + $0x40] sm:$0xff]
        %v9504 = vld [vmem:[%s1065 + $0x48] sm:$0xff]
        %v9505 = vld [vmem:[%s1065 + $0x50] sm:$0xff]
        %v9506 = vld [vmem:[%s1065 + $0x58] sm:$0xff]
        %v9507 = vld [vmem:[%s1065 + $0x60] sm:$0xff]
        %v9508 = vld [vmem:[%s1065 + $0x68] sm:$0xff]
        %v9509 = vld [vmem:[%s1065 + $0x70] sm:$0xff]
        %v9510 = vld [vmem:[%s1065 + $0x78] sm:$0xff]
        %v9511 = vld [vmem:[%s1228] sm:$0x3]
        %v9513 = vlaneseq
        %v9514 = vshrl.u32 %v9513, 7
        %v9515 = vsub.s32 0, %v9514
        %v9516 = vrot.slane %v9511, %v9515
        %v9517 = vlaneseq
        %v9518 = vshrl.u32 %v9517, 7
        %v9519 = vsub.s32 1, %v9518
        %v9520 = vrot.slane %v9511, %v9519
        %v9539 = vunpack.c.l.b16 %v9495
        %v9540 = vunpack.c.h.b16 %v9495
        %v9541 = vunpack.c.l.b16 %v9496
        %v9542 = vunpack.c.h.b16 %v9496
        %v9543 = vunpack.c.l.b16 %v9497
        %v9544 = vunpack.c.h.b16 %v9497
        %v9545 = vunpack.c.l.b16 %v9498
        %v9546 = vunpack.c.h.b16 %v9498
        %v9547 = vunpack.c.l.b16 %v9499
        %v9548 = vunpack.c.h.b16 %v9499
        %v9549 = vunpack.c.l.b16 %v9500
        %v9550 = vunpack.c.h.b16 %v9500
        %v9551 = vunpack.c.l.b16 %v9501
        %v9552 = vunpack.c.h.b16 %v9501
        %v9553 = vunpack.c.l.b16 %v9502
        %v9554 = vunpack.c.h.b16 %v9502
        %v9555 = vunpack.c.l.b16 %v9503
        %v9556 = vunpack.c.h.b16 %v9503
        %v9557 = vunpack.c.l.b16 %v9504
        %v9558 = vunpack.c.h.b16 %v9504
        %v9559 = vunpack.c.l.b16 %v9505
        %v9560 = vunpack.c.h.b16 %v9505
        %v9561 = vunpack.c.l.b16 %v9506
        %v9562 = vunpack.c.h.b16 %v9506
        %v9563 = vunpack.c.l.b16 %v9507
        %v9564 = vunpack.c.h.b16 %v9507
        %v9565 = vunpack.c.l.b16 %v9508
        %v9566 = vunpack.c.h.b16 %v9508
        %v9567 = vunpack.c.l.b16 %v9509
        %v9568 = vunpack.c.h.b16 %v9509
        %v9569 = vunpack.c.l.b16 %v9510
        %v9570 = vunpack.c.h.b16 %v9510
        %v9571 = vpack.c.b16 %v9541, %v9539
        %v9572 = vpack.c.b16 %v9542, %v9540
        %v9573 = vpack.c.b16 %v9545, %v9543
        %v9574 = vpack.c.b16 %v9546, %v9544
        %v9575 = vpack.c.b16 %v9549, %v9547
        %v9576 = vpack.c.b16 %v9550, %v9548
        %v9577 = vpack.c.b16 %v9553, %v9551
        %v9578 = vpack.c.b16 %v9554, %v9552
        %v9579 = vpack.c.b16 %v9557, %v9555
        %v9580 = vpack.c.b16 %v9558, %v9556
        %v9581 = vpack.c.b16 %v9561, %v9559
        %v9582 = vpack.c.b16 %v9562, %v9560
        %v9583 = vpack.c.b16 %v9565, %v9563
        %v9584 = vpack.c.b16 %v9566, %v9564
        %v9585 = vpack.c.b16 %v9569, %v9567
        %v9586 = vpack.c.b16 %v9570, %v9568
        %9603 = vmatprep.subr.bf16.mxu0 %v9572
        %9604 = vmatpush1.bf16.msra.mxu0 %v9571
        %9605 = vmatprep.subr.bf16.mxu0 %v9574
        %9606 = vmatpush1.bf16.msra.mxu0 %v9573
        %9607 = vmatprep.subr.bf16.mxu0 %v9576
        %9608 = vmatpush1.bf16.msra.mxu0 %v9575
        %9609 = vmatprep.subr.bf16.mxu0 %v9578
        %9610 = vmatpush1.bf16.msra.mxu0 %v9577
        %9611 = vmatprep.subr.bf16.mxu0 %v9580
        %9612 = vmatpush1.bf16.msra.mxu0 %v9579
        %9613 = vmatprep.subr.bf16.mxu0 %v9582
        %9614 = vmatpush1.bf16.msra.mxu0 %v9581
        %9615 = vmatprep.subr.bf16.mxu0 %v9584
        %9616 = vmatpush1.bf16.msra.mxu0 %v9583
        %9617 = vmatprep.subr.bf16.mxu0 %v9586
        %9618 = vmatpush1.bf16.msra.mxu0 %v9585
        %9619 = vmatprep.subr.bf16.mxu0 0
        %9620 = vmatpush1.bf16.msra.mxu0 0
        %9621 = vmatprep.subr.bf16.mxu0 0
        %9622 = vmatpush1.bf16.msra.mxu0 0
        %9623 = vmatprep.subr.bf16.mxu0 0
        %9624 = vmatpush1.bf16.msra.mxu0 0
        %9625 = vmatprep.subr.bf16.mxu0 0
        %9626 = vmatpush1.bf16.msra.mxu0 0
        %9627 = vmatprep.subr.bf16.mxu0 0
        %9628 = vmatpush1.bf16.msra.mxu0 0
        %9629 = vmatprep.subr.bf16.mxu0 0
        %9630 = vmatpush1.bf16.msra.mxu0 0
        %9631 = vmatprep.subr.bf16.mxu0 0
        %9632 = vmatpush1.bf16.msra.mxu0 0
        %9633 = vmatprep.subr.bf16.mxu0 0
        %9634 = vmatpush1.bf16.msra.mxu0 0
        %9635 = vmatprep.mubr.bf16.mxu0 0
        %9636 = vmatmul.mubr.bf16.gmra.mrb[0].mxu0 %v9493
        %v9637 = vpop.f32.mrb[0].mxu0
        %v9638 = vadd.f32 %v9516, %v9637
        %v9639 = vpop.f32.mrb[0].mxu0
        %v9640 = vadd.f32 %v9520, %v9639
        %v9641 = vpop.f32.mrb[0].mxu0
        %v9642 = vadd.f32 %v9516, %v9641
        %v9643 = vpop.f32.mrb[0].mxu0
        %v9644 = vadd.f32 %v9520, %v9643
        %9645 = vmatprep.mubr.bf16.mxu0 0
        %9646 = vmatmul.mubr.bf16.gmra.mrb[0].mxu0 %v9494
        %v9647 = vpop.f32.mrb[0].mxu0
        %v9648 = vadd.f32 %v9516, %v9647
        %v9649 = vpop.f32.mrb[0].mxu0
        %v9650 = vadd.f32 %v9520, %v9649
        %v9651 = vpop.f32.mrb[0].mxu0
        %v9652 = vadd.f32 %v9516, %v9651
        %v9653 = vpop.f32.mrb[0].mxu0
        %v9654 = vadd.f32 %v9520, %v9653
        %9655 = vdwg.mxu0
        %v9656 = vmax.f32 %v9638, 0.0
        %v9657 = vmax.f32 %v9640, 0.0
        %v9658 = vmax.f32 %v9642, 0.0
        %v9659 = vmax.f32 %v9644, 0.0
        %v9660 = vmax.f32 %v9648, 0.0
        %v9661 = vmax.f32 %v9650, 0.0
        %v9662 = vmax.f32 %v9652, 0.0
        %v9663 = vmax.f32 %v9654, 0.0
        %v9664 = vpack.c.bf16 %v9658, %v9656
        %v9665 = vpack.c.bf16 %v9659, %v9657
        %v9666 = vpack.c.bf16 %v9662, %v9660
        %v9667 = vpack.c.bf16 %v9663, %v9661
        %v9668 = vld [vmem:[%s1074] sm:$0xf]
        %v9669 = vld [vmem:[%s1074 + $0x4] sm:$0xf]
        %v9670 = vld [vmem:[%s1074 + $0x8] sm:$0xf]
        %v9671 = vld [vmem:[%s1074 + $0xc] sm:$0xf]
        %v9672 = vld [vmem:[%s1074 + $0x10] sm:$0xf]
        %v9673 = vld [vmem:[%s1074 + $0x14] sm:$0xf]
        %v9674 = vld [vmem:[%s1074 + $0x18] sm:$0xf]
        %v9675 = vld [vmem:[%s1074 + $0x1c] sm:$0xf]
        %v9676 = vld [vmem:[%s1074 + $0x20] sm:$0xf]
        %v9677 = vld [vmem:[%s1074 + $0x24] sm:$0xf]
        %v9678 = vld [vmem:[%s1074 + $0x28] sm:$0xf]
        %v9679 = vld [vmem:[%s1074 + $0x2c] sm:$0xf]
        %v9680 = vld [vmem:[%s1074 + $0x30] sm:$0xf]
        %v9681 = vld [vmem:[%s1074 + $0x34] sm:$0xf]
        %v9682 = vld [vmem:[%s1074 + $0x38] sm:$0xf]
        %v9683 = vld [vmem:[%s1074 + $0x3c] sm:$0xf]
        %v9684 = vld [vmem:[%s1074 + $0x40] sm:$0xf]
        %v9685 = vld [vmem:[%s1074 + $0x44] sm:$0xf]
        %v9686 = vld [vmem:[%s1074 + $0x48] sm:$0xf]
        %v9687 = vld [vmem:[%s1074 + $0x4c] sm:$0xf]
        %v9688 = vld [vmem:[%s1074 + $0x50] sm:$0xf]
        %v9689 = vld [vmem:[%s1074 + $0x54] sm:$0xf]
        %v9690 = vld [vmem:[%s1074 + $0x58] sm:$0xf]
        %v9691 = vld [vmem:[%s1074 + $0x5c] sm:$0xf]
        %v9692 = vld [vmem:[%s1074 + $0x60] sm:$0xf]
        %v9693 = vld [vmem:[%s1074 + $0x64] sm:$0xf]
        %v9694 = vld [vmem:[%s1074 + $0x68] sm:$0xf]
        %v9695 = vld [vmem:[%s1074 + $0x6c] sm:$0xf]
        %v9696 = vld [vmem:[%s1074 + $0x70] sm:$0xf]
        %v9697 = vld [vmem:[%s1074 + $0x74] sm:$0xf]
        %v9698 = vld [vmem:[%s1074 + $0x78] sm:$0xf]
        %v9699 = vld [vmem:[%s1074 + $0x7c] sm:$0xf]
        %v9700 = vld [vmem:[%s1231] sm:$0x1]
        %v9702 = vlaneseq
        %v9703 = vshrl.u32 %v9702, 7
        %v9704 = vsub.s32 0, %v9703
        %v9705 = vrot.slane %v9700, %v9704
        %v9739 = vunpack.c.l.b16 %v9668
        %v9740 = vunpack.c.l.b16 %v9669
        %v9741 = vunpack.c.l.b16 %v9670
        %v9742 = vunpack.c.l.b16 %v9671
        %v9743 = vunpack.c.l.b16 %v9672
        %v9744 = vunpack.c.l.b16 %v9673
        %v9745 = vunpack.c.l.b16 %v9674
        %v9746 = vunpack.c.l.b16 %v9675
        %v9747 = vunpack.c.l.b16 %v9676
        %v9748 = vunpack.c.l.b16 %v9677
        %v9749 = vunpack.c.l.b16 %v9678
        %v9750 = vunpack.c.l.b16 %v9679
        %v9751 = vunpack.c.l.b16 %v9680
        %v9752 = vunpack.c.l.b16 %v9681
        %v9753 = vunpack.c.l.b16 %v9682
        %v9754 = vunpack.c.l.b16 %v9683
        %v9755 = vunpack.c.l.b16 %v9684
        %v9756 = vunpack.c.l.b16 %v9685
        %v9757 = vunpack.c.l.b16 %v9686
        %v9758 = vunpack.c.l.b16 %v9687
        %v9759 = vunpack.c.l.b16 %v9688
        %v9760 = vunpack.c.l.b16 %v9689
        %v9761 = vunpack.c.l.b16 %v9690
        %v9762 = vunpack.c.l.b16 %v9691
        %v9763 = vunpack.c.l.b16 %v9692
        %v9764 = vunpack.c.l.b16 %v9693
        %v9765 = vunpack.c.l.b16 %v9694
        %v9766 = vunpack.c.l.b16 %v9695
        %v9767 = vunpack.c.l.b16 %v9696
        %v9768 = vunpack.c.l.b16 %v9697
        %v9769 = vunpack.c.l.b16 %v9698
        %v9770 = vunpack.c.l.b16 %v9699
        %v9771 = vpack.c.b16 %v9740, %v9739
        %v9772 = vpack.c.b16 %v9742, %v9741
        %v9773 = vpack.c.b16 %v9744, %v9743
        %v9774 = vpack.c.b16 %v9746, %v9745
        %v9775 = vpack.c.b16 %v9748, %v9747
        %v9776 = vpack.c.b16 %v9750, %v9749
        %v9777 = vpack.c.b16 %v9752, %v9751
        %v9778 = vpack.c.b16 %v9754, %v9753
        %v9779 = vpack.c.b16 %v9756, %v9755
        %v9780 = vpack.c.b16 %v9758, %v9757
        %v9781 = vpack.c.b16 %v9760, %v9759
        %v9782 = vpack.c.b16 %v9762, %v9761
        %v9783 = vpack.c.b16 %v9764, %v9763
        %v9784 = vpack.c.b16 %v9766, %v9765
        %v9785 = vpack.c.b16 %v9768, %v9767
        %v9786 = vpack.c.b16 %v9770, %v9769
        %9803 = vmatprep.subr.bf16.mxu0 0
        %9804 = vmatpush1.bf16.msra.mxu0 %v9771
        %9805 = vmatprep.subr.bf16.mxu0 0
        %9806 = vmatpush1.bf16.msra.mxu0 %v9772
        %9807 = vmatprep.subr.bf16.mxu0 0
        %9808 = vmatpush1.bf16.msra.mxu0 %v9773
        %9809 = vmatprep.subr.bf16.mxu0 0
        %9810 = vmatpush1.bf16.msra.mxu0 %v9774
        %9811 = vmatprep.subr.bf16.mxu0 0
        %9812 = vmatpush1.bf16.msra.mxu0 %v9775
        %9813 = vmatprep.subr.bf16.mxu0 0
        %9814 = vmatpush1.bf16.msra.mxu0 %v9776
        %9815 = vmatprep.subr.bf16.mxu0 0
        %9816 = vmatpush1.bf16.msra.mxu0 %v9777
        %9817 = vmatprep.subr.bf16.mxu0 0
        %9818 = vmatpush1.bf16.msra.mxu0 %v9778
        %9819 = vmatprep.subr.bf16.mxu0 0
        %9820 = vmatpush1.bf16.msra.mxu0 %v9779
        %9821 = vmatprep.subr.bf16.mxu0 0
        %9822 = vmatpush1.bf16.msra.mxu0 %v9780
        %9823 = vmatprep.subr.bf16.mxu0 0
        %9824 = vmatpush1.bf16.msra.mxu0 %v9781
        %9825 = vmatprep.subr.bf16.mxu0 0
        %9826 = vmatpush1.bf16.msra.mxu0 %v9782
        %9827 = vmatprep.subr.bf16.mxu0 0
        %9828 = vmatpush1.bf16.msra.mxu0 %v9783
        %9829 = vmatprep.subr.bf16.mxu0 0
        %9830 = vmatpush1.bf16.msra.mxu0 %v9784
        %9831 = vmatprep.subr.bf16.mxu0 0
        %9832 = vmatpush1.bf16.msra.mxu0 %v9785
        %9833 = vmatprep.subr.bf16.mxu0 0
        %9834 = vmatpush1.bf16.msra.mxu0 %v9786
        %9835 = vmatprep.mubr.bf16.mxu0 %v9665
        %9836 = vmatmul.mubr.bf16.gmra.mrb[0].mxu0 %v9664
        %v9837 = vpop.f32.mrb[0].mxu0
        %v9838 = vadd.f32 %v9705, %v9837
        %v9839 = vpop.f32.mrb[0].mxu0
        %v9840 = vpop.f32.mrb[0].mxu0
        %v9841 = vadd.f32 %v9705, %v9840
        %v9842 = vpop.f32.mrb[0].mxu0
        %9843 = vmatprep.mubr.bf16.mxu0 %v9667
        %9844 = vmatmul.mubr.bf16.gmra.mrb[0].mxu0 %v9666
        %v9845 = vpop.f32.mrb[0].mxu0
        %v9846 = vadd.f32 %v9705, %v9845
        %v9847 = vpop.f32.mrb[0].mxu0
        %v9848 = vpop.f32.mrb[0].mxu0
        %v9849 = vadd.f32 %v9705, %v9848
        %v9850 = vpop.f32.mrb[0].mxu0
        %9851 = vdwg.mxu0
        %v9852 = vadd.f32 %v9489, %v9838
        %v9853 = vadd.f32 %v9490, %v9841
        %v9854 = vadd.f32 %v9491, %v9846
        %v9855 = vadd.f32 %v9492, %v9849
        %9856 = vadd.xlane.f32.xlu0 %v9852
        %v9857 = vpop.xlane.xlu0 %9856
        %9858 = vadd.xlane.f32.xlu0 %v9853
        %v9859 = vpop.xlane.xlu0 %9858
        %9860 = vadd.xlane.f32.xlu0 %v9854
        %v9861 = vpop.xlane.xlu0 %9860
        %9862 = vadd.xlane.f32.xlu0 %v9855
        %v9863 = vpop.xlane.xlu0 %9862
        %v9864 = vmul.f32 %v9857, %v4989
        %v9865 = vmul.f32 %v9859, %v4989
        %v9866 = vmul.f32 %v9861, %v4989
        %v9867 = vmul.f32 %v9863, %v4989
        %v9868 = vsub.f32 %v9852, %v9864
        %v9869 = vsub.f32 %v9853, %v9865
        %v9870 = vsub.f32 %v9854, %v9866
        %v9871 = vsub.f32 %v9855, %v9867
        %v9872 = vmul.f32 %v9868, %v9868
        %v9873 = vmul.f32 %v9869, %v9869
        %v9874 = vmul.f32 %v9870, %v9870
        %v9875 = vmul.f32 %v9871, %v9871
        %9876 = vadd.xlane.f32.xlu0 %v9872
        %v9877 = vpop.xlane.xlu0 %9876
        %9878 = vadd.xlane.f32.xlu0 %v9873
        %v9879 = vpop.xlane.xlu0 %9878
        %9880 = vadd.xlane.f32.xlu0 %v9874
        %v9881 = vpop.xlane.xlu0 %9880
        %9882 = vadd.xlane.f32.xlu0 %v9875
        %v9883 = vpop.xlane.xlu0 %9882
        %v9884 = vmul.f32 %v9877, %v4989
        %v9885 = vmul.f32 %v9879, %v4989
        %v9886 = vmul.f32 %v9881, %v4989
        %v9887 = vmul.f32 %v9883, %v4989
        %v9888 = vadd.f32 %v9884, 1e-05
        %v9889 = vadd.f32 %v9885, 1e-05
        %v9890 = vadd.f32 %v9886, 1e-05
        %v9891 = vadd.f32 %v9887, 1e-05
        %v9892 = vrsqrt.pop %v9888
        %v9893 = vrsqrt.pop %v9889
        %v9894 = vrsqrt.pop %v9890
        %v9895 = vrsqrt.pop %v9891
        %v9896 = vmul.f32 %v9868, %v9892
        %v9897 = vmul.f32 %v9869, %v9893
        %v9898 = vmul.f32 %v9870, %v9894
        %v9899 = vmul.f32 %v9871, %v9895
        %v9900 = vld [vmem:[%s1246] sm:$0x1]
        %v9902 = vlaneseq
        %v9903 = vshrl.u32 %v9902, 7
        %v9904 = vsub.s32 0, %v9903
        %v9905 = vrot.slane %v9900, %v9904
        %v9907 = vmul.f32 %v9896, %v9905
        %v9908 = vmul.f32 %v9897, %v9905
        %v9909 = vmul.f32 %v9898, %v9905
        %v9910 = vmul.f32 %v9899, %v9905
        %v9911 = vld [vmem:[%s1249] sm:$0x1]
        %v9913 = vlaneseq
        %v9914 = vshrl.u32 %v9913, 7
        %v9915 = vsub.s32 0, %v9914
        %v9916 = vrot.slane %v9911, %v9915
        %v9918 = vadd.f32 %v9907, %v9916
        %v9919 = vadd.f32 %v9908, %v9916
        %v9920 = vadd.f32 %v9909, %v9916
        %v9921 = vadd.f32 %v9910, %v9916
        %9922 = vst [vmem:[#allocation17] sm:$0xff] %v9918
        %9923 = vst [vmem:[#allocation17 + $0x8] sm:$0xff] %v9919
        %9924 = vst [vmem:[#allocation17 + $0x10] sm:$0xff] %v9920
        %9925 = vst [vmem:[#allocation17 + $0x18] sm:$0xff] %v9921
        // Predicated region
        $region165: #{tpu_custom_call.1} parent=115 // pred_check
          %p9926 = pneg %p683
        $region166: #{tpu_custom_call.1} parent=115 // pred_check_branch
          %9928 = sbr.rel (%p9926) target = $region168
        $region167: #{tpu_custom_call.1} parent=115 // pred_region
          %s9929 = smul.u32 2, %s43
          %s9931 = ssub.s32 512, 512
          %9932 = vsyncadd [#allocation4], %s9931
          %s9933 = smul.addr %s9929, 2
          %s9934 = smul.addr %s9933, 128
          %s9935 = scalar_lea.hbm %s24, %s9934
          %s9936 = sshll.u32 [#allocation17], 4
          %s9937 = int_to_ptr.vmem [resolvable:$true] %s9936
          %9942 = dma.vmem_to_hbm [thread:$0]  %s9937, 512, %s9935, [#allocation4], 128, 128, 8
        $region168: #{tpu_custom_call.1} parent=115 // pred_fallthru
          _
        // Predicated region
        $region169: #{tpu_custom_call.1} parent=115 // pred_check
          %p9943 = pneg %p683
        $region170: #{tpu_custom_call.1} parent=115 // pred_check_branch
          %9945 = sbr.rel (%p9943) target = $region172
        $region171: #{tpu_custom_call.1} parent=115 // pred_region
          %9946 = dma.done [#allocation4], 512
        $region172: #{tpu_custom_call.1} parent=115 // pred_fallthru
          _
      $region116: #{tpu_custom_call.1} parent=5 // pred_fallthru
        _
      %p9947 = scmp.le.s32.totalorder 2, %s34
      // Predicated region
      $region173: #{tpu_custom_call.1} parent=5 // pred_check
        %p9948 = pneg %p9947
      $region174: #{tpu_custom_call.1} parent=5 // pred_check_branch
        %9950 = sbr.rel (%p9948) target = $region176
      $region175: #{tpu_custom_call.1} parent=5 // pred_region
        %s9951 = ssub.s32 %s34, 2
      $region176: #{tpu_custom_call.1} parent=5 // pred_fallthru
        _
    $region6: #{tpu_custom_call.1} parent=1 // loop_footer
      %s38 = sadd.s32 1, %s34
    $region7: #{tpu_custom_call.1} parent=1 // loop_footer_branch
      %33 = sbr.rel target = $region3
    $region8: #{tpu_custom_call.1} parent=1 // loop_exit
      _
    %9952 = vsyncpa [#allocation3], 1
    %s9953 = scalar_lea.sflag [#allocation3], 1
    %9954 = vsyncpa %s9953, 1
    %9955 = vsyncpa [#allocation6], 1
    %9956 = vsyncpa [#allocation9], 1
    %9957 = vsyncpa [#allocation4], 1
    %s9958 = scalar_lea.sflag [#allocation4], 1
    %9959 = vsyncpa %s9958, 1

</llo_original>
